<compile_context>
chip_gen: v6e
topology: v6e:2x2x1
jax: 0.10.0
libtpu: 0.0.40
codegen_flags: <defaults>
</compile_context>

<pallas_src>
import functools
import numpy as np
import jax
import jax.numpy as jnp
from jax.experimental import pallas as pl
from jax.experimental.pallas import tpu as pltpu

NETWORK_CONFIG = [(32, 3, 1), (64, 3, 2), ['B', 1], (128, 3, 2), ['B', 2],
                  (256, 3, 2), ['B', 8], (512, 3, 2), ['B', 8], (1024, 3, 2),
                  ['B', 4], (512, 1, 1), (1024, 3, 1), 'S', (256, 1, 1), 'U',
                  (256, 1, 1), (512, 3, 1), 'S', (128, 1, 1), 'U',
                  (128, 1, 1), (256, 3, 1), 'S']

CHANNEL_SCALE = 8  # shrink channel widths (config is a ctor arg) for a small run

LANE = 128  # TPU lane width; channel padding target


def _scaled_config(cfg, s):
    out = []
    for m in cfg:
        if isinstance(m, tuple):
            out.append((max(2, m[0] // s), m[1], m[2]))
        else:
            out.append(m)
    return out


def _round_up(a, b):
    return (a + b - 1) // b * b


# ----------------------------------------------------------------------------
# Pallas kernels: fused (patches @ W_folded) + bias [+ LeakyReLU] [+ residual]
#   patches/weights/residual: bf16, accumulate + epilogue: f32.
# ----------------------------------------------------------------------------
def _conv_kernel_factory(apply_act, add_residual):
    def kernel(p_ref, w_ref, b_ref, *rest):
        if add_residual:
            r_ref, o_ref = rest
        else:
            (o_ref,) = rest
        y = jnp.dot(p_ref[...], w_ref[...], preferred_element_type=jnp.float32)
        y = y + b_ref[...]                          # BN bias (scale folded in W)
        if apply_act:
            y = jnp.where(y > 0, y, 0.1 * y)        # LeakyReLU(0.1)
        if add_residual:
            y = y + r_ref[...].astype(jnp.float32)  # ResBlock skip connection
        o_ref[...] = y.astype(o_ref.dtype)
    return kernel


_KERNELS = {(a, r): _conv_kernel_factory(a, r)
            for a in (True, False) for r in (True, False)}


def _pick_tm(M):
    """Pick (tile_M, padded_M): big tiles, >=2 grid steps on big layers."""
    Mp = _round_up(M, 8)
    for t in (1024, 512, 256):
        if Mp % t == 0 and Mp // t >= 2:
            return t, Mp
    if Mp <= 1024:
        return Mp, Mp
    return 512, _round_up(Mp, 512)


def _im2col(x, K, stride, pad):
    # x: (N, H, W, C) real channels -> patches (N*Ho*Wo, K*K*C), row order
    # (n, ho, wo), column order (ki, kj, c) matching weight layout (K,K,Cin,Cout).
    N, H, W, C = x.shape
    xp = jnp.pad(x, ((0, 0), (pad, pad), (pad, pad), (0, 0)))
    Ho = (H + 2 * pad - K) // stride + 1
    Wo = (W + 2 * pad - K) // stride + 1
    cols = []
    for ki in range(K):
        for kj in range(K):
            cols.append(xp[:, ki:ki + stride * Ho:stride,
                           kj:kj + stride * Wo:stride, :])
    patches = jnp.concatenate(cols, axis=-1)
    return patches.reshape(N * Ho * Wo, K * K * C), Ho, Wo


def conv_block(x, p, K, stride, pad, cin, act=True, residual=None,
               out_dtype=jnp.bfloat16):
    """Fused Conv(+foldedBN)(+LeakyReLU)(+residual).

    x: NHWC activation, channels possibly zero-padded to a multiple of 128.
    p: {'w2': (Kc, Coutp) bf16 weight with BN scale folded, 'b': (1, Coutp) f32}
    Returns NHWC with Coutp (=round_up(cout,128)) channels (padded lanes = 0).
    """
    N, H, W, _ = x.shape
    w2, b = p['w2'], p['b']
    coutp = w2.shape[1]

    if K == 1 and stride == 1:
        # No im2col: feed the stored (lane-padded) activation directly; the
        # weight's padded Cin rows are zero so extra lanes contribute nothing.
        patches = x.astype(jnp.bfloat16).reshape(N * H * W, x.shape[-1])
        Ho, Wo = H, W
    else:
        # Slice to real channels first so patch bytes scale with real Cin.
        patches, Ho, Wo = _im2col(x[..., :cin].astype(jnp.bfloat16),
                                  K, stride, pad)

    M, Kc = patches.shape
    assert Kc == w2.shape[0], (Kc, w2.shape)

    TM, Mp = _pick_tm(M)
    if Mp != M:
        patches = jnp.pad(patches, ((0, Mp - M), (0, 0)))

    args = [patches, w2, b]
    in_specs = [
        pl.BlockSpec((TM, Kc), lambda i: (i, 0)),
        pl.BlockSpec((Kc, coutp), lambda i: (0, 0)),
        pl.BlockSpec((1, coutp), lambda i: (0, 0)),
    ]
    add_res = residual is not None
    if add_res:
        r = residual.reshape(-1, coutp)     # stored activation, already padded
        if Mp != M:
            r = jnp.pad(r, ((0, Mp - M), (0, 0)))
        args.append(r)
        in_specs.append(pl.BlockSpec((TM, coutp), lambda i: (i, 0)))

    out = pl.pallas_call(
        _KERNELS[(act, add_res)],
        out_shape=jax.ShapeDtypeStruct((Mp, coutp), out_dtype),
        grid=(Mp // TM,),
        in_specs=in_specs,
        out_specs=pl.BlockSpec((TM, coutp), lambda i: (i, 0)),
        compiler_params=pltpu.CompilerParams(dimension_semantics=("parallel",)),
    )(*args)

    if Mp != M:
        out = out[:M]
    return out.reshape(N, Ho, Wo, coutp)


def upsample2(x):  # nearest-neighbour, scale_factor=2 (NHWC)
    return jnp.repeat(jnp.repeat(x, 2, axis=1), 2, axis=2)


# ----------------------------------------------------------------------------
# Parameter prep + static network structure (mirrors _create_network_layers)
# ----------------------------------------------------------------------------
def _prep_conv(key, K, cin, cout, bn_act):
    """Init a ConvBlock and pre-fold/pad it for the Pallas kernel."""
    kw, kb = jax.random.split(key)
    w = jax.random.normal(kw, (K, K, cin, cout), jnp.float32) / np.sqrt(K * K * cin)
    if bn_act:
        eps = 1e-5
        # fresh BN running stats (eval semantics): gamma=1, beta=0, mean=0, var=1
        scale = jnp.full((cout,), 1.0 / np.sqrt(1.0 + eps), jnp.float32)
        bias = jnp.zeros((cout,), jnp.float32)
    else:  # final prediction conv: real conv bias, no BN, no activation
        scale = jnp.ones((cout,), jnp.float32)
        bias = jax.random.normal(kb, (cout,), jnp.float32) * 0.01

    w2 = (w * scale).reshape(K * K * cin, cout)     # fold BN scale into weights
    if K == 1:
        # 1x1 convs read the lane-padded stored activation: pad Cin rows too.
        cin_p = _round_up(cin, LANE)
        w2 = jnp.pad(w2, ((0, cin_p - cin), (0, 0)))
    coutp = _round_up(cout, LANE)
    w2 = jnp.pad(w2, ((0, 0), (0, coutp - cout))).astype(jnp.bfloat16)
    b = jnp.pad(bias, (0, coutp - cout)).reshape(1, coutp)
    return {'w2': w2, 'b': b}


def build_network(key, c_in, config, num_classes):
    specs, params = [], []
    route_c = []

    def nk():
        nonlocal key
        key, sub = jax.random.split(key)
        return sub

    c = c_in
    for module in config:
        if isinstance(module, tuple):
            c_out, k, s = module
            specs.append(('conv', dict(K=k, stride=s, pad=1 if k == 3 else 0,
                                       cin=c, cout=c_out)))
            params.append(_prep_conv(nk(), k, c, c_out, True))
            c = c_out
        elif isinstance(module, list):
            n_rep = module[1]
            specs.append(('res', dict(num_repeats=n_rep, res_connection=True, c=c)))
            params.append([{'c1': _prep_conv(nk(), 1, c, c // 2, True),
                            'c2': _prep_conv(nk(), 3, c // 2, c, True)}
                           for _ in range(n_rep)])
            if n_rep == 8:
                route_c.append(c)
        elif module == 'S':
            specs.append(('res', dict(num_repeats=1, res_connection=False, c=c)))
            params.append([{'c1': _prep_conv(nk(), 1, c, c // 2, True),
                            'c2': _prep_conv(nk(), 3, c // 2, c, True)}])
            specs.append(('conv', dict(K=1, stride=1, pad=0, cin=c, cout=c // 2)))
            params.append(_prep_conv(nk(), 1, c, c // 2, True))
            c = c // 2
            specs.append(('scale_pred', dict(c=c, num_classes=num_classes)))
            params.append({'c1': _prep_conv(nk(), 3, c, 2 * c, True),
                           'c2': _prep_conv(nk(), 1, 2 * c,
                                            (num_classes + 5) * 3, False)})
        elif module == 'U':
            cr = route_c.pop()
            specs.append(('upsample', dict(c_x=c, c_route=cr)))
            params.append({})
            c = c + cr  # == c * 3, matching torch config bookkeeping
    return specs, params


# ----------------------------------------------------------------------------
# Forward pass (mirrors YOLOv3.forward)
# ----------------------------------------------------------------------------
def forward(specs, params, x_nchw):
    x = jnp.transpose(x_nchw, (0, 2, 3, 1))  # NCHW -> NHWC
    outputs, routes = [], []
    for (kind, info), p in zip(specs, params):
        if kind == 'conv':
            x = conv_block(x, p, info['K'], info['stride'], info['pad'],
                           info['cin'], act=True)
        elif kind == 'res':
            c = info['c']
            for rp in p:
                h = conv_block(x, rp['c1'], 1, 1, 0, c, act=True)
                res = x if info['res_connection'] else None
                x = conv_block(h, rp['c2'], 3, 1, 1, c // 2, act=True,
                               residual=res)
            if info['num_repeats'] == 8:
                routes.append(x)
        elif kind == 'scale_pred':
            c, nc = info['c'], info['num_classes']
            h = conv_block(x, p['c1'], 3, 1, 1, c, act=True)
            h = conv_block(h, p['c2'], 1, 1, 0, 2 * c, act=False,
                           out_dtype=jnp.float32)
            N, H, W, _ = h.shape
            hr = h[..., :3 * (nc + 5)]  # drop padded lanes
            # NHWC (N,H,W,3*(nc+5)) -> (N,3,H,W,nc+5), matching torch
            # reshape(N,3,nc+5,H,W).permute(0,1,3,4,2)
            outputs.append(hr.reshape(N, H, W, 3, nc + 5).transpose(0, 3, 1, 2, 4))
        elif kind == 'upsample':
            up = upsample2(x)
            cat = jnp.concatenate([up[..., :info['c_x']],
                                   routes.pop()[..., :info['c_route']]], axis=-1)
            cp = _round_up(info['c_x'] + info['c_route'], LANE)
            x = jnp.pad(cat, ((0, 0), (0, 0), (0, 0), (0, cp - cat.shape[-1])))
    return outputs


if __name__ == "__main__":
    key = jax.random.PRNGKey(0)
    k_params, k_x = jax.random.split(key)

    num_classes = 20
    cfg = _scaled_config(NETWORK_CONFIG, CHANNEL_SCALE)
    specs, params = build_network(k_params, 1, cfg, num_classes)

    # PyTorch-convention NCHW input: batch=2, c_in=1, spatial=32 (div by 32).
    x = jax.random.normal(k_x, (2, 1, 32, 32), jnp.float32)

    fwd = jax.jit(functools.partial(forward, specs))
    outs = jax.block_until_ready(fwd(params, x))

    expected = [(2, 3, 1, 1, num_classes + 5),
                (2, 3, 2, 2, num_classes + 5),
                (2, 3, 4, 4, num_classes + 5)]
    got = [tuple(o.shape) for o in outs]
    assert got == expected, (got, expected)
    assert all(bool(jnp.all(jnp.isfinite(o))) for o in outs)
    print("KERNEL_OK")
</pallas_src>

<mosaic_0001>
module attributes {stable_mosaic.version = 11 : i64} {
  func.func @kernel(%arg0: i32, %arg1: memref<1024x9xbf16, #tpu.memory_space<vmem>>, %arg2: memref<9x128xbf16, #tpu.memory_space<vmem>>, %arg3: memref<1x128xf32, #tpu.memory_space<vmem>>, %arg4: memref<1024x128xbf16, #tpu.memory_space<vmem>>) attributes {dimension_semantics = [#tpu.dimension_semantics<parallel>], iteration_bounds = array<i64: 2>, scalar_prefetch = 0 : i64, scratch_operands = 0 : i64, tpu.core_type = #tpu.core_type<tc>, window_params = [{transform_indices = @transform_0, window_bounds = array<i64: 1024, 9>}, {pipeline_mode = #tpu.pipeline_mode<synchronous>, transform_indices = @transform_1, window_bounds = array<i64: 9, 128>}, {pipeline_mode = #tpu.pipeline_mode<synchronous>, transform_indices = @transform_2, window_bounds = array<i64: 1, 128>}, {transform_indices = @transform_3, window_bounds = array<i64: 1024, 128>}]} {
    %c0 = arith.constant 0 : index
    %c0_0 = arith.constant 0 : index
    %0 = vector.load %arg1[%c0, %c0_0] : memref<1024x9xbf16, #tpu.memory_space<vmem>>, vector<1024x9xbf16>
    %c0_1 = arith.constant 0 : index
    %c0_2 = arith.constant 0 : index
    %1 = vector.load %arg2[%c0_1, %c0_2] : memref<9x128xbf16, #tpu.memory_space<vmem>>, vector<9x128xbf16>
    %cst = arith.constant dense<0.000000e+00> : vector<1024x128xf32>
    %2 = tpu.matmul %0, %1, %cst {dimension_numbers = #tpu.dot_dimension_numbers<[1], [0], [0], [1], [0, 0, 1, 1], [], []>} : vector<1024x9xbf16>, vector<9x128xbf16>, vector<1024x128xf32> -> vector<1024x128xf32>
    %c0_3 = arith.constant 0 : index
    %c0_4 = arith.constant 0 : index
    %3 = vector.load %arg3[%c0_3, %c0_4] : memref<1x128xf32, #tpu.memory_space<vmem>>, vector<1x128xf32>
    %4 = vector.broadcast %3 : vector<1x128xf32> to vector<1024x128xf32>
    %5 = arith.addf %2, %4 : vector<1024x128xf32>
    %cst_5 = arith.constant 0.000000e+00 : f32
    %6 = vector.broadcast %cst_5 : f32 to vector<1024x128xf32>
    %7 = arith.cmpf ogt, %5, %6 : vector<1024x128xf32>
    %cst_6 = arith.constant 1.000000e-01 : f32
    %8 = vector.broadcast %cst_6 : f32 to vector<1024x128xf32>
    %9 = arith.mulf %8, %5 : vector<1024x128xf32>
    %10 = arith.select %7, %5, %9 : vector<1024x128xi1>, vector<1024x128xf32>
    %11 = arith.truncf %10 : vector<1024x128xf32> to vector<1024x128xbf16>
    %c0_7 = arith.constant 0 : index
    %c0_8 = arith.constant 0 : index
    %12 = vector.load %arg4[%c0_7, %c0_8] : memref<1024x128xbf16, #tpu.memory_space<vmem>>, vector<1024x128xbf16>
    tpu.vector_store %arg4[%c0_7, %c0_8], %11 {strides = array<i32>} : memref<1024x128xbf16, #tpu.memory_space<vmem>>, vector<1024x128xbf16>,
    return
  }
  func.func @transform_0(%arg0: i32) -> (i32, i32) {
    %c0_i32 = arith.constant 0 : i32
    %c0_i32_0 = arith.constant 0 : i32
    return %arg0, %c0_i32 : i32, i32
  }
  func.func @transform_1(%arg0: i32) -> (i32, i32) {
    %c0_i32 = arith.constant 0 : i32
    %c0_i32_0 = arith.constant 0 : i32
    %c0_i32_1 = arith.constant 0 : i32
    return %c0_i32, %c0_i32_0 : i32, i32
  }
  func.func @transform_2(%arg0: i32) -> (i32, i32) {
    %c0_i32 = arith.constant 0 : i32
    %c0_i32_0 = arith.constant 0 : i32
    %c0_i32_1 = arith.constant 0 : i32
    return %c0_i32, %c0_i32_0 : i32, i32
  }
  func.func @transform_3(%arg0: i32) -> (i32, i32) {
    %c0_i32 = arith.constant 0 : i32
    %c0_i32_0 = arith.constant 0 : i32
    return %arg0, %c0_i32 : i32, i32
  }
}

module attributes {stable_mosaic.version = 11 : i64} {
  func.func @kernel(%arg0: i32, %arg1: memref<256x36xbf16, #tpu.memory_space<vmem>>, %arg2: memref<36x128xbf16, #tpu.memory_space<vmem>>, %arg3: memref<1x128xf32, #tpu.memory_space<vmem>>, %arg4: memref<256x128xbf16, #tpu.memory_space<vmem>>) attributes {dimension_semantics = [#tpu.dimension_semantics<parallel>], iteration_bounds = array<i64: 2>, scalar_prefetch = 0 : i64, scratch_operands = 0 : i64, tpu.core_type = #tpu.core_type<tc>, window_params = [{transform_indices = @transform_0, window_bounds = array<i64: 256, 36>}, {pipeline_mode = #tpu.pipeline_mode<synchronous>, transform_indices = @transform_1, window_bounds = array<i64: 36, 128>}, {pipeline_mode = #tpu.pipeline_mode<synchronous>, transform_indices = @transform_2, window_bounds = array<i64: 1, 128>}, {transform_indices = @transform_3, window_bounds = array<i64: 256, 128>}]} {
    %c0 = arith.constant 0 : index
    %c0_0 = arith.constant 0 : index
    %0 = vector.load %arg1[%c0, %c0_0] : memref<256x36xbf16, #tpu.memory_space<vmem>>, vector<256x36xbf16>
    %c0_1 = arith.constant 0 : index
    %c0_2 = arith.constant 0 : index
    %1 = vector.load %arg2[%c0_1, %c0_2] : memref<36x128xbf16, #tpu.memory_space<vmem>>, vector<36x128xbf16>
    %cst = arith.constant dense<0.000000e+00> : vector<256x128xf32>
    %2 = tpu.matmul %0, %1, %cst {dimension_numbers = #tpu.dot_dimension_numbers<[1], [0], [0], [1], [0, 0, 1, 1], [], []>} : vector<256x36xbf16>, vector<36x128xbf16>, vector<256x128xf32> -> vector<256x128xf32>
    %c0_3 = arith.constant 0 : index
    %c0_4 = arith.constant 0 : index
    %3 = vector.load %arg3[%c0_3, %c0_4] : memref<1x128xf32, #tpu.memory_space<vmem>>, vector<1x128xf32>
    %4 = vector.broadcast %3 : vector<1x128xf32> to vector<256x128xf32>
    %5 = arith.addf %2, %4 : vector<256x128xf32>
    %cst_5 = arith.constant 0.000000e+00 : f32
    %6 = vector.broadcast %cst_5 : f32 to vector<256x128xf32>
    %7 = arith.cmpf ogt, %5, %6 : vector<256x128xf32>
    %cst_6 = arith.constant 1.000000e-01 : f32
    %8 = vector.broadcast %cst_6 : f32 to vector<256x128xf32>
    %9 = arith.mulf %8, %5 : vector<256x128xf32>
    %10 = arith.select %7, %5, %9 : vector<256x128xi1>, vector<256x128xf32>
    %11 = arith.truncf %10 : vector<256x128xf32> to vector<256x128xbf16>
    %c0_7 = arith.constant 0 : index
    %c0_8 = arith.constant 0 : index
    %12 = vector.load %arg4[%c0_7, %c0_8] : memref<256x128xbf16, #tpu.memory_space<vmem>>, vector<256x128xbf16>
    tpu.vector_store %arg4[%c0_7, %c0_8], %11 {strides = array<i32>} : memref<256x128xbf16, #tpu.memory_space<vmem>>, vector<256x128xbf16>,
    return
  }
  func.func @transform_0(%arg0: i32) -> (i32, i32) {
    %c0_i32 = arith.constant 0 : i32
    %c0_i32_0 = arith.constant 0 : i32
    return %arg0, %c0_i32 : i32, i32
  }
  func.func @transform_1(%arg0: i32) -> (i32, i32) {
    %c0_i32 = arith.constant 0 : i32
    %c0_i32_0 = arith.constant 0 : i32
    %c0_i32_1 = arith.constant 0 : i32
    return %c0_i32, %c0_i32_0 : i32, i32
  }
  func.func @transform_2(%arg0: i32) -> (i32, i32) {
    %c0_i32 = arith.constant 0 : i32
    %c0_i32_0 = arith.constant 0 : i32
    %c0_i32_1 = arith.constant 0 : i32
    return %c0_i32, %c0_i32_0 : i32, i32
  }
  func.func @transform_3(%arg0: i32) -> (i32, i32) {
    %c0_i32 = arith.constant 0 : i32
    %c0_i32_0 = arith.constant 0 : i32
    return %arg0, %c0_i32 : i32, i32
  }
}

module attributes {stable_mosaic.version = 11 : i64} {
  func.func @kernel(%arg0: i32, %arg1: memref<256x128xbf16, #tpu.memory_space<vmem>>, %arg2: memref<128x128xbf16, #tpu.memory_space<vmem>>, %arg3: memref<1x128xf32, #tpu.memory_space<vmem>>, %arg4: memref<256x128xbf16, #tpu.memory_space<vmem>>) attributes {dimension_semantics = [#tpu.dimension_semantics<parallel>], iteration_bounds = array<i64: 2>, scalar_prefetch = 0 : i64, scratch_operands = 0 : i64, tpu.core_type = #tpu.core_type<tc>, window_params = [{transform_indices = @transform_0, window_bounds = array<i64: 256, 128>}, {pipeline_mode = #tpu.pipeline_mode<synchronous>, transform_indices = @transform_1, window_bounds = array<i64: 128, 128>}, {pipeline_mode = #tpu.pipeline_mode<synchronous>, transform_indices = @transform_2, window_bounds = array<i64: 1, 128>}, {transform_indices = @transform_3, window_bounds = array<i64: 256, 128>}]} {
    %c0 = arith.constant 0 : index
    %c0_0 = arith.constant 0 : index
    %0 = vector.load %arg1[%c0, %c0_0] : memref<256x128xbf16, #tpu.memory_space<vmem>>, vector<256x128xbf16>
    %c0_1 = arith.constant 0 : index
    %c0_2 = arith.constant 0 : index
    %1 = vector.load %arg2[%c0_1, %c0_2] : memref<128x128xbf16, #tpu.memory_space<vmem>>, vector<128x128xbf16>
    %cst = arith.constant dense<0.000000e+00> : vector<256x128xf32>
    %2 = tpu.matmul %0, %1, %cst {dimension_numbers = #tpu.dot_dimension_numbers<[1], [0], [0], [1], [0, 0, 1, 1], [], []>} : vector<256x128xbf16>, vector<128x128xbf16>, vector<256x128xf32> -> vector<256x128xf32>
    %c0_3 = arith.constant 0 : index
    %c0_4 = arith.constant 0 : index
    %3 = vector.load %arg3[%c0_3, %c0_4] : memref<1x128xf32, #tpu.memory_space<vmem>>, vector<1x128xf32>
    %4 = vector.broadcast %3 : vector<1x128xf32> to vector<256x128xf32>
    %5 = arith.addf %2, %4 : vector<256x128xf32>
    %cst_5 = arith.constant 0.000000e+00 : f32
    %6 = vector.broadcast %cst_5 : f32 to vector<256x128xf32>
    %7 = arith.cmpf ogt, %5, %6 : vector<256x128xf32>
    %cst_6 = arith.constant 1.000000e-01 : f32
    %8 = vector.broadcast %cst_6 : f32 to vector<256x128xf32>
    %9 = arith.mulf %8, %5 : vector<256x128xf32>
    %10 = arith.select %7, %5, %9 : vector<256x128xi1>, vector<256x128xf32>
    %11 = arith.truncf %10 : vector<256x128xf32> to vector<256x128xbf16>
    %c0_7 = arith.constant 0 : index
    %c0_8 = arith.constant 0 : index
    %12 = vector.load %arg4[%c0_7, %c0_8] : memref<256x128xbf16, #tpu.memory_space<vmem>>, vector<256x128xbf16>
    tpu.vector_store %arg4[%c0_7, %c0_8], %11 {strides = array<i32>} : memref<256x128xbf16, #tpu.memory_space<vmem>>, vector<256x128xbf16>,
    return
  }
  func.func @transform_0(%arg0: i32) -> (i32, i32) {
    %c0_i32 = arith.constant 0 : i32
    %c0_i32_0 = arith.constant 0 : i32
    return %arg0, %c0_i32 : i32, i32
  }
  func.func @transform_1(%arg0: i32) -> (i32, i32) {
    %c0_i32 = arith.constant 0 : i32
    %c0_i32_0 = arith.constant 0 : i32
    %c0_i32_1 = arith.constant 0 : i32
    return %c0_i32, %c0_i32_0 : i32, i32
  }
  func.func @transform_2(%arg0: i32) -> (i32, i32) {
    %c0_i32 = arith.constant 0 : i32
    %c0_i32_0 = arith.constant 0 : i32
    %c0_i32_1 = arith.constant 0 : i32
    return %c0_i32, %c0_i32_0 : i32, i32
  }
  func.func @transform_3(%arg0: i32) -> (i32, i32) {
    %c0_i32 = arith.constant 0 : i32
    %c0_i32_0 = arith.constant 0 : i32
    return %arg0, %c0_i32 : i32, i32
  }
}

module attributes {stable_mosaic.version = 11 : i64} {
  func.func @kernel(%arg0: i32, %arg1: memref<256x36xbf16, #tpu.memory_space<vmem>>, %arg2: memref<36x128xbf16, #tpu.memory_space<vmem>>, %arg3: memref<1x128xf32, #tpu.memory_space<vmem>>, %arg4: memref<256x128xbf16, #tpu.memory_space<vmem>>, %arg5: memref<256x128xbf16, #tpu.memory_space<vmem>>) attributes {dimension_semantics = [#tpu.dimension_semantics<parallel>], iteration_bounds = array<i64: 2>, scalar_prefetch = 0 : i64, scratch_operands = 0 : i64, tpu.core_type = #tpu.core_type<tc>, window_params = [{transform_indices = @transform_0, window_bounds = array<i64: 256, 36>}, {pipeline_mode = #tpu.pipeline_mode<synchronous>, transform_indices = @transform_1, window_bounds = array<i64: 36, 128>}, {pipeline_mode = #tpu.pipeline_mode<synchronous>, transform_indices = @transform_2, window_bounds = array<i64: 1, 128>}, {transform_indices = @transform_3, window_bounds = array<i64: 256, 128>}, {transform_indices = @transform_4, window_bounds = array<i64: 256, 128>}]} {
    %c0 = arith.constant 0 : index
    %c0_0 = arith.constant 0 : index
    %0 = vector.load %arg1[%c0, %c0_0] : memref<256x36xbf16, #tpu.memory_space<vmem>>, vector<256x36xbf16>
    %c0_1 = arith.constant 0 : index
    %c0_2 = arith.constant 0 : index
    %1 = vector.load %arg2[%c0_1, %c0_2] : memref<36x128xbf16, #tpu.memory_space<vmem>>, vector<36x128xbf16>
    %cst = arith.constant dense<0.000000e+00> : vector<256x128xf32>
    %2 = tpu.matmul %0, %1, %cst {dimension_numbers = #tpu.dot_dimension_numbers<[1], [0], [0], [1], [0, 0, 1, 1], [], []>} : vector<256x36xbf16>, vector<36x128xbf16>, vector<256x128xf32> -> vector<256x128xf32>
    %c0_3 = arith.constant 0 : index
    %c0_4 = arith.constant 0 : index
    %3 = vector.load %arg3[%c0_3, %c0_4] : memref<1x128xf32, #tpu.memory_space<vmem>>, vector<1x128xf32>
    %4 = vector.broadcast %3 : vector<1x128xf32> to vector<256x128xf32>
    %5 = arith.addf %2, %4 : vector<256x128xf32>
    %cst_5 = arith.constant 0.000000e+00 : f32
    %6 = vector.broadcast %cst_5 : f32 to vector<256x128xf32>
    %7 = arith.cmpf ogt, %5, %6 : vector<256x128xf32>
    %cst_6 = arith.constant 1.000000e-01 : f32
    %8 = vector.broadcast %cst_6 : f32 to vector<256x128xf32>
    %9 = arith.mulf %8, %5 : vector<256x128xf32>
    %10 = arith.select %7, %5, %9 : vector<256x128xi1>, vector<256x128xf32>
    %c0_7 = arith.constant 0 : index
    %c0_8 = arith.constant 0 : index
    %11 = vector.load %arg4[%c0_7, %c0_8] : memref<256x128xbf16, #tpu.memory_space<vmem>>, vector<256x128xbf16>
    %12 = arith.extf %11 : vector<256x128xbf16> to vector<256x128xf32>
    %13 = arith.addf %10, %12 : vector<256x128xf32>
    %14 = arith.truncf %13 : vector<256x128xf32> to vector<256x128xbf16>
    %c0_9 = arith.constant 0 : index
    %c0_10 = arith.constant 0 : index
    %15 = vector.load %arg5[%c0_9, %c0_10] : memref<256x128xbf16, #tpu.memory_space<vmem>>, vector<256x128xbf16>
    tpu.vector_store %arg5[%c0_9, %c0_10], %14 {strides = array<i32>} : memref<256x128xbf16, #tpu.memory_space<vmem>>, vector<256x128xbf16>,
    return
  }
  func.func @transform_0(%arg0: i32) -> (i32, i32) {
    %c0_i32 = arith.constant 0 : i32
    %c0_i32_0 = arith.constant 0 : i32
    return %arg0, %c0_i32 : i32, i32
  }
  func.func @transform_1(%arg0: i32) -> (i32, i32) {
    %c0_i32 = arith.constant 0 : i32
    %c0_i32_0 = arith.constant 0 : i32
    %c0_i32_1 = arith.constant 0 : i32
    return %c0_i32, %c0_i32_0 : i32, i32
  }
  func.func @transform_2(%arg0: i32) -> (i32, i32) {
    %c0_i32 = arith.constant 0 : i32
    %c0_i32_0 = arith.constant 0 : i32
    %c0_i32_1 = arith.constant 0 : i32
    return %c0_i32, %c0_i32_0 : i32, i32
  }
  func.func @transform_3(%arg0: i32) -> (i32, i32) {
    %c0_i32 = arith.constant 0 : i32
    %c0_i32_0 = arith.constant 0 : i32
    return %arg0, %c0_i32 : i32, i32
  }
  func.func @transform_4(%arg0: i32) -> (i32, i32) {
    %c0_i32 = arith.constant 0 : i32
    %c0_i32_0 = arith.constant 0 : i32
    return %arg0, %c0_i32 : i32, i32
  }
}

module attributes {stable_mosaic.version = 11 : i64} {
  func.func @kernel(%arg0: i32, %arg1: memref<128x72xbf16, #tpu.memory_space<vmem>>, %arg2: memref<72x128xbf16, #tpu.memory_space<vmem>>, %arg3: memref<1x128xf32, #tpu.memory_space<vmem>>, %arg4: memref<128x128xbf16, #tpu.memory_space<vmem>>) attributes {dimension_semantics = [#tpu.dimension_semantics<parallel>], iteration_bounds = array<i64: 1>, scalar_prefetch = 0 : i64, scratch_operands = 0 : i64, tpu.core_type = #tpu.core_type<tc>, window_params = [{transform_indices = @transform_0, window_bounds = array<i64: 128, 72>}, {pipeline_mode = #tpu.pipeline_mode<synchronous>, transform_indices = @transform_1, window_bounds = array<i64: 72, 128>}, {pipeline_mode = #tpu.pipeline_mode<synchronous>, transform_indices = @transform_2, window_bounds = array<i64: 1, 128>}, {transform_indices = @transform_3, window_bounds = array<i64: 128, 128>}]} {
    %c0 = arith.constant 0 : index
    %c0_0 = arith.constant 0 : index
    %0 = vector.load %arg1[%c0, %c0_0] : memref<128x72xbf16, #tpu.memory_space<vmem>>, vector<128x72xbf16>
    %c0_1 = arith.constant 0 : index
    %c0_2 = arith.constant 0 : index
    %1 = vector.load %arg2[%c0_1, %c0_2] : memref<72x128xbf16, #tpu.memory_space<vmem>>, vector<72x128xbf16>
    %cst = arith.constant dense<0.000000e+00> : vector<128x128xf32>
    %2 = tpu.matmul %0, %1, %cst {dimension_numbers = #tpu.dot_dimension_numbers<[1], [0], [0], [1], [0, 0, 1, 1], [], []>} : vector<128x72xbf16>, vector<72x128xbf16>, vector<128x128xf32> -> vector<128x128xf32>
    %c0_3 = arith.constant 0 : index
    %c0_4 = arith.constant 0 : index
    %3 = vector.load %arg3[%c0_3, %c0_4] : memref<1x128xf32, #tpu.memory_space<vmem>>, vector<1x128xf32>
    %4 = vector.broadcast %3 : vector<1x128xf32> to vector<128x128xf32>
    %5 = arith.addf %2, %4 : vector<128x128xf32>
    %cst_5 = arith.constant 0.000000e+00 : f32
    %6 = vector.broadcast %cst_5 : f32 to vector<128x128xf32>
    %7 = arith.cmpf ogt, %5, %6 : vector<128x128xf32>
    %cst_6 = arith.constant 1.000000e-01 : f32
    %8 = vector.broadcast %cst_6 : f32 to vector<128x128xf32>
    %9 = arith.mulf %8, %5 : vector<128x128xf32>
    %10 = arith.select %7, %5, %9 : vector<128x128xi1>, vector<128x128xf32>
    %11 = arith.truncf %10 : vector<128x128xf32> to vector<128x128xbf16>
    %c0_7 = arith.constant 0 : index
    %c0_8 = arith.constant 0 : index
    %12 = vector.load %arg4[%c0_7, %c0_8] : memref<128x128xbf16, #tpu.memory_space<vmem>>, vector<128x128xbf16>
    tpu.vector_store %arg4[%c0_7, %c0_8], %11 {strides = array<i32>} : memref<128x128xbf16, #tpu.memory_space<vmem>>, vector<128x128xbf16>,
    return
  }
  func.func @transform_0(%arg0: i32) -> (i32, i32) {
    %c0_i32 = arith.constant 0 : i32
    %c0_i32_0 = arith.constant 0 : i32
    return %arg0, %c0_i32 : i32, i32
  }
  func.func @transform_1(%arg0: i32) -> (i32, i32) {
    %c0_i32 = arith.constant 0 : i32
    %c0_i32_0 = arith.constant 0 : i32
    %c0_i32_1 = arith.constant 0 : i32
    return %c0_i32, %c0_i32_0 : i32, i32
  }
  func.func @transform_2(%arg0: i32) -> (i32, i32) {
    %c0_i32 = arith.constant 0 : i32
    %c0_i32_0 = arith.constant 0 : i32
    %c0_i32_1 = arith.constant 0 : i32
    return %c0_i32, %c0_i32_0 : i32, i32
  }
  func.func @transform_3(%arg0: i32) -> (i32, i32) {
    %c0_i32 = arith.constant 0 : i32
    %c0_i32_0 = arith.constant 0 : i32
    return %arg0, %c0_i32 : i32, i32
  }
}

module attributes {stable_mosaic.version = 11 : i64} {
  func.func @kernel(%arg0: i32, %arg1: memref<128x128xbf16, #tpu.memory_space<vmem>>, %arg2: memref<128x128xbf16, #tpu.memory_space<vmem>>, %arg3: memref<1x128xf32, #tpu.memory_space<vmem>>, %arg4: memref<128x128xbf16, #tpu.memory_space<vmem>>) attributes {dimension_semantics = [#tpu.dimension_semantics<parallel>], iteration_bounds = array<i64: 1>, scalar_prefetch = 0 : i64, scratch_operands = 0 : i64, tpu.core_type = #tpu.core_type<tc>, window_params = [{transform_indices = @transform_0, window_bounds = array<i64: 128, 128>}, {pipeline_mode = #tpu.pipeline_mode<synchronous>, transform_indices = @transform_1, window_bounds = array<i64: 128, 128>}, {pipeline_mode = #tpu.pipeline_mode<synchronous>, transform_indices = @transform_2, window_bounds = array<i64: 1, 128>}, {transform_indices = @transform_3, window_bounds = array<i64: 128, 128>}]} {
    %c0 = arith.constant 0 : index
    %c0_0 = arith.constant 0 : index
    %0 = vector.load %arg1[%c0, %c0_0] : memref<128x128xbf16, #tpu.memory_space<vmem>>, vector<128x128xbf16>
    %c0_1 = arith.constant 0 : index
    %c0_2 = arith.constant 0 : index
    %1 = vector.load %arg2[%c0_1, %c0_2] : memref<128x128xbf16, #tpu.memory_space<vmem>>, vector<128x128xbf16>
    %cst = arith.constant dense<0.000000e+00> : vector<128x128xf32>
    %2 = tpu.matmul %0, %1, %cst {dimension_numbers = #tpu.dot_dimension_numbers<[1], [0], [0], [1], [0, 0, 1, 1], [], []>} : vector<128x128xbf16>, vector<128x128xbf16>, vector<128x128xf32> -> vector<128x128xf32>
    %c0_3 = arith.constant 0 : index
    %c0_4 = arith.constant 0 : index
    %3 = vector.load %arg3[%c0_3, %c0_4] : memref<1x128xf32, #tpu.memory_space<vmem>>, vector<1x128xf32>
    %4 = vector.broadcast %3 : vector<1x128xf32> to vector<128x128xf32>
    %5 = arith.addf %2, %4 : vector<128x128xf32>
    %cst_5 = arith.constant 0.000000e+00 : f32
    %6 = vector.broadcast %cst_5 : f32 to vector<128x128xf32>
    %7 = arith.cmpf ogt, %5, %6 : vector<128x128xf32>
    %cst_6 = arith.constant 1.000000e-01 : f32
    %8 = vector.broadcast %cst_6 : f32 to vector<128x128xf32>
    %9 = arith.mulf %8, %5 : vector<128x128xf32>
    %10 = arith.select %7, %5, %9 : vector<128x128xi1>, vector<128x128xf32>
    %11 = arith.truncf %10 : vector<128x128xf32> to vector<128x128xbf16>
    %c0_7 = arith.constant 0 : index
    %c0_8 = arith.constant 0 : index
    %12 = vector.load %arg4[%c0_7, %c0_8] : memref<128x128xbf16, #tpu.memory_space<vmem>>, vector<128x128xbf16>
    tpu.vector_store %arg4[%c0_7, %c0_8], %11 {strides = array<i32>} : memref<128x128xbf16, #tpu.memory_space<vmem>>, vector<128x128xbf16>,
    return
  }
  func.func @transform_0(%arg0: i32) -> (i32, i32) {
    %c0_i32 = arith.constant 0 : i32
    %c0_i32_0 = arith.constant 0 : i32
    return %arg0, %c0_i32 : i32, i32
  }
  func.func @transform_1(%arg0: i32) -> (i32, i32) {
    %c0_i32 = arith.constant 0 : i32
    %c0_i32_0 = arith.constant 0 : i32
    %c0_i32_1 = arith.constant 0 : i32
    return %c0_i32, %c0_i32_0 : i32, i32
  }
  func.func @transform_2(%arg0: i32) -> (i32, i32) {
    %c0_i32 = arith.constant 0 : i32
    %c0_i32_0 = arith.constant 0 : i32
    %c0_i32_1 = arith.constant 0 : i32
    return %c0_i32, %c0_i32_0 : i32, i32
  }
  func.func @transform_3(%arg0: i32) -> (i32, i32) {
    %c0_i32 = arith.constant 0 : i32
    %c0_i32_0 = arith.constant 0 : i32
    return %arg0, %c0_i32 : i32, i32
  }
}

module attributes {stable_mosaic.version = 11 : i64} {
  func.func @kernel(%arg0: i32, %arg1: memref<128x72xbf16, #tpu.memory_space<vmem>>, %arg2: memref<72x128xbf16, #tpu.memory_space<vmem>>, %arg3: memref<1x128xf32, #tpu.memory_space<vmem>>, %arg4: memref<128x128xbf16, #tpu.memory_space<vmem>>, %arg5: memref<128x128xbf16, #tpu.memory_space<vmem>>) attributes {dimension_semantics = [#tpu.dimension_semantics<parallel>], iteration_bounds = array<i64: 1>, scalar_prefetch = 0 : i64, scratch_operands = 0 : i64, tpu.core_type = #tpu.core_type<tc>, window_params = [{transform_indices = @transform_0, window_bounds = array<i64: 128, 72>}, {pipeline_mode = #tpu.pipeline_mode<synchronous>, transform_indices = @transform_1, window_bounds = array<i64: 72, 128>}, {pipeline_mode = #tpu.pipeline_mode<synchronous>, transform_indices = @transform_2, window_bounds = array<i64: 1, 128>}, {transform_indices = @transform_3, window_bounds = array<i64: 128, 128>}, {transform_indices = @transform_4, window_bounds = array<i64: 128, 128>}]} {
    %c0 = arith.constant 0 : index
    %c0_0 = arith.constant 0 : index
    %0 = vector.load %arg1[%c0, %c0_0] : memref<128x72xbf16, #tpu.memory_space<vmem>>, vector<128x72xbf16>
    %c0_1 = arith.constant 0 : index
    %c0_2 = arith.constant 0 : index
    %1 = vector.load %arg2[%c0_1, %c0_2] : memref<72x128xbf16, #tpu.memory_space<vmem>>, vector<72x128xbf16>
    %cst = arith.constant dense<0.000000e+00> : vector<128x128xf32>
    %2 = tpu.matmul %0, %1, %cst {dimension_numbers = #tpu.dot_dimension_numbers<[1], [0], [0], [1], [0, 0, 1, 1], [], []>} : vector<128x72xbf16>, vector<72x128xbf16>, vector<128x128xf32> -> vector<128x128xf32>
    %c0_3 = arith.constant 0 : index
    %c0_4 = arith.constant 0 : index
    %3 = vector.load %arg3[%c0_3, %c0_4] : memref<1x128xf32, #tpu.memory_space<vmem>>, vector<1x128xf32>
    %4 = vector.broadcast %3 : vector<1x128xf32> to vector<128x128xf32>
    %5 = arith.addf %2, %4 : vector<128x128xf32>
    %cst_5 = arith.constant 0.000000e+00 : f32
    %6 = vector.broadcast %cst_5 : f32 to vector<128x128xf32>
    %7 = arith.cmpf ogt, %5, %6 : vector<128x128xf32>
    %cst_6 = arith.constant 1.000000e-01 : f32
    %8 = vector.broadcast %cst_6 : f32 to vector<128x128xf32>
    %9 = arith.mulf %8, %5 : vector<128x128xf32>
    %10 = arith.select %7, %5, %9 : vector<128x128xi1>, vector<128x128xf32>
    %c0_7 = arith.constant 0 : index
    %c0_8 = arith.constant 0 : index
    %11 = vector.load %arg4[%c0_7, %c0_8] : memref<128x128xbf16, #tpu.memory_space<vmem>>, vector<128x128xbf16>
    %12 = arith.extf %11 : vector<128x128xbf16> to vector<128x128xf32>
    %13 = arith.addf %10, %12 : vector<128x128xf32>
    %14 = arith.truncf %13 : vector<128x128xf32> to vector<128x128xbf16>
    %c0_9 = arith.constant 0 : index
    %c0_10 = arith.constant 0 : index
    %15 = vector.load %arg5[%c0_9, %c0_10] : memref<128x128xbf16, #tpu.memory_space<vmem>>, vector<128x128xbf16>
    tpu.vector_store %arg5[%c0_9, %c0_10], %14 {strides = array<i32>} : memref<128x128xbf16, #tpu.memory_space<vmem>>, vector<128x128xbf16>,
    return
  }
  func.func @transform_0(%arg0: i32) -> (i32, i32) {
    %c0_i32 = arith.constant 0 : i32
    %c0_i32_0 = arith.constant 0 : i32
    return %arg0, %c0_i32 : i32, i32
  }
  func.func @transform_1(%arg0: i32) -> (i32, i32) {
    %c0_i32 = arith.constant 0 : i32
    %c0_i32_0 = arith.constant 0 : i32
    %c0_i32_1 = arith.constant 0 : i32
    return %c0_i32, %c0_i32_0 : i32, i32
  }
  func.func @transform_2(%arg0: i32) -> (i32, i32) {
    %c0_i32 = arith.constant 0 : i32
    %c0_i32_0 = arith.constant 0 : i32
    %c0_i32_1 = arith.constant 0 : i32
    return %c0_i32, %c0_i32_0 : i32, i32
  }
  func.func @transform_3(%arg0: i32) -> (i32, i32) {
    %c0_i32 = arith.constant 0 : i32
    %c0_i32_0 = arith.constant 0 : i32
    return %arg0, %c0_i32 : i32, i32
  }
  func.func @transform_4(%arg0: i32) -> (i32, i32) {
    %c0_i32 = arith.constant 0 : i32
    %c0_i32_0 = arith.constant 0 : i32
    return %arg0, %c0_i32 : i32, i32
  }
}

module attributes {stable_mosaic.version = 11 : i64} {
  func.func @kernel(%arg0: i32, %arg1: memref<32x144xbf16, #tpu.memory_space<vmem>>, %arg2: memref<144x128xbf16, #tpu.memory_space<vmem>>, %arg3: memref<1x128xf32, #tpu.memory_space<vmem>>, %arg4: memref<32x128xbf16, #tpu.memory_space<vmem>>) attributes {dimension_semantics = [#tpu.dimension_semantics<parallel>], iteration_bounds = array<i64: 1>, scalar_prefetch = 0 : i64, scratch_operands = 0 : i64, tpu.core_type = #tpu.core_type<tc>, window_params = [{transform_indices = @transform_0, window_bounds = array<i64: 32, 144>}, {pipeline_mode = #tpu.pipeline_mode<synchronous>, transform_indices = @transform_1, window_bounds = array<i64: 144, 128>}, {pipeline_mode = #tpu.pipeline_mode<synchronous>, transform_indices = @transform_2, window_bounds = array<i64: 1, 128>}, {transform_indices = @transform_3, window_bounds = array<i64: 32, 128>}]} {
    %c0 = arith.constant 0 : index
    %c0_0 = arith.constant 0 : index
    %0 = vector.load %arg1[%c0, %c0_0] : memref<32x144xbf16, #tpu.memory_space<vmem>>, vector<32x144xbf16>
    %c0_1 = arith.constant 0 : index
    %c0_2 = arith.constant 0 : index
    %1 = vector.load %arg2[%c0_1, %c0_2] : memref<144x128xbf16, #tpu.memory_space<vmem>>, vector<144x128xbf16>
    %cst = arith.constant dense<0.000000e+00> : vector<32x128xf32>
    %2 = tpu.matmul %0, %1, %cst {dimension_numbers = #tpu.dot_dimension_numbers<[1], [0], [0], [1], [0, 0, 1, 1], [], []>} : vector<32x144xbf16>, vector<144x128xbf16>, vector<32x128xf32> -> vector<32x128xf32>
    %c0_3 = arith.constant 0 : index
    %c0_4 = arith.constant 0 : index
    %3 = vector.load %arg3[%c0_3, %c0_4] : memref<1x128xf32, #tpu.memory_space<vmem>>, vector<1x128xf32>
    %4 = vector.broadcast %3 : vector<1x128xf32> to vector<32x128xf32>
    %5 = arith.addf %2, %4 : vector<32x128xf32>
    %cst_5 = arith.constant 0.000000e+00 : f32
    %6 = vector.broadcast %cst_5 : f32 to vector<32x128xf32>
    %7 = arith.cmpf ogt, %5, %6 : vector<32x128xf32>
    %cst_6 = arith.constant 1.000000e-01 : f32
    %8 = vector.broadcast %cst_6 : f32 to vector<32x128xf32>
    %9 = arith.mulf %8, %5 : vector<32x128xf32>
    %10 = arith.select %7, %5, %9 : vector<32x128xi1>, vector<32x128xf32>
    %11 = arith.truncf %10 : vector<32x128xf32> to vector<32x128xbf16>
    %c0_7 = arith.constant 0 : index
    %c0_8 = arith.constant 0 : index
    %12 = vector.load %arg4[%c0_7, %c0_8] : memref<32x128xbf16, #tpu.memory_space<vmem>>, vector<32x128xbf16>
    tpu.vector_store %arg4[%c0_7, %c0_8], %11 {strides = array<i32>} : memref<32x128xbf16, #tpu.memory_space<vmem>>, vector<32x128xbf16>,
    return
  }
  func.func @transform_0(%arg0: i32) -> (i32, i32) {
    %c0_i32 = arith.constant 0 : i32
    %c0_i32_0 = arith.constant 0 : i32
    return %arg0, %c0_i32 : i32, i32
  }
  func.func @transform_1(%arg0: i32) -> (i32, i32) {
    %c0_i32 = arith.constant 0 : i32
    %c0_i32_0 = arith.constant 0 : i32
    %c0_i32_1 = arith.constant 0 : i32
    return %c0_i32, %c0_i32_0 : i32, i32
  }
  func.func @transform_2(%arg0: i32) -> (i32, i32) {
    %c0_i32 = arith.constant 0 : i32
    %c0_i32_0 = arith.constant 0 : i32
    %c0_i32_1 = arith.constant 0 : i32
    return %c0_i32, %c0_i32_0 : i32, i32
  }
  func.func @transform_3(%arg0: i32) -> (i32, i32) {
    %c0_i32 = arith.constant 0 : i32
    %c0_i32_0 = arith.constant 0 : i32
    return %arg0, %c0_i32 : i32, i32
  }
}

module attributes {stable_mosaic.version = 11 : i64} {
  func.func @kernel(%arg0: i32, %arg1: memref<32x128xbf16, #tpu.memory_space<vmem>>, %arg2: memref<128x128xbf16, #tpu.memory_space<vmem>>, %arg3: memref<1x128xf32, #tpu.memory_space<vmem>>, %arg4: memref<32x128xbf16, #tpu.memory_space<vmem>>) attributes {dimension_semantics = [#tpu.dimension_semantics<parallel>], iteration_bounds = array<i64: 1>, scalar_prefetch = 0 : i64, scratch_operands = 0 : i64, tpu.core_type = #tpu.core_type<tc>, window_params = [{transform_indices = @transform_0, window_bounds = array<i64: 32, 128>}, {pipeline_mode = #tpu.pipeline_mode<synchronous>, transform_indices = @transform_1, window_bounds = array<i64: 128, 128>}, {pipeline_mode = #tpu.pipeline_mode<synchronous>, transform_indices = @transform_2, window_bounds = array<i64: 1, 128>}, {transform_indices = @transform_3, window_bounds = array<i64: 32, 128>}]} {
    %c0 = arith.constant 0 : index
    %c0_0 = arith.constant 0 : index
    %0 = vector.load %arg1[%c0, %c0_0] : memref<32x128xbf16, #tpu.memory_space<vmem>>, vector<32x128xbf16>
    %c0_1 = arith.constant 0 : index
    %c0_2 = arith.constant 0 : index
    %1 = vector.load %arg2[%c0_1, %c0_2] : memref<128x128xbf16, #tpu.memory_space<vmem>>, vector<128x128xbf16>
    %cst = arith.constant dense<0.000000e+00> : vector<32x128xf32>
    %2 = tpu.matmul %0, %1, %cst {dimension_numbers = #tpu.dot_dimension_numbers<[1], [0], [0], [1], [0, 0, 1, 1], [], []>} : vector<32x128xbf16>, vector<128x128xbf16>, vector<32x128xf32> -> vector<32x128xf32>
    %c0_3 = arith.constant 0 : index
    %c0_4 = arith.constant 0 : index
    %3 = vector.load %arg3[%c0_3, %c0_4] : memref<1x128xf32, #tpu.memory_space<vmem>>, vector<1x128xf32>
    %4 = vector.broadcast %3 : vector<1x128xf32> to vector<32x128xf32>
    %5 = arith.addf %2, %4 : vector<32x128xf32>
    %cst_5 = arith.constant 0.000000e+00 : f32
    %6 = vector.broadcast %cst_5 : f32 to vector<32x128xf32>
    %7 = arith.cmpf ogt, %5, %6 : vector<32x128xf32>
    %cst_6 = arith.constant 1.000000e-01 : f32
    %8 = vector.broadcast %cst_6 : f32 to vector<32x128xf32>
    %9 = arith.mulf %8, %5 : vector<32x128xf32>
    %10 = arith.select %7, %5, %9 : vector<32x128xi1>, vector<32x128xf32>
    %11 = arith.truncf %10 : vector<32x128xf32> to vector<32x128xbf16>
    %c0_7 = arith.constant 0 : index
    %c0_8 = arith.constant 0 : index
    %12 = vector.load %arg4[%c0_7, %c0_8] : memref<32x128xbf16, #tpu.memory_space<vmem>>, vector<32x128xbf16>
    tpu.vector_store %arg4[%c0_7, %c0_8], %11 {strides = array<i32>} : memref<32x128xbf16, #tpu.memory_space<vmem>>, vector<32x128xbf16>,
    return
  }
  func.func @transform_0(%arg0: i32) -> (i32, i32) {
    %c0_i32 = arith.constant 0 : i32
    %c0_i32_0 = arith.constant 0 : i32
    return %arg0, %c0_i32 : i32, i32
  }
  func.func @transform_1(%arg0: i32) -> (i32, i32) {
    %c0_i32 = arith.constant 0 : i32
    %c0_i32_0 = arith.constant 0 : i32
    %c0_i32_1 = arith.constant 0 : i32
    return %c0_i32, %c0_i32_0 : i32, i32
  }
  func.func @transform_2(%arg0: i32) -> (i32, i32) {
    %c0_i32 = arith.constant 0 : i32
    %c0_i32_0 = arith.constant 0 : i32
    %c0_i32_1 = arith.constant 0 : i32
    return %c0_i32, %c0_i32_0 : i32, i32
  }
  func.func @transform_3(%arg0: i32) -> (i32, i32) {
    %c0_i32 = arith.constant 0 : i32
    %c0_i32_0 = arith.constant 0 : i32
    return %arg0, %c0_i32 : i32, i32
  }
}

module attributes {stable_mosaic.version = 11 : i64} {
  func.func @kernel(%arg0: i32, %arg1: memref<32x144xbf16, #tpu.memory_space<vmem>>, %arg2: memref<144x128xbf16, #tpu.memory_space<vmem>>, %arg3: memref<1x128xf32, #tpu.memory_space<vmem>>, %arg4: memref<32x128xbf16, #tpu.memory_space<vmem>>, %arg5: memref<32x128xbf16, #tpu.memory_space<vmem>>) attributes {dimension_semantics = [#tpu.dimension_semantics<parallel>], iteration_bounds = array<i64: 1>, scalar_prefetch = 0 : i64, scratch_operands = 0 : i64, tpu.core_type = #tpu.core_type<tc>, window_params = [{transform_indices = @transform_0, window_bounds = array<i64: 32, 144>}, {pipeline_mode = #tpu.pipeline_mode<synchronous>, transform_indices = @transform_1, window_bounds = array<i64: 144, 128>}, {pipeline_mode = #tpu.pipeline_mode<synchronous>, transform_indices = @transform_2, window_bounds = array<i64: 1, 128>}, {transform_indices = @transform_3, window_bounds = array<i64: 32, 128>}, {transform_indices = @transform_4, window_bounds = array<i64: 32, 128>}]} {
    %c0 = arith.constant 0 : index
    %c0_0 = arith.constant 0 : index
    %0 = vector.load %arg1[%c0, %c0_0] : memref<32x144xbf16, #tpu.memory_space<vmem>>, vector<32x144xbf16>
    %c0_1 = arith.constant 0 : index
    %c0_2 = arith.constant 0 : index
    %1 = vector.load %arg2[%c0_1, %c0_2] : memref<144x128xbf16, #tpu.memory_space<vmem>>, vector<144x128xbf16>
    %cst = arith.constant dense<0.000000e+00> : vector<32x128xf32>
    %2 = tpu.matmul %0, %1, %cst {dimension_numbers = #tpu.dot_dimension_numbers<[1], [0], [0], [1], [0, 0, 1, 1], [], []>} : vector<32x144xbf16>, vector<144x128xbf16>, vector<32x128xf32> -> vector<32x128xf32>
    %c0_3 = arith.constant 0 : index
    %c0_4 = arith.constant 0 : index
    %3 = vector.load %arg3[%c0_3, %c0_4] : memref<1x128xf32, #tpu.memory_space<vmem>>, vector<1x128xf32>
    %4 = vector.broadcast %3 : vector<1x128xf32> to vector<32x128xf32>
    %5 = arith.addf %2, %4 : vector<32x128xf32>
    %cst_5 = arith.constant 0.000000e+00 : f32
    %6 = vector.broadcast %cst_5 : f32 to vector<32x128xf32>
    %7 = arith.cmpf ogt, %5, %6 : vector<32x128xf32>
    %cst_6 = arith.constant 1.000000e-01 : f32
    %8 = vector.broadcast %cst_6 : f32 to vector<32x128xf32>
    %9 = arith.mulf %8, %5 : vector<32x128xf32>
    %10 = arith.select %7, %5, %9 : vector<32x128xi1>, vector<32x128xf32>
    %c0_7 = arith.constant 0 : index
    %c0_8 = arith.constant 0 : index
    %11 = vector.load %arg4[%c0_7, %c0_8] : memref<32x128xbf16, #tpu.memory_space<vmem>>, vector<32x128xbf16>
    %12 = arith.extf %11 : vector<32x128xbf16> to vector<32x128xf32>
    %13 = arith.addf %10, %12 : vector<32x128xf32>
    %14 = arith.truncf %13 : vector<32x128xf32> to vector<32x128xbf16>
    %c0_9 = arith.constant 0 : index
    %c0_10 = arith.constant 0 : index
    %15 = vector.load %arg5[%c0_9, %c0_10] : memref<32x128xbf16, #tpu.memory_space<vmem>>, vector<32x128xbf16>
    tpu.vector_store %arg5[%c0_9, %c0_10], %14 {strides = array<i32>} : memref<32x128xbf16, #tpu.memory_space<vmem>>, vector<32x128xbf16>,
    return
  }
  func.func @transform_0(%arg0: i32) -> (i32, i32) {
    %c0_i32 = arith.constant 0 : i32
    %c0_i32_0 = arith.constant 0 : i32
    return %arg0, %c0_i32 : i32, i32
  }
  func.func @transform_1(%arg0: i32) -> (i32, i32) {
    %c0_i32 = arith.constant 0 : i32
    %c0_i32_0 = arith.constant 0 : i32
    %c0_i32_1 = arith.constant 0 : i32
    return %c0_i32, %c0_i32_0 : i32, i32
  }
  func.func @transform_2(%arg0: i32) -> (i32, i32) {
    %c0_i32 = arith.constant 0 : i32
    %c0_i32_0 = arith.constant 0 : i32
    %c0_i32_1 = arith.constant 0 : i32
    return %c0_i32, %c0_i32_0 : i32, i32
  }
  func.func @transform_3(%arg0: i32) -> (i32, i32) {
    %c0_i32 = arith.constant 0 : i32
    %c0_i32_0 = arith.constant 0 : i32
    return %arg0, %c0_i32 : i32, i32
  }
  func.func @transform_4(%arg0: i32) -> (i32, i32) {
    %c0_i32 = arith.constant 0 : i32
    %c0_i32_0 = arith.constant 0 : i32
    return %arg0, %c0_i32 : i32, i32
  }
}

module attributes {stable_mosaic.version = 11 : i64} {
  func.func @kernel(%arg0: i32, %arg1: memref<8x128xbf16, #tpu.memory_space<vmem>>, %arg2: memref<128x128xbf16, #tpu.memory_space<vmem>>, %arg3: memref<1x128xf32, #tpu.memory_space<vmem>>, %arg4: memref<8x128xbf16, #tpu.memory_space<vmem>>) attributes {dimension_semantics = [#tpu.dimension_semantics<parallel>], iteration_bounds = array<i64: 1>, scalar_prefetch = 0 : i64, scratch_operands = 0 : i64, tpu.core_type = #tpu.core_type<tc>, window_params = [{transform_indices = @transform_0, window_bounds = array<i64: 8, 128>}, {pipeline_mode = #tpu.pipeline_mode<synchronous>, transform_indices = @transform_1, window_bounds = array<i64: 128, 128>}, {pipeline_mode = #tpu.pipeline_mode<synchronous>, transform_indices = @transform_2, window_bounds = array<i64: 1, 128>}, {transform_indices = @transform_3, window_bounds = array<i64: 8, 128>}]} {
    %c0 = arith.constant 0 : index
    %c0_0 = arith.constant 0 : index
    %0 = vector.load %arg1[%c0, %c0_0] : memref<8x128xbf16, #tpu.memory_space<vmem>>, vector<8x128xbf16>
    %c0_1 = arith.constant 0 : index
    %c0_2 = arith.constant 0 : index
    %1 = vector.load %arg2[%c0_1, %c0_2] : memref<128x128xbf16, #tpu.memory_space<vmem>>, vector<128x128xbf16>
    %cst = arith.constant dense<0.000000e+00> : vector<8x128xf32>
    %2 = tpu.matmul %0, %1, %cst {dimension_numbers = #tpu.dot_dimension_numbers<[1], [0], [0], [1], [0, 0, 1, 1], [], []>} : vector<8x128xbf16>, vector<128x128xbf16>, vector<8x128xf32> -> vector<8x128xf32>
    %c0_3 = arith.constant 0 : index
    %c0_4 = arith.constant 0 : index
    %3 = vector.load %arg3[%c0_3, %c0_4] : memref<1x128xf32, #tpu.memory_space<vmem>>, vector<1x128xf32>
    %4 = vector.broadcast %3 : vector<1x128xf32> to vector<8x128xf32>
    %5 = arith.addf %2, %4 : vector<8x128xf32>
    %cst_5 = arith.constant 0.000000e+00 : f32
    %6 = vector.broadcast %cst_5 : f32 to vector<8x128xf32>
    %7 = arith.cmpf ogt, %5, %6 : vector<8x128xf32>
    %cst_6 = arith.constant 1.000000e-01 : f32
    %8 = vector.broadcast %cst_6 : f32 to vector<8x128xf32>
    %9 = arith.mulf %8, %5 : vector<8x128xf32>
    %10 = arith.select %7, %5, %9 : vector<8x128xi1>, vector<8x128xf32>
    %11 = arith.truncf %10 : vector<8x128xf32> to vector<8x128xbf16>
    %c0_7 = arith.constant 0 : index
    %c0_8 = arith.constant 0 : index
    %12 = vector.load %arg4[%c0_7, %c0_8] : memref<8x128xbf16, #tpu.memory_space<vmem>>, vector<8x128xbf16>
    tpu.vector_store %arg4[%c0_7, %c0_8], %11 {strides = array<i32>} : memref<8x128xbf16, #tpu.memory_space<vmem>>, vector<8x128xbf16>,
    return
  }
  func.func @transform_0(%arg0: i32) -> (i32, i32) {
    %c0_i32 = arith.constant 0 : i32
    %c0_i32_0 = arith.constant 0 : i32
    return %arg0, %c0_i32 : i32, i32
  }
  func.func @transform_1(%arg0: i32) -> (i32, i32) {
    %c0_i32 = arith.constant 0 : i32
    %c0_i32_0 = arith.constant 0 : i32
    %c0_i32_1 = arith.constant 0 : i32
    return %c0_i32, %c0_i32_0 : i32, i32
  }
  func.func @transform_2(%arg0: i32) -> (i32, i32) {
    %c0_i32 = arith.constant 0 : i32
    %c0_i32_0 = arith.constant 0 : i32
    %c0_i32_1 = arith.constant 0 : i32
    return %c0_i32, %c0_i32_0 : i32, i32
  }
  func.func @transform_3(%arg0: i32) -> (i32, i32) {
    %c0_i32 = arith.constant 0 : i32
    %c0_i32_0 = arith.constant 0 : i32
    return %arg0, %c0_i32 : i32, i32
  }
}

module attributes {stable_mosaic.version = 11 : i64} {
  func.func @kernel(%arg0: i32, %arg1: memref<8x288xbf16, #tpu.memory_space<vmem>>, %arg2: memref<288x128xbf16, #tpu.memory_space<vmem>>, %arg3: memref<1x128xf32, #tpu.memory_space<vmem>>, %arg4: memref<8x128xbf16, #tpu.memory_space<vmem>>) attributes {dimension_semantics = [#tpu.dimension_semantics<parallel>], iteration_bounds = array<i64: 1>, scalar_prefetch = 0 : i64, scratch_operands = 0 : i64, tpu.core_type = #tpu.core_type<tc>, window_params = [{transform_indices = @transform_0, window_bounds = array<i64: 8, 288>}, {pipeline_mode = #tpu.pipeline_mode<synchronous>, transform_indices = @transform_1, window_bounds = array<i64: 288, 128>}, {pipeline_mode = #tpu.pipeline_mode<synchronous>, transform_indices = @transform_2, window_bounds = array<i64: 1, 128>}, {transform_indices = @transform_3, window_bounds = array<i64: 8, 128>}]} {
    %c0 = arith.constant 0 : index
    %c0_0 = arith.constant 0 : index
    %0 = vector.load %arg1[%c0, %c0_0] : memref<8x288xbf16, #tpu.memory_space<vmem>>, vector<8x288xbf16>
    %c0_1 = arith.constant 0 : index
    %c0_2 = arith.constant 0 : index
    %1 = vector.load %arg2[%c0_1, %c0_2] : memref<288x128xbf16, #tpu.memory_space<vmem>>, vector<288x128xbf16>
    %cst = arith.constant dense<0.000000e+00> : vector<8x128xf32>
    %2 = tpu.matmul %0, %1, %cst {dimension_numbers = #tpu.dot_dimension_numbers<[1], [0], [0], [1], [0, 0, 1, 1], [], []>} : vector<8x288xbf16>, vector<288x128xbf16>, vector<8x128xf32> -> vector<8x128xf32>
    %c0_3 = arith.constant 0 : index
    %c0_4 = arith.constant 0 : index
    %3 = vector.load %arg3[%c0_3, %c0_4] : memref<1x128xf32, #tpu.memory_space<vmem>>, vector<1x128xf32>
    %4 = vector.broadcast %3 : vector<1x128xf32> to vector<8x128xf32>
    %5 = arith.addf %2, %4 : vector<8x128xf32>
    %cst_5 = arith.constant 0.000000e+00 : f32
    %6 = vector.broadcast %cst_5 : f32 to vector<8x128xf32>
    %7 = arith.cmpf ogt, %5, %6 : vector<8x128xf32>
    %cst_6 = arith.constant 1.000000e-01 : f32
    %8 = vector.broadcast %cst_6 : f32 to vector<8x128xf32>
    %9 = arith.mulf %8, %5 : vector<8x128xf32>
    %10 = arith.select %7, %5, %9 : vector<8x128xi1>, vector<8x128xf32>
    %11 = arith.truncf %10 : vector<8x128xf32> to vector<8x128xbf16>
    %c0_7 = arith.constant 0 : index
    %c0_8 = arith.constant 0 : index
    %12 = vector.load %arg4[%c0_7, %c0_8] : memref<8x128xbf16, #tpu.memory_space<vmem>>, vector<8x128xbf16>
    tpu.vector_store %arg4[%c0_7, %c0_8], %11 {strides = array<i32>} : memref<8x128xbf16, #tpu.memory_space<vmem>>, vector<8x128xbf16>,
    return
  }
  func.func @transform_0(%arg0: i32) -> (i32, i32) {
    %c0_i32 = arith.constant 0 : i32
    %c0_i32_0 = arith.constant 0 : i32
    return %arg0, %c0_i32 : i32, i32
  }
  func.func @transform_1(%arg0: i32) -> (i32, i32) {
    %c0_i32 = arith.constant 0 : i32
    %c0_i32_0 = arith.constant 0 : i32
    %c0_i32_1 = arith.constant 0 : i32
    return %c0_i32, %c0_i32_0 : i32, i32
  }
  func.func @transform_2(%arg0: i32) -> (i32, i32) {
    %c0_i32 = arith.constant 0 : i32
    %c0_i32_0 = arith.constant 0 : i32
    %c0_i32_1 = arith.constant 0 : i32
    return %c0_i32, %c0_i32_0 : i32, i32
  }
  func.func @transform_3(%arg0: i32) -> (i32, i32) {
    %c0_i32 = arith.constant 0 : i32
    %c0_i32_0 = arith.constant 0 : i32
    return %arg0, %c0_i32 : i32, i32
  }
}

module attributes {stable_mosaic.version = 11 : i64} {
  func.func @kernel(%arg0: i32, %arg1: memref<8x288xbf16, #tpu.memory_space<vmem>>, %arg2: memref<288x128xbf16, #tpu.memory_space<vmem>>, %arg3: memref<1x128xf32, #tpu.memory_space<vmem>>, %arg4: memref<8x128xbf16, #tpu.memory_space<vmem>>, %arg5: memref<8x128xbf16, #tpu.memory_space<vmem>>) attributes {dimension_semantics = [#tpu.dimension_semantics<parallel>], iteration_bounds = array<i64: 1>, scalar_prefetch = 0 : i64, scratch_operands = 0 : i64, tpu.core_type = #tpu.core_type<tc>, window_params = [{transform_indices = @transform_0, window_bounds = array<i64: 8, 288>}, {pipeline_mode = #tpu.pipeline_mode<synchronous>, transform_indices = @transform_1, window_bounds = array<i64: 288, 128>}, {pipeline_mode = #tpu.pipeline_mode<synchronous>, transform_indices = @transform_2, window_bounds = array<i64: 1, 128>}, {transform_indices = @transform_3, window_bounds = array<i64: 8, 128>}, {transform_indices = @transform_4, window_bounds = array<i64: 8, 128>}]} {
    %c0 = arith.constant 0 : index
    %c0_0 = arith.constant 0 : index
    %0 = vector.load %arg1[%c0, %c0_0] : memref<8x288xbf16, #tpu.memory_space<vmem>>, vector<8x288xbf16>
    %c0_1 = arith.constant 0 : index
    %c0_2 = arith.constant 0 : index
    %1 = vector.load %arg2[%c0_1, %c0_2] : memref<288x128xbf16, #tpu.memory_space<vmem>>, vector<288x128xbf16>
    %cst = arith.constant dense<0.000000e+00> : vector<8x128xf32>
    %2 = tpu.matmul %0, %1, %cst {dimension_numbers = #tpu.dot_dimension_numbers<[1], [0], [0], [1], [0, 0, 1, 1], [], []>} : vector<8x288xbf16>, vector<288x128xbf16>, vector<8x128xf32> -> vector<8x128xf32>
    %c0_3 = arith.constant 0 : index
    %c0_4 = arith.constant 0 : index
    %3 = vector.load %arg3[%c0_3, %c0_4] : memref<1x128xf32, #tpu.memory_space<vmem>>, vector<1x128xf32>
    %4 = vector.broadcast %3 : vector<1x128xf32> to vector<8x128xf32>
    %5 = arith.addf %2, %4 : vector<8x128xf32>
    %cst_5 = arith.constant 0.000000e+00 : f32
    %6 = vector.broadcast %cst_5 : f32 to vector<8x128xf32>
    %7 = arith.cmpf ogt, %5, %6 : vector<8x128xf32>
    %cst_6 = arith.constant 1.000000e-01 : f32
    %8 = vector.broadcast %cst_6 : f32 to vector<8x128xf32>
    %9 = arith.mulf %8, %5 : vector<8x128xf32>
    %10 = arith.select %7, %5, %9 : vector<8x128xi1>, vector<8x128xf32>
    %c0_7 = arith.constant 0 : index
    %c0_8 = arith.constant 0 : index
    %11 = vector.load %arg4[%c0_7, %c0_8] : memref<8x128xbf16, #tpu.memory_space<vmem>>, vector<8x128xbf16>
    %12 = arith.extf %11 : vector<8x128xbf16> to vector<8x128xf32>
    %13 = arith.addf %10, %12 : vector<8x128xf32>
    %14 = arith.truncf %13 : vector<8x128xf32> to vector<8x128xbf16>
    %c0_9 = arith.constant 0 : index
    %c0_10 = arith.constant 0 : index
    %15 = vector.load %arg5[%c0_9, %c0_10] : memref<8x128xbf16, #tpu.memory_space<vmem>>, vector<8x128xbf16>
    tpu.vector_store %arg5[%c0_9, %c0_10], %14 {strides = array<i32>} : memref<8x128xbf16, #tpu.memory_space<vmem>>, vector<8x128xbf16>,
    return
  }
  func.func @transform_0(%arg0: i32) -> (i32, i32) {
    %c0_i32 = arith.constant 0 : i32
    %c0_i32_0 = arith.constant 0 : i32
    return %arg0, %c0_i32 : i32, i32
  }
  func.func @transform_1(%arg0: i32) -> (i32, i32) {
    %c0_i32 = arith.constant 0 : i32
    %c0_i32_0 = arith.constant 0 : i32
    %c0_i32_1 = arith.constant 0 : i32
    return %c0_i32, %c0_i32_0 : i32, i32
  }
  func.func @transform_2(%arg0: i32) -> (i32, i32) {
    %c0_i32 = arith.constant 0 : i32
    %c0_i32_0 = arith.constant 0 : i32
    %c0_i32_1 = arith.constant 0 : i32
    return %c0_i32, %c0_i32_0 : i32, i32
  }
  func.func @transform_3(%arg0: i32) -> (i32, i32) {
    %c0_i32 = arith.constant 0 : i32
    %c0_i32_0 = arith.constant 0 : i32
    return %arg0, %c0_i32 : i32, i32
  }
  func.func @transform_4(%arg0: i32) -> (i32, i32) {
    %c0_i32 = arith.constant 0 : i32
    %c0_i32_0 = arith.constant 0 : i32
    return %arg0, %c0_i32 : i32, i32
  }
}

module attributes {stable_mosaic.version = 11 : i64} {
  func.func @kernel(%arg0: i32, %arg1: memref<8x576xbf16, #tpu.memory_space<vmem>>, %arg2: memref<576x128xbf16, #tpu.memory_space<vmem>>, %arg3: memref<1x128xf32, #tpu.memory_space<vmem>>, %arg4: memref<8x128xbf16, #tpu.memory_space<vmem>>) attributes {dimension_semantics = [#tpu.dimension_semantics<parallel>], iteration_bounds = array<i64: 1>, scalar_prefetch = 0 : i64, scratch_operands = 0 : i64, tpu.core_type = #tpu.core_type<tc>, window_params = [{transform_indices = @transform_0, window_bounds = array<i64: 8, 576>}, {pipeline_mode = #tpu.pipeline_mode<synchronous>, transform_indices = @transform_1, window_bounds = array<i64: 576, 128>}, {pipeline_mode = #tpu.pipeline_mode<synchronous>, transform_indices = @transform_2, window_bounds = array<i64: 1, 128>}, {transform_indices = @transform_3, window_bounds = array<i64: 8, 128>}]} {
    %c0 = arith.constant 0 : index
    %c0_0 = arith.constant 0 : index
    %0 = vector.load %arg1[%c0, %c0_0] : memref<8x576xbf16, #tpu.memory_space<vmem>>, vector<8x576xbf16>
    %c0_1 = arith.constant 0 : index
    %c0_2 = arith.constant 0 : index
    %1 = vector.load %arg2[%c0_1, %c0_2] : memref<576x128xbf16, #tpu.memory_space<vmem>>, vector<576x128xbf16>
    %cst = arith.constant dense<0.000000e+00> : vector<8x128xf32>
    %2 = tpu.matmul %0, %1, %cst {dimension_numbers = #tpu.dot_dimension_numbers<[1], [0], [0], [1], [0, 0, 1, 1], [], []>} : vector<8x576xbf16>, vector<576x128xbf16>, vector<8x128xf32> -> vector<8x128xf32>
    %c0_3 = arith.constant 0 : index
    %c0_4 = arith.constant 0 : index
    %3 = vector.load %arg3[%c0_3, %c0_4] : memref<1x128xf32, #tpu.memory_space<vmem>>, vector<1x128xf32>
    %4 = vector.broadcast %3 : vector<1x128xf32> to vector<8x128xf32>
    %5 = arith.addf %2, %4 : vector<8x128xf32>
    %cst_5 = arith.constant 0.000000e+00 : f32
    %6 = vector.broadcast %cst_5 : f32 to vector<8x128xf32>
    %7 = arith.cmpf ogt, %5, %6 : vector<8x128xf32>
    %cst_6 = arith.constant 1.000000e-01 : f32
    %8 = vector.broadcast %cst_6 : f32 to vector<8x128xf32>
    %9 = arith.mulf %8, %5 : vector<8x128xf32>
    %10 = arith.select %7, %5, %9 : vector<8x128xi1>, vector<8x128xf32>
    %11 = arith.truncf %10 : vector<8x128xf32> to vector<8x128xbf16>
    %c0_7 = arith.constant 0 : index
    %c0_8 = arith.constant 0 : index
    %12 = vector.load %arg4[%c0_7, %c0_8] : memref<8x128xbf16, #tpu.memory_space<vmem>>, vector<8x128xbf16>
    tpu.vector_store %arg4[%c0_7, %c0_8], %11 {strides = array<i32>} : memref<8x128xbf16, #tpu.memory_space<vmem>>, vector<8x128xbf16>,
    return
  }
  func.func @transform_0(%arg0: i32) -> (i32, i32) {
    %c0_i32 = arith.constant 0 : i32
    %c0_i32_0 = arith.constant 0 : i32
    return %arg0, %c0_i32 : i32, i32
  }
  func.func @transform_1(%arg0: i32) -> (i32, i32) {
    %c0_i32 = arith.constant 0 : i32
    %c0_i32_0 = arith.constant 0 : i32
    %c0_i32_1 = arith.constant 0 : i32
    return %c0_i32, %c0_i32_0 : i32, i32
  }
  func.func @transform_2(%arg0: i32) -> (i32, i32) {
    %c0_i32 = arith.constant 0 : i32
    %c0_i32_0 = arith.constant 0 : i32
    %c0_i32_1 = arith.constant 0 : i32
    return %c0_i32, %c0_i32_0 : i32, i32
  }
  func.func @transform_3(%arg0: i32) -> (i32, i32) {
    %c0_i32 = arith.constant 0 : i32
    %c0_i32_0 = arith.constant 0 : i32
    return %arg0, %c0_i32 : i32, i32
  }
}

module attributes {stable_mosaic.version = 11 : i64} {
  func.func @kernel(%arg0: i32, %arg1: memref<8x576xbf16, #tpu.memory_space<vmem>>, %arg2: memref<576x128xbf16, #tpu.memory_space<vmem>>, %arg3: memref<1x128xf32, #tpu.memory_space<vmem>>, %arg4: memref<8x128xbf16, #tpu.memory_space<vmem>>, %arg5: memref<8x128xbf16, #tpu.memory_space<vmem>>) attributes {dimension_semantics = [#tpu.dimension_semantics<parallel>], iteration_bounds = array<i64: 1>, scalar_prefetch = 0 : i64, scratch_operands = 0 : i64, tpu.core_type = #tpu.core_type<tc>, window_params = [{transform_indices = @transform_0, window_bounds = array<i64: 8, 576>}, {pipeline_mode = #tpu.pipeline_mode<synchronous>, transform_indices = @transform_1, window_bounds = array<i64: 576, 128>}, {pipeline_mode = #tpu.pipeline_mode<synchronous>, transform_indices = @transform_2, window_bounds = array<i64: 1, 128>}, {transform_indices = @transform_3, window_bounds = array<i64: 8, 128>}, {transform_indices = @transform_4, window_bounds = array<i64: 8, 128>}]} {
    %c0 = arith.constant 0 : index
    %c0_0 = arith.constant 0 : index
    %0 = vector.load %arg1[%c0, %c0_0] : memref<8x576xbf16, #tpu.memory_space<vmem>>, vector<8x576xbf16>
    %c0_1 = arith.constant 0 : index
    %c0_2 = arith.constant 0 : index
    %1 = vector.load %arg2[%c0_1, %c0_2] : memref<576x128xbf16, #tpu.memory_space<vmem>>, vector<576x128xbf16>
    %cst = arith.constant dense<0.000000e+00> : vector<8x128xf32>
    %2 = tpu.matmul %0, %1, %cst {dimension_numbers = #tpu.dot_dimension_numbers<[1], [0], [0], [1], [0, 0, 1, 1], [], []>} : vector<8x576xbf16>, vector<576x128xbf16>, vector<8x128xf32> -> vector<8x128xf32>
    %c0_3 = arith.constant 0 : index
    %c0_4 = arith.constant 0 : index
    %3 = vector.load %arg3[%c0_3, %c0_4] : memref<1x128xf32, #tpu.memory_space<vmem>>, vector<1x128xf32>
    %4 = vector.broadcast %3 : vector<1x128xf32> to vector<8x128xf32>
    %5 = arith.addf %2, %4 : vector<8x128xf32>
    %cst_5 = arith.constant 0.000000e+00 : f32
    %6 = vector.broadcast %cst_5 : f32 to vector<8x128xf32>
    %7 = arith.cmpf ogt, %5, %6 : vector<8x128xf32>
    %cst_6 = arith.constant 1.000000e-01 : f32
    %8 = vector.broadcast %cst_6 : f32 to vector<8x128xf32>
    %9 = arith.mulf %8, %5 : vector<8x128xf32>
    %10 = arith.select %7, %5, %9 : vector<8x128xi1>, vector<8x128xf32>
    %c0_7 = arith.constant 0 : index
    %c0_8 = arith.constant 0 : index
    %11 = vector.load %arg4[%c0_7, %c0_8] : memref<8x128xbf16, #tpu.memory_space<vmem>>, vector<8x128xbf16>
    %12 = arith.extf %11 : vector<8x128xbf16> to vector<8x128xf32>
    %13 = arith.addf %10, %12 : vector<8x128xf32>
    %14 = arith.truncf %13 : vector<8x128xf32> to vector<8x128xbf16>
    %c0_9 = arith.constant 0 : index
    %c0_10 = arith.constant 0 : index
    %15 = vector.load %arg5[%c0_9, %c0_10] : memref<8x128xbf16, #tpu.memory_space<vmem>>, vector<8x128xbf16>
    tpu.vector_store %arg5[%c0_9, %c0_10], %14 {strides = array<i32>} : memref<8x128xbf16, #tpu.memory_space<vmem>>, vector<8x128xbf16>,
    return
  }
  func.func @transform_0(%arg0: i32) -> (i32, i32) {
    %c0_i32 = arith.constant 0 : i32
    %c0_i32_0 = arith.constant 0 : i32
    return %arg0, %c0_i32 : i32, i32
  }
  func.func @transform_1(%arg0: i32) -> (i32, i32) {
    %c0_i32 = arith.constant 0 : i32
    %c0_i32_0 = arith.constant 0 : i32
    %c0_i32_1 = arith.constant 0 : i32
    return %c0_i32, %c0_i32_0 : i32, i32
  }
  func.func @transform_2(%arg0: i32) -> (i32, i32) {
    %c0_i32 = arith.constant 0 : i32
    %c0_i32_0 = arith.constant 0 : i32
    %c0_i32_1 = arith.constant 0 : i32
    return %c0_i32, %c0_i32_0 : i32, i32
  }
  func.func @transform_3(%arg0: i32) -> (i32, i32) {
    %c0_i32 = arith.constant 0 : i32
    %c0_i32_0 = arith.constant 0 : i32
    return %arg0, %c0_i32 : i32, i32
  }
  func.func @transform_4(%arg0: i32) -> (i32, i32) {
    %c0_i32 = arith.constant 0 : i32
    %c0_i32_0 = arith.constant 0 : i32
    return %arg0, %c0_i32 : i32, i32
  }
}

module attributes {stable_mosaic.version = 11 : i64} {
  func.func @kernel(%arg0: i32, %arg1: memref<32x128xbf16, #tpu.memory_space<vmem>>, %arg2: memref<128x128xbf16, #tpu.memory_space<vmem>>, %arg3: memref<1x128xf32, #tpu.memory_space<vmem>>, %arg4: memref<32x128xf32, #tpu.memory_space<vmem>>) attributes {dimension_semantics = [#tpu.dimension_semantics<parallel>], iteration_bounds = array<i64: 1>, scalar_prefetch = 0 : i64, scratch_operands = 0 : i64, tpu.core_type = #tpu.core_type<tc>, window_params = [{transform_indices = @transform_0, window_bounds = array<i64: 32, 128>}, {pipeline_mode = #tpu.pipeline_mode<synchronous>, transform_indices = @transform_1, window_bounds = array<i64: 128, 128>}, {pipeline_mode = #tpu.pipeline_mode<synchronous>, transform_indices = @transform_2, window_bounds = array<i64: 1, 128>}, {transform_indices = @transform_3, window_bounds = array<i64: 32, 128>}]} {
    %c0 = arith.constant 0 : index
    %c0_0 = arith.constant 0 : index
    %0 = vector.load %arg1[%c0, %c0_0] : memref<32x128xbf16, #tpu.memory_space<vmem>>, vector<32x128xbf16>
    %c0_1 = arith.constant 0 : index
    %c0_2 = arith.constant 0 : index
    %1 = vector.load %arg2[%c0_1, %c0_2] : memref<128x128xbf16, #tpu.memory_space<vmem>>, vector<128x128xbf16>
    %cst = arith.constant dense<0.000000e+00> : vector<32x128xf32>
    %2 = tpu.matmul %0, %1, %cst {dimension_numbers = #tpu.dot_dimension_numbers<[1], [0], [0], [1], [0, 0, 1, 1], [], []>} : vector<32x128xbf16>, vector<128x128xbf16>, vector<32x128xf32> -> vector<32x128xf32>
    %c0_3 = arith.constant 0 : index
    %c0_4 = arith.constant 0 : index
    %3 = vector.load %arg3[%c0_3, %c0_4] : memref<1x128xf32, #tpu.memory_space<vmem>>, vector<1x128xf32>
    %4 = vector.broadcast %3 : vector<1x128xf32> to vector<32x128xf32>
    %5 = arith.addf %2, %4 : vector<32x128xf32>
    %c0_5 = arith.constant 0 : index
    %c0_6 = arith.constant 0 : index
    %6 = vector.load %arg4[%c0_5, %c0_6] : memref<32x128xf32, #tpu.memory_space<vmem>>, vector<32x128xf32>
    tpu.vector_store %arg4[%c0_5, %c0_6], %5 {strides = array<i32>} : memref<32x128xf32, #tpu.memory_space<vmem>>, vector<32x128xf32>,
    return
  }
  func.func @transform_0(%arg0: i32) -> (i32, i32) {
    %c0_i32 = arith.constant 0 : i32
    %c0_i32_0 = arith.constant 0 : i32
    return %arg0, %c0_i32 : i32, i32
  }
  func.func @transform_1(%arg0: i32) -> (i32, i32) {
    %c0_i32 = arith.constant 0 : i32
    %c0_i32_0 = arith.constant 0 : i32
    %c0_i32_1 = arith.constant 0 : i32
    return %c0_i32, %c0_i32_0 : i32, i32
  }
  func.func @transform_2(%arg0: i32) -> (i32, i32) {
    %c0_i32 = arith.constant 0 : i32
    %c0_i32_0 = arith.constant 0 : i32
    %c0_i32_1 = arith.constant 0 : i32
    return %c0_i32, %c0_i32_0 : i32, i32
  }
  func.func @transform_3(%arg0: i32) -> (i32, i32) {
    %c0_i32 = arith.constant 0 : i32
    %c0_i32_0 = arith.constant 0 : i32
    return %arg0, %c0_i32 : i32, i32
  }
}

module attributes {stable_mosaic.version = 11 : i64} {
  func.func @kernel(%arg0: i32, %arg1: memref<8x128xbf16, #tpu.memory_space<vmem>>, %arg2: memref<128x128xbf16, #tpu.memory_space<vmem>>, %arg3: memref<1x128xf32, #tpu.memory_space<vmem>>, %arg4: memref<8x128xf32, #tpu.memory_space<vmem>>) attributes {dimension_semantics = [#tpu.dimension_semantics<parallel>], iteration_bounds = array<i64: 1>, scalar_prefetch = 0 : i64, scratch_operands = 0 : i64, tpu.core_type = #tpu.core_type<tc>, window_params = [{transform_indices = @transform_0, window_bounds = array<i64: 8, 128>}, {pipeline_mode = #tpu.pipeline_mode<synchronous>, transform_indices = @transform_1, window_bounds = array<i64: 128, 128>}, {pipeline_mode = #tpu.pipeline_mode<synchronous>, transform_indices = @transform_2, window_bounds = array<i64: 1, 128>}, {transform_indices = @transform_3, window_bounds = array<i64: 8, 128>}]} {
    %c0 = arith.constant 0 : index
    %c0_0 = arith.constant 0 : index
    %0 = vector.load %arg1[%c0, %c0_0] : memref<8x128xbf16, #tpu.memory_space<vmem>>, vector<8x128xbf16>
    %c0_1 = arith.constant 0 : index
    %c0_2 = arith.constant 0 : index
    %1 = vector.load %arg2[%c0_1, %c0_2] : memref<128x128xbf16, #tpu.memory_space<vmem>>, vector<128x128xbf16>
    %cst = arith.constant dense<0.000000e+00> : vector<8x128xf32>
    %2 = tpu.matmul %0, %1, %cst {dimension_numbers = #tpu.dot_dimension_numbers<[1], [0], [0], [1], [0, 0, 1, 1], [], []>} : vector<8x128xbf16>, vector<128x128xbf16>, vector<8x128xf32> -> vector<8x128xf32>
    %c0_3 = arith.constant 0 : index
    %c0_4 = arith.constant 0 : index
    %3 = vector.load %arg3[%c0_3, %c0_4] : memref<1x128xf32, #tpu.memory_space<vmem>>, vector<1x128xf32>
    %4 = vector.broadcast %3 : vector<1x128xf32> to vector<8x128xf32>
    %5 = arith.addf %2, %4 : vector<8x128xf32>
    %c0_5 = arith.constant 0 : index
    %c0_6 = arith.constant 0 : index
    %6 = vector.load %arg4[%c0_5, %c0_6] : memref<8x128xf32, #tpu.memory_space<vmem>>, vector<8x128xf32>
    tpu.vector_store %arg4[%c0_5, %c0_6], %5 {strides = array<i32>} : memref<8x128xf32, #tpu.memory_space<vmem>>, vector<8x128xf32>,
    return
  }
  func.func @transform_0(%arg0: i32) -> (i32, i32) {
    %c0_i32 = arith.constant 0 : i32
    %c0_i32_0 = arith.constant 0 : i32
    return %arg0, %c0_i32 : i32, i32
  }
  func.func @transform_1(%arg0: i32) -> (i32, i32) {
    %c0_i32 = arith.constant 0 : i32
    %c0_i32_0 = arith.constant 0 : i32
    %c0_i32_1 = arith.constant 0 : i32
    return %c0_i32, %c0_i32_0 : i32, i32
  }
  func.func @transform_2(%arg0: i32) -> (i32, i32) {
    %c0_i32 = arith.constant 0 : i32
    %c0_i32_0 = arith.constant 0 : i32
    %c0_i32_1 = arith.constant 0 : i32
    return %c0_i32, %c0_i32_0 : i32, i32
  }
  func.func @transform_3(%arg0: i32) -> (i32, i32) {
    %c0_i32 = arith.constant 0 : i32
    %c0_i32_0 = arith.constant 0 : i32
    return %arg0, %c0_i32 : i32, i32
  }
}

</mosaic_0001>

<llo_original>
// kernel: forward.76
$region0: #{forward.76}
  #allocation0 [shape = 'u32[]', space=smem, size = 0x4, offset = 0x4, fixed_abs, tag = 'smem constant byte address 0x4 - core index']
  #allocation1 [shape = 'u32[144,128]{1,0:T(1,128)}', space=vmem, size = 0x12000, scoped, tag = 'internal scratch']
  %s0 = inlined_call_operand.vmem [shape: bf16[512,36], index: 0, kind: input, shape index: {}]
  %s1 = inlined_call_operand.vmem [shape: bf16[36,128], index: 1, kind: input, shape index: {}]
  %s2 = inlined_call_operand.vmem [shape: f32[1,128], index: 2, kind: input, shape index: {}]
  %s3 = inlined_call_operand.vmem [shape: bf16[512,128], index: 3, kind: output, shape index: {}]
  %s4 = sld [smem:[#allocation0]]
  $region45: #{forward.76} parent=0
    _
  %s6 = ssub.s32 1, %s4
  %s7 = scalar_select 0, %s6, %s4
  loop: start=0, step=1, limit=4
  $region2: #{forward.76} parent=0 // loop_pre_header
    _
  $region3: #{forward.76} parent=0 // loop_header
    %s9 = sphi 0, %s13
    %p10 = scmp.ge.s32.totalorder %s9, 4
    %s19 = sphi 0, %s21
    %s22 = sphi 0, %s19
    %s23 = sphi 0, %s22
    %s39 = sphi 0, %s23
    %s43 = sphi 0, %s43
    %s45 = sphi 0, %s43
    %s46 = sphi 0, %s45
    %s60 = sphi 0, %s46
    %s64 = sphi 0, %s64
    %s66 = sphi 0, %s64
    %s67 = sphi 0, %s66
    %s81 = sphi 0, %s67
    %s87 = sphi 0, %s89
    %s90 = sphi 0, %s87
    %s91 = sphi 0, %s90
    %s107 = sphi 0, %s91
  $region4: #{forward.76} parent=0 // loop_header_branch
    %12 = sbr.rel (%p10) target = $region8
  $region5: #{forward.76} parent=0 // loop_body
    %s14 = ssub.s32 %s9, 1
    %s15 = ssub.s32 %s9, 2
    %s16 = sadd.s32 %s9, 1
    %s17 = ssub.s32 %s9, %s16
    %p18 = scmp.eq.s32.totalorder %s17, 0
    %s20 = sadd.s32 %s19, 1
    %s21 = scalar_select %p18, %s19, %s20
    %p24 = pneg %p18
    %p25 = scmp.eq.s32.totalorder %s9, 1
    %p26 = por %p24, %p25
    %p27 = scmp.ne.s32.totalorder %s19, %s22
    %p28 = scmp.eq.s32.totalorder %s9, 0
    %p29 = por %p27, %p28
    %p30 = scmp.ne.s32.totalorder %s19, %s22
    %p31 = scmp.eq.s32.totalorder %s14, 1
    %p32 = por %p30, %p31
    %p33 = scmp.ne.s32.totalorder %s22, %s23
    %p34 = scmp.eq.s32.totalorder %s14, 0
    %p35 = por %p33, %p34
    %p36 = scmp.ne.s32.totalorder %s22, %s23
    %p37 = scmp.eq.s32.totalorder %s15, 1
    %p38 = por %p36, %p37
    %p40 = scmp.ne.s32.totalorder %s23, %s39
    %p41 = scmp.eq.s32.totalorder %s15, 0
    %p42 = por %p40, %p41
    %s44 = sadd.s32 %s43, 1
    %p47 = scmp.eq.s32.totalorder %s9, 1
    %p48 = scmp.ne.s32.totalorder %s43, %s45
    %p49 = scmp.eq.s32.totalorder %s9, 0
    %p50 = por %p48, %p49
    %p51 = scmp.ne.s32.totalorder %s43, %s45
    %p52 = scmp.eq.s32.totalorder %s14, 1
    %p53 = por %p51, %p52
    %p54 = scmp.ne.s32.totalorder %s45, %s46
    %p55 = scmp.eq.s32.totalorder %s14, 0
    %p56 = por %p54, %p55
    %p57 = scmp.ne.s32.totalorder %s45, %s46
    %p58 = scmp.eq.s32.totalorder %s15, 1
    %p59 = por %p57, %p58
    %p61 = scmp.ne.s32.totalorder %s46, %s60
    %p62 = scmp.eq.s32.totalorder %s15, 0
    %p63 = por %p61, %p62
    %s65 = sadd.s32 %s64, 1
    %p68 = scmp.eq.s32.totalorder %s9, 1
    %p69 = scmp.ne.s32.totalorder %s64, %s66
    %p70 = scmp.eq.s32.totalorder %s9, 0
    %p71 = por %p69, %p70
    %p72 = scmp.ne.s32.totalorder %s64, %s66
    %p73 = scmp.eq.s32.totalorder %s14, 1
    %p74 = por %p72, %p73
    %p75 = scmp.ne.s32.totalorder %s66, %s67
    %p76 = scmp.eq.s32.totalorder %s14, 0
    %p77 = por %p75, %p76
    %p78 = scmp.ne.s32.totalorder %s66, %s67
    %p79 = scmp.eq.s32.totalorder %s15, 1
    %p80 = por %p78, %p79
    %p82 = scmp.ne.s32.totalorder %s67, %s81
    %p83 = scmp.eq.s32.totalorder %s15, 0
    %p84 = por %p82, %p83
    %s85 = ssub.s32 %s9, %s16
    %p86 = scmp.eq.s32.totalorder %s85, 0
    %s88 = sadd.s32 %s87, 1
    %s89 = scalar_select %p86, %s87, %s88
    %p92 = pneg %p86
    %p93 = scmp.eq.s32.totalorder %s9, 1
    %p94 = por %p92, %p93
    %p95 = scmp.ne.s32.totalorder %s87, %s90
    %p96 = scmp.eq.s32.totalorder %s9, 0
    %p97 = por %p95, %p96
    %p98 = scmp.ne.s32.totalorder %s87, %s90
    %p99 = scmp.eq.s32.totalorder %s14, 1
    %p100 = por %p98, %p99
    %p101 = scmp.ne.s32.totalorder %s90, %s91
    %p102 = scmp.eq.s32.totalorder %s14, 0
    %p103 = por %p101, %p102
    %p104 = scmp.ne.s32.totalorder %s90, %s91
    %p105 = scmp.eq.s32.totalorder %s15, 1
    %p106 = por %p104, %p105
    %p108 = scmp.ne.s32.totalorder %s91, %s107
    %p109 = scmp.eq.s32.totalorder %s15, 0
    %p110 = por %p108, %p109
    %p111 = scmp.le.s32.totalorder 1, %s9
    %p112 = scmp.lt.s32.totalorder %s9, 3
    %p113 = pnand %p111, %p112
    %p114 = pneg %p113
    // Predicated region
    $region9: #{forward.76} parent=5 // pred_check
      _
    $region10: #{forward.76} parent=5 // pred_check_branch
      %116 = sbr.rel (%p113) target = $region12
    $region11: #{forward.76} parent=5 // pred_region
      %s117 = ssub.s32 %s9, 1
      // Predicated region
      $region13: #{forward.76} parent=11 // pred_check
        %p118 = pneg %p56
      $region14: #{forward.76} parent=11 // pred_check_branch
        %120 = sbr.rel (%p118) target = $region16
      $region15: #{forward.76} parent=11 // pred_region
        _
      $region16: #{forward.76} parent=11 // pred_fallthru
        _
      // Predicated region
      $region17: #{forward.76} parent=11 // pred_check
        %p121 = pneg %p77
      $region18: #{forward.76} parent=11 // pred_check_branch
        %123 = sbr.rel (%p121) target = $region20
      $region19: #{forward.76} parent=11 // pred_region
        _
      $region20: #{forward.76} parent=11 // pred_fallthru
        _
    $region12: #{forward.76} parent=5 // pred_fallthru
      _
    %p124 = scmp.lt.s32.totalorder %s9, 2
    // Predicated region
    $region21: #{forward.76} parent=5 // pred_check
      %p125 = pneg %p124
    $region22: #{forward.76} parent=5 // pred_check_branch
      %127 = sbr.rel (%p125) target = $region24
    $region23: #{forward.76} parent=5 // pred_region
      // Predicated region
      $region25: #{forward.76} parent=23 // pred_check
        %p128 = pneg %p29
      $region26: #{forward.76} parent=23 // pred_check_branch
        %130 = sbr.rel (%p128) target = $region28
      $region27: #{forward.76} parent=23 // pred_region
        %s131 = smul.u32 32, %s9
        %p132 = scmp.lt.s32.totalorder %s131, 63
        %s133 = scalar_select %p132, %s131, 63
        %s134 = smul.addr %s133, 4
        %s135 = scalar_lea.vmem %s0, %s134
        %s136 = smul.u32 32, %s9
      $region28: #{forward.76} parent=23 // pred_fallthru
        _
    $region24: #{forward.76} parent=5 // pred_fallthru
      _
    %p137 = scmp.le.s32.totalorder 1, %s9
    %p138 = scmp.lt.s32.totalorder %s9, 3
    %p139 = pnand %p137, %p138
    %p140 = pneg %p139
    // Predicated region
    $region29: #{forward.76} parent=5 // pred_check
      _
    $region30: #{forward.76} parent=5 // pred_check_branch
      %142 = sbr.rel (%p139) target = $region32
    $region31: #{forward.76} parent=5 // pred_region
      %s143 = ssub.s32 %s9, 1
      %s144 = smul.u32 32, %s14
      %p145 = scmp.lt.s32.totalorder %s144, 63
      %s146 = scalar_select %p145, %s144, 63
      %s147 = smul.addr %s146, 4
      %s148 = scalar_lea.vmem %s0, %s147
      %p149 = pneg %p35
      %p150 = pneg %p32
      %p151 = pneg %p56
      %p152 = pneg %p53
      %p153 = pneg %p77
      %p154 = pneg %p74
      %p155 = pneg %p103
      %p156 = pneg %p100
      %s157 = smul.u32 32, %s14
      %p158 = scmp.lt.s32.totalorder %s157, 63
      %s159 = scalar_select %p158, %s157, 63
      %s160 = smul.addr %s159, 4
      %s161 = scalar_lea.vmem %s3, %s160
      %s162 = smul.u32 32, %s14
      %p163 = scmp.lt.s32.totalorder %s162, 63
      %s164 = scalar_select %p163, %s162, 63
      %s165 = smul.addr %s164, 4
      %s166 = scalar_lea.vmem %s0, %s165
      %s167 = smul.u32 32, %s14
      %s168 = smul.u32 32, %s14
      %p169 = scmp.lt.s32.totalorder %s168, 63
      %s170 = scalar_select %p169, %s168, 63
      %s171 = smul.addr %s170, 4
      %s172 = scalar_lea.vmem %s3, %s171
      %s173 = smul.u32 32, %s14
      %v175 = vld [vmem:[%s166] sm:$0xf]
      %v176 = vld [vmem:[%s166 + $0x4] sm:$0xf]
      %v177 = vld [vmem:[%s166 + $0x8] sm:$0xf]
      %v178 = vld [vmem:[%s166 + $0xc] sm:$0xf]
      %v179 = vld [vmem:[%s166 + $0x10] sm:$0xf]
      %v180 = vld [vmem:[%s166 + $0x14] sm:$0xf]
      %v181 = vld [vmem:[%s166 + $0x18] sm:$0xf]
      %v182 = vld [vmem:[%s166 + $0x1c] sm:$0xf]
      %v183 = vld [vmem:[%s166 + $0x20] sm:$0xf]
      %v184 = vld [vmem:[%s166 + $0x24] sm:$0xf]
      %v185 = vld [vmem:[%s166 + $0x28] sm:$0xf]
      %v186 = vld [vmem:[%s166 + $0x2c] sm:$0xf]
      %v187 = vld [vmem:[%s166 + $0x30] sm:$0xf]
      %v188 = vld [vmem:[%s166 + $0x34] sm:$0xf]
      %v189 = vld [vmem:[%s166 + $0x38] sm:$0xf]
      %v190 = vld [vmem:[%s166 + $0x3c] sm:$0xf]
      %v191 = vld [vmem:[%s166 + $0x40] sm:$0xf]
      %v192 = vld [vmem:[%s166 + $0x44] sm:$0xf]
      %v193 = vld [vmem:[%s166 + $0x48] sm:$0xf]
      %v194 = vld [vmem:[%s166 + $0x4c] sm:$0xf]
      %v195 = vld [vmem:[%s166 + $0x50] sm:$0xf]
      %v196 = vld [vmem:[%s166 + $0x54] sm:$0xf]
      %v197 = vld [vmem:[%s166 + $0x58] sm:$0xf]
      %v198 = vld [vmem:[%s166 + $0x5c] sm:$0xf]
      %v199 = vld [vmem:[%s166 + $0x60] sm:$0xf]
      %v200 = vld [vmem:[%s166 + $0x64] sm:$0xf]
      %v201 = vld [vmem:[%s166 + $0x68] sm:$0xf]
      %v202 = vld [vmem:[%s166 + $0x6c] sm:$0xf]
      %v203 = vld [vmem:[%s166 + $0x70] sm:$0xf]
      %v204 = vld [vmem:[%s166 + $0x74] sm:$0xf]
      %v205 = vld [vmem:[%s166 + $0x78] sm:$0xf]
      %v206 = vld [vmem:[%s166 + $0x7c] sm:$0xf]
      %v207 = vld [vmem:[%s1] sm:$0xf]
      %v208 = vld [vmem:[%s1 + $0x4] sm:$0xf]
      %v209 = vld [vmem:[%s1 + $0x8] sm:$0xf]
      %v210 = vld [vmem:[%s1 + $0xc] sm:$0xf]
      %v211 = vld [vmem:[%s1 + $0x10] sm:$0x3]
      %v212 = vld [vmem:[%s2] sm:$0x1]
      %v214 = vlaneseq
      %v215 = vshrl.u32 %v214, 7
      %v216 = vsub.s32 0, %v215
      %v217 = vrot.slane %v212, %v216
      %v251 = vunpack.c.l.b16 %v175
      %v252 = vunpack.c.l.b16 %v176
      %v253 = vunpack.c.l.b16 %v177
      %v254 = vunpack.c.l.b16 %v178
      %v255 = vunpack.c.l.b16 %v179
      %v256 = vunpack.c.l.b16 %v180
      %v257 = vunpack.c.l.b16 %v181
      %v258 = vunpack.c.l.b16 %v182
      %v259 = vunpack.c.l.b16 %v183
      %v260 = vunpack.c.l.b16 %v184
      %v261 = vunpack.c.l.b16 %v185
      %v262 = vunpack.c.l.b16 %v186
      %v263 = vunpack.c.l.b16 %v187
      %v264 = vunpack.c.l.b16 %v188
      %v265 = vunpack.c.l.b16 %v189
      %v266 = vunpack.c.l.b16 %v190
      %v267 = vunpack.c.l.b16 %v191
      %v268 = vunpack.c.l.b16 %v192
      %v269 = vunpack.c.l.b16 %v193
      %v270 = vunpack.c.l.b16 %v194
      %v271 = vunpack.c.l.b16 %v195
      %v272 = vunpack.c.l.b16 %v196
      %v273 = vunpack.c.l.b16 %v197
      %v274 = vunpack.c.l.b16 %v198
      %v275 = vunpack.c.l.b16 %v199
      %v276 = vunpack.c.l.b16 %v200
      %v277 = vunpack.c.l.b16 %v201
      %v278 = vunpack.c.l.b16 %v202
      %v279 = vunpack.c.l.b16 %v203
      %v280 = vunpack.c.l.b16 %v204
      %v281 = vunpack.c.l.b16 %v205
      %v282 = vunpack.c.l.b16 %v206
      %v283 = vpack.c.b16 %v252, %v251
      %v284 = vpack.c.b16 %v254, %v253
      %v285 = vpack.c.b16 %v256, %v255
      %v286 = vpack.c.b16 %v258, %v257
      %v287 = vpack.c.b16 %v260, %v259
      %v288 = vpack.c.b16 %v262, %v261
      %v289 = vpack.c.b16 %v264, %v263
      %v290 = vpack.c.b16 %v266, %v265
      %v291 = vpack.c.b16 %v268, %v267
      %v292 = vpack.c.b16 %v270, %v269
      %v293 = vpack.c.b16 %v272, %v271
      %v294 = vpack.c.b16 %v274, %v273
      %v295 = vpack.c.b16 %v276, %v275
      %v296 = vpack.c.b16 %v278, %v277
      %v297 = vpack.c.b16 %v280, %v279
      %v298 = vpack.c.b16 %v282, %v281
      %v304 = vunpack.c.l.b16 %v207
      %v305 = vunpack.c.l.b16 %v208
      %v306 = vunpack.c.l.b16 %v209
      %v307 = vunpack.c.l.b16 %v210
      %v308 = vunpack.c.l.b16 %v211
      %v309 = vpack.c.b16 %v305, %v304
      %v310 = vpack.c.b16 %v307, %v306
      %v311 = vpack.c.b16 %v308, %v308
      %vm314 = vcmask 293888
      %v316 = vsel %vm314, %v283, 0
      %v319 = vsel %vm314, %v284, 0
      %v322 = vsel %vm314, %v285, 0
      %v325 = vsel %vm314, %v286, 0
      %v328 = vsel %vm314, %v287, 0
      %v331 = vsel %vm314, %v288, 0
      %v334 = vsel %vm314, %v289, 0
      %v337 = vsel %vm314, %v290, 0
      %v340 = vsel %vm314, %v291, 0
      %v343 = vsel %vm314, %v292, 0
      %v346 = vsel %vm314, %v293, 0
      %v349 = vsel %vm314, %v294, 0
      %v352 = vsel %vm314, %v295, 0
      %v355 = vsel %vm314, %v296, 0
      %v358 = vsel %vm314, %v297, 0
      %v361 = vsel %vm314, %v298, 0
      %vm363 = vcmask 1041408
      %v365 = vsel %vm363, %v311, 0
      %367 = vmatprep.subr.bf16.mxu0 0
      %368 = vmatpush1.bf16.msra.mxu0 0
      %369 = vmatprep.subr.bf16.mxu0 0
      %370 = vmatpush1.bf16.msra.mxu0 0
      %371 = vmatprep.subr.bf16.mxu0 0
      %372 = vmatpush1.bf16.msra.mxu0 0
      %373 = vmatprep.subr.bf16.mxu0 0
      %374 = vmatpush1.bf16.msra.mxu0 0
      %375 = vmatprep.subr.bf16.mxu0 0
      %376 = vmatpush1.bf16.msra.mxu0 0
      %377 = vmatprep.subr.bf16.mxu0 0
      %378 = vmatpush1.bf16.msra.mxu0 %v365
      %379 = vmatprep.subr.bf16.mxu0 0
      %380 = vmatpush1.bf16.msra.mxu0 %v310
      %381 = vmatprep.subr.bf16.mxu0 0
      %382 = vmatpush1.bf16.msra.mxu0 %v309
      %383 = vmatprep.subr.bf16.mxu0 0
      %384 = vmatpush2.bf16.msra.mxu0 0
      %385 = vmatprep.subr.bf16.mxu0 0
      %386 = vmatpush2.bf16.msra.mxu0 0
      %387 = vmatprep.subr.bf16.mxu0 0
      %388 = vmatpush2.bf16.msra.mxu0 0
      %389 = vmatprep.subr.bf16.mxu0 0
      %390 = vmatpush2.bf16.msra.mxu0 0
      %391 = vmatprep.subr.bf16.mxu0 0
      %392 = vmatpush2.bf16.msra.mxu0 0
      %393 = vmatprep.subr.bf16.mxu0 0
      %394 = vmatpush2.bf16.msra.mxu0 0
      %395 = vmatprep.subr.bf16.mxu0 0
      %396 = vmatpush2.bf16.msra.mxu0 0
      %397 = vmatprep.subr.bf16.mxu0 0
      %398 = vmatpush2.bf16.msra.mxu0 0
      %399 = vmatprep.mubr.bf16.mxu0 0
      %400 = vmatmul.mubr.bf16.gmra.mxu0 %v316
      %v401 = vpop.f32.mrf.mxu0
      %v402 = vadd.f32 %v217, %v401
      %v403 = vpop.f32.mrf.mxu0
      %v404 = vpop.f32.mrf.mxu0
      %v405 = vadd.f32 %v217, %v404
      %v406 = vpop.f32.mrf.mxu0
      %407 = vmatprep.mubr.bf16.mxu0 0
      %408 = vmatmul.mubr.bf16.gmra.mxu0 %v319
      %v409 = vpop.f32.mrf.mxu0
      %v410 = vadd.f32 %v217, %v409
      %v411 = vpop.f32.mrf.mxu0
      %v412 = vpop.f32.mrf.mxu0
      %v413 = vadd.f32 %v217, %v412
      %v414 = vpop.f32.mrf.mxu0
      %415 = vmatprep.mubr.bf16.mxu0 0
      %416 = vmatmul.mubr.bf16.gmra.mxu0 %v322
      %v417 = vpop.f32.mrf.mxu0
      %v418 = vadd.f32 %v217, %v417
      %v419 = vpop.f32.mrf.mxu0
      %v420 = vpop.f32.mrf.mxu0
      %v421 = vadd.f32 %v217, %v420
      %v422 = vpop.f32.mrf.mxu0
      %423 = vmatprep.mubr.bf16.mxu0 0
      %424 = vmatmul.mubr.bf16.gmra.mxu0 %v325
      %v425 = vpop.f32.mrf.mxu0
      %v426 = vadd.f32 %v217, %v425
      %v427 = vpop.f32.mrf.mxu0
      %v428 = vpop.f32.mrf.mxu0
      %v429 = vadd.f32 %v217, %v428
      %v430 = vpop.f32.mrf.mxu0
      %431 = vmatprep.mubr.bf16.mxu0 0
      %432 = vmatmul.mubr.bf16.gmra.mxu0 %v328
      %v433 = vpop.f32.mrf.mxu0
      %v434 = vadd.f32 %v217, %v433
      %v435 = vpop.f32.mrf.mxu0
      %v436 = vpop.f32.mrf.mxu0
      %v437 = vadd.f32 %v217, %v436
      %v438 = vpop.f32.mrf.mxu0
      %439 = vmatprep.mubr.bf16.mxu0 0
      %440 = vmatmul.mubr.bf16.gmra.mxu0 %v331
      %v441 = vpop.f32.mrf.mxu0
      %v442 = vadd.f32 %v217, %v441
      %v443 = vpop.f32.mrf.mxu0
      %v444 = vpop.f32.mrf.mxu0
      %v445 = vadd.f32 %v217, %v444
      %v446 = vpop.f32.mrf.mxu0
      %447 = vmatprep.mubr.bf16.mxu0 0
      %448 = vmatmul.mubr.bf16.gmra.mxu0 %v334
      %v449 = vpop.f32.mrf.mxu0
      %v450 = vadd.f32 %v217, %v449
      %v451 = vpop.f32.mrf.mxu0
      %v452 = vpop.f32.mrf.mxu0
      %v453 = vadd.f32 %v217, %v452
      %v454 = vpop.f32.mrf.mxu0
      %455 = vmatprep.mubr.bf16.mxu0 0
      %456 = vmatmul.mubr.bf16.gmra.mxu0 %v337
      %v457 = vpop.f32.mrf.mxu0
      %v458 = vadd.f32 %v217, %v457
      %v459 = vpop.f32.mrf.mxu0
      %v460 = vpop.f32.mrf.mxu0
      %v461 = vadd.f32 %v217, %v460
      %v462 = vpop.f32.mrf.mxu0
      %463 = vmatprep.mubr.bf16.mxu0 0
      %464 = vmatmul.mubr.bf16.gmra.mxu0 %v340
      %v465 = vpop.f32.mrf.mxu0
      %v466 = vadd.f32 %v217, %v465
      %v467 = vpop.f32.mrf.mxu0
      %v468 = vpop.f32.mrf.mxu0
      %v469 = vadd.f32 %v217, %v468
      %v470 = vpop.f32.mrf.mxu0
      %471 = vmatprep.mubr.bf16.mxu0 0
      %472 = vmatmul.mubr.bf16.gmra.mxu0 %v343
      %v473 = vpop.f32.mrf.mxu0
      %v474 = vadd.f32 %v217, %v473
      %v475 = vpop.f32.mrf.mxu0
      %v476 = vpop.f32.mrf.mxu0
      %v477 = vadd.f32 %v217, %v476
      %v478 = vpop.f32.mrf.mxu0
      %479 = vmatprep.mubr.bf16.mxu0 0
      %480 = vmatmul.mubr.bf16.gmra.mxu0 %v346
      %v481 = vpop.f32.mrf.mxu0
      %v482 = vadd.f32 %v217, %v481
      %v483 = vpop.f32.mrf.mxu0
      %v484 = vpop.f32.mrf.mxu0
      %v485 = vadd.f32 %v217, %v484
      %v486 = vpop.f32.mrf.mxu0
      %487 = vmatprep.mubr.bf16.mxu0 0
      %488 = vmatmul.mubr.bf16.gmra.mxu0 %v349
      %v489 = vpop.f32.mrf.mxu0
      %v490 = vadd.f32 %v217, %v489
      %v491 = vpop.f32.mrf.mxu0
      %v492 = vpop.f32.mrf.mxu0
      %v493 = vadd.f32 %v217, %v492
      %v494 = vpop.f32.mrf.mxu0
      %495 = vmatprep.mubr.bf16.mxu0 0
      %496 = vmatmul.mubr.bf16.gmra.mxu0 %v352
      %v497 = vpop.f32.mrf.mxu0
      %v498 = vadd.f32 %v217, %v497
      %v499 = vpop.f32.mrf.mxu0
      %v500 = vpop.f32.mrf.mxu0
      %v501 = vadd.f32 %v217, %v500
      %v502 = vpop.f32.mrf.mxu0
      %503 = vmatprep.mubr.bf16.mxu0 0
      %504 = vmatmul.mubr.bf16.gmra.mxu0 %v355
      %v505 = vpop.f32.mrf.mxu0
      %v506 = vadd.f32 %v217, %v505
      %v507 = vpop.f32.mrf.mxu0
      %v508 = vpop.f32.mrf.mxu0
      %v509 = vadd.f32 %v217, %v508
      %v510 = vpop.f32.mrf.mxu0
      %511 = vmatprep.mubr.bf16.mxu0 0
      %512 = vmatmul.mubr.bf16.gmra.mxu0 %v358
      %v513 = vpop.f32.mrf.mxu0
      %v514 = vadd.f32 %v217, %v513
      %v515 = vpop.f32.mrf.mxu0
      %v516 = vpop.f32.mrf.mxu0
      %v517 = vadd.f32 %v217, %v516
      %v518 = vpop.f32.mrf.mxu0
      %519 = vmatprep.mubr.bf16.mxu0 0
      %520 = vmatmul.mubr.bf16.gmra.mxu0 %v361
      %v521 = vpop.f32.mrf.mxu0
      %v522 = vadd.f32 %v217, %v521
      %v523 = vpop.f32.mrf.mxu0
      %v524 = vpop.f32.mrf.mxu0
      %v525 = vadd.f32 %v217, %v524
      %v526 = vpop.f32.mrf.mxu0
      %527 = vdwg.mxu0
      %vm528 = vcmp.gt.f32.partialorder %v402, 0.0
      %vm529 = vcmp.gt.f32.partialorder %v405, 0.0
      %vm530 = vcmp.gt.f32.partialorder %v410, 0.0
      %vm531 = vcmp.gt.f32.partialorder %v413, 0.0
      %vm532 = vcmp.gt.f32.partialorder %v418, 0.0
      %vm533 = vcmp.gt.f32.partialorder %v421, 0.0
      %vm534 = vcmp.gt.f32.partialorder %v426, 0.0
      %vm535 = vcmp.gt.f32.partialorder %v429, 0.0
      %vm536 = vcmp.gt.f32.partialorder %v434, 0.0
      %vm537 = vcmp.gt.f32.partialorder %v437, 0.0
      %vm538 = vcmp.gt.f32.partialorder %v442, 0.0
      %vm539 = vcmp.gt.f32.partialorder %v445, 0.0
      %vm540 = vcmp.gt.f32.partialorder %v450, 0.0
      %vm541 = vcmp.gt.f32.partialorder %v453, 0.0
      %vm542 = vcmp.gt.f32.partialorder %v458, 0.0
      %vm543 = vcmp.gt.f32.partialorder %v461, 0.0
      %vm544 = vcmp.gt.f32.partialorder %v466, 0.0
      %vm545 = vcmp.gt.f32.partialorder %v469, 0.0
      %vm546 = vcmp.gt.f32.partialorder %v474, 0.0
      %vm547 = vcmp.gt.f32.partialorder %v477, 0.0
      %vm548 = vcmp.gt.f32.partialorder %v482, 0.0
      %vm549 = vcmp.gt.f32.partialorder %v485, 0.0
      %vm550 = vcmp.gt.f32.partialorder %v490, 0.0
      %vm551 = vcmp.gt.f32.partialorder %v493, 0.0
      %vm552 = vcmp.gt.f32.partialorder %v498, 0.0
      %vm553 = vcmp.gt.f32.partialorder %v501, 0.0
      %vm554 = vcmp.gt.f32.partialorder %v506, 0.0
      %vm555 = vcmp.gt.f32.partialorder %v509, 0.0
      %vm556 = vcmp.gt.f32.partialorder %v514, 0.0
      %vm557 = vcmp.gt.f32.partialorder %v517, 0.0
      %vm558 = vcmp.gt.f32.partialorder %v522, 0.0
      %vm559 = vcmp.gt.f32.partialorder %v525, 0.0
      %v560 = vmul.f32 %v402, 0.1
      %v561 = vmul.f32 %v405, 0.1
      %v562 = vmul.f32 %v410, 0.1
      %v563 = vmul.f32 %v413, 0.1
      %v564 = vmul.f32 %v418, 0.1
      %v565 = vmul.f32 %v421, 0.1
      %v566 = vmul.f32 %v426, 0.1
      %v567 = vmul.f32 %v429, 0.1
      %v568 = vmul.f32 %v434, 0.1
      %v569 = vmul.f32 %v437, 0.1
      %v570 = vmul.f32 %v442, 0.1
      %v571 = vmul.f32 %v445, 0.1
      %v572 = vmul.f32 %v450, 0.1
      %v573 = vmul.f32 %v453, 0.1
      %v574 = vmul.f32 %v458, 0.1
      %v575 = vmul.f32 %v461, 0.1
      %v576 = vmul.f32 %v466, 0.1
      %v577 = vmul.f32 %v469, 0.1
      %v578 = vmul.f32 %v474, 0.1
      %v579 = vmul.f32 %v477, 0.1
      %v580 = vmul.f32 %v482, 0.1
      %v581 = vmul.f32 %v485, 0.1
      %v582 = vmul.f32 %v490, 0.1
      %v583 = vmul.f32 %v493, 0.1
      %v584 = vmul.f32 %v498, 0.1
      %v585 = vmul.f32 %v501, 0.1
      %v586 = vmul.f32 %v506, 0.1
      %v587 = vmul.f32 %v509, 0.1
      %v588 = vmul.f32 %v514, 0.1
      %v589 = vmul.f32 %v517, 0.1
      %v590 = vmul.f32 %v522, 0.1
      %v591 = vmul.f32 %v525, 0.1
      %v592 = vsel %vm528, %v402, %v560
      %v593 = vsel %vm529, %v405, %v561
      %v594 = vsel %vm530, %v410, %v562
      %v595 = vsel %vm531, %v413, %v563
      %v596 = vsel %vm532, %v418, %v564
      %v597 = vsel %vm533, %v421, %v565
      %v598 = vsel %vm534, %v426, %v566
      %v599 = vsel %vm535, %v429, %v567
      %v600 = vsel %vm536, %v434, %v568
      %v601 = vsel %vm537, %v437, %v569
      %v602 = vsel %vm538, %v442, %v570
      %v603 = vsel %vm539, %v445, %v571
      %v604 = vsel %vm540, %v450, %v572
      %v605 = vsel %vm541, %v453, %v573
      %v606 = vsel %vm542, %v458, %v574
      %v607 = vsel %vm543, %v461, %v575
      %v608 = vsel %vm544, %v466, %v576
      %v609 = vsel %vm545, %v469, %v577
      %v610 = vsel %vm546, %v474, %v578
      %v611 = vsel %vm547, %v477, %v579
      %v612 = vsel %vm548, %v482, %v580
      %v613 = vsel %vm549, %v485, %v581
      %v614 = vsel %vm550, %v490, %v582
      %v615 = vsel %vm551, %v493, %v583
      %v616 = vsel %vm552, %v498, %v584
      %v617 = vsel %vm553, %v501, %v585
      %v618 = vsel %vm554, %v506, %v586
      %v619 = vsel %vm555, %v509, %v587
      %v620 = vsel %vm556, %v514, %v588
      %v621 = vsel %vm557, %v517, %v589
      %v622 = vsel %vm558, %v522, %v590
      %v623 = vsel %vm559, %v525, %v591
      %v624 = vpack.c.bf16 %v593, %v592
      %v625 = vpack.c.bf16 %v595, %v594
      %v626 = vpack.c.bf16 %v597, %v596
      %v627 = vpack.c.bf16 %v599, %v598
      %v628 = vpack.c.bf16 %v601, %v600
      %v629 = vpack.c.bf16 %v603, %v602
      %v630 = vpack.c.bf16 %v605, %v604
      %v631 = vpack.c.bf16 %v607, %v606
      %v632 = vpack.c.bf16 %v609, %v608
      %v633 = vpack.c.bf16 %v611, %v610
      %v634 = vpack.c.bf16 %v613, %v612
      %v635 = vpack.c.bf16 %v615, %v614
      %v636 = vpack.c.bf16 %v617, %v616
      %v637 = vpack.c.bf16 %v619, %v618
      %v638 = vpack.c.bf16 %v621, %v620
      %v639 = vpack.c.bf16 %v623, %v622
      %v656 = vunpack.c.l.b16 %v624
      %v657 = vunpack.c.h.b16 %v624
      %v658 = vunpack.c.l.b16 %v625
      %v659 = vunpack.c.h.b16 %v625
      %v660 = vunpack.c.l.b16 %v626
      %v661 = vunpack.c.h.b16 %v626
      %v662 = vunpack.c.l.b16 %v627
      %v663 = vunpack.c.h.b16 %v627
      %v664 = vunpack.c.l.b16 %v628
      %v665 = vunpack.c.h.b16 %v628
      %v666 = vunpack.c.l.b16 %v629
      %v667 = vunpack.c.h.b16 %v629
      %v668 = vunpack.c.l.b16 %v630
      %v669 = vunpack.c.h.b16 %v630
      %v670 = vunpack.c.l.b16 %v631
      %v671 = vunpack.c.h.b16 %v631
      %v672 = vunpack.c.l.b16 %v632
      %v673 = vunpack.c.h.b16 %v632
      %v674 = vunpack.c.l.b16 %v633
      %v675 = vunpack.c.h.b16 %v633
      %v676 = vunpack.c.l.b16 %v634
      %v677 = vunpack.c.h.b16 %v634
      %v678 = vunpack.c.l.b16 %v635
      %v679 = vunpack.c.h.b16 %v635
      %v680 = vunpack.c.l.b16 %v636
      %v681 = vunpack.c.h.b16 %v636
      %v682 = vunpack.c.l.b16 %v637
      %v683 = vunpack.c.h.b16 %v637
      %v684 = vunpack.c.l.b16 %v638
      %v685 = vunpack.c.h.b16 %v638
      %v686 = vunpack.c.l.b16 %v639
      %v687 = vunpack.c.h.b16 %v639
      %v688 = vpack.c.b16 %v656, %v656
      %v689 = vpack.c.b16 %v657, %v657
      %v690 = vpack.c.b16 %v658, %v658
      %v691 = vpack.c.b16 %v659, %v659
      %v692 = vpack.c.b16 %v660, %v660
      %v693 = vpack.c.b16 %v661, %v661
      %v694 = vpack.c.b16 %v662, %v662
      %v695 = vpack.c.b16 %v663, %v663
      %v696 = vpack.c.b16 %v664, %v664
      %v697 = vpack.c.b16 %v665, %v665
      %v698 = vpack.c.b16 %v666, %v666
      %v699 = vpack.c.b16 %v667, %v667
      %v700 = vpack.c.b16 %v668, %v668
      %v701 = vpack.c.b16 %v669, %v669
      %v702 = vpack.c.b16 %v670, %v670
      %v703 = vpack.c.b16 %v671, %v671
      %v704 = vpack.c.b16 %v672, %v672
      %v705 = vpack.c.b16 %v673, %v673
      %v706 = vpack.c.b16 %v674, %v674
      %v707 = vpack.c.b16 %v675, %v675
      %v708 = vpack.c.b16 %v676, %v676
      %v709 = vpack.c.b16 %v677, %v677
      %v710 = vpack.c.b16 %v678, %v678
      %v711 = vpack.c.b16 %v679, %v679
      %v712 = vpack.c.b16 %v680, %v680
      %v713 = vpack.c.b16 %v681, %v681
      %v714 = vpack.c.b16 %v682, %v682
      %v715 = vpack.c.b16 %v683, %v683
      %v716 = vpack.c.b16 %v684, %v684
      %v717 = vpack.c.b16 %v685, %v685
      %v718 = vpack.c.b16 %v686, %v686
      %v719 = vpack.c.b16 %v687, %v687
      %752 = vst [vmem:[%s172] sm:$0xf] %v688
      %753 = vst [vmem:[%s172 + $0x4] sm:$0xf] %v689
      %754 = vst [vmem:[%s172 + $0x8] sm:$0xf] %v690
      %755 = vst [vmem:[%s172 + $0xc] sm:$0xf] %v691
      %756 = vst [vmem:[%s172 + $0x10] sm:$0xf] %v692
      %757 = vst [vmem:[%s172 + $0x14] sm:$0xf] %v693
      %758 = vst [vmem:[%s172 + $0x18] sm:$0xf] %v694
      %759 = vst [vmem:[%s172 + $0x1c] sm:$0xf] %v695
      %760 = vst [vmem:[%s172 + $0x20] sm:$0xf] %v696
      %761 = vst [vmem:[%s172 + $0x24] sm:$0xf] %v697
      %762 = vst [vmem:[%s172 + $0x28] sm:$0xf] %v698
      %763 = vst [vmem:[%s172 + $0x2c] sm:$0xf] %v699
      %764 = vst [vmem:[%s172 + $0x30] sm:$0xf] %v700
      %765 = vst [vmem:[%s172 + $0x34] sm:$0xf] %v701
      %766 = vst [vmem:[%s172 + $0x38] sm:$0xf] %v702
      %767 = vst [vmem:[%s172 + $0x3c] sm:$0xf] %v703
      %768 = vst [vmem:[%s172 + $0x40] sm:$0xf] %v704
      %769 = vst [vmem:[%s172 + $0x44] sm:$0xf] %v705
      %770 = vst [vmem:[%s172 + $0x48] sm:$0xf] %v706
      %771 = vst [vmem:[%s172 + $0x4c] sm:$0xf] %v707
      %772 = vst [vmem:[%s172 + $0x50] sm:$0xf] %v708
      %773 = vst [vmem:[%s172 + $0x54] sm:$0xf] %v709
      %774 = vst [vmem:[%s172 + $0x58] sm:$0xf] %v710
      %775 = vst [vmem:[%s172 + $0x5c] sm:$0xf] %v711
      %776 = vst [vmem:[%s172 + $0x60] sm:$0xf] %v712
      %777 = vst [vmem:[%s172 + $0x64] sm:$0xf] %v713
      %778 = vst [vmem:[%s172 + $0x68] sm:$0xf] %v714
      %779 = vst [vmem:[%s172 + $0x6c] sm:$0xf] %v715
      %780 = vst [vmem:[%s172 + $0x70] sm:$0xf] %v716
      %781 = vst [vmem:[%s172 + $0x74] sm:$0xf] %v717
      %782 = vst [vmem:[%s172 + $0x78] sm:$0xf] %v718
      %783 = vst [vmem:[%s172 + $0x7c] sm:$0xf] %v719
      %s784 = smul.u32 32, %s14
      %p785 = scmp.lt.s32.totalorder %s784, 63
      %s786 = scalar_select %p785, %s784, 63
      %s787 = smul.addr %s786, 4
      %s788 = scalar_lea.vmem %s3, %s787
      // Predicated region
      $region33: #{forward.76} parent=31 // pred_check
        %p789 = pneg %p100
      $region34: #{forward.76} parent=31 // pred_check_branch
        %791 = sbr.rel (%p789) target = $region36
      $region35: #{forward.76} parent=31 // pred_region
        %s792 = smul.u32 32, %s14
      $region36: #{forward.76} parent=31 // pred_fallthru
        _
    $region32: #{forward.76} parent=5 // pred_fallthru
      _
    %p793 = scmp.le.s32.totalorder 2, %s9
    // Predicated region
    $region37: #{forward.76} parent=5 // pred_check
      %p794 = pneg %p793
    $region38: #{forward.76} parent=5 // pred_check_branch
      %796 = sbr.rel (%p794) target = $region40
    $region39: #{forward.76} parent=5 // pred_region
      %s797 = ssub.s32 %s9, 2
      // Predicated region
      $region41: #{forward.76} parent=39 // pred_check
        %p798 = pneg %p106
      $region42: #{forward.76} parent=39 // pred_check_branch
        %800 = sbr.rel (%p798) target = $region44
      $region43: #{forward.76} parent=39 // pred_region
        %s801 = smul.u32 32, %s15
        %p802 = scmp.lt.s32.totalorder %s801, 63
        %s803 = scalar_select %p802, %s801, 63
        %s804 = smul.addr %s803, 4
        %s805 = scalar_lea.vmem %s3, %s804
      $region44: #{forward.76} parent=39 // pred_fallthru
        _
    $region40: #{forward.76} parent=5 // pred_fallthru
      _
  $region6: #{forward.76} parent=0 // loop_footer
    %s13 = sadd.s32 1, %s9
  $region7: #{forward.76} parent=0 // loop_footer_branch
    %8 = sbr.rel target = $region3
  $region8: #{forward.76} parent=0 // loop_exit
    _

// kernel: forward.75
$region0: #{forward.75}
  #allocation0 [shape = 'u32[]', space=smem, size = 0x4, offset = 0x4, fixed_abs, tag = 'smem constant byte address 0x4 - core index']
  #allocation1 [shape = 'u32[144,128]{1,0:T(1,128)}', space=vmem, size = 0x12000, scoped, tag = 'internal scratch']
  %s0 = inlined_call_operand.vmem [shape: bf16[2048,9], index: 0, kind: input, shape index: {}]
  %s1 = inlined_call_operand.vmem [shape: bf16[9,128], index: 1, kind: input, shape index: {}]
  %s2 = inlined_call_operand.vmem [shape: f32[1,128], index: 2, kind: input, shape index: {}]
  %s3 = inlined_call_operand.vmem [shape: bf16[2048,128], index: 3, kind: output, shape index: {}]
  %s4 = sld [smem:[#allocation0]]
  $region45: #{forward.75} parent=0
    _
  %s6 = ssub.s32 1, %s4
  %s7 = scalar_select 0, %s6, %s4
  loop: start=0, step=1, limit=4
  $region2: #{forward.75} parent=0 // loop_pre_header
    _
  $region3: #{forward.75} parent=0 // loop_header
    %s9 = sphi 0, %s13
    %p10 = scmp.ge.s32.totalorder %s9, 4
    %s19 = sphi 0, %s21
    %s22 = sphi 0, %s19
    %s23 = sphi 0, %s22
    %s39 = sphi 0, %s23
    %s43 = sphi 0, %s43
    %s45 = sphi 0, %s43
    %s46 = sphi 0, %s45
    %s60 = sphi 0, %s46
    %s64 = sphi 0, %s64
    %s66 = sphi 0, %s64
    %s67 = sphi 0, %s66
    %s81 = sphi 0, %s67
    %s87 = sphi 0, %s89
    %s90 = sphi 0, %s87
    %s91 = sphi 0, %s90
    %s107 = sphi 0, %s91
  $region4: #{forward.75} parent=0 // loop_header_branch
    %12 = sbr.rel (%p10) target = $region8
  $region5: #{forward.75} parent=0 // loop_body
    %s14 = ssub.s32 %s9, 1
    %s15 = ssub.s32 %s9, 2
    %s16 = sadd.s32 %s9, 1
    %s17 = ssub.s32 %s9, %s16
    %p18 = scmp.eq.s32.totalorder %s17, 0
    %s20 = sadd.s32 %s19, 1
    %s21 = scalar_select %p18, %s19, %s20
    %p24 = pneg %p18
    %p25 = scmp.eq.s32.totalorder %s9, 1
    %p26 = por %p24, %p25
    %p27 = scmp.ne.s32.totalorder %s19, %s22
    %p28 = scmp.eq.s32.totalorder %s9, 0
    %p29 = por %p27, %p28
    %p30 = scmp.ne.s32.totalorder %s19, %s22
    %p31 = scmp.eq.s32.totalorder %s14, 1
    %p32 = por %p30, %p31
    %p33 = scmp.ne.s32.totalorder %s22, %s23
    %p34 = scmp.eq.s32.totalorder %s14, 0
    %p35 = por %p33, %p34
    %p36 = scmp.ne.s32.totalorder %s22, %s23
    %p37 = scmp.eq.s32.totalorder %s15, 1
    %p38 = por %p36, %p37
    %p40 = scmp.ne.s32.totalorder %s23, %s39
    %p41 = scmp.eq.s32.totalorder %s15, 0
    %p42 = por %p40, %p41
    %s44 = sadd.s32 %s43, 1
    %p47 = scmp.eq.s32.totalorder %s9, 1
    %p48 = scmp.ne.s32.totalorder %s43, %s45
    %p49 = scmp.eq.s32.totalorder %s9, 0
    %p50 = por %p48, %p49
    %p51 = scmp.ne.s32.totalorder %s43, %s45
    %p52 = scmp.eq.s32.totalorder %s14, 1
    %p53 = por %p51, %p52
    %p54 = scmp.ne.s32.totalorder %s45, %s46
    %p55 = scmp.eq.s32.totalorder %s14, 0
    %p56 = por %p54, %p55
    %p57 = scmp.ne.s32.totalorder %s45, %s46
    %p58 = scmp.eq.s32.totalorder %s15, 1
    %p59 = por %p57, %p58
    %p61 = scmp.ne.s32.totalorder %s46, %s60
    %p62 = scmp.eq.s32.totalorder %s15, 0
    %p63 = por %p61, %p62
    %s65 = sadd.s32 %s64, 1
    %p68 = scmp.eq.s32.totalorder %s9, 1
    %p69 = scmp.ne.s32.totalorder %s64, %s66
    %p70 = scmp.eq.s32.totalorder %s9, 0
    %p71 = por %p69, %p70
    %p72 = scmp.ne.s32.totalorder %s64, %s66
    %p73 = scmp.eq.s32.totalorder %s14, 1
    %p74 = por %p72, %p73
    %p75 = scmp.ne.s32.totalorder %s66, %s67
    %p76 = scmp.eq.s32.totalorder %s14, 0
    %p77 = por %p75, %p76
    %p78 = scmp.ne.s32.totalorder %s66, %s67
    %p79 = scmp.eq.s32.totalorder %s15, 1
    %p80 = por %p78, %p79
    %p82 = scmp.ne.s32.totalorder %s67, %s81
    %p83 = scmp.eq.s32.totalorder %s15, 0
    %p84 = por %p82, %p83
    %s85 = ssub.s32 %s9, %s16
    %p86 = scmp.eq.s32.totalorder %s85, 0
    %s88 = sadd.s32 %s87, 1
    %s89 = scalar_select %p86, %s87, %s88
    %p92 = pneg %p86
    %p93 = scmp.eq.s32.totalorder %s9, 1
    %p94 = por %p92, %p93
    %p95 = scmp.ne.s32.totalorder %s87, %s90
    %p96 = scmp.eq.s32.totalorder %s9, 0
    %p97 = por %p95, %p96
    %p98 = scmp.ne.s32.totalorder %s87, %s90
    %p99 = scmp.eq.s32.totalorder %s14, 1
    %p100 = por %p98, %p99
    %p101 = scmp.ne.s32.totalorder %s90, %s91
    %p102 = scmp.eq.s32.totalorder %s14, 0
    %p103 = por %p101, %p102
    %p104 = scmp.ne.s32.totalorder %s90, %s91
    %p105 = scmp.eq.s32.totalorder %s15, 1
    %p106 = por %p104, %p105
    %p108 = scmp.ne.s32.totalorder %s91, %s107
    %p109 = scmp.eq.s32.totalorder %s15, 0
    %p110 = por %p108, %p109
    %p111 = scmp.le.s32.totalorder 1, %s9
    %p112 = scmp.lt.s32.totalorder %s9, 3
    %p113 = pnand %p111, %p112
    %p114 = pneg %p113
    // Predicated region
    $region9: #{forward.75} parent=5 // pred_check
      _
    $region10: #{forward.75} parent=5 // pred_check_branch
      %116 = sbr.rel (%p113) target = $region12
    $region11: #{forward.75} parent=5 // pred_region
      %s117 = ssub.s32 %s9, 1
      // Predicated region
      $region13: #{forward.75} parent=11 // pred_check
        %p118 = pneg %p56
      $region14: #{forward.75} parent=11 // pred_check_branch
        %120 = sbr.rel (%p118) target = $region16
      $region15: #{forward.75} parent=11 // pred_region
        _
      $region16: #{forward.75} parent=11 // pred_fallthru
        _
      // Predicated region
      $region17: #{forward.75} parent=11 // pred_check
        %p121 = pneg %p77
      $region18: #{forward.75} parent=11 // pred_check_branch
        %123 = sbr.rel (%p121) target = $region20
      $region19: #{forward.75} parent=11 // pred_region
        _
      $region20: #{forward.75} parent=11 // pred_fallthru
        _
    $region12: #{forward.75} parent=5 // pred_fallthru
      _
    %p124 = scmp.lt.s32.totalorder %s9, 2
    // Predicated region
    $region21: #{forward.75} parent=5 // pred_check
      %p125 = pneg %p124
    $region22: #{forward.75} parent=5 // pred_check_branch
      %127 = sbr.rel (%p125) target = $region24
    $region23: #{forward.75} parent=5 // pred_region
      // Predicated region
      $region25: #{forward.75} parent=23 // pred_check
        %p128 = pneg %p29
      $region26: #{forward.75} parent=23 // pred_check_branch
        %130 = sbr.rel (%p128) target = $region28
      $region27: #{forward.75} parent=23 // pred_region
        %s131 = smul.u32 128, %s9
        %p132 = scmp.lt.s32.totalorder %s131, 255
        %s133 = scalar_select %p132, %s131, 255
        %s134 = smul.addr %s133, 4
        %s135 = scalar_lea.vmem %s0, %s134
        %s136 = smul.u32 128, %s9
      $region28: #{forward.75} parent=23 // pred_fallthru
        _
    $region24: #{forward.75} parent=5 // pred_fallthru
      _
    %p137 = scmp.le.s32.totalorder 1, %s9
    %p138 = scmp.lt.s32.totalorder %s9, 3
    %p139 = pnand %p137, %p138
    %p140 = pneg %p139
    // Predicated region
    $region29: #{forward.75} parent=5 // pred_check
      _
    $region30: #{forward.75} parent=5 // pred_check_branch
      %142 = sbr.rel (%p139) target = $region32
    $region31: #{forward.75} parent=5 // pred_region
      %s143 = ssub.s32 %s9, 1
      %s144 = smul.u32 128, %s14
      %p145 = scmp.lt.s32.totalorder %s144, 255
      %s146 = scalar_select %p145, %s144, 255
      %s147 = smul.addr %s146, 4
      %s148 = scalar_lea.vmem %s0, %s147
      %p149 = pneg %p35
      %p150 = pneg %p32
      %p151 = pneg %p56
      %p152 = pneg %p53
      %p153 = pneg %p77
      %p154 = pneg %p74
      %p155 = pneg %p103
      %p156 = pneg %p100
      %s157 = smul.u32 128, %s14
      %p158 = scmp.lt.s32.totalorder %s157, 255
      %s159 = scalar_select %p158, %s157, 255
      %s160 = smul.addr %s159, 4
      %s161 = scalar_lea.vmem %s3, %s160
      %s162 = smul.u32 128, %s14
      %p163 = scmp.lt.s32.totalorder %s162, 255
      %s164 = scalar_select %p163, %s162, 255
      %s165 = smul.addr %s164, 4
      %s166 = scalar_lea.vmem %s0, %s165
      %s167 = smul.u32 128, %s14
      %s168 = smul.u32 128, %s14
      %p169 = scmp.lt.s32.totalorder %s168, 255
      %s170 = scalar_select %p169, %s168, 255
      %s171 = smul.addr %s170, 4
      %s172 = scalar_lea.vmem %s3, %s171
      %s173 = smul.u32 128, %s14
      %v175 = vld [vmem:[%s166] sm:$0xf]
      %v176 = vld [vmem:[%s166 + $0x4] sm:$0xf]
      %v177 = vld [vmem:[%s166 + $0x8] sm:$0xf]
      %v178 = vld [vmem:[%s166 + $0xc] sm:$0xf]
      %v179 = vld [vmem:[%s166 + $0x10] sm:$0xf]
      %v180 = vld [vmem:[%s166 + $0x14] sm:$0xf]
      %v181 = vld [vmem:[%s166 + $0x18] sm:$0xf]
      %v182 = vld [vmem:[%s166 + $0x1c] sm:$0xf]
      %v183 = vld [vmem:[%s166 + $0x20] sm:$0xf]
      %v184 = vld [vmem:[%s166 + $0x24] sm:$0xf]
      %v185 = vld [vmem:[%s166 + $0x28] sm:$0xf]
      %v186 = vld [vmem:[%s166 + $0x2c] sm:$0xf]
      %v187 = vld [vmem:[%s166 + $0x30] sm:$0xf]
      %v188 = vld [vmem:[%s166 + $0x34] sm:$0xf]
      %v189 = vld [vmem:[%s166 + $0x38] sm:$0xf]
      %v190 = vld [vmem:[%s166 + $0x3c] sm:$0xf]
      %v191 = vld [vmem:[%s166 + $0x40] sm:$0xf]
      %v192 = vld [vmem:[%s166 + $0x44] sm:$0xf]
      %v193 = vld [vmem:[%s166 + $0x48] sm:$0xf]
      %v194 = vld [vmem:[%s166 + $0x4c] sm:$0xf]
      %v195 = vld [vmem:[%s166 + $0x50] sm:$0xf]
      %v196 = vld [vmem:[%s166 + $0x54] sm:$0xf]
      %v197 = vld [vmem:[%s166 + $0x58] sm:$0xf]
      %v198 = vld [vmem:[%s166 + $0x5c] sm:$0xf]
      %v199 = vld [vmem:[%s166 + $0x60] sm:$0xf]
      %v200 = vld [vmem:[%s166 + $0x64] sm:$0xf]
      %v201 = vld [vmem:[%s166 + $0x68] sm:$0xf]
      %v202 = vld [vmem:[%s166 + $0x6c] sm:$0xf]
      %v203 = vld [vmem:[%s166 + $0x70] sm:$0xf]
      %v204 = vld [vmem:[%s166 + $0x74] sm:$0xf]
      %v205 = vld [vmem:[%s166 + $0x78] sm:$0xf]
      %v206 = vld [vmem:[%s166 + $0x7c] sm:$0xf]
      %v207 = vld [vmem:[%s166 + $0x80] sm:$0xf]
      %v208 = vld [vmem:[%s166 + $0x84] sm:$0xf]
      %v209 = vld [vmem:[%s166 + $0x88] sm:$0xf]
      %v210 = vld [vmem:[%s166 + $0x8c] sm:$0xf]
      %v211 = vld [vmem:[%s166 + $0x90] sm:$0xf]
      %v212 = vld [vmem:[%s166 + $0x94] sm:$0xf]
      %v213 = vld [vmem:[%s166 + $0x98] sm:$0xf]
      %v214 = vld [vmem:[%s166 + $0x9c] sm:$0xf]
      %v215 = vld [vmem:[%s166 + $0xa0] sm:$0xf]
      %v216 = vld [vmem:[%s166 + $0xa4] sm:$0xf]
      %v217 = vld [vmem:[%s166 + $0xa8] sm:$0xf]
      %v218 = vld [vmem:[%s166 + $0xac] sm:$0xf]
      %v219 = vld [vmem:[%s166 + $0xb0] sm:$0xf]
      %v220 = vld [vmem:[%s166 + $0xb4] sm:$0xf]
      %v221 = vld [vmem:[%s166 + $0xb8] sm:$0xf]
      %v222 = vld [vmem:[%s166 + $0xbc] sm:$0xf]
      %v223 = vld [vmem:[%s166 + $0xc0] sm:$0xf]
      %v224 = vld [vmem:[%s166 + $0xc4] sm:$0xf]
      %v225 = vld [vmem:[%s166 + $0xc8] sm:$0xf]
      %v226 = vld [vmem:[%s166 + $0xcc] sm:$0xf]
      %v227 = vld [vmem:[%s166 + $0xd0] sm:$0xf]
      %v228 = vld [vmem:[%s166 + $0xd4] sm:$0xf]
      %v229 = vld [vmem:[%s166 + $0xd8] sm:$0xf]
      %v230 = vld [vmem:[%s166 + $0xdc] sm:$0xf]
      %v231 = vld [vmem:[%s166 + $0xe0] sm:$0xf]
      %v232 = vld [vmem:[%s166 + $0xe4] sm:$0xf]
      %v233 = vld [vmem:[%s166 + $0xe8] sm:$0xf]
      %v234 = vld [vmem:[%s166 + $0xec] sm:$0xf]
      %v235 = vld [vmem:[%s166 + $0xf0] sm:$0xf]
      %v236 = vld [vmem:[%s166 + $0xf4] sm:$0xf]
      %v237 = vld [vmem:[%s166 + $0xf8] sm:$0xf]
      %v238 = vld [vmem:[%s166 + $0xfc] sm:$0xf]
      %v239 = vld [vmem:[%s166 + $0x100] sm:$0xf]
      %v240 = vld [vmem:[%s166 + $0x104] sm:$0xf]
      %v241 = vld [vmem:[%s166 + $0x108] sm:$0xf]
      %v242 = vld [vmem:[%s166 + $0x10c] sm:$0xf]
      %v243 = vld [vmem:[%s166 + $0x110] sm:$0xf]
      %v244 = vld [vmem:[%s166 + $0x114] sm:$0xf]
      %v245 = vld [vmem:[%s166 + $0x118] sm:$0xf]
      %v246 = vld [vmem:[%s166 + $0x11c] sm:$0xf]
      %v247 = vld [vmem:[%s166 + $0x120] sm:$0xf]
      %v248 = vld [vmem:[%s166 + $0x124] sm:$0xf]
      %v249 = vld [vmem:[%s166 + $0x128] sm:$0xf]
      %v250 = vld [vmem:[%s166 + $0x12c] sm:$0xf]
      %v251 = vld [vmem:[%s166 + $0x130] sm:$0xf]
      %v252 = vld [vmem:[%s166 + $0x134] sm:$0xf]
      %v253 = vld [vmem:[%s166 + $0x138] sm:$0xf]
      %v254 = vld [vmem:[%s166 + $0x13c] sm:$0xf]
      %v255 = vld [vmem:[%s166 + $0x140] sm:$0xf]
      %v256 = vld [vmem:[%s166 + $0x144] sm:$0xf]
      %v257 = vld [vmem:[%s166 + $0x148] sm:$0xf]
      %v258 = vld [vmem:[%s166 + $0x14c] sm:$0xf]
      %v259 = vld [vmem:[%s166 + $0x150] sm:$0xf]
      %v260 = vld [vmem:[%s166 + $0x154] sm:$0xf]
      %v261 = vld [vmem:[%s166 + $0x158] sm:$0xf]
      %v262 = vld [vmem:[%s166 + $0x15c] sm:$0xf]
      %v263 = vld [vmem:[%s166 + $0x160] sm:$0xf]
      %v264 = vld [vmem:[%s166 + $0x164] sm:$0xf]
      %v265 = vld [vmem:[%s166 + $0x168] sm:$0xf]
      %v266 = vld [vmem:[%s166 + $0x16c] sm:$0xf]
      %v267 = vld [vmem:[%s166 + $0x170] sm:$0xf]
      %v268 = vld [vmem:[%s166 + $0x174] sm:$0xf]
      %v269 = vld [vmem:[%s166 + $0x178] sm:$0xf]
      %v270 = vld [vmem:[%s166 + $0x17c] sm:$0xf]
      %v271 = vld [vmem:[%s166 + $0x180] sm:$0xf]
      %v272 = vld [vmem:[%s166 + $0x184] sm:$0xf]
      %v273 = vld [vmem:[%s166 + $0x188] sm:$0xf]
      %v274 = vld [vmem:[%s166 + $0x18c] sm:$0xf]
      %v275 = vld [vmem:[%s166 + $0x190] sm:$0xf]
      %v276 = vld [vmem:[%s166 + $0x194] sm:$0xf]
      %v277 = vld [vmem:[%s166 + $0x198] sm:$0xf]
      %v278 = vld [vmem:[%s166 + $0x19c] sm:$0xf]
      %v279 = vld [vmem:[%s166 + $0x1a0] sm:$0xf]
      %v280 = vld [vmem:[%s166 + $0x1a4] sm:$0xf]
      %v281 = vld [vmem:[%s166 + $0x1a8] sm:$0xf]
      %v282 = vld [vmem:[%s166 + $0x1ac] sm:$0xf]
      %v283 = vld [vmem:[%s166 + $0x1b0] sm:$0xf]
      %v284 = vld [vmem:[%s166 + $0x1b4] sm:$0xf]
      %v285 = vld [vmem:[%s166 + $0x1b8] sm:$0xf]
      %v286 = vld [vmem:[%s166 + $0x1bc] sm:$0xf]
      %v287 = vld [vmem:[%s166 + $0x1c0] sm:$0xf]
      %v288 = vld [vmem:[%s166 + $0x1c4] sm:$0xf]
      %v289 = vld [vmem:[%s166 + $0x1c8] sm:$0xf]
      %v290 = vld [vmem:[%s166 + $0x1cc] sm:$0xf]
      %v291 = vld [vmem:[%s166 + $0x1d0] sm:$0xf]
      %v292 = vld [vmem:[%s166 + $0x1d4] sm:$0xf]
      %v293 = vld [vmem:[%s166 + $0x1d8] sm:$0xf]
      %v294 = vld [vmem:[%s166 + $0x1dc] sm:$0xf]
      %v295 = vld [vmem:[%s166 + $0x1e0] sm:$0xf]
      %v296 = vld [vmem:[%s166 + $0x1e4] sm:$0xf]
      %v297 = vld [vmem:[%s166 + $0x1e8] sm:$0xf]
      %v298 = vld [vmem:[%s166 + $0x1ec] sm:$0xf]
      %v299 = vld [vmem:[%s166 + $0x1f0] sm:$0xf]
      %v300 = vld [vmem:[%s166 + $0x1f4] sm:$0xf]
      %v301 = vld [vmem:[%s166 + $0x1f8] sm:$0xf]
      %v302 = vld [vmem:[%s166 + $0x1fc] sm:$0xf]
      %v303 = vld [vmem:[%s1] sm:$0xf]
      %v304 = vld [vmem:[%s1 + $0x4] sm:$0x1]
      %v305 = vld [vmem:[%s2] sm:$0x1]
      %v307 = vlaneseq
      %v308 = vshrl.u32 %v307, 7
      %v309 = vsub.s32 0, %v308
      %v310 = vrot.slane %v305, %v309
      %v440 = vunpack.c.l.b16 %v175
      %v441 = vunpack.c.l.b16 %v176
      %v442 = vunpack.c.l.b16 %v177
      %v443 = vunpack.c.l.b16 %v178
      %v444 = vunpack.c.l.b16 %v179
      %v445 = vunpack.c.l.b16 %v180
      %v446 = vunpack.c.l.b16 %v181
      %v447 = vunpack.c.l.b16 %v182
      %v448 = vunpack.c.l.b16 %v183
      %v449 = vunpack.c.l.b16 %v184
      %v450 = vunpack.c.l.b16 %v185
      %v451 = vunpack.c.l.b16 %v186
      %v452 = vunpack.c.l.b16 %v187
      %v453 = vunpack.c.l.b16 %v188
      %v454 = vunpack.c.l.b16 %v189
      %v455 = vunpack.c.l.b16 %v190
      %v456 = vunpack.c.l.b16 %v191
      %v457 = vunpack.c.l.b16 %v192
      %v458 = vunpack.c.l.b16 %v193
      %v459 = vunpack.c.l.b16 %v194
      %v460 = vunpack.c.l.b16 %v195
      %v461 = vunpack.c.l.b16 %v196
      %v462 = vunpack.c.l.b16 %v197
      %v463 = vunpack.c.l.b16 %v198
      %v464 = vunpack.c.l.b16 %v199
      %v465 = vunpack.c.l.b16 %v200
      %v466 = vunpack.c.l.b16 %v201
      %v467 = vunpack.c.l.b16 %v202
      %v468 = vunpack.c.l.b16 %v203
      %v469 = vunpack.c.l.b16 %v204
      %v470 = vunpack.c.l.b16 %v205
      %v471 = vunpack.c.l.b16 %v206
      %v472 = vunpack.c.l.b16 %v207
      %v473 = vunpack.c.l.b16 %v208
      %v474 = vunpack.c.l.b16 %v209
      %v475 = vunpack.c.l.b16 %v210
      %v476 = vunpack.c.l.b16 %v211
      %v477 = vunpack.c.l.b16 %v212
      %v478 = vunpack.c.l.b16 %v213
      %v479 = vunpack.c.l.b16 %v214
      %v480 = vunpack.c.l.b16 %v215
      %v481 = vunpack.c.l.b16 %v216
      %v482 = vunpack.c.l.b16 %v217
      %v483 = vunpack.c.l.b16 %v218
      %v484 = vunpack.c.l.b16 %v219
      %v485 = vunpack.c.l.b16 %v220
      %v486 = vunpack.c.l.b16 %v221
      %v487 = vunpack.c.l.b16 %v222
      %v488 = vunpack.c.l.b16 %v223
      %v489 = vunpack.c.l.b16 %v224
      %v490 = vunpack.c.l.b16 %v225
      %v491 = vunpack.c.l.b16 %v226
      %v492 = vunpack.c.l.b16 %v227
      %v493 = vunpack.c.l.b16 %v228
      %v494 = vunpack.c.l.b16 %v229
      %v495 = vunpack.c.l.b16 %v230
      %v496 = vunpack.c.l.b16 %v231
      %v497 = vunpack.c.l.b16 %v232
      %v498 = vunpack.c.l.b16 %v233
      %v499 = vunpack.c.l.b16 %v234
      %v500 = vunpack.c.l.b16 %v235
      %v501 = vunpack.c.l.b16 %v236
      %v502 = vunpack.c.l.b16 %v237
      %v503 = vunpack.c.l.b16 %v238
      %v504 = vunpack.c.l.b16 %v239
      %v505 = vunpack.c.l.b16 %v240
      %v506 = vunpack.c.l.b16 %v241
      %v507 = vunpack.c.l.b16 %v242
      %v508 = vunpack.c.l.b16 %v243
      %v509 = vunpack.c.l.b16 %v244
      %v510 = vunpack.c.l.b16 %v245
      %v511 = vunpack.c.l.b16 %v246
      %v512 = vunpack.c.l.b16 %v247
      %v513 = vunpack.c.l.b16 %v248
      %v514 = vunpack.c.l.b16 %v249
      %v515 = vunpack.c.l.b16 %v250
      %v516 = vunpack.c.l.b16 %v251
      %v517 = vunpack.c.l.b16 %v252
      %v518 = vunpack.c.l.b16 %v253
      %v519 = vunpack.c.l.b16 %v254
      %v520 = vunpack.c.l.b16 %v255
      %v521 = vunpack.c.l.b16 %v256
      %v522 = vunpack.c.l.b16 %v257
      %v523 = vunpack.c.l.b16 %v258
      %v524 = vunpack.c.l.b16 %v259
      %v525 = vunpack.c.l.b16 %v260
      %v526 = vunpack.c.l.b16 %v261
      %v527 = vunpack.c.l.b16 %v262
      %v528 = vunpack.c.l.b16 %v263
      %v529 = vunpack.c.l.b16 %v264
      %v530 = vunpack.c.l.b16 %v265
      %v531 = vunpack.c.l.b16 %v266
      %v532 = vunpack.c.l.b16 %v267
      %v533 = vunpack.c.l.b16 %v268
      %v534 = vunpack.c.l.b16 %v269
      %v535 = vunpack.c.l.b16 %v270
      %v536 = vunpack.c.l.b16 %v271
      %v537 = vunpack.c.l.b16 %v272
      %v538 = vunpack.c.l.b16 %v273
      %v539 = vunpack.c.l.b16 %v274
      %v540 = vunpack.c.l.b16 %v275
      %v541 = vunpack.c.l.b16 %v276
      %v542 = vunpack.c.l.b16 %v277
      %v543 = vunpack.c.l.b16 %v278
      %v544 = vunpack.c.l.b16 %v279
      %v545 = vunpack.c.l.b16 %v280
      %v546 = vunpack.c.l.b16 %v281
      %v547 = vunpack.c.l.b16 %v282
      %v548 = vunpack.c.l.b16 %v283
      %v549 = vunpack.c.l.b16 %v284
      %v550 = vunpack.c.l.b16 %v285
      %v551 = vunpack.c.l.b16 %v286
      %v552 = vunpack.c.l.b16 %v287
      %v553 = vunpack.c.l.b16 %v288
      %v554 = vunpack.c.l.b16 %v289
      %v555 = vunpack.c.l.b16 %v290
      %v556 = vunpack.c.l.b16 %v291
      %v557 = vunpack.c.l.b16 %v292
      %v558 = vunpack.c.l.b16 %v293
      %v559 = vunpack.c.l.b16 %v294
      %v560 = vunpack.c.l.b16 %v295
      %v561 = vunpack.c.l.b16 %v296
      %v562 = vunpack.c.l.b16 %v297
      %v563 = vunpack.c.l.b16 %v298
      %v564 = vunpack.c.l.b16 %v299
      %v565 = vunpack.c.l.b16 %v300
      %v566 = vunpack.c.l.b16 %v301
      %v567 = vunpack.c.l.b16 %v302
      %v568 = vpack.c.b16 %v441, %v440
      %v569 = vpack.c.b16 %v443, %v442
      %v570 = vpack.c.b16 %v445, %v444
      %v571 = vpack.c.b16 %v447, %v446
      %v572 = vpack.c.b16 %v449, %v448
      %v573 = vpack.c.b16 %v451, %v450
      %v574 = vpack.c.b16 %v453, %v452
      %v575 = vpack.c.b16 %v455, %v454
      %v576 = vpack.c.b16 %v457, %v456
      %v577 = vpack.c.b16 %v459, %v458
      %v578 = vpack.c.b16 %v461, %v460
      %v579 = vpack.c.b16 %v463, %v462
      %v580 = vpack.c.b16 %v465, %v464
      %v581 = vpack.c.b16 %v467, %v466
      %v582 = vpack.c.b16 %v469, %v468
      %v583 = vpack.c.b16 %v471, %v470
      %v584 = vpack.c.b16 %v473, %v472
      %v585 = vpack.c.b16 %v475, %v474
      %v586 = vpack.c.b16 %v477, %v476
      %v587 = vpack.c.b16 %v479, %v478
      %v588 = vpack.c.b16 %v481, %v480
      %v589 = vpack.c.b16 %v483, %v482
      %v590 = vpack.c.b16 %v485, %v484
      %v591 = vpack.c.b16 %v487, %v486
      %v592 = vpack.c.b16 %v489, %v488
      %v593 = vpack.c.b16 %v491, %v490
      %v594 = vpack.c.b16 %v493, %v492
      %v595 = vpack.c.b16 %v495, %v494
      %v596 = vpack.c.b16 %v497, %v496
      %v597 = vpack.c.b16 %v499, %v498
      %v598 = vpack.c.b16 %v501, %v500
      %v599 = vpack.c.b16 %v503, %v502
      %v600 = vpack.c.b16 %v505, %v504
      %v601 = vpack.c.b16 %v507, %v506
      %v602 = vpack.c.b16 %v509, %v508
      %v603 = vpack.c.b16 %v511, %v510
      %v604 = vpack.c.b16 %v513, %v512
      %v605 = vpack.c.b16 %v515, %v514
      %v606 = vpack.c.b16 %v517, %v516
      %v607 = vpack.c.b16 %v519, %v518
      %v608 = vpack.c.b16 %v521, %v520
      %v609 = vpack.c.b16 %v523, %v522
      %v610 = vpack.c.b16 %v525, %v524
      %v611 = vpack.c.b16 %v527, %v526
      %v612 = vpack.c.b16 %v529, %v528
      %v613 = vpack.c.b16 %v531, %v530
      %v614 = vpack.c.b16 %v533, %v532
      %v615 = vpack.c.b16 %v535, %v534
      %v616 = vpack.c.b16 %v537, %v536
      %v617 = vpack.c.b16 %v539, %v538
      %v618 = vpack.c.b16 %v541, %v540
      %v619 = vpack.c.b16 %v543, %v542
      %v620 = vpack.c.b16 %v545, %v544
      %v621 = vpack.c.b16 %v547, %v546
      %v622 = vpack.c.b16 %v549, %v548
      %v623 = vpack.c.b16 %v551, %v550
      %v624 = vpack.c.b16 %v553, %v552
      %v625 = vpack.c.b16 %v555, %v554
      %v626 = vpack.c.b16 %v557, %v556
      %v627 = vpack.c.b16 %v559, %v558
      %v628 = vpack.c.b16 %v561, %v560
      %v629 = vpack.c.b16 %v563, %v562
      %v630 = vpack.c.b16 %v565, %v564
      %v631 = vpack.c.b16 %v567, %v566
      %v634 = vunpack.c.l.b16 %v303
      %v635 = vunpack.c.l.b16 %v304
      %v636 = vpack.c.b16 %v635, %v634
      %vm637 = vcmask 72704
      %v639 = vsel %vm637, %v568, 0
      %v642 = vsel %vm637, %v569, 0
      %v645 = vsel %vm637, %v570, 0
      %v648 = vsel %vm637, %v571, 0
      %v651 = vsel %vm637, %v572, 0
      %v654 = vsel %vm637, %v573, 0
      %v657 = vsel %vm637, %v574, 0
      %v660 = vsel %vm637, %v575, 0
      %v663 = vsel %vm637, %v576, 0
      %v666 = vsel %vm637, %v577, 0
      %v669 = vsel %vm637, %v578, 0
      %v672 = vsel %vm637, %v579, 0
      %v675 = vsel %vm637, %v580, 0
      %v678 = vsel %vm637, %v581, 0
      %v681 = vsel %vm637, %v582, 0
      %v684 = vsel %vm637, %v583, 0
      %v687 = vsel %vm637, %v584, 0
      %v690 = vsel %vm637, %v585, 0
      %v693 = vsel %vm637, %v586, 0
      %v696 = vsel %vm637, %v587, 0
      %v699 = vsel %vm637, %v588, 0
      %v702 = vsel %vm637, %v589, 0
      %v705 = vsel %vm637, %v590, 0
      %v708 = vsel %vm637, %v591, 0
      %v711 = vsel %vm637, %v592, 0
      %v714 = vsel %vm637, %v593, 0
      %v717 = vsel %vm637, %v594, 0
      %v720 = vsel %vm637, %v595, 0
      %v723 = vsel %vm637, %v596, 0
      %v726 = vsel %vm637, %v597, 0
      %v729 = vsel %vm637, %v598, 0
      %v732 = vsel %vm637, %v599, 0
      %v735 = vsel %vm637, %v600, 0
      %v738 = vsel %vm637, %v601, 0
      %v741 = vsel %vm637, %v602, 0
      %v744 = vsel %vm637, %v603, 0
      %v747 = vsel %vm637, %v604, 0
      %v750 = vsel %vm637, %v605, 0
      %v753 = vsel %vm637, %v606, 0
      %v756 = vsel %vm637, %v607, 0
      %v759 = vsel %vm637, %v608, 0
      %v762 = vsel %vm637, %v609, 0
      %v765 = vsel %vm637, %v610, 0
      %v768 = vsel %vm637, %v611, 0
      %v771 = vsel %vm637, %v612, 0
      %v774 = vsel %vm637, %v613, 0
      %v777 = vsel %vm637, %v614, 0
      %v780 = vsel %vm637, %v615, 0
      %v783 = vsel %vm637, %v616, 0
      %v786 = vsel %vm637, %v617, 0
      %v789 = vsel %vm637, %v618, 0
      %v792 = vsel %vm637, %v619, 0
      %v795 = vsel %vm637, %v620, 0
      %v798 = vsel %vm637, %v621, 0
      %v801 = vsel %vm637, %v622, 0
      %v804 = vsel %vm637, %v623, 0
      %v807 = vsel %vm637, %v624, 0
      %v810 = vsel %vm637, %v625, 0
      %v813 = vsel %vm637, %v626, 0
      %v816 = vsel %vm637, %v627, 0
      %v819 = vsel %vm637, %v628, 0
      %v822 = vsel %vm637, %v629, 0
      %v825 = vsel %vm637, %v630, 0
      %v828 = vsel %vm637, %v631, 0
      %vm830 = vcmask 1043456
      %vm831 = vcmask 1044480
      %v832 = vsel %vm830, 4294967295, 65535
      %v833 = vsel %vm831, %v832, 0
      %v835 = vand.u32 %v636, %v833
      %837 = vmatprep.subr.bf16.mxu0 0
      %838 = vmatpush1.bf16.msra.mxu0 0
      %839 = vmatprep.subr.bf16.mxu0 0
      %840 = vmatpush1.bf16.msra.mxu0 0
      %841 = vmatprep.subr.bf16.mxu0 0
      %842 = vmatpush1.bf16.msra.mxu0 0
      %843 = vmatprep.subr.bf16.mxu0 0
      %844 = vmatpush1.bf16.msra.mxu0 0
      %845 = vmatprep.subr.bf16.mxu0 0
      %846 = vmatpush1.bf16.msra.mxu0 0
      %847 = vmatprep.subr.bf16.mxu0 0
      %848 = vmatpush1.bf16.msra.mxu0 0
      %849 = vmatprep.subr.bf16.mxu0 0
      %850 = vmatpush1.bf16.msra.mxu0 0
      %851 = vmatprep.subr.bf16.mxu0 0
      %852 = vmatpush1.bf16.msra.mxu0 %v835
      %853 = vmatprep.subr.bf16.mxu0 0
      %854 = vmatpush2.bf16.msra.mxu0 0
      %855 = vmatprep.subr.bf16.mxu0 0
      %856 = vmatpush2.bf16.msra.mxu0 0
      %857 = vmatprep.subr.bf16.mxu0 0
      %858 = vmatpush2.bf16.msra.mxu0 0
      %859 = vmatprep.subr.bf16.mxu0 0
      %860 = vmatpush2.bf16.msra.mxu0 0
      %861 = vmatprep.subr.bf16.mxu0 0
      %862 = vmatpush2.bf16.msra.mxu0 0
      %863 = vmatprep.subr.bf16.mxu0 0
      %864 = vmatpush2.bf16.msra.mxu0 0
      %865 = vmatprep.subr.bf16.mxu0 0
      %866 = vmatpush2.bf16.msra.mxu0 0
      %867 = vmatprep.subr.bf16.mxu0 0
      %868 = vmatpush2.bf16.msra.mxu0 0
      %869 = vmatprep.mubr.bf16.mxu0 0
      %870 = vmatmul.mubr.bf16.gmra.mxu0 %v639
      %v871 = vpop.f32.mrf.mxu0
      %v872 = vadd.f32 %v310, %v871
      %v873 = vpop.f32.mrf.mxu0
      %v874 = vpop.f32.mrf.mxu0
      %v875 = vadd.f32 %v310, %v874
      %v876 = vpop.f32.mrf.mxu0
      %877 = vmatprep.mubr.bf16.mxu0 0
      %878 = vmatmul.mubr.bf16.gmra.mxu0 %v642
      %v879 = vpop.f32.mrf.mxu0
      %v880 = vadd.f32 %v310, %v879
      %v881 = vpop.f32.mrf.mxu0
      %v882 = vpop.f32.mrf.mxu0
      %v883 = vadd.f32 %v310, %v882
      %v884 = vpop.f32.mrf.mxu0
      %885 = vmatprep.mubr.bf16.mxu0 0
      %886 = vmatmul.mubr.bf16.gmra.mxu0 %v645
      %v887 = vpop.f32.mrf.mxu0
      %v888 = vadd.f32 %v310, %v887
      %v889 = vpop.f32.mrf.mxu0
      %v890 = vpop.f32.mrf.mxu0
      %v891 = vadd.f32 %v310, %v890
      %v892 = vpop.f32.mrf.mxu0
      %893 = vmatprep.mubr.bf16.mxu0 0
      %894 = vmatmul.mubr.bf16.gmra.mxu0 %v648
      %v895 = vpop.f32.mrf.mxu0
      %v896 = vadd.f32 %v310, %v895
      %v897 = vpop.f32.mrf.mxu0
      %v898 = vpop.f32.mrf.mxu0
      %v899 = vadd.f32 %v310, %v898
      %v900 = vpop.f32.mrf.mxu0
      %901 = vmatprep.mubr.bf16.mxu0 0
      %902 = vmatmul.mubr.bf16.gmra.mxu0 %v651
      %v903 = vpop.f32.mrf.mxu0
      %v904 = vadd.f32 %v310, %v903
      %v905 = vpop.f32.mrf.mxu0
      %v906 = vpop.f32.mrf.mxu0
      %v907 = vadd.f32 %v310, %v906
      %v908 = vpop.f32.mrf.mxu0
      %909 = vmatprep.mubr.bf16.mxu0 0
      %910 = vmatmul.mubr.bf16.gmra.mxu0 %v654
      %v911 = vpop.f32.mrf.mxu0
      %v912 = vadd.f32 %v310, %v911
      %v913 = vpop.f32.mrf.mxu0
      %v914 = vpop.f32.mrf.mxu0
      %v915 = vadd.f32 %v310, %v914
      %v916 = vpop.f32.mrf.mxu0
      %917 = vmatprep.mubr.bf16.mxu0 0
      %918 = vmatmul.mubr.bf16.gmra.mxu0 %v657
      %v919 = vpop.f32.mrf.mxu0
      %v920 = vadd.f32 %v310, %v919
      %v921 = vpop.f32.mrf.mxu0
      %v922 = vpop.f32.mrf.mxu0
      %v923 = vadd.f32 %v310, %v922
      %v924 = vpop.f32.mrf.mxu0
      %925 = vmatprep.mubr.bf16.mxu0 0
      %926 = vmatmul.mubr.bf16.gmra.mxu0 %v660
      %v927 = vpop.f32.mrf.mxu0
      %v928 = vadd.f32 %v310, %v927
      %v929 = vpop.f32.mrf.mxu0
      %v930 = vpop.f32.mrf.mxu0
      %v931 = vadd.f32 %v310, %v930
      %v932 = vpop.f32.mrf.mxu0
      %933 = vmatprep.mubr.bf16.mxu0 0
      %934 = vmatmul.mubr.bf16.gmra.mxu0 %v663
      %v935 = vpop.f32.mrf.mxu0
      %v936 = vadd.f32 %v310, %v935
      %v937 = vpop.f32.mrf.mxu0
      %v938 = vpop.f32.mrf.mxu0
      %v939 = vadd.f32 %v310, %v938
      %v940 = vpop.f32.mrf.mxu0
      %941 = vmatprep.mubr.bf16.mxu0 0
      %942 = vmatmul.mubr.bf16.gmra.mxu0 %v666
      %v943 = vpop.f32.mrf.mxu0
      %v944 = vadd.f32 %v310, %v943
      %v945 = vpop.f32.mrf.mxu0
      %v946 = vpop.f32.mrf.mxu0
      %v947 = vadd.f32 %v310, %v946
      %v948 = vpop.f32.mrf.mxu0
      %949 = vmatprep.mubr.bf16.mxu0 0
      %950 = vmatmul.mubr.bf16.gmra.mxu0 %v669
      %v951 = vpop.f32.mrf.mxu0
      %v952 = vadd.f32 %v310, %v951
      %v953 = vpop.f32.mrf.mxu0
      %v954 = vpop.f32.mrf.mxu0
      %v955 = vadd.f32 %v310, %v954
      %v956 = vpop.f32.mrf.mxu0
      %957 = vmatprep.mubr.bf16.mxu0 0
      %958 = vmatmul.mubr.bf16.gmra.mxu0 %v672
      %v959 = vpop.f32.mrf.mxu0
      %v960 = vadd.f32 %v310, %v959
      %v961 = vpop.f32.mrf.mxu0
      %v962 = vpop.f32.mrf.mxu0
      %v963 = vadd.f32 %v310, %v962
      %v964 = vpop.f32.mrf.mxu0
      %965 = vmatprep.mubr.bf16.mxu0 0
      %966 = vmatmul.mubr.bf16.gmra.mxu0 %v675
      %v967 = vpop.f32.mrf.mxu0
      %v968 = vadd.f32 %v310, %v967
      %v969 = vpop.f32.mrf.mxu0
      %v970 = vpop.f32.mrf.mxu0
      %v971 = vadd.f32 %v310, %v970
      %v972 = vpop.f32.mrf.mxu0
      %973 = vmatprep.mubr.bf16.mxu0 0
      %974 = vmatmul.mubr.bf16.gmra.mxu0 %v678
      %v975 = vpop.f32.mrf.mxu0
      %v976 = vadd.f32 %v310, %v975
      %v977 = vpop.f32.mrf.mxu0
      %v978 = vpop.f32.mrf.mxu0
      %v979 = vadd.f32 %v310, %v978
      %v980 = vpop.f32.mrf.mxu0
      %981 = vmatprep.mubr.bf16.mxu0 0
      %982 = vmatmul.mubr.bf16.gmra.mxu0 %v681
      %v983 = vpop.f32.mrf.mxu0
      %v984 = vadd.f32 %v310, %v983
      %v985 = vpop.f32.mrf.mxu0
      %v986 = vpop.f32.mrf.mxu0
      %v987 = vadd.f32 %v310, %v986
      %v988 = vpop.f32.mrf.mxu0
      %989 = vmatprep.mubr.bf16.mxu0 0
      %990 = vmatmul.mubr.bf16.gmra.mxu0 %v684
      %v991 = vpop.f32.mrf.mxu0
      %v992 = vadd.f32 %v310, %v991
      %v993 = vpop.f32.mrf.mxu0
      %v994 = vpop.f32.mrf.mxu0
      %v995 = vadd.f32 %v310, %v994
      %v996 = vpop.f32.mrf.mxu0
      %997 = vmatprep.mubr.bf16.mxu0 0
      %998 = vmatmul.mubr.bf16.gmra.mxu0 %v687
      %v999 = vpop.f32.mrf.mxu0
      %v1000 = vadd.f32 %v310, %v999
      %v1001 = vpop.f32.mrf.mxu0
      %v1002 = vpop.f32.mrf.mxu0
      %v1003 = vadd.f32 %v310, %v1002
      %v1004 = vpop.f32.mrf.mxu0
      %1005 = vmatprep.mubr.bf16.mxu0 0
      %1006 = vmatmul.mubr.bf16.gmra.mxu0 %v690
      %v1007 = vpop.f32.mrf.mxu0
      %v1008 = vadd.f32 %v310, %v1007
      %v1009 = vpop.f32.mrf.mxu0
      %v1010 = vpop.f32.mrf.mxu0
      %v1011 = vadd.f32 %v310, %v1010
      %v1012 = vpop.f32.mrf.mxu0
      %1013 = vmatprep.mubr.bf16.mxu0 0
      %1014 = vmatmul.mubr.bf16.gmra.mxu0 %v693
      %v1015 = vpop.f32.mrf.mxu0
      %v1016 = vadd.f32 %v310, %v1015
      %v1017 = vpop.f32.mrf.mxu0
      %v1018 = vpop.f32.mrf.mxu0
      %v1019 = vadd.f32 %v310, %v1018
      %v1020 = vpop.f32.mrf.mxu0
      %1021 = vmatprep.mubr.bf16.mxu0 0
      %1022 = vmatmul.mubr.bf16.gmra.mxu0 %v696
      %v1023 = vpop.f32.mrf.mxu0
      %v1024 = vadd.f32 %v310, %v1023
      %v1025 = vpop.f32.mrf.mxu0
      %v1026 = vpop.f32.mrf.mxu0
      %v1027 = vadd.f32 %v310, %v1026
      %v1028 = vpop.f32.mrf.mxu0
      %1029 = vmatprep.mubr.bf16.mxu0 0
      %1030 = vmatmul.mubr.bf16.gmra.mxu0 %v699
      %v1031 = vpop.f32.mrf.mxu0
      %v1032 = vadd.f32 %v310, %v1031
      %v1033 = vpop.f32.mrf.mxu0
      %v1034 = vpop.f32.mrf.mxu0
      %v1035 = vadd.f32 %v310, %v1034
      %v1036 = vpop.f32.mrf.mxu0
      %1037 = vmatprep.mubr.bf16.mxu0 0
      %1038 = vmatmul.mubr.bf16.gmra.mxu0 %v702
      %v1039 = vpop.f32.mrf.mxu0
      %v1040 = vadd.f32 %v310, %v1039
      %v1041 = vpop.f32.mrf.mxu0
      %v1042 = vpop.f32.mrf.mxu0
      %v1043 = vadd.f32 %v310, %v1042
      %v1044 = vpop.f32.mrf.mxu0
      %1045 = vmatprep.mubr.bf16.mxu0 0
      %1046 = vmatmul.mubr.bf16.gmra.mxu0 %v705
      %v1047 = vpop.f32.mrf.mxu0
      %v1048 = vadd.f32 %v310, %v1047
      %v1049 = vpop.f32.mrf.mxu0
      %v1050 = vpop.f32.mrf.mxu0
      %v1051 = vadd.f32 %v310, %v1050
      %v1052 = vpop.f32.mrf.mxu0
      %1053 = vmatprep.mubr.bf16.mxu0 0
      %1054 = vmatmul.mubr.bf16.gmra.mxu0 %v708
      %v1055 = vpop.f32.mrf.mxu0
      %v1056 = vadd.f32 %v310, %v1055
      %v1057 = vpop.f32.mrf.mxu0
      %v1058 = vpop.f32.mrf.mxu0
      %v1059 = vadd.f32 %v310, %v1058
      %v1060 = vpop.f32.mrf.mxu0
      %1061 = vmatprep.mubr.bf16.mxu0 0
      %1062 = vmatmul.mubr.bf16.gmra.mxu0 %v711
      %v1063 = vpop.f32.mrf.mxu0
      %v1064 = vadd.f32 %v310, %v1063
      %v1065 = vpop.f32.mrf.mxu0
      %v1066 = vpop.f32.mrf.mxu0
      %v1067 = vadd.f32 %v310, %v1066
      %v1068 = vpop.f32.mrf.mxu0
      %1069 = vmatprep.mubr.bf16.mxu0 0
      %1070 = vmatmul.mubr.bf16.gmra.mxu0 %v714
      %v1071 = vpop.f32.mrf.mxu0
      %v1072 = vadd.f32 %v310, %v1071
      %v1073 = vpop.f32.mrf.mxu0
      %v1074 = vpop.f32.mrf.mxu0
      %v1075 = vadd.f32 %v310, %v1074
      %v1076 = vpop.f32.mrf.mxu0
      %1077 = vmatprep.mubr.bf16.mxu0 0
      %1078 = vmatmul.mubr.bf16.gmra.mxu0 %v717
      %v1079 = vpop.f32.mrf.mxu0
      %v1080 = vadd.f32 %v310, %v1079
      %v1081 = vpop.f32.mrf.mxu0
      %v1082 = vpop.f32.mrf.mxu0
      %v1083 = vadd.f32 %v310, %v1082
      %v1084 = vpop.f32.mrf.mxu0
      %1085 = vmatprep.mubr.bf16.mxu0 0
      %1086 = vmatmul.mubr.bf16.gmra.mxu0 %v720
      %v1087 = vpop.f32.mrf.mxu0
      %v1088 = vadd.f32 %v310, %v1087
      %v1089 = vpop.f32.mrf.mxu0
      %v1090 = vpop.f32.mrf.mxu0
      %v1091 = vadd.f32 %v310, %v1090
      %v1092 = vpop.f32.mrf.mxu0
      %1093 = vmatprep.mubr.bf16.mxu0 0
      %1094 = vmatmul.mubr.bf16.gmra.mxu0 %v723
      %v1095 = vpop.f32.mrf.mxu0
      %v1096 = vadd.f32 %v310, %v1095
      %v1097 = vpop.f32.mrf.mxu0
      %v1098 = vpop.f32.mrf.mxu0
      %v1099 = vadd.f32 %v310, %v1098
      %v1100 = vpop.f32.mrf.mxu0
      %1101 = vmatprep.mubr.bf16.mxu0 0
      %1102 = vmatmul.mubr.bf16.gmra.mxu0 %v726
      %v1103 = vpop.f32.mrf.mxu0
      %v1104 = vadd.f32 %v310, %v1103
      %v1105 = vpop.f32.mrf.mxu0
      %v1106 = vpop.f32.mrf.mxu0
      %v1107 = vadd.f32 %v310, %v1106
      %v1108 = vpop.f32.mrf.mxu0
      %1109 = vmatprep.mubr.bf16.mxu0 0
      %1110 = vmatmul.mubr.bf16.gmra.mxu0 %v729
      %v1111 = vpop.f32.mrf.mxu0
      %v1112 = vadd.f32 %v310, %v1111
      %v1113 = vpop.f32.mrf.mxu0
      %v1114 = vpop.f32.mrf.mxu0
      %v1115 = vadd.f32 %v310, %v1114
      %v1116 = vpop.f32.mrf.mxu0
      %1117 = vmatprep.mubr.bf16.mxu0 0
      %1118 = vmatmul.mubr.bf16.gmra.mxu0 %v732
      %v1119 = vpop.f32.mrf.mxu0
      %v1120 = vadd.f32 %v310, %v1119
      %v1121 = vpop.f32.mrf.mxu0
      %v1122 = vpop.f32.mrf.mxu0
      %v1123 = vadd.f32 %v310, %v1122
      %v1124 = vpop.f32.mrf.mxu0
      %1125 = vmatprep.mubr.bf16.mxu0 0
      %1126 = vmatmul.mubr.bf16.gmra.mxu0 %v735
      %v1127 = vpop.f32.mrf.mxu0
      %v1128 = vadd.f32 %v310, %v1127
      %v1129 = vpop.f32.mrf.mxu0
      %v1130 = vpop.f32.mrf.mxu0
      %v1131 = vadd.f32 %v310, %v1130
      %v1132 = vpop.f32.mrf.mxu0
      %1133 = vmatprep.mubr.bf16.mxu0 0
      %1134 = vmatmul.mubr.bf16.gmra.mxu0 %v738
      %v1135 = vpop.f32.mrf.mxu0
      %v1136 = vadd.f32 %v310, %v1135
      %v1137 = vpop.f32.mrf.mxu0
      %v1138 = vpop.f32.mrf.mxu0
      %v1139 = vadd.f32 %v310, %v1138
      %v1140 = vpop.f32.mrf.mxu0
      %1141 = vmatprep.mubr.bf16.mxu0 0
      %1142 = vmatmul.mubr.bf16.gmra.mxu0 %v741
      %v1143 = vpop.f32.mrf.mxu0
      %v1144 = vadd.f32 %v310, %v1143
      %v1145 = vpop.f32.mrf.mxu0
      %v1146 = vpop.f32.mrf.mxu0
      %v1147 = vadd.f32 %v310, %v1146
      %v1148 = vpop.f32.mrf.mxu0
      %1149 = vmatprep.mubr.bf16.mxu0 0
      %1150 = vmatmul.mubr.bf16.gmra.mxu0 %v744
      %v1151 = vpop.f32.mrf.mxu0
      %v1152 = vadd.f32 %v310, %v1151
      %v1153 = vpop.f32.mrf.mxu0
      %v1154 = vpop.f32.mrf.mxu0
      %v1155 = vadd.f32 %v310, %v1154
      %v1156 = vpop.f32.mrf.mxu0
      %1157 = vmatprep.mubr.bf16.mxu0 0
      %1158 = vmatmul.mubr.bf16.gmra.mxu0 %v747
      %v1159 = vpop.f32.mrf.mxu0
      %v1160 = vadd.f32 %v310, %v1159
      %v1161 = vpop.f32.mrf.mxu0
      %v1162 = vpop.f32.mrf.mxu0
      %v1163 = vadd.f32 %v310, %v1162
      %v1164 = vpop.f32.mrf.mxu0
      %1165 = vmatprep.mubr.bf16.mxu0 0
      %1166 = vmatmul.mubr.bf16.gmra.mxu0 %v750
      %v1167 = vpop.f32.mrf.mxu0
      %v1168 = vadd.f32 %v310, %v1167
      %v1169 = vpop.f32.mrf.mxu0
      %v1170 = vpop.f32.mrf.mxu0
      %v1171 = vadd.f32 %v310, %v1170
      %v1172 = vpop.f32.mrf.mxu0
      %1173 = vmatprep.mubr.bf16.mxu0 0
      %1174 = vmatmul.mubr.bf16.gmra.mxu0 %v753
      %v1175 = vpop.f32.mrf.mxu0
      %v1176 = vadd.f32 %v310, %v1175
      %v1177 = vpop.f32.mrf.mxu0
      %v1178 = vpop.f32.mrf.mxu0
      %v1179 = vadd.f32 %v310, %v1178
      %v1180 = vpop.f32.mrf.mxu0
      %1181 = vmatprep.mubr.bf16.mxu0 0
      %1182 = vmatmul.mubr.bf16.gmra.mxu0 %v756
      %v1183 = vpop.f32.mrf.mxu0
      %v1184 = vadd.f32 %v310, %v1183
      %v1185 = vpop.f32.mrf.mxu0
      %v1186 = vpop.f32.mrf.mxu0
      %v1187 = vadd.f32 %v310, %v1186
      %v1188 = vpop.f32.mrf.mxu0
      %1189 = vmatprep.mubr.bf16.mxu0 0
      %1190 = vmatmul.mubr.bf16.gmra.mxu0 %v759
      %v1191 = vpop.f32.mrf.mxu0
      %v1192 = vadd.f32 %v310, %v1191
      %v1193 = vpop.f32.mrf.mxu0
      %v1194 = vpop.f32.mrf.mxu0
      %v1195 = vadd.f32 %v310, %v1194
      %v1196 = vpop.f32.mrf.mxu0
      %1197 = vmatprep.mubr.bf16.mxu0 0
      %1198 = vmatmul.mubr.bf16.gmra.mxu0 %v762
      %v1199 = vpop.f32.mrf.mxu0
      %v1200 = vadd.f32 %v310, %v1199
      %v1201 = vpop.f32.mrf.mxu0
      %v1202 = vpop.f32.mrf.mxu0
      %v1203 = vadd.f32 %v310, %v1202
      %v1204 = vpop.f32.mrf.mxu0
      %1205 = vmatprep.mubr.bf16.mxu0 0
      %1206 = vmatmul.mubr.bf16.gmra.mxu0 %v765
      %v1207 = vpop.f32.mrf.mxu0
      %v1208 = vadd.f32 %v310, %v1207
      %v1209 = vpop.f32.mrf.mxu0
      %v1210 = vpop.f32.mrf.mxu0
      %v1211 = vadd.f32 %v310, %v1210
      %v1212 = vpop.f32.mrf.mxu0
      %1213 = vmatprep.mubr.bf16.mxu0 0
      %1214 = vmatmul.mubr.bf16.gmra.mxu0 %v768
      %v1215 = vpop.f32.mrf.mxu0
      %v1216 = vadd.f32 %v310, %v1215
      %v1217 = vpop.f32.mrf.mxu0
      %v1218 = vpop.f32.mrf.mxu0
      %v1219 = vadd.f32 %v310, %v1218
      %v1220 = vpop.f32.mrf.mxu0
      %1221 = vmatprep.mubr.bf16.mxu0 0
      %1222 = vmatmul.mubr.bf16.gmra.mxu0 %v771
      %v1223 = vpop.f32.mrf.mxu0
      %v1224 = vadd.f32 %v310, %v1223
      %v1225 = vpop.f32.mrf.mxu0
      %v1226 = vpop.f32.mrf.mxu0
      %v1227 = vadd.f32 %v310, %v1226
      %v1228 = vpop.f32.mrf.mxu0
      %1229 = vmatprep.mubr.bf16.mxu0 0
      %1230 = vmatmul.mubr.bf16.gmra.mxu0 %v774
      %v1231 = vpop.f32.mrf.mxu0
      %v1232 = vadd.f32 %v310, %v1231
      %v1233 = vpop.f32.mrf.mxu0
      %v1234 = vpop.f32.mrf.mxu0
      %v1235 = vadd.f32 %v310, %v1234
      %v1236 = vpop.f32.mrf.mxu0
      %1237 = vmatprep.mubr.bf16.mxu0 0
      %1238 = vmatmul.mubr.bf16.gmra.mxu0 %v777
      %v1239 = vpop.f32.mrf.mxu0
      %v1240 = vadd.f32 %v310, %v1239
      %v1241 = vpop.f32.mrf.mxu0
      %v1242 = vpop.f32.mrf.mxu0
      %v1243 = vadd.f32 %v310, %v1242
      %v1244 = vpop.f32.mrf.mxu0
      %1245 = vmatprep.mubr.bf16.mxu0 0
      %1246 = vmatmul.mubr.bf16.gmra.mxu0 %v780
      %v1247 = vpop.f32.mrf.mxu0
      %v1248 = vadd.f32 %v310, %v1247
      %v1249 = vpop.f32.mrf.mxu0
      %v1250 = vpop.f32.mrf.mxu0
      %v1251 = vadd.f32 %v310, %v1250
      %v1252 = vpop.f32.mrf.mxu0
      %1253 = vmatprep.mubr.bf16.mxu0 0
      %1254 = vmatmul.mubr.bf16.gmra.mxu0 %v783
      %v1255 = vpop.f32.mrf.mxu0
      %v1256 = vadd.f32 %v310, %v1255
      %v1257 = vpop.f32.mrf.mxu0
      %v1258 = vpop.f32.mrf.mxu0
      %v1259 = vadd.f32 %v310, %v1258
      %v1260 = vpop.f32.mrf.mxu0
      %1261 = vmatprep.mubr.bf16.mxu0 0
      %1262 = vmatmul.mubr.bf16.gmra.mxu0 %v786
      %v1263 = vpop.f32.mrf.mxu0
      %v1264 = vadd.f32 %v310, %v1263
      %v1265 = vpop.f32.mrf.mxu0
      %v1266 = vpop.f32.mrf.mxu0
      %v1267 = vadd.f32 %v310, %v1266
      %v1268 = vpop.f32.mrf.mxu0
      %1269 = vmatprep.mubr.bf16.mxu0 0
      %1270 = vmatmul.mubr.bf16.gmra.mxu0 %v789
      %v1271 = vpop.f32.mrf.mxu0
      %v1272 = vadd.f32 %v310, %v1271
      %v1273 = vpop.f32.mrf.mxu0
      %v1274 = vpop.f32.mrf.mxu0
      %v1275 = vadd.f32 %v310, %v1274
      %v1276 = vpop.f32.mrf.mxu0
      %1277 = vmatprep.mubr.bf16.mxu0 0
      %1278 = vmatmul.mubr.bf16.gmra.mxu0 %v792
      %v1279 = vpop.f32.mrf.mxu0
      %v1280 = vadd.f32 %v310, %v1279
      %v1281 = vpop.f32.mrf.mxu0
      %v1282 = vpop.f32.mrf.mxu0
      %v1283 = vadd.f32 %v310, %v1282
      %v1284 = vpop.f32.mrf.mxu0
      %1285 = vmatprep.mubr.bf16.mxu0 0
      %1286 = vmatmul.mubr.bf16.gmra.mxu0 %v795
      %v1287 = vpop.f32.mrf.mxu0
      %v1288 = vadd.f32 %v310, %v1287
      %v1289 = vpop.f32.mrf.mxu0
      %v1290 = vpop.f32.mrf.mxu0
      %v1291 = vadd.f32 %v310, %v1290
      %v1292 = vpop.f32.mrf.mxu0
      %1293 = vmatprep.mubr.bf16.mxu0 0
      %1294 = vmatmul.mubr.bf16.gmra.mxu0 %v798
      %v1295 = vpop.f32.mrf.mxu0
      %v1296 = vadd.f32 %v310, %v1295
      %v1297 = vpop.f32.mrf.mxu0
      %v1298 = vpop.f32.mrf.mxu0
      %v1299 = vadd.f32 %v310, %v1298
      %v1300 = vpop.f32.mrf.mxu0
      %1301 = vmatprep.mubr.bf16.mxu0 0
      %1302 = vmatmul.mubr.bf16.gmra.mxu0 %v801
      %v1303 = vpop.f32.mrf.mxu0
      %v1304 = vadd.f32 %v310, %v1303
      %v1305 = vpop.f32.mrf.mxu0
      %v1306 = vpop.f32.mrf.mxu0
      %v1307 = vadd.f32 %v310, %v1306
      %v1308 = vpop.f32.mrf.mxu0
      %1309 = vmatprep.mubr.bf16.mxu0 0
      %1310 = vmatmul.mubr.bf16.gmra.mxu0 %v804
      %v1311 = vpop.f32.mrf.mxu0
      %v1312 = vadd.f32 %v310, %v1311
      %v1313 = vpop.f32.mrf.mxu0
      %v1314 = vpop.f32.mrf.mxu0
      %v1315 = vadd.f32 %v310, %v1314
      %v1316 = vpop.f32.mrf.mxu0
      %1317 = vmatprep.mubr.bf16.mxu0 0
      %1318 = vmatmul.mubr.bf16.gmra.mxu0 %v807
      %v1319 = vpop.f32.mrf.mxu0
      %v1320 = vadd.f32 %v310, %v1319
      %v1321 = vpop.f32.mrf.mxu0
      %v1322 = vpop.f32.mrf.mxu0
      %v1323 = vadd.f32 %v310, %v1322
      %v1324 = vpop.f32.mrf.mxu0
      %1325 = vmatprep.mubr.bf16.mxu0 0
      %1326 = vmatmul.mubr.bf16.gmra.mxu0 %v810
      %v1327 = vpop.f32.mrf.mxu0
      %v1328 = vadd.f32 %v310, %v1327
      %v1329 = vpop.f32.mrf.mxu0
      %v1330 = vpop.f32.mrf.mxu0
      %v1331 = vadd.f32 %v310, %v1330
      %v1332 = vpop.f32.mrf.mxu0
      %1333 = vmatprep.mubr.bf16.mxu0 0
      %1334 = vmatmul.mubr.bf16.gmra.mxu0 %v813
      %v1335 = vpop.f32.mrf.mxu0
      %v1336 = vadd.f32 %v310, %v1335
      %v1337 = vpop.f32.mrf.mxu0
      %v1338 = vpop.f32.mrf.mxu0
      %v1339 = vadd.f32 %v310, %v1338
      %v1340 = vpop.f32.mrf.mxu0
      %1341 = vmatprep.mubr.bf16.mxu0 0
      %1342 = vmatmul.mubr.bf16.gmra.mxu0 %v816
      %v1343 = vpop.f32.mrf.mxu0
      %v1344 = vadd.f32 %v310, %v1343
      %v1345 = vpop.f32.mrf.mxu0
      %v1346 = vpop.f32.mrf.mxu0
      %v1347 = vadd.f32 %v310, %v1346
      %v1348 = vpop.f32.mrf.mxu0
      %1349 = vmatprep.mubr.bf16.mxu0 0
      %1350 = vmatmul.mubr.bf16.gmra.mxu0 %v819
      %v1351 = vpop.f32.mrf.mxu0
      %v1352 = vadd.f32 %v310, %v1351
      %v1353 = vpop.f32.mrf.mxu0
      %v1354 = vpop.f32.mrf.mxu0
      %v1355 = vadd.f32 %v310, %v1354
      %v1356 = vpop.f32.mrf.mxu0
      %1357 = vmatprep.mubr.bf16.mxu0 0
      %1358 = vmatmul.mubr.bf16.gmra.mxu0 %v822
      %v1359 = vpop.f32.mrf.mxu0
      %v1360 = vadd.f32 %v310, %v1359
      %v1361 = vpop.f32.mrf.mxu0
      %v1362 = vpop.f32.mrf.mxu0
      %v1363 = vadd.f32 %v310, %v1362
      %v1364 = vpop.f32.mrf.mxu0
      %1365 = vmatprep.mubr.bf16.mxu0 0
      %1366 = vmatmul.mubr.bf16.gmra.mxu0 %v825
      %v1367 = vpop.f32.mrf.mxu0
      %v1368 = vadd.f32 %v310, %v1367
      %v1369 = vpop.f32.mrf.mxu0
      %v1370 = vpop.f32.mrf.mxu0
      %v1371 = vadd.f32 %v310, %v1370
      %v1372 = vpop.f32.mrf.mxu0
      %1373 = vmatprep.mubr.bf16.mxu0 0
      %1374 = vmatmul.mubr.bf16.gmra.mxu0 %v828
      %v1375 = vpop.f32.mrf.mxu0
      %v1376 = vadd.f32 %v310, %v1375
      %v1377 = vpop.f32.mrf.mxu0
      %v1378 = vpop.f32.mrf.mxu0
      %v1379 = vadd.f32 %v310, %v1378
      %v1380 = vpop.f32.mrf.mxu0
      %1381 = vdwg.mxu0
      %vm1382 = vcmp.gt.f32.partialorder %v872, 0.0
      %vm1383 = vcmp.gt.f32.partialorder %v875, 0.0
      %vm1384 = vcmp.gt.f32.partialorder %v880, 0.0
      %vm1385 = vcmp.gt.f32.partialorder %v883, 0.0
      %vm1386 = vcmp.gt.f32.partialorder %v888, 0.0
      %vm1387 = vcmp.gt.f32.partialorder %v891, 0.0
      %vm1388 = vcmp.gt.f32.partialorder %v896, 0.0
      %vm1389 = vcmp.gt.f32.partialorder %v899, 0.0
      %vm1390 = vcmp.gt.f32.partialorder %v904, 0.0
      %vm1391 = vcmp.gt.f32.partialorder %v907, 0.0
      %vm1392 = vcmp.gt.f32.partialorder %v912, 0.0
      %vm1393 = vcmp.gt.f32.partialorder %v915, 0.0
      %vm1394 = vcmp.gt.f32.partialorder %v920, 0.0
      %vm1395 = vcmp.gt.f32.partialorder %v923, 0.0
      %vm1396 = vcmp.gt.f32.partialorder %v928, 0.0
      %vm1397 = vcmp.gt.f32.partialorder %v931, 0.0
      %vm1398 = vcmp.gt.f32.partialorder %v936, 0.0
      %vm1399 = vcmp.gt.f32.partialorder %v939, 0.0
      %vm1400 = vcmp.gt.f32.partialorder %v944, 0.0
      %vm1401 = vcmp.gt.f32.partialorder %v947, 0.0
      %vm1402 = vcmp.gt.f32.partialorder %v952, 0.0
      %vm1403 = vcmp.gt.f32.partialorder %v955, 0.0
      %vm1404 = vcmp.gt.f32.partialorder %v960, 0.0
      %vm1405 = vcmp.gt.f32.partialorder %v963, 0.0
      %vm1406 = vcmp.gt.f32.partialorder %v968, 0.0
      %vm1407 = vcmp.gt.f32.partialorder %v971, 0.0
      %vm1408 = vcmp.gt.f32.partialorder %v976, 0.0
      %vm1409 = vcmp.gt.f32.partialorder %v979, 0.0
      %vm1410 = vcmp.gt.f32.partialorder %v984, 0.0
      %vm1411 = vcmp.gt.f32.partialorder %v987, 0.0
      %vm1412 = vcmp.gt.f32.partialorder %v992, 0.0
      %vm1413 = vcmp.gt.f32.partialorder %v995, 0.0
      %vm1414 = vcmp.gt.f32.partialorder %v1000, 0.0
      %vm1415 = vcmp.gt.f32.partialorder %v1003, 0.0
      %vm1416 = vcmp.gt.f32.partialorder %v1008, 0.0
      %vm1417 = vcmp.gt.f32.partialorder %v1011, 0.0
      %vm1418 = vcmp.gt.f32.partialorder %v1016, 0.0
      %vm1419 = vcmp.gt.f32.partialorder %v1019, 0.0
      %vm1420 = vcmp.gt.f32.partialorder %v1024, 0.0
      %vm1421 = vcmp.gt.f32.partialorder %v1027, 0.0
      %vm1422 = vcmp.gt.f32.partialorder %v1032, 0.0
      %vm1423 = vcmp.gt.f32.partialorder %v1035, 0.0
      %vm1424 = vcmp.gt.f32.partialorder %v1040, 0.0
      %vm1425 = vcmp.gt.f32.partialorder %v1043, 0.0
      %vm1426 = vcmp.gt.f32.partialorder %v1048, 0.0
      %vm1427 = vcmp.gt.f32.partialorder %v1051, 0.0
      %vm1428 = vcmp.gt.f32.partialorder %v1056, 0.0
      %vm1429 = vcmp.gt.f32.partialorder %v1059, 0.0
      %vm1430 = vcmp.gt.f32.partialorder %v1064, 0.0
      %vm1431 = vcmp.gt.f32.partialorder %v1067, 0.0
      %vm1432 = vcmp.gt.f32.partialorder %v1072, 0.0
      %vm1433 = vcmp.gt.f32.partialorder %v1075, 0.0
      %vm1434 = vcmp.gt.f32.partialorder %v1080, 0.0
      %vm1435 = vcmp.gt.f32.partialorder %v1083, 0.0
      %vm1436 = vcmp.gt.f32.partialorder %v1088, 0.0
      %vm1437 = vcmp.gt.f32.partialorder %v1091, 0.0
      %vm1438 = vcmp.gt.f32.partialorder %v1096, 0.0
      %vm1439 = vcmp.gt.f32.partialorder %v1099, 0.0
      %vm1440 = vcmp.gt.f32.partialorder %v1104, 0.0
      %vm1441 = vcmp.gt.f32.partialorder %v1107, 0.0
      %vm1442 = vcmp.gt.f32.partialorder %v1112, 0.0
      %vm1443 = vcmp.gt.f32.partialorder %v1115, 0.0
      %vm1444 = vcmp.gt.f32.partialorder %v1120, 0.0
      %vm1445 = vcmp.gt.f32.partialorder %v1123, 0.0
      %vm1446 = vcmp.gt.f32.partialorder %v1128, 0.0
      %vm1447 = vcmp.gt.f32.partialorder %v1131, 0.0
      %vm1448 = vcmp.gt.f32.partialorder %v1136, 0.0
      %vm1449 = vcmp.gt.f32.partialorder %v1139, 0.0
      %vm1450 = vcmp.gt.f32.partialorder %v1144, 0.0
      %vm1451 = vcmp.gt.f32.partialorder %v1147, 0.0
      %vm1452 = vcmp.gt.f32.partialorder %v1152, 0.0
      %vm1453 = vcmp.gt.f32.partialorder %v1155, 0.0
      %vm1454 = vcmp.gt.f32.partialorder %v1160, 0.0
      %vm1455 = vcmp.gt.f32.partialorder %v1163, 0.0
      %vm1456 = vcmp.gt.f32.partialorder %v1168, 0.0
      %vm1457 = vcmp.gt.f32.partialorder %v1171, 0.0
      %vm1458 = vcmp.gt.f32.partialorder %v1176, 0.0
      %vm1459 = vcmp.gt.f32.partialorder %v1179, 0.0
      %vm1460 = vcmp.gt.f32.partialorder %v1184, 0.0
      %vm1461 = vcmp.gt.f32.partialorder %v1187, 0.0
      %vm1462 = vcmp.gt.f32.partialorder %v1192, 0.0
      %vm1463 = vcmp.gt.f32.partialorder %v1195, 0.0
      %vm1464 = vcmp.gt.f32.partialorder %v1200, 0.0
      %vm1465 = vcmp.gt.f32.partialorder %v1203, 0.0
      %vm1466 = vcmp.gt.f32.partialorder %v1208, 0.0
      %vm1467 = vcmp.gt.f32.partialorder %v1211, 0.0
      %vm1468 = vcmp.gt.f32.partialorder %v1216, 0.0
      %vm1469 = vcmp.gt.f32.partialorder %v1219, 0.0
      %vm1470 = vcmp.gt.f32.partialorder %v1224, 0.0
      %vm1471 = vcmp.gt.f32.partialorder %v1227, 0.0
      %vm1472 = vcmp.gt.f32.partialorder %v1232, 0.0
      %vm1473 = vcmp.gt.f32.partialorder %v1235, 0.0
      %vm1474 = vcmp.gt.f32.partialorder %v1240, 0.0
      %vm1475 = vcmp.gt.f32.partialorder %v1243, 0.0
      %vm1476 = vcmp.gt.f32.partialorder %v1248, 0.0
      %vm1477 = vcmp.gt.f32.partialorder %v1251, 0.0
      %vm1478 = vcmp.gt.f32.partialorder %v1256, 0.0
      %vm1479 = vcmp.gt.f32.partialorder %v1259, 0.0
      %vm1480 = vcmp.gt.f32.partialorder %v1264, 0.0
      %vm1481 = vcmp.gt.f32.partialorder %v1267, 0.0
      %vm1482 = vcmp.gt.f32.partialorder %v1272, 0.0
      %vm1483 = vcmp.gt.f32.partialorder %v1275, 0.0
      %vm1484 = vcmp.gt.f32.partialorder %v1280, 0.0
      %vm1485 = vcmp.gt.f32.partialorder %v1283, 0.0
      %vm1486 = vcmp.gt.f32.partialorder %v1288, 0.0
      %vm1487 = vcmp.gt.f32.partialorder %v1291, 0.0
      %vm1488 = vcmp.gt.f32.partialorder %v1296, 0.0
      %vm1489 = vcmp.gt.f32.partialorder %v1299, 0.0
      %vm1490 = vcmp.gt.f32.partialorder %v1304, 0.0
      %vm1491 = vcmp.gt.f32.partialorder %v1307, 0.0
      %vm1492 = vcmp.gt.f32.partialorder %v1312, 0.0
      %vm1493 = vcmp.gt.f32.partialorder %v1315, 0.0
      %vm1494 = vcmp.gt.f32.partialorder %v1320, 0.0
      %vm1495 = vcmp.gt.f32.partialorder %v1323, 0.0
      %vm1496 = vcmp.gt.f32.partialorder %v1328, 0.0
      %vm1497 = vcmp.gt.f32.partialorder %v1331, 0.0
      %vm1498 = vcmp.gt.f32.partialorder %v1336, 0.0
      %vm1499 = vcmp.gt.f32.partialorder %v1339, 0.0
      %vm1500 = vcmp.gt.f32.partialorder %v1344, 0.0
      %vm1501 = vcmp.gt.f32.partialorder %v1347, 0.0
      %vm1502 = vcmp.gt.f32.partialorder %v1352, 0.0
      %vm1503 = vcmp.gt.f32.partialorder %v1355, 0.0
      %vm1504 = vcmp.gt.f32.partialorder %v1360, 0.0
      %vm1505 = vcmp.gt.f32.partialorder %v1363, 0.0
      %vm1506 = vcmp.gt.f32.partialorder %v1368, 0.0
      %vm1507 = vcmp.gt.f32.partialorder %v1371, 0.0
      %vm1508 = vcmp.gt.f32.partialorder %v1376, 0.0
      %vm1509 = vcmp.gt.f32.partialorder %v1379, 0.0
      %v1510 = vmul.f32 %v872, 0.1
      %v1511 = vmul.f32 %v875, 0.1
      %v1512 = vmul.f32 %v880, 0.1
      %v1513 = vmul.f32 %v883, 0.1
      %v1514 = vmul.f32 %v888, 0.1
      %v1515 = vmul.f32 %v891, 0.1
      %v1516 = vmul.f32 %v896, 0.1
      %v1517 = vmul.f32 %v899, 0.1
      %v1518 = vmul.f32 %v904, 0.1
      %v1519 = vmul.f32 %v907, 0.1
      %v1520 = vmul.f32 %v912, 0.1
      %v1521 = vmul.f32 %v915, 0.1
      %v1522 = vmul.f32 %v920, 0.1
      %v1523 = vmul.f32 %v923, 0.1
      %v1524 = vmul.f32 %v928, 0.1
      %v1525 = vmul.f32 %v931, 0.1
      %v1526 = vmul.f32 %v936, 0.1
      %v1527 = vmul.f32 %v939, 0.1
      %v1528 = vmul.f32 %v944, 0.1
      %v1529 = vmul.f32 %v947, 0.1
      %v1530 = vmul.f32 %v952, 0.1
      %v1531 = vmul.f32 %v955, 0.1
      %v1532 = vmul.f32 %v960, 0.1
      %v1533 = vmul.f32 %v963, 0.1
      %v1534 = vmul.f32 %v968, 0.1
      %v1535 = vmul.f32 %v971, 0.1
      %v1536 = vmul.f32 %v976, 0.1
      %v1537 = vmul.f32 %v979, 0.1
      %v1538 = vmul.f32 %v984, 0.1
      %v1539 = vmul.f32 %v987, 0.1
      %v1540 = vmul.f32 %v992, 0.1
      %v1541 = vmul.f32 %v995, 0.1
      %v1542 = vmul.f32 %v1000, 0.1
      %v1543 = vmul.f32 %v1003, 0.1
      %v1544 = vmul.f32 %v1008, 0.1
      %v1545 = vmul.f32 %v1011, 0.1
      %v1546 = vmul.f32 %v1016, 0.1
      %v1547 = vmul.f32 %v1019, 0.1
      %v1548 = vmul.f32 %v1024, 0.1
      %v1549 = vmul.f32 %v1027, 0.1
      %v1550 = vmul.f32 %v1032, 0.1
      %v1551 = vmul.f32 %v1035, 0.1
      %v1552 = vmul.f32 %v1040, 0.1
      %v1553 = vmul.f32 %v1043, 0.1
      %v1554 = vmul.f32 %v1048, 0.1
      %v1555 = vmul.f32 %v1051, 0.1
      %v1556 = vmul.f32 %v1056, 0.1
      %v1557 = vmul.f32 %v1059, 0.1
      %v1558 = vmul.f32 %v1064, 0.1
      %v1559 = vmul.f32 %v1067, 0.1
      %v1560 = vmul.f32 %v1072, 0.1
      %v1561 = vmul.f32 %v1075, 0.1
      %v1562 = vmul.f32 %v1080, 0.1
      %v1563 = vmul.f32 %v1083, 0.1
      %v1564 = vmul.f32 %v1088, 0.1
      %v1565 = vmul.f32 %v1091, 0.1
      %v1566 = vmul.f32 %v1096, 0.1
      %v1567 = vmul.f32 %v1099, 0.1
      %v1568 = vmul.f32 %v1104, 0.1
      %v1569 = vmul.f32 %v1107, 0.1
      %v1570 = vmul.f32 %v1112, 0.1
      %v1571 = vmul.f32 %v1115, 0.1
      %v1572 = vmul.f32 %v1120, 0.1
      %v1573 = vmul.f32 %v1123, 0.1
      %v1574 = vmul.f32 %v1128, 0.1
      %v1575 = vmul.f32 %v1131, 0.1
      %v1576 = vmul.f32 %v1136, 0.1
      %v1577 = vmul.f32 %v1139, 0.1
      %v1578 = vmul.f32 %v1144, 0.1
      %v1579 = vmul.f32 %v1147, 0.1
      %v1580 = vmul.f32 %v1152, 0.1
      %v1581 = vmul.f32 %v1155, 0.1
      %v1582 = vmul.f32 %v1160, 0.1
      %v1583 = vmul.f32 %v1163, 0.1
      %v1584 = vmul.f32 %v1168, 0.1
      %v1585 = vmul.f32 %v1171, 0.1
      %v1586 = vmul.f32 %v1176, 0.1
      %v1587 = vmul.f32 %v1179, 0.1
      %v1588 = vmul.f32 %v1184, 0.1
      %v1589 = vmul.f32 %v1187, 0.1
      %v1590 = vmul.f32 %v1192, 0.1
      %v1591 = vmul.f32 %v1195, 0.1
      %v1592 = vmul.f32 %v1200, 0.1
      %v1593 = vmul.f32 %v1203, 0.1
      %v1594 = vmul.f32 %v1208, 0.1
      %v1595 = vmul.f32 %v1211, 0.1
      %v1596 = vmul.f32 %v1216, 0.1
      %v1597 = vmul.f32 %v1219, 0.1
      %v1598 = vmul.f32 %v1224, 0.1
      %v1599 = vmul.f32 %v1227, 0.1
      %v1600 = vmul.f32 %v1232, 0.1
      %v1601 = vmul.f32 %v1235, 0.1
      %v1602 = vmul.f32 %v1240, 0.1
      %v1603 = vmul.f32 %v1243, 0.1
      %v1604 = vmul.f32 %v1248, 0.1
      %v1605 = vmul.f32 %v1251, 0.1
      %v1606 = vmul.f32 %v1256, 0.1
      %v1607 = vmul.f32 %v1259, 0.1
      %v1608 = vmul.f32 %v1264, 0.1
      %v1609 = vmul.f32 %v1267, 0.1
      %v1610 = vmul.f32 %v1272, 0.1
      %v1611 = vmul.f32 %v1275, 0.1
      %v1612 = vmul.f32 %v1280, 0.1
      %v1613 = vmul.f32 %v1283, 0.1
      %v1614 = vmul.f32 %v1288, 0.1
      %v1615 = vmul.f32 %v1291, 0.1
      %v1616 = vmul.f32 %v1296, 0.1
      %v1617 = vmul.f32 %v1299, 0.1
      %v1618 = vmul.f32 %v1304, 0.1
      %v1619 = vmul.f32 %v1307, 0.1
      %v1620 = vmul.f32 %v1312, 0.1
      %v1621 = vmul.f32 %v1315, 0.1
      %v1622 = vmul.f32 %v1320, 0.1
      %v1623 = vmul.f32 %v1323, 0.1
      %v1624 = vmul.f32 %v1328, 0.1
      %v1625 = vmul.f32 %v1331, 0.1
      %v1626 = vmul.f32 %v1336, 0.1
      %v1627 = vmul.f32 %v1339, 0.1
      %v1628 = vmul.f32 %v1344, 0.1
      %v1629 = vmul.f32 %v1347, 0.1
      %v1630 = vmul.f32 %v1352, 0.1
      %v1631 = vmul.f32 %v1355, 0.1
      %v1632 = vmul.f32 %v1360, 0.1
      %v1633 = vmul.f32 %v1363, 0.1
      %v1634 = vmul.f32 %v1368, 0.1
      %v1635 = vmul.f32 %v1371, 0.1
      %v1636 = vmul.f32 %v1376, 0.1
      %v1637 = vmul.f32 %v1379, 0.1
      %v1638 = vsel %vm1382, %v872, %v1510
      %v1639 = vsel %vm1383, %v875, %v1511
      %v1640 = vsel %vm1384, %v880, %v1512
      %v1641 = vsel %vm1385, %v883, %v1513
      %v1642 = vsel %vm1386, %v888, %v1514
      %v1643 = vsel %vm1387, %v891, %v1515
      %v1644 = vsel %vm1388, %v896, %v1516
      %v1645 = vsel %vm1389, %v899, %v1517
      %v1646 = vsel %vm1390, %v904, %v1518
      %v1647 = vsel %vm1391, %v907, %v1519
      %v1648 = vsel %vm1392, %v912, %v1520
      %v1649 = vsel %vm1393, %v915, %v1521
      %v1650 = vsel %vm1394, %v920, %v1522
      %v1651 = vsel %vm1395, %v923, %v1523
      %v1652 = vsel %vm1396, %v928, %v1524
      %v1653 = vsel %vm1397, %v931, %v1525
      %v1654 = vsel %vm1398, %v936, %v1526
      %v1655 = vsel %vm1399, %v939, %v1527
      %v1656 = vsel %vm1400, %v944, %v1528
      %v1657 = vsel %vm1401, %v947, %v1529
      %v1658 = vsel %vm1402, %v952, %v1530
      %v1659 = vsel %vm1403, %v955, %v1531
      %v1660 = vsel %vm1404, %v960, %v1532
      %v1661 = vsel %vm1405, %v963, %v1533
      %v1662 = vsel %vm1406, %v968, %v1534
      %v1663 = vsel %vm1407, %v971, %v1535
      %v1664 = vsel %vm1408, %v976, %v1536
      %v1665 = vsel %vm1409, %v979, %v1537
      %v1666 = vsel %vm1410, %v984, %v1538
      %v1667 = vsel %vm1411, %v987, %v1539
      %v1668 = vsel %vm1412, %v992, %v1540
      %v1669 = vsel %vm1413, %v995, %v1541
      %v1670 = vsel %vm1414, %v1000, %v1542
      %v1671 = vsel %vm1415, %v1003, %v1543
      %v1672 = vsel %vm1416, %v1008, %v1544
      %v1673 = vsel %vm1417, %v1011, %v1545
      %v1674 = vsel %vm1418, %v1016, %v1546
      %v1675 = vsel %vm1419, %v1019, %v1547
      %v1676 = vsel %vm1420, %v1024, %v1548
      %v1677 = vsel %vm1421, %v1027, %v1549
      %v1678 = vsel %vm1422, %v1032, %v1550
      %v1679 = vsel %vm1423, %v1035, %v1551
      %v1680 = vsel %vm1424, %v1040, %v1552
      %v1681 = vsel %vm1425, %v1043, %v1553
      %v1682 = vsel %vm1426, %v1048, %v1554
      %v1683 = vsel %vm1427, %v1051, %v1555
      %v1684 = vsel %vm1428, %v1056, %v1556
      %v1685 = vsel %vm1429, %v1059, %v1557
      %v1686 = vsel %vm1430, %v1064, %v1558
      %v1687 = vsel %vm1431, %v1067, %v1559
      %v1688 = vsel %vm1432, %v1072, %v1560
      %v1689 = vsel %vm1433, %v1075, %v1561
      %v1690 = vsel %vm1434, %v1080, %v1562
      %v1691 = vsel %vm1435, %v1083, %v1563
      %v1692 = vsel %vm1436, %v1088, %v1564
      %v1693 = vsel %vm1437, %v1091, %v1565
      %v1694 = vsel %vm1438, %v1096, %v1566
      %v1695 = vsel %vm1439, %v1099, %v1567
      %v1696 = vsel %vm1440, %v1104, %v1568
      %v1697 = vsel %vm1441, %v1107, %v1569
      %v1698 = vsel %vm1442, %v1112, %v1570
      %v1699 = vsel %vm1443, %v1115, %v1571
      %v1700 = vsel %vm1444, %v1120, %v1572
      %v1701 = vsel %vm1445, %v1123, %v1573
      %v1702 = vsel %vm1446, %v1128, %v1574
      %v1703 = vsel %vm1447, %v1131, %v1575
      %v1704 = vsel %vm1448, %v1136, %v1576
      %v1705 = vsel %vm1449, %v1139, %v1577
      %v1706 = vsel %vm1450, %v1144, %v1578
      %v1707 = vsel %vm1451, %v1147, %v1579
      %v1708 = vsel %vm1452, %v1152, %v1580
      %v1709 = vsel %vm1453, %v1155, %v1581
      %v1710 = vsel %vm1454, %v1160, %v1582
      %v1711 = vsel %vm1455, %v1163, %v1583
      %v1712 = vsel %vm1456, %v1168, %v1584
      %v1713 = vsel %vm1457, %v1171, %v1585
      %v1714 = vsel %vm1458, %v1176, %v1586
      %v1715 = vsel %vm1459, %v1179, %v1587
      %v1716 = vsel %vm1460, %v1184, %v1588
      %v1717 = vsel %vm1461, %v1187, %v1589
      %v1718 = vsel %vm1462, %v1192, %v1590
      %v1719 = vsel %vm1463, %v1195, %v1591
      %v1720 = vsel %vm1464, %v1200, %v1592
      %v1721 = vsel %vm1465, %v1203, %v1593
      %v1722 = vsel %vm1466, %v1208, %v1594
      %v1723 = vsel %vm1467, %v1211, %v1595
      %v1724 = vsel %vm1468, %v1216, %v1596
      %v1725 = vsel %vm1469, %v1219, %v1597
      %v1726 = vsel %vm1470, %v1224, %v1598
      %v1727 = vsel %vm1471, %v1227, %v1599
      %v1728 = vsel %vm1472, %v1232, %v1600
      %v1729 = vsel %vm1473, %v1235, %v1601
      %v1730 = vsel %vm1474, %v1240, %v1602
      %v1731 = vsel %vm1475, %v1243, %v1603
      %v1732 = vsel %vm1476, %v1248, %v1604
      %v1733 = vsel %vm1477, %v1251, %v1605
      %v1734 = vsel %vm1478, %v1256, %v1606
      %v1735 = vsel %vm1479, %v1259, %v1607
      %v1736 = vsel %vm1480, %v1264, %v1608
      %v1737 = vsel %vm1481, %v1267, %v1609
      %v1738 = vsel %vm1482, %v1272, %v1610
      %v1739 = vsel %vm1483, %v1275, %v1611
      %v1740 = vsel %vm1484, %v1280, %v1612
      %v1741 = vsel %vm1485, %v1283, %v1613
      %v1742 = vsel %vm1486, %v1288, %v1614
      %v1743 = vsel %vm1487, %v1291, %v1615
      %v1744 = vsel %vm1488, %v1296, %v1616
      %v1745 = vsel %vm1489, %v1299, %v1617
      %v1746 = vsel %vm1490, %v1304, %v1618
      %v1747 = vsel %vm1491, %v1307, %v1619
      %v1748 = vsel %vm1492, %v1312, %v1620
      %v1749 = vsel %vm1493, %v1315, %v1621
      %v1750 = vsel %vm1494, %v1320, %v1622
      %v1751 = vsel %vm1495, %v1323, %v1623
      %v1752 = vsel %vm1496, %v1328, %v1624
      %v1753 = vsel %vm1497, %v1331, %v1625
      %v1754 = vsel %vm1498, %v1336, %v1626
      %v1755 = vsel %vm1499, %v1339, %v1627
      %v1756 = vsel %vm1500, %v1344, %v1628
      %v1757 = vsel %vm1501, %v1347, %v1629
      %v1758 = vsel %vm1502, %v1352, %v1630
      %v1759 = vsel %vm1503, %v1355, %v1631
      %v1760 = vsel %vm1504, %v1360, %v1632
      %v1761 = vsel %vm1505, %v1363, %v1633
      %v1762 = vsel %vm1506, %v1368, %v1634
      %v1763 = vsel %vm1507, %v1371, %v1635
      %v1764 = vsel %vm1508, %v1376, %v1636
      %v1765 = vsel %vm1509, %v1379, %v1637
      %v1766 = vpack.c.bf16 %v1639, %v1638
      %v1767 = vpack.c.bf16 %v1641, %v1640
      %v1768 = vpack.c.bf16 %v1643, %v1642
      %v1769 = vpack.c.bf16 %v1645, %v1644
      %v1770 = vpack.c.bf16 %v1647, %v1646
      %v1771 = vpack.c.bf16 %v1649, %v1648
      %v1772 = vpack.c.bf16 %v1651, %v1650
      %v1773 = vpack.c.bf16 %v1653, %v1652
      %v1774 = vpack.c.bf16 %v1655, %v1654
      %v1775 = vpack.c.bf16 %v1657, %v1656
      %v1776 = vpack.c.bf16 %v1659, %v1658
      %v1777 = vpack.c.bf16 %v1661, %v1660
      %v1778 = vpack.c.bf16 %v1663, %v1662
      %v1779 = vpack.c.bf16 %v1665, %v1664
      %v1780 = vpack.c.bf16 %v1667, %v1666
      %v1781 = vpack.c.bf16 %v1669, %v1668
      %v1782 = vpack.c.bf16 %v1671, %v1670
      %v1783 = vpack.c.bf16 %v1673, %v1672
      %v1784 = vpack.c.bf16 %v1675, %v1674
      %v1785 = vpack.c.bf16 %v1677, %v1676
      %v1786 = vpack.c.bf16 %v1679, %v1678
      %v1787 = vpack.c.bf16 %v1681, %v1680
      %v1788 = vpack.c.bf16 %v1683, %v1682
      %v1789 = vpack.c.bf16 %v1685, %v1684
      %v1790 = vpack.c.bf16 %v1687, %v1686
      %v1791 = vpack.c.bf16 %v1689, %v1688
      %v1792 = vpack.c.bf16 %v1691, %v1690
      %v1793 = vpack.c.bf16 %v1693, %v1692
      %v1794 = vpack.c.bf16 %v1695, %v1694
      %v1795 = vpack.c.bf16 %v1697, %v1696
      %v1796 = vpack.c.bf16 %v1699, %v1698
      %v1797 = vpack.c.bf16 %v1701, %v1700
      %v1798 = vpack.c.bf16 %v1703, %v1702
      %v1799 = vpack.c.bf16 %v1705, %v1704
      %v1800 = vpack.c.bf16 %v1707, %v1706
      %v1801 = vpack.c.bf16 %v1709, %v1708
      %v1802 = vpack.c.bf16 %v1711, %v1710
      %v1803 = vpack.c.bf16 %v1713, %v1712
      %v1804 = vpack.c.bf16 %v1715, %v1714
      %v1805 = vpack.c.bf16 %v1717, %v1716
      %v1806 = vpack.c.bf16 %v1719, %v1718
      %v1807 = vpack.c.bf16 %v1721, %v1720
      %v1808 = vpack.c.bf16 %v1723, %v1722
      %v1809 = vpack.c.bf16 %v1725, %v1724
      %v1810 = vpack.c.bf16 %v1727, %v1726
      %v1811 = vpack.c.bf16 %v1729, %v1728
      %v1812 = vpack.c.bf16 %v1731, %v1730
      %v1813 = vpack.c.bf16 %v1733, %v1732
      %v1814 = vpack.c.bf16 %v1735, %v1734
      %v1815 = vpack.c.bf16 %v1737, %v1736
      %v1816 = vpack.c.bf16 %v1739, %v1738
      %v1817 = vpack.c.bf16 %v1741, %v1740
      %v1818 = vpack.c.bf16 %v1743, %v1742
      %v1819 = vpack.c.bf16 %v1745, %v1744
      %v1820 = vpack.c.bf16 %v1747, %v1746
      %v1821 = vpack.c.bf16 %v1749, %v1748
      %v1822 = vpack.c.bf16 %v1751, %v1750
      %v1823 = vpack.c.bf16 %v1753, %v1752
      %v1824 = vpack.c.bf16 %v1755, %v1754
      %v1825 = vpack.c.bf16 %v1757, %v1756
      %v1826 = vpack.c.bf16 %v1759, %v1758
      %v1827 = vpack.c.bf16 %v1761, %v1760
      %v1828 = vpack.c.bf16 %v1763, %v1762
      %v1829 = vpack.c.bf16 %v1765, %v1764
      %v1894 = vunpack.c.l.b16 %v1766
      %v1895 = vunpack.c.h.b16 %v1766
      %v1896 = vunpack.c.l.b16 %v1767
      %v1897 = vunpack.c.h.b16 %v1767
      %v1898 = vunpack.c.l.b16 %v1768
      %v1899 = vunpack.c.h.b16 %v1768
      %v1900 = vunpack.c.l.b16 %v1769
      %v1901 = vunpack.c.h.b16 %v1769
      %v1902 = vunpack.c.l.b16 %v1770
      %v1903 = vunpack.c.h.b16 %v1770
      %v1904 = vunpack.c.l.b16 %v1771
      %v1905 = vunpack.c.h.b16 %v1771
      %v1906 = vunpack.c.l.b16 %v1772
      %v1907 = vunpack.c.h.b16 %v1772
      %v1908 = vunpack.c.l.b16 %v1773
      %v1909 = vunpack.c.h.b16 %v1773
      %v1910 = vunpack.c.l.b16 %v1774
      %v1911 = vunpack.c.h.b16 %v1774
      %v1912 = vunpack.c.l.b16 %v1775
      %v1913 = vunpack.c.h.b16 %v1775
      %v1914 = vunpack.c.l.b16 %v1776
      %v1915 = vunpack.c.h.b16 %v1776
      %v1916 = vunpack.c.l.b16 %v1777
      %v1917 = vunpack.c.h.b16 %v1777
      %v1918 = vunpack.c.l.b16 %v1778
      %v1919 = vunpack.c.h.b16 %v1778
      %v1920 = vunpack.c.l.b16 %v1779
      %v1921 = vunpack.c.h.b16 %v1779
      %v1922 = vunpack.c.l.b16 %v1780
      %v1923 = vunpack.c.h.b16 %v1780
      %v1924 = vunpack.c.l.b16 %v1781
      %v1925 = vunpack.c.h.b16 %v1781
      %v1926 = vunpack.c.l.b16 %v1782
      %v1927 = vunpack.c.h.b16 %v1782
      %v1928 = vunpack.c.l.b16 %v1783
      %v1929 = vunpack.c.h.b16 %v1783
      %v1930 = vunpack.c.l.b16 %v1784
      %v1931 = vunpack.c.h.b16 %v1784
      %v1932 = vunpack.c.l.b16 %v1785
      %v1933 = vunpack.c.h.b16 %v1785
      %v1934 = vunpack.c.l.b16 %v1786
      %v1935 = vunpack.c.h.b16 %v1786
      %v1936 = vunpack.c.l.b16 %v1787
      %v1937 = vunpack.c.h.b16 %v1787
      %v1938 = vunpack.c.l.b16 %v1788
      %v1939 = vunpack.c.h.b16 %v1788
      %v1940 = vunpack.c.l.b16 %v1789
      %v1941 = vunpack.c.h.b16 %v1789
      %v1942 = vunpack.c.l.b16 %v1790
      %v1943 = vunpack.c.h.b16 %v1790
      %v1944 = vunpack.c.l.b16 %v1791
      %v1945 = vunpack.c.h.b16 %v1791
      %v1946 = vunpack.c.l.b16 %v1792
      %v1947 = vunpack.c.h.b16 %v1792
      %v1948 = vunpack.c.l.b16 %v1793
      %v1949 = vunpack.c.h.b16 %v1793
      %v1950 = vunpack.c.l.b16 %v1794
      %v1951 = vunpack.c.h.b16 %v1794
      %v1952 = vunpack.c.l.b16 %v1795
      %v1953 = vunpack.c.h.b16 %v1795
      %v1954 = vunpack.c.l.b16 %v1796
      %v1955 = vunpack.c.h.b16 %v1796
      %v1956 = vunpack.c.l.b16 %v1797
      %v1957 = vunpack.c.h.b16 %v1797
      %v1958 = vunpack.c.l.b16 %v1798
      %v1959 = vunpack.c.h.b16 %v1798
      %v1960 = vunpack.c.l.b16 %v1799
      %v1961 = vunpack.c.h.b16 %v1799
      %v1962 = vunpack.c.l.b16 %v1800
      %v1963 = vunpack.c.h.b16 %v1800
      %v1964 = vunpack.c.l.b16 %v1801
      %v1965 = vunpack.c.h.b16 %v1801
      %v1966 = vunpack.c.l.b16 %v1802
      %v1967 = vunpack.c.h.b16 %v1802
      %v1968 = vunpack.c.l.b16 %v1803
      %v1969 = vunpack.c.h.b16 %v1803
      %v1970 = vunpack.c.l.b16 %v1804
      %v1971 = vunpack.c.h.b16 %v1804
      %v1972 = vunpack.c.l.b16 %v1805
      %v1973 = vunpack.c.h.b16 %v1805
      %v1974 = vunpack.c.l.b16 %v1806
      %v1975 = vunpack.c.h.b16 %v1806
      %v1976 = vunpack.c.l.b16 %v1807
      %v1977 = vunpack.c.h.b16 %v1807
      %v1978 = vunpack.c.l.b16 %v1808
      %v1979 = vunpack.c.h.b16 %v1808
      %v1980 = vunpack.c.l.b16 %v1809
      %v1981 = vunpack.c.h.b16 %v1809
      %v1982 = vunpack.c.l.b16 %v1810
      %v1983 = vunpack.c.h.b16 %v1810
      %v1984 = vunpack.c.l.b16 %v1811
      %v1985 = vunpack.c.h.b16 %v1811
      %v1986 = vunpack.c.l.b16 %v1812
      %v1987 = vunpack.c.h.b16 %v1812
      %v1988 = vunpack.c.l.b16 %v1813
      %v1989 = vunpack.c.h.b16 %v1813
      %v1990 = vunpack.c.l.b16 %v1814
      %v1991 = vunpack.c.h.b16 %v1814
      %v1992 = vunpack.c.l.b16 %v1815
      %v1993 = vunpack.c.h.b16 %v1815
      %v1994 = vunpack.c.l.b16 %v1816
      %v1995 = vunpack.c.h.b16 %v1816
      %v1996 = vunpack.c.l.b16 %v1817
      %v1997 = vunpack.c.h.b16 %v1817
      %v1998 = vunpack.c.l.b16 %v1818
      %v1999 = vunpack.c.h.b16 %v1818
      %v2000 = vunpack.c.l.b16 %v1819
      %v2001 = vunpack.c.h.b16 %v1819
      %v2002 = vunpack.c.l.b16 %v1820
      %v2003 = vunpack.c.h.b16 %v1820
      %v2004 = vunpack.c.l.b16 %v1821
      %v2005 = vunpack.c.h.b16 %v1821
      %v2006 = vunpack.c.l.b16 %v1822
      %v2007 = vunpack.c.h.b16 %v1822
      %v2008 = vunpack.c.l.b16 %v1823
      %v2009 = vunpack.c.h.b16 %v1823
      %v2010 = vunpack.c.l.b16 %v1824
      %v2011 = vunpack.c.h.b16 %v1824
      %v2012 = vunpack.c.l.b16 %v1825
      %v2013 = vunpack.c.h.b16 %v1825
      %v2014 = vunpack.c.l.b16 %v1826
      %v2015 = vunpack.c.h.b16 %v1826
      %v2016 = vunpack.c.l.b16 %v1827
      %v2017 = vunpack.c.h.b16 %v1827
      %v2018 = vunpack.c.l.b16 %v1828
      %v2019 = vunpack.c.h.b16 %v1828
      %v2020 = vunpack.c.l.b16 %v1829
      %v2021 = vunpack.c.h.b16 %v1829
      %v2022 = vpack.c.b16 %v1894, %v1894
      %v2023 = vpack.c.b16 %v1895, %v1895
      %v2024 = vpack.c.b16 %v1896, %v1896
      %v2025 = vpack.c.b16 %v1897, %v1897
      %v2026 = vpack.c.b16 %v1898, %v1898
      %v2027 = vpack.c.b16 %v1899, %v1899
      %v2028 = vpack.c.b16 %v1900, %v1900
      %v2029 = vpack.c.b16 %v1901, %v1901
      %v2030 = vpack.c.b16 %v1902, %v1902
      %v2031 = vpack.c.b16 %v1903, %v1903
      %v2032 = vpack.c.b16 %v1904, %v1904
      %v2033 = vpack.c.b16 %v1905, %v1905
      %v2034 = vpack.c.b16 %v1906, %v1906
      %v2035 = vpack.c.b16 %v1907, %v1907
      %v2036 = vpack.c.b16 %v1908, %v1908
      %v2037 = vpack.c.b16 %v1909, %v1909
      %v2038 = vpack.c.b16 %v1910, %v1910
      %v2039 = vpack.c.b16 %v1911, %v1911
      %v2040 = vpack.c.b16 %v1912, %v1912
      %v2041 = vpack.c.b16 %v1913, %v1913
      %v2042 = vpack.c.b16 %v1914, %v1914
      %v2043 = vpack.c.b16 %v1915, %v1915
      %v2044 = vpack.c.b16 %v1916, %v1916
      %v2045 = vpack.c.b16 %v1917, %v1917
      %v2046 = vpack.c.b16 %v1918, %v1918
      %v2047 = vpack.c.b16 %v1919, %v1919
      %v2048 = vpack.c.b16 %v1920, %v1920
      %v2049 = vpack.c.b16 %v1921, %v1921
      %v2050 = vpack.c.b16 %v1922, %v1922
      %v2051 = vpack.c.b16 %v1923, %v1923
      %v2052 = vpack.c.b16 %v1924, %v1924
      %v2053 = vpack.c.b16 %v1925, %v1925
      %v2054 = vpack.c.b16 %v1926, %v1926
      %v2055 = vpack.c.b16 %v1927, %v1927
      %v2056 = vpack.c.b16 %v1928, %v1928
      %v2057 = vpack.c.b16 %v1929, %v1929
      %v2058 = vpack.c.b16 %v1930, %v1930
      %v2059 = vpack.c.b16 %v1931, %v1931
      %v2060 = vpack.c.b16 %v1932, %v1932
      %v2061 = vpack.c.b16 %v1933, %v1933
      %v2062 = vpack.c.b16 %v1934, %v1934
      %v2063 = vpack.c.b16 %v1935, %v1935
      %v2064 = vpack.c.b16 %v1936, %v1936
      %v2065 = vpack.c.b16 %v1937, %v1937
      %v2066 = vpack.c.b16 %v1938, %v1938
      %v2067 = vpack.c.b16 %v1939, %v1939
      %v2068 = vpack.c.b16 %v1940, %v1940
      %v2069 = vpack.c.b16 %v1941, %v1941
      %v2070 = vpack.c.b16 %v1942, %v1942
      %v2071 = vpack.c.b16 %v1943, %v1943
      %v2072 = vpack.c.b16 %v1944, %v1944
      %v2073 = vpack.c.b16 %v1945, %v1945
      %v2074 = vpack.c.b16 %v1946, %v1946
      %v2075 = vpack.c.b16 %v1947, %v1947
      %v2076 = vpack.c.b16 %v1948, %v1948
      %v2077 = vpack.c.b16 %v1949, %v1949
      %v2078 = vpack.c.b16 %v1950, %v1950
      %v2079 = vpack.c.b16 %v1951, %v1951
      %v2080 = vpack.c.b16 %v1952, %v1952
      %v2081 = vpack.c.b16 %v1953, %v1953
      %v2082 = vpack.c.b16 %v1954, %v1954
      %v2083 = vpack.c.b16 %v1955, %v1955
      %v2084 = vpack.c.b16 %v1956, %v1956
      %v2085 = vpack.c.b16 %v1957, %v1957
      %v2086 = vpack.c.b16 %v1958, %v1958
      %v2087 = vpack.c.b16 %v1959, %v1959
      %v2088 = vpack.c.b16 %v1960, %v1960
      %v2089 = vpack.c.b16 %v1961, %v1961
      %v2090 = vpack.c.b16 %v1962, %v1962
      %v2091 = vpack.c.b16 %v1963, %v1963
      %v2092 = vpack.c.b16 %v1964, %v1964
      %v2093 = vpack.c.b16 %v1965, %v1965
      %v2094 = vpack.c.b16 %v1966, %v1966
      %v2095 = vpack.c.b16 %v1967, %v1967
      %v2096 = vpack.c.b16 %v1968, %v1968
      %v2097 = vpack.c.b16 %v1969, %v1969
      %v2098 = vpack.c.b16 %v1970, %v1970
      %v2099 = vpack.c.b16 %v1971, %v1971
      %v2100 = vpack.c.b16 %v1972, %v1972
      %v2101 = vpack.c.b16 %v1973, %v1973
      %v2102 = vpack.c.b16 %v1974, %v1974
      %v2103 = vpack.c.b16 %v1975, %v1975
      %v2104 = vpack.c.b16 %v1976, %v1976
      %v2105 = vpack.c.b16 %v1977, %v1977
      %v2106 = vpack.c.b16 %v1978, %v1978
      %v2107 = vpack.c.b16 %v1979, %v1979
      %v2108 = vpack.c.b16 %v1980, %v1980
      %v2109 = vpack.c.b16 %v1981, %v1981
      %v2110 = vpack.c.b16 %v1982, %v1982
      %v2111 = vpack.c.b16 %v1983, %v1983
      %v2112 = vpack.c.b16 %v1984, %v1984
      %v2113 = vpack.c.b16 %v1985, %v1985
      %v2114 = vpack.c.b16 %v1986, %v1986
      %v2115 = vpack.c.b16 %v1987, %v1987
      %v2116 = vpack.c.b16 %v1988, %v1988
      %v2117 = vpack.c.b16 %v1989, %v1989
      %v2118 = vpack.c.b16 %v1990, %v1990
      %v2119 = vpack.c.b16 %v1991, %v1991
      %v2120 = vpack.c.b16 %v1992, %v1992
      %v2121 = vpack.c.b16 %v1993, %v1993
      %v2122 = vpack.c.b16 %v1994, %v1994
      %v2123 = vpack.c.b16 %v1995, %v1995
      %v2124 = vpack.c.b16 %v1996, %v1996
      %v2125 = vpack.c.b16 %v1997, %v1997
      %v2126 = vpack.c.b16 %v1998, %v1998
      %v2127 = vpack.c.b16 %v1999, %v1999
      %v2128 = vpack.c.b16 %v2000, %v2000
      %v2129 = vpack.c.b16 %v2001, %v2001
      %v2130 = vpack.c.b16 %v2002, %v2002
      %v2131 = vpack.c.b16 %v2003, %v2003
      %v2132 = vpack.c.b16 %v2004, %v2004
      %v2133 = vpack.c.b16 %v2005, %v2005
      %v2134 = vpack.c.b16 %v2006, %v2006
      %v2135 = vpack.c.b16 %v2007, %v2007
      %v2136 = vpack.c.b16 %v2008, %v2008
      %v2137 = vpack.c.b16 %v2009, %v2009
      %v2138 = vpack.c.b16 %v2010, %v2010
      %v2139 = vpack.c.b16 %v2011, %v2011
      %v2140 = vpack.c.b16 %v2012, %v2012
      %v2141 = vpack.c.b16 %v2013, %v2013
      %v2142 = vpack.c.b16 %v2014, %v2014
      %v2143 = vpack.c.b16 %v2015, %v2015
      %v2144 = vpack.c.b16 %v2016, %v2016
      %v2145 = vpack.c.b16 %v2017, %v2017
      %v2146 = vpack.c.b16 %v2018, %v2018
      %v2147 = vpack.c.b16 %v2019, %v2019
      %v2148 = vpack.c.b16 %v2020, %v2020
      %v2149 = vpack.c.b16 %v2021, %v2021
      %2278 = vst [vmem:[%s172] sm:$0xf] %v2022
      %2279 = vst [vmem:[%s172 + $0x4] sm:$0xf] %v2023
      %2280 = vst [vmem:[%s172 + $0x8] sm:$0xf] %v2024
      %2281 = vst [vmem:[%s172 + $0xc] sm:$0xf] %v2025
      %2282 = vst [vmem:[%s172 + $0x10] sm:$0xf] %v2026
      %2283 = vst [vmem:[%s172 + $0x14] sm:$0xf] %v2027
      %2284 = vst [vmem:[%s172 + $0x18] sm:$0xf] %v2028
      %2285 = vst [vmem:[%s172 + $0x1c] sm:$0xf] %v2029
      %2286 = vst [vmem:[%s172 + $0x20] sm:$0xf] %v2030
      %2287 = vst [vmem:[%s172 + $0x24] sm:$0xf] %v2031
      %2288 = vst [vmem:[%s172 + $0x28] sm:$0xf] %v2032
      %2289 = vst [vmem:[%s172 + $0x2c] sm:$0xf] %v2033
      %2290 = vst [vmem:[%s172 + $0x30] sm:$0xf] %v2034
      %2291 = vst [vmem:[%s172 + $0x34] sm:$0xf] %v2035
      %2292 = vst [vmem:[%s172 + $0x38] sm:$0xf] %v2036
      %2293 = vst [vmem:[%s172 + $0x3c] sm:$0xf] %v2037
      %2294 = vst [vmem:[%s172 + $0x40] sm:$0xf] %v2038
      %2295 = vst [vmem:[%s172 + $0x44] sm:$0xf] %v2039
      %2296 = vst [vmem:[%s172 + $0x48] sm:$0xf] %v2040
      %2297 = vst [vmem:[%s172 + $0x4c] sm:$0xf] %v2041
      %2298 = vst [vmem:[%s172 + $0x50] sm:$0xf] %v2042
      %2299 = vst [vmem:[%s172 + $0x54] sm:$0xf] %v2043
      %2300 = vst [vmem:[%s172 + $0x58] sm:$0xf] %v2044
      %2301 = vst [vmem:[%s172 + $0x5c] sm:$0xf] %v2045
      %2302 = vst [vmem:[%s172 + $0x60] sm:$0xf] %v2046
      %2303 = vst [vmem:[%s172 + $0x64] sm:$0xf] %v2047
      %2304 = vst [vmem:[%s172 + $0x68] sm:$0xf] %v2048
      %2305 = vst [vmem:[%s172 + $0x6c] sm:$0xf] %v2049
      %2306 = vst [vmem:[%s172 + $0x70] sm:$0xf] %v2050
      %2307 = vst [vmem:[%s172 + $0x74] sm:$0xf] %v2051
      %2308 = vst [vmem:[%s172 + $0x78] sm:$0xf] %v2052
      %2309 = vst [vmem:[%s172 + $0x7c] sm:$0xf] %v2053
      %2310 = vst [vmem:[%s172 + $0x80] sm:$0xf] %v2054
      %2311 = vst [vmem:[%s172 + $0x84] sm:$0xf] %v2055
      %2312 = vst [vmem:[%s172 + $0x88] sm:$0xf] %v2056
      %2313 = vst [vmem:[%s172 + $0x8c] sm:$0xf] %v2057
      %2314 = vst [vmem:[%s172 + $0x90] sm:$0xf] %v2058
      %2315 = vst [vmem:[%s172 + $0x94] sm:$0xf] %v2059
      %2316 = vst [vmem:[%s172 + $0x98] sm:$0xf] %v2060
      %2317 = vst [vmem:[%s172 + $0x9c] sm:$0xf] %v2061
      %2318 = vst [vmem:[%s172 + $0xa0] sm:$0xf] %v2062
      %2319 = vst [vmem:[%s172 + $0xa4] sm:$0xf] %v2063
      %2320 = vst [vmem:[%s172 + $0xa8] sm:$0xf] %v2064
      %2321 = vst [vmem:[%s172 + $0xac] sm:$0xf] %v2065
      %2322 = vst [vmem:[%s172 + $0xb0] sm:$0xf] %v2066
      %2323 = vst [vmem:[%s172 + $0xb4] sm:$0xf] %v2067
      %2324 = vst [vmem:[%s172 + $0xb8] sm:$0xf] %v2068
      %2325 = vst [vmem:[%s172 + $0xbc] sm:$0xf] %v2069
      %2326 = vst [vmem:[%s172 + $0xc0] sm:$0xf] %v2070
      %2327 = vst [vmem:[%s172 + $0xc4] sm:$0xf] %v2071
      %2328 = vst [vmem:[%s172 + $0xc8] sm:$0xf] %v2072
      %2329 = vst [vmem:[%s172 + $0xcc] sm:$0xf] %v2073
      %2330 = vst [vmem:[%s172 + $0xd0] sm:$0xf] %v2074
      %2331 = vst [vmem:[%s172 + $0xd4] sm:$0xf] %v2075
      %2332 = vst [vmem:[%s172 + $0xd8] sm:$0xf] %v2076
      %2333 = vst [vmem:[%s172 + $0xdc] sm:$0xf] %v2077
      %2334 = vst [vmem:[%s172 + $0xe0] sm:$0xf] %v2078
      %2335 = vst [vmem:[%s172 + $0xe4] sm:$0xf] %v2079
      %2336 = vst [vmem:[%s172 + $0xe8] sm:$0xf] %v2080
      %2337 = vst [vmem:[%s172 + $0xec] sm:$0xf] %v2081
      %2338 = vst [vmem:[%s172 + $0xf0] sm:$0xf] %v2082
      %2339 = vst [vmem:[%s172 + $0xf4] sm:$0xf] %v2083
      %2340 = vst [vmem:[%s172 + $0xf8] sm:$0xf] %v2084
      %2341 = vst [vmem:[%s172 + $0xfc] sm:$0xf] %v2085
      %2342 = vst [vmem:[%s172 + $0x100] sm:$0xf] %v2086
      %2343 = vst [vmem:[%s172 + $0x104] sm:$0xf] %v2087
      %2344 = vst [vmem:[%s172 + $0x108] sm:$0xf] %v2088
      %2345 = vst [vmem:[%s172 + $0x10c] sm:$0xf] %v2089
      %2346 = vst [vmem:[%s172 + $0x110] sm:$0xf] %v2090
      %2347 = vst [vmem:[%s172 + $0x114] sm:$0xf] %v2091
      %2348 = vst [vmem:[%s172 + $0x118] sm:$0xf] %v2092
      %2349 = vst [vmem:[%s172 + $0x11c] sm:$0xf] %v2093
      %2350 = vst [vmem:[%s172 + $0x120] sm:$0xf] %v2094
      %2351 = vst [vmem:[%s172 + $0x124] sm:$0xf] %v2095
      %2352 = vst [vmem:[%s172 + $0x128] sm:$0xf] %v2096
      %2353 = vst [vmem:[%s172 + $0x12c] sm:$0xf] %v2097
      %2354 = vst [vmem:[%s172 + $0x130] sm:$0xf] %v2098
      %2355 = vst [vmem:[%s172 + $0x134] sm:$0xf] %v2099
      %2356 = vst [vmem:[%s172 + $0x138] sm:$0xf] %v2100
      %2357 = vst [vmem:[%s172 + $0x13c] sm:$0xf] %v2101
      %2358 = vst [vmem:[%s172 + $0x140] sm:$0xf] %v2102
      %2359 = vst [vmem:[%s172 + $0x144] sm:$0xf] %v2103
      %2360 = vst [vmem:[%s172 + $0x148] sm:$0xf] %v2104
      %2361 = vst [vmem:[%s172 + $0x14c] sm:$0xf] %v2105
      %2362 = vst [vmem:[%s172 + $0x150] sm:$0xf] %v2106
      %2363 = vst [vmem:[%s172 + $0x154] sm:$0xf] %v2107
      %2364 = vst [vmem:[%s172 + $0x158] sm:$0xf] %v2108
      %2365 = vst [vmem:[%s172 + $0x15c] sm:$0xf] %v2109
      %2366 = vst [vmem:[%s172 + $0x160] sm:$0xf] %v2110
      %2367 = vst [vmem:[%s172 + $0x164] sm:$0xf] %v2111
      %2368 = vst [vmem:[%s172 + $0x168] sm:$0xf] %v2112
      %2369 = vst [vmem:[%s172 + $0x16c] sm:$0xf] %v2113
      %2370 = vst [vmem:[%s172 + $0x170] sm:$0xf] %v2114
      %2371 = vst [vmem:[%s172 + $0x174] sm:$0xf] %v2115
      %2372 = vst [vmem:[%s172 + $0x178] sm:$0xf] %v2116
      %2373 = vst [vmem:[%s172 + $0x17c] sm:$0xf] %v2117
      %2374 = vst [vmem:[%s172 + $0x180] sm:$0xf] %v2118
      %2375 = vst [vmem:[%s172 + $0x184] sm:$0xf] %v2119
      %2376 = vst [vmem:[%s172 + $0x188] sm:$0xf] %v2120
      %2377 = vst [vmem:[%s172 + $0x18c] sm:$0xf] %v2121
      %2378 = vst [vmem:[%s172 + $0x190] sm:$0xf] %v2122
      %2379 = vst [vmem:[%s172 + $0x194] sm:$0xf] %v2123
      %2380 = vst [vmem:[%s172 + $0x198] sm:$0xf] %v2124
      %2381 = vst [vmem:[%s172 + $0x19c] sm:$0xf] %v2125
      %2382 = vst [vmem:[%s172 + $0x1a0] sm:$0xf] %v2126
      %2383 = vst [vmem:[%s172 + $0x1a4] sm:$0xf] %v2127
      %2384 = vst [vmem:[%s172 + $0x1a8] sm:$0xf] %v2128
      %2385 = vst [vmem:[%s172 + $0x1ac] sm:$0xf] %v2129
      %2386 = vst [vmem:[%s172 + $0x1b0] sm:$0xf] %v2130
      %2387 = vst [vmem:[%s172 + $0x1b4] sm:$0xf] %v2131
      %2388 = vst [vmem:[%s172 + $0x1b8] sm:$0xf] %v2132
      %2389 = vst [vmem:[%s172 + $0x1bc] sm:$0xf] %v2133
      %2390 = vst [vmem:[%s172 + $0x1c0] sm:$0xf] %v2134
      %2391 = vst [vmem:[%s172 + $0x1c4] sm:$0xf] %v2135
      %2392 = vst [vmem:[%s172 + $0x1c8] sm:$0xf] %v2136
      %2393 = vst [vmem:[%s172 + $0x1cc] sm:$0xf] %v2137
      %2394 = vst [vmem:[%s172 + $0x1d0] sm:$0xf] %v2138
      %2395 = vst [vmem:[%s172 + $0x1d4] sm:$0xf] %v2139
      %2396 = vst [vmem:[%s172 + $0x1d8] sm:$0xf] %v2140
      %2397 = vst [vmem:[%s172 + $0x1dc] sm:$0xf] %v2141
      %2398 = vst [vmem:[%s172 + $0x1e0] sm:$0xf] %v2142
      %2399 = vst [vmem:[%s172 + $0x1e4] sm:$0xf] %v2143
      %2400 = vst [vmem:[%s172 + $0x1e8] sm:$0xf] %v2144
      %2401 = vst [vmem:[%s172 + $0x1ec] sm:$0xf] %v2145
      %2402 = vst [vmem:[%s172 + $0x1f0] sm:$0xf] %v2146
      %2403 = vst [vmem:[%s172 + $0x1f4] sm:$0xf] %v2147
      %2404 = vst [vmem:[%s172 + $0x1f8] sm:$0xf] %v2148
      %2405 = vst [vmem:[%s172 + $0x1fc] sm:$0xf] %v2149
      %s2406 = smul.u32 128, %s14
      %p2407 = scmp.lt.s32.totalorder %s2406, 255
      %s2408 = scalar_select %p2407, %s2406, 255
      %s2409 = smul.addr %s2408, 4
      %s2410 = scalar_lea.vmem %s3, %s2409
      // Predicated region
      $region33: #{forward.75} parent=31 // pred_check
        %p2411 = pneg %p100
      $region34: #{forward.75} parent=31 // pred_check_branch
        %2413 = sbr.rel (%p2411) target = $region36
      $region35: #{forward.75} parent=31 // pred_region
        %s2414 = smul.u32 128, %s14
      $region36: #{forward.75} parent=31 // pred_fallthru
        _
    $region32: #{forward.75} parent=5 // pred_fallthru
      _
    %p2415 = scmp.le.s32.totalorder 2, %s9
    // Predicated region
    $region37: #{forward.75} parent=5 // pred_check
      %p2416 = pneg %p2415
    $region38: #{forward.75} parent=5 // pred_check_branch
      %2418 = sbr.rel (%p2416) target = $region40
    $region39: #{forward.75} parent=5 // pred_region
      %s2419 = ssub.s32 %s9, 2
      // Predicated region
      $region41: #{forward.75} parent=39 // pred_check
        %p2420 = pneg %p106
      $region42: #{forward.75} parent=39 // pred_check_branch
        %2422 = sbr.rel (%p2420) target = $region44
      $region43: #{forward.75} parent=39 // pred_region
        %s2423 = smul.u32 128, %s15
        %p2424 = scmp.lt.s32.totalorder %s2423, 255
        %s2425 = scalar_select %p2424, %s2423, 255
        %s2426 = smul.addr %s2425, 4
        %s2427 = scalar_lea.vmem %s3, %s2426
      $region44: #{forward.75} parent=39 // pred_fallthru
        _
    $region40: #{forward.75} parent=5 // pred_fallthru
      _
  $region6: #{forward.75} parent=0 // loop_footer
    %s13 = sadd.s32 1, %s9
  $region7: #{forward.75} parent=0 // loop_footer_branch
    %8 = sbr.rel target = $region3
  $region8: #{forward.75} parent=0 // loop_exit
    _

// kernel: forward.77
$region0: #{forward.77}
  #allocation0 [shape = 'u32[]', space=smem, size = 0x4, offset = 0x4, fixed_abs, tag = 'smem constant byte address 0x4 - core index']
  #allocation1 [shape = 'u32[144,128]{1,0:T(1,128)}', space=vmem, size = 0x12000, scoped, tag = 'internal scratch']
  %s0 = inlined_call_operand.vmem [shape: bf16[512,128], index: 0, kind: input, shape index: {}]
  %s1 = inlined_call_operand.vmem [shape: bf16[128,128], index: 1, kind: input, shape index: {}]
  %s2 = inlined_call_operand.vmem [shape: f32[1,128], index: 2, kind: input, shape index: {}]
  %s3 = inlined_call_operand.vmem [shape: bf16[512,128], index: 3, kind: output, shape index: {}]
  %s4 = sld [smem:[#allocation0]]
  $region45: #{forward.77} parent=0
    _
  %s6 = ssub.s32 1, %s4
  %s7 = scalar_select 0, %s6, %s4
  loop: start=0, step=1, limit=4
  $region2: #{forward.77} parent=0 // loop_pre_header
    _
  $region3: #{forward.77} parent=0 // loop_header
    %s9 = sphi 0, %s13
    %p10 = scmp.ge.s32.totalorder %s9, 4
    %s19 = sphi 0, %s21
    %s22 = sphi 0, %s19
    %s23 = sphi 0, %s22
    %s39 = sphi 0, %s23
    %s43 = sphi 0, %s43
    %s45 = sphi 0, %s43
    %s46 = sphi 0, %s45
    %s60 = sphi 0, %s46
    %s64 = sphi 0, %s64
    %s66 = sphi 0, %s64
    %s67 = sphi 0, %s66
    %s81 = sphi 0, %s67
    %s87 = sphi 0, %s89
    %s90 = sphi 0, %s87
    %s91 = sphi 0, %s90
    %s107 = sphi 0, %s91
  $region4: #{forward.77} parent=0 // loop_header_branch
    %12 = sbr.rel (%p10) target = $region8
  $region5: #{forward.77} parent=0 // loop_body
    %s14 = ssub.s32 %s9, 1
    %s15 = ssub.s32 %s9, 2
    %s16 = sadd.s32 %s9, 1
    %s17 = ssub.s32 %s9, %s16
    %p18 = scmp.eq.s32.totalorder %s17, 0
    %s20 = sadd.s32 %s19, 1
    %s21 = scalar_select %p18, %s19, %s20
    %p24 = pneg %p18
    %p25 = scmp.eq.s32.totalorder %s9, 1
    %p26 = por %p24, %p25
    %p27 = scmp.ne.s32.totalorder %s19, %s22
    %p28 = scmp.eq.s32.totalorder %s9, 0
    %p29 = por %p27, %p28
    %p30 = scmp.ne.s32.totalorder %s19, %s22
    %p31 = scmp.eq.s32.totalorder %s14, 1
    %p32 = por %p30, %p31
    %p33 = scmp.ne.s32.totalorder %s22, %s23
    %p34 = scmp.eq.s32.totalorder %s14, 0
    %p35 = por %p33, %p34
    %p36 = scmp.ne.s32.totalorder %s22, %s23
    %p37 = scmp.eq.s32.totalorder %s15, 1
    %p38 = por %p36, %p37
    %p40 = scmp.ne.s32.totalorder %s23, %s39
    %p41 = scmp.eq.s32.totalorder %s15, 0
    %p42 = por %p40, %p41
    %s44 = sadd.s32 %s43, 1
    %p47 = scmp.eq.s32.totalorder %s9, 1
    %p48 = scmp.ne.s32.totalorder %s43, %s45
    %p49 = scmp.eq.s32.totalorder %s9, 0
    %p50 = por %p48, %p49
    %p51 = scmp.ne.s32.totalorder %s43, %s45
    %p52 = scmp.eq.s32.totalorder %s14, 1
    %p53 = por %p51, %p52
    %p54 = scmp.ne.s32.totalorder %s45, %s46
    %p55 = scmp.eq.s32.totalorder %s14, 0
    %p56 = por %p54, %p55
    %p57 = scmp.ne.s32.totalorder %s45, %s46
    %p58 = scmp.eq.s32.totalorder %s15, 1
    %p59 = por %p57, %p58
    %p61 = scmp.ne.s32.totalorder %s46, %s60
    %p62 = scmp.eq.s32.totalorder %s15, 0
    %p63 = por %p61, %p62
    %s65 = sadd.s32 %s64, 1
    %p68 = scmp.eq.s32.totalorder %s9, 1
    %p69 = scmp.ne.s32.totalorder %s64, %s66
    %p70 = scmp.eq.s32.totalorder %s9, 0
    %p71 = por %p69, %p70
    %p72 = scmp.ne.s32.totalorder %s64, %s66
    %p73 = scmp.eq.s32.totalorder %s14, 1
    %p74 = por %p72, %p73
    %p75 = scmp.ne.s32.totalorder %s66, %s67
    %p76 = scmp.eq.s32.totalorder %s14, 0
    %p77 = por %p75, %p76
    %p78 = scmp.ne.s32.totalorder %s66, %s67
    %p79 = scmp.eq.s32.totalorder %s15, 1
    %p80 = por %p78, %p79
    %p82 = scmp.ne.s32.totalorder %s67, %s81
    %p83 = scmp.eq.s32.totalorder %s15, 0
    %p84 = por %p82, %p83
    %s85 = ssub.s32 %s9, %s16
    %p86 = scmp.eq.s32.totalorder %s85, 0
    %s88 = sadd.s32 %s87, 1
    %s89 = scalar_select %p86, %s87, %s88
    %p92 = pneg %p86
    %p93 = scmp.eq.s32.totalorder %s9, 1
    %p94 = por %p92, %p93
    %p95 = scmp.ne.s32.totalorder %s87, %s90
    %p96 = scmp.eq.s32.totalorder %s9, 0
    %p97 = por %p95, %p96
    %p98 = scmp.ne.s32.totalorder %s87, %s90
    %p99 = scmp.eq.s32.totalorder %s14, 1
    %p100 = por %p98, %p99
    %p101 = scmp.ne.s32.totalorder %s90, %s91
    %p102 = scmp.eq.s32.totalorder %s14, 0
    %p103 = por %p101, %p102
    %p104 = scmp.ne.s32.totalorder %s90, %s91
    %p105 = scmp.eq.s32.totalorder %s15, 1
    %p106 = por %p104, %p105
    %p108 = scmp.ne.s32.totalorder %s91, %s107
    %p109 = scmp.eq.s32.totalorder %s15, 0
    %p110 = por %p108, %p109
    %p111 = scmp.le.s32.totalorder 1, %s9
    %p112 = scmp.lt.s32.totalorder %s9, 3
    %p113 = pnand %p111, %p112
    %p114 = pneg %p113
    // Predicated region
    $region9: #{forward.77} parent=5 // pred_check
      _
    $region10: #{forward.77} parent=5 // pred_check_branch
      %116 = sbr.rel (%p113) target = $region12
    $region11: #{forward.77} parent=5 // pred_region
      %s117 = ssub.s32 %s9, 1
      // Predicated region
      $region13: #{forward.77} parent=11 // pred_check
        %p118 = pneg %p56
      $region14: #{forward.77} parent=11 // pred_check_branch
        %120 = sbr.rel (%p118) target = $region16
      $region15: #{forward.77} parent=11 // pred_region
        _
      $region16: #{forward.77} parent=11 // pred_fallthru
        _
      // Predicated region
      $region17: #{forward.77} parent=11 // pred_check
        %p121 = pneg %p77
      $region18: #{forward.77} parent=11 // pred_check_branch
        %123 = sbr.rel (%p121) target = $region20
      $region19: #{forward.77} parent=11 // pred_region
        _
      $region20: #{forward.77} parent=11 // pred_fallthru
        _
    $region12: #{forward.77} parent=5 // pred_fallthru
      _
    %p124 = scmp.lt.s32.totalorder %s9, 2
    // Predicated region
    $region21: #{forward.77} parent=5 // pred_check
      %p125 = pneg %p124
    $region22: #{forward.77} parent=5 // pred_check_branch
      %127 = sbr.rel (%p125) target = $region24
    $region23: #{forward.77} parent=5 // pred_region
      // Predicated region
      $region25: #{forward.77} parent=23 // pred_check
        %p128 = pneg %p29
      $region26: #{forward.77} parent=23 // pred_check_branch
        %130 = sbr.rel (%p128) target = $region28
      $region27: #{forward.77} parent=23 // pred_region
        %s131 = smul.u32 32, %s9
        %p132 = scmp.lt.s32.totalorder %s131, 63
        %s133 = scalar_select %p132, %s131, 63
        %s134 = smul.addr %s133, 4
        %s135 = scalar_lea.vmem %s0, %s134
        %s136 = smul.u32 32, %s9
      $region28: #{forward.77} parent=23 // pred_fallthru
        _
    $region24: #{forward.77} parent=5 // pred_fallthru
      _
    %p137 = scmp.le.s32.totalorder 1, %s9
    %p138 = scmp.lt.s32.totalorder %s9, 3
    %p139 = pnand %p137, %p138
    %p140 = pneg %p139
    // Predicated region
    $region29: #{forward.77} parent=5 // pred_check
      _
    $region30: #{forward.77} parent=5 // pred_check_branch
      %142 = sbr.rel (%p139) target = $region32
    $region31: #{forward.77} parent=5 // pred_region
      %s143 = ssub.s32 %s9, 1
      %s144 = smul.u32 32, %s14
      %p145 = scmp.lt.s32.totalorder %s144, 63
      %s146 = scalar_select %p145, %s144, 63
      %s147 = smul.addr %s146, 4
      %s148 = scalar_lea.vmem %s0, %s147
      %p149 = pneg %p35
      %p150 = pneg %p32
      %p151 = pneg %p56
      %p152 = pneg %p53
      %p153 = pneg %p77
      %p154 = pneg %p74
      %p155 = pneg %p103
      %p156 = pneg %p100
      %s157 = smul.u32 32, %s14
      %p158 = scmp.lt.s32.totalorder %s157, 63
      %s159 = scalar_select %p158, %s157, 63
      %s160 = smul.addr %s159, 4
      %s161 = scalar_lea.vmem %s3, %s160
      %s162 = smul.u32 32, %s14
      %p163 = scmp.lt.s32.totalorder %s162, 63
      %s164 = scalar_select %p163, %s162, 63
      %s165 = smul.addr %s164, 4
      %s166 = scalar_lea.vmem %s0, %s165
      %s167 = smul.u32 32, %s14
      %s168 = smul.u32 32, %s14
      %p169 = scmp.lt.s32.totalorder %s168, 63
      %s170 = scalar_select %p169, %s168, 63
      %s171 = smul.addr %s170, 4
      %s172 = scalar_lea.vmem %s3, %s171
      %s173 = smul.u32 32, %s14
      %v175 = vld [vmem:[%s166] sm:$0xf]
      %v176 = vld [vmem:[%s166 + $0x4] sm:$0xf]
      %v177 = vld [vmem:[%s166 + $0x8] sm:$0xf]
      %v178 = vld [vmem:[%s166 + $0xc] sm:$0xf]
      %v179 = vld [vmem:[%s166 + $0x10] sm:$0xf]
      %v180 = vld [vmem:[%s166 + $0x14] sm:$0xf]
      %v181 = vld [vmem:[%s166 + $0x18] sm:$0xf]
      %v182 = vld [vmem:[%s166 + $0x1c] sm:$0xf]
      %v183 = vld [vmem:[%s166 + $0x20] sm:$0xf]
      %v184 = vld [vmem:[%s166 + $0x24] sm:$0xf]
      %v185 = vld [vmem:[%s166 + $0x28] sm:$0xf]
      %v186 = vld [vmem:[%s166 + $0x2c] sm:$0xf]
      %v187 = vld [vmem:[%s166 + $0x30] sm:$0xf]
      %v188 = vld [vmem:[%s166 + $0x34] sm:$0xf]
      %v189 = vld [vmem:[%s166 + $0x38] sm:$0xf]
      %v190 = vld [vmem:[%s166 + $0x3c] sm:$0xf]
      %v191 = vld [vmem:[%s166 + $0x40] sm:$0xf]
      %v192 = vld [vmem:[%s166 + $0x44] sm:$0xf]
      %v193 = vld [vmem:[%s166 + $0x48] sm:$0xf]
      %v194 = vld [vmem:[%s166 + $0x4c] sm:$0xf]
      %v195 = vld [vmem:[%s166 + $0x50] sm:$0xf]
      %v196 = vld [vmem:[%s166 + $0x54] sm:$0xf]
      %v197 = vld [vmem:[%s166 + $0x58] sm:$0xf]
      %v198 = vld [vmem:[%s166 + $0x5c] sm:$0xf]
      %v199 = vld [vmem:[%s166 + $0x60] sm:$0xf]
      %v200 = vld [vmem:[%s166 + $0x64] sm:$0xf]
      %v201 = vld [vmem:[%s166 + $0x68] sm:$0xf]
      %v202 = vld [vmem:[%s166 + $0x6c] sm:$0xf]
      %v203 = vld [vmem:[%s166 + $0x70] sm:$0xf]
      %v204 = vld [vmem:[%s166 + $0x74] sm:$0xf]
      %v205 = vld [vmem:[%s166 + $0x78] sm:$0xf]
      %v206 = vld [vmem:[%s166 + $0x7c] sm:$0xf]
      %v207 = vld [vmem:[%s1] sm:$0xf]
      %v208 = vld [vmem:[%s1 + $0x4] sm:$0xf]
      %v209 = vld [vmem:[%s1 + $0x8] sm:$0xf]
      %v210 = vld [vmem:[%s1 + $0xc] sm:$0xf]
      %v211 = vld [vmem:[%s1 + $0x10] sm:$0xf]
      %v212 = vld [vmem:[%s1 + $0x14] sm:$0xf]
      %v213 = vld [vmem:[%s1 + $0x18] sm:$0xf]
      %v214 = vld [vmem:[%s1 + $0x1c] sm:$0xf]
      %v215 = vld [vmem:[%s1 + $0x20] sm:$0xf]
      %v216 = vld [vmem:[%s1 + $0x24] sm:$0xf]
      %v217 = vld [vmem:[%s1 + $0x28] sm:$0xf]
      %v218 = vld [vmem:[%s1 + $0x2c] sm:$0xf]
      %v219 = vld [vmem:[%s1 + $0x30] sm:$0xf]
      %v220 = vld [vmem:[%s1 + $0x34] sm:$0xf]
      %v221 = vld [vmem:[%s1 + $0x38] sm:$0xf]
      %v222 = vld [vmem:[%s1 + $0x3c] sm:$0xf]
      %v223 = vld [vmem:[%s2] sm:$0x1]
      %v225 = vlaneseq
      %v226 = vshrl.u32 %v225, 7
      %v227 = vsub.s32 0, %v226
      %v228 = vrot.slane %v223, %v227
      %v262 = vunpack.c.l.b16 %v175
      %v263 = vunpack.c.l.b16 %v176
      %v264 = vunpack.c.l.b16 %v177
      %v265 = vunpack.c.l.b16 %v178
      %v266 = vunpack.c.l.b16 %v179
      %v267 = vunpack.c.l.b16 %v180
      %v268 = vunpack.c.l.b16 %v181
      %v269 = vunpack.c.l.b16 %v182
      %v270 = vunpack.c.l.b16 %v183
      %v271 = vunpack.c.l.b16 %v184
      %v272 = vunpack.c.l.b16 %v185
      %v273 = vunpack.c.l.b16 %v186
      %v274 = vunpack.c.l.b16 %v187
      %v275 = vunpack.c.l.b16 %v188
      %v276 = vunpack.c.l.b16 %v189
      %v277 = vunpack.c.l.b16 %v190
      %v278 = vunpack.c.l.b16 %v191
      %v279 = vunpack.c.l.b16 %v192
      %v280 = vunpack.c.l.b16 %v193
      %v281 = vunpack.c.l.b16 %v194
      %v282 = vunpack.c.l.b16 %v195
      %v283 = vunpack.c.l.b16 %v196
      %v284 = vunpack.c.l.b16 %v197
      %v285 = vunpack.c.l.b16 %v198
      %v286 = vunpack.c.l.b16 %v199
      %v287 = vunpack.c.l.b16 %v200
      %v288 = vunpack.c.l.b16 %v201
      %v289 = vunpack.c.l.b16 %v202
      %v290 = vunpack.c.l.b16 %v203
      %v291 = vunpack.c.l.b16 %v204
      %v292 = vunpack.c.l.b16 %v205
      %v293 = vunpack.c.l.b16 %v206
      %v294 = vpack.c.b16 %v263, %v262
      %v295 = vpack.c.b16 %v265, %v264
      %v296 = vpack.c.b16 %v267, %v266
      %v297 = vpack.c.b16 %v269, %v268
      %v298 = vpack.c.b16 %v271, %v270
      %v299 = vpack.c.b16 %v273, %v272
      %v300 = vpack.c.b16 %v275, %v274
      %v301 = vpack.c.b16 %v277, %v276
      %v302 = vpack.c.b16 %v279, %v278
      %v303 = vpack.c.b16 %v281, %v280
      %v304 = vpack.c.b16 %v283, %v282
      %v305 = vpack.c.b16 %v285, %v284
      %v306 = vpack.c.b16 %v287, %v286
      %v307 = vpack.c.b16 %v289, %v288
      %v308 = vpack.c.b16 %v291, %v290
      %v309 = vpack.c.b16 %v293, %v292
      %v342 = vunpack.c.l.b16 %v207
      %v343 = vunpack.c.l.b16 %v208
      %v344 = vunpack.c.l.b16 %v209
      %v345 = vunpack.c.l.b16 %v210
      %v346 = vunpack.c.l.b16 %v211
      %v347 = vunpack.c.l.b16 %v212
      %v348 = vunpack.c.l.b16 %v213
      %v349 = vunpack.c.l.b16 %v214
      %v350 = vunpack.c.l.b16 %v215
      %v351 = vunpack.c.l.b16 %v216
      %v352 = vunpack.c.l.b16 %v217
      %v353 = vunpack.c.l.b16 %v218
      %v354 = vunpack.c.l.b16 %v219
      %v355 = vunpack.c.l.b16 %v220
      %v356 = vunpack.c.l.b16 %v221
      %v357 = vunpack.c.l.b16 %v222
      %v358 = vpack.c.b16 %v343, %v342
      %v359 = vpack.c.b16 %v345, %v344
      %v360 = vpack.c.b16 %v347, %v346
      %v361 = vpack.c.b16 %v349, %v348
      %v362 = vpack.c.b16 %v351, %v350
      %v363 = vpack.c.b16 %v353, %v352
      %v364 = vpack.c.b16 %v355, %v354
      %v365 = vpack.c.b16 %v357, %v356
      %374 = vmatprep.subr.bf16.mxu0 0
      %375 = vmatpush1.bf16.msra.mxu0 %v365
      %376 = vmatprep.subr.bf16.mxu0 0
      %377 = vmatpush1.bf16.msra.mxu0 %v364
      %378 = vmatprep.subr.bf16.mxu0 0
      %379 = vmatpush1.bf16.msra.mxu0 %v363
      %380 = vmatprep.subr.bf16.mxu0 0
      %381 = vmatpush1.bf16.msra.mxu0 %v362
      %382 = vmatprep.subr.bf16.mxu0 0
      %383 = vmatpush1.bf16.msra.mxu0 %v361
      %384 = vmatprep.subr.bf16.mxu0 0
      %385 = vmatpush1.bf16.msra.mxu0 %v360
      %386 = vmatprep.subr.bf16.mxu0 0
      %387 = vmatpush1.bf16.msra.mxu0 %v359
      %388 = vmatprep.subr.bf16.mxu0 0
      %389 = vmatpush1.bf16.msra.mxu0 %v358
      %390 = vmatprep.subr.bf16.mxu0 0
      %391 = vmatpush2.bf16.msra.mxu0 0
      %392 = vmatprep.subr.bf16.mxu0 0
      %393 = vmatpush2.bf16.msra.mxu0 0
      %394 = vmatprep.subr.bf16.mxu0 0
      %395 = vmatpush2.bf16.msra.mxu0 0
      %396 = vmatprep.subr.bf16.mxu0 0
      %397 = vmatpush2.bf16.msra.mxu0 0
      %398 = vmatprep.subr.bf16.mxu0 0
      %399 = vmatpush2.bf16.msra.mxu0 0
      %400 = vmatprep.subr.bf16.mxu0 0
      %401 = vmatpush2.bf16.msra.mxu0 0
      %402 = vmatprep.subr.bf16.mxu0 0
      %403 = vmatpush2.bf16.msra.mxu0 0
      %404 = vmatprep.subr.bf16.mxu0 0
      %405 = vmatpush2.bf16.msra.mxu0 0
      %406 = vmatprep.mubr.bf16.mxu0 0
      %407 = vmatmul.mubr.bf16.gmra.mxu0 %v294
      %v408 = vpop.f32.mrf.mxu0
      %v409 = vadd.f32 %v228, %v408
      %v410 = vpop.f32.mrf.mxu0
      %v411 = vpop.f32.mrf.mxu0
      %v412 = vadd.f32 %v228, %v411
      %v413 = vpop.f32.mrf.mxu0
      %414 = vmatprep.mubr.bf16.mxu0 0
      %415 = vmatmul.mubr.bf16.gmra.mxu0 %v295
      %v416 = vpop.f32.mrf.mxu0
      %v417 = vadd.f32 %v228, %v416
      %v418 = vpop.f32.mrf.mxu0
      %v419 = vpop.f32.mrf.mxu0
      %v420 = vadd.f32 %v228, %v419
      %v421 = vpop.f32.mrf.mxu0
      %422 = vmatprep.mubr.bf16.mxu0 0
      %423 = vmatmul.mubr.bf16.gmra.mxu0 %v296
      %v424 = vpop.f32.mrf.mxu0
      %v425 = vadd.f32 %v228, %v424
      %v426 = vpop.f32.mrf.mxu0
      %v427 = vpop.f32.mrf.mxu0
      %v428 = vadd.f32 %v228, %v427
      %v429 = vpop.f32.mrf.mxu0
      %430 = vmatprep.mubr.bf16.mxu0 0
      %431 = vmatmul.mubr.bf16.gmra.mxu0 %v297
      %v432 = vpop.f32.mrf.mxu0
      %v433 = vadd.f32 %v228, %v432
      %v434 = vpop.f32.mrf.mxu0
      %v435 = vpop.f32.mrf.mxu0
      %v436 = vadd.f32 %v228, %v435
      %v437 = vpop.f32.mrf.mxu0
      %438 = vmatprep.mubr.bf16.mxu0 0
      %439 = vmatmul.mubr.bf16.gmra.mxu0 %v298
      %v440 = vpop.f32.mrf.mxu0
      %v441 = vadd.f32 %v228, %v440
      %v442 = vpop.f32.mrf.mxu0
      %v443 = vpop.f32.mrf.mxu0
      %v444 = vadd.f32 %v228, %v443
      %v445 = vpop.f32.mrf.mxu0
      %446 = vmatprep.mubr.bf16.mxu0 0
      %447 = vmatmul.mubr.bf16.gmra.mxu0 %v299
      %v448 = vpop.f32.mrf.mxu0
      %v449 = vadd.f32 %v228, %v448
      %v450 = vpop.f32.mrf.mxu0
      %v451 = vpop.f32.mrf.mxu0
      %v452 = vadd.f32 %v228, %v451
      %v453 = vpop.f32.mrf.mxu0
      %454 = vmatprep.mubr.bf16.mxu0 0
      %455 = vmatmul.mubr.bf16.gmra.mxu0 %v300
      %v456 = vpop.f32.mrf.mxu0
      %v457 = vadd.f32 %v228, %v456
      %v458 = vpop.f32.mrf.mxu0
      %v459 = vpop.f32.mrf.mxu0
      %v460 = vadd.f32 %v228, %v459
      %v461 = vpop.f32.mrf.mxu0
      %462 = vmatprep.mubr.bf16.mxu0 0
      %463 = vmatmul.mubr.bf16.gmra.mxu0 %v301
      %v464 = vpop.f32.mrf.mxu0
      %v465 = vadd.f32 %v228, %v464
      %v466 = vpop.f32.mrf.mxu0
      %v467 = vpop.f32.mrf.mxu0
      %v468 = vadd.f32 %v228, %v467
      %v469 = vpop.f32.mrf.mxu0
      %470 = vmatprep.mubr.bf16.mxu0 0
      %471 = vmatmul.mubr.bf16.gmra.mxu0 %v302
      %v472 = vpop.f32.mrf.mxu0
      %v473 = vadd.f32 %v228, %v472
      %v474 = vpop.f32.mrf.mxu0
      %v475 = vpop.f32.mrf.mxu0
      %v476 = vadd.f32 %v228, %v475
      %v477 = vpop.f32.mrf.mxu0
      %478 = vmatprep.mubr.bf16.mxu0 0
      %479 = vmatmul.mubr.bf16.gmra.mxu0 %v303
      %v480 = vpop.f32.mrf.mxu0
      %v481 = vadd.f32 %v228, %v480
      %v482 = vpop.f32.mrf.mxu0
      %v483 = vpop.f32.mrf.mxu0
      %v484 = vadd.f32 %v228, %v483
      %v485 = vpop.f32.mrf.mxu0
      %486 = vmatprep.mubr.bf16.mxu0 0
      %487 = vmatmul.mubr.bf16.gmra.mxu0 %v304
      %v488 = vpop.f32.mrf.mxu0
      %v489 = vadd.f32 %v228, %v488
      %v490 = vpop.f32.mrf.mxu0
      %v491 = vpop.f32.mrf.mxu0
      %v492 = vadd.f32 %v228, %v491
      %v493 = vpop.f32.mrf.mxu0
      %494 = vmatprep.mubr.bf16.mxu0 0
      %495 = vmatmul.mubr.bf16.gmra.mxu0 %v305
      %v496 = vpop.f32.mrf.mxu0
      %v497 = vadd.f32 %v228, %v496
      %v498 = vpop.f32.mrf.mxu0
      %v499 = vpop.f32.mrf.mxu0
      %v500 = vadd.f32 %v228, %v499
      %v501 = vpop.f32.mrf.mxu0
      %502 = vmatprep.mubr.bf16.mxu0 0
      %503 = vmatmul.mubr.bf16.gmra.mxu0 %v306
      %v504 = vpop.f32.mrf.mxu0
      %v505 = vadd.f32 %v228, %v504
      %v506 = vpop.f32.mrf.mxu0
      %v507 = vpop.f32.mrf.mxu0
      %v508 = vadd.f32 %v228, %v507
      %v509 = vpop.f32.mrf.mxu0
      %510 = vmatprep.mubr.bf16.mxu0 0
      %511 = vmatmul.mubr.bf16.gmra.mxu0 %v307
      %v512 = vpop.f32.mrf.mxu0
      %v513 = vadd.f32 %v228, %v512
      %v514 = vpop.f32.mrf.mxu0
      %v515 = vpop.f32.mrf.mxu0
      %v516 = vadd.f32 %v228, %v515
      %v517 = vpop.f32.mrf.mxu0
      %518 = vmatprep.mubr.bf16.mxu0 0
      %519 = vmatmul.mubr.bf16.gmra.mxu0 %v308
      %v520 = vpop.f32.mrf.mxu0
      %v521 = vadd.f32 %v228, %v520
      %v522 = vpop.f32.mrf.mxu0
      %v523 = vpop.f32.mrf.mxu0
      %v524 = vadd.f32 %v228, %v523
      %v525 = vpop.f32.mrf.mxu0
      %526 = vmatprep.mubr.bf16.mxu0 0
      %527 = vmatmul.mubr.bf16.gmra.mxu0 %v309
      %v528 = vpop.f32.mrf.mxu0
      %v529 = vadd.f32 %v228, %v528
      %v530 = vpop.f32.mrf.mxu0
      %v531 = vpop.f32.mrf.mxu0
      %v532 = vadd.f32 %v228, %v531
      %v533 = vpop.f32.mrf.mxu0
      %534 = vdwg.mxu0
      %vm535 = vcmp.gt.f32.partialorder %v409, 0.0
      %vm536 = vcmp.gt.f32.partialorder %v412, 0.0
      %vm537 = vcmp.gt.f32.partialorder %v417, 0.0
      %vm538 = vcmp.gt.f32.partialorder %v420, 0.0
      %vm539 = vcmp.gt.f32.partialorder %v425, 0.0
      %vm540 = vcmp.gt.f32.partialorder %v428, 0.0
      %vm541 = vcmp.gt.f32.partialorder %v433, 0.0
      %vm542 = vcmp.gt.f32.partialorder %v436, 0.0
      %vm543 = vcmp.gt.f32.partialorder %v441, 0.0
      %vm544 = vcmp.gt.f32.partialorder %v444, 0.0
      %vm545 = vcmp.gt.f32.partialorder %v449, 0.0
      %vm546 = vcmp.gt.f32.partialorder %v452, 0.0
      %vm547 = vcmp.gt.f32.partialorder %v457, 0.0
      %vm548 = vcmp.gt.f32.partialorder %v460, 0.0
      %vm549 = vcmp.gt.f32.partialorder %v465, 0.0
      %vm550 = vcmp.gt.f32.partialorder %v468, 0.0
      %vm551 = vcmp.gt.f32.partialorder %v473, 0.0
      %vm552 = vcmp.gt.f32.partialorder %v476, 0.0
      %vm553 = vcmp.gt.f32.partialorder %v481, 0.0
      %vm554 = vcmp.gt.f32.partialorder %v484, 0.0
      %vm555 = vcmp.gt.f32.partialorder %v489, 0.0
      %vm556 = vcmp.gt.f32.partialorder %v492, 0.0
      %vm557 = vcmp.gt.f32.partialorder %v497, 0.0
      %vm558 = vcmp.gt.f32.partialorder %v500, 0.0
      %vm559 = vcmp.gt.f32.partialorder %v505, 0.0
      %vm560 = vcmp.gt.f32.partialorder %v508, 0.0
      %vm561 = vcmp.gt.f32.partialorder %v513, 0.0
      %vm562 = vcmp.gt.f32.partialorder %v516, 0.0
      %vm563 = vcmp.gt.f32.partialorder %v521, 0.0
      %vm564 = vcmp.gt.f32.partialorder %v524, 0.0
      %vm565 = vcmp.gt.f32.partialorder %v529, 0.0
      %vm566 = vcmp.gt.f32.partialorder %v532, 0.0
      %v567 = vmul.f32 %v409, 0.1
      %v568 = vmul.f32 %v412, 0.1
      %v569 = vmul.f32 %v417, 0.1
      %v570 = vmul.f32 %v420, 0.1
      %v571 = vmul.f32 %v425, 0.1
      %v572 = vmul.f32 %v428, 0.1
      %v573 = vmul.f32 %v433, 0.1
      %v574 = vmul.f32 %v436, 0.1
      %v575 = vmul.f32 %v441, 0.1
      %v576 = vmul.f32 %v444, 0.1
      %v577 = vmul.f32 %v449, 0.1
      %v578 = vmul.f32 %v452, 0.1
      %v579 = vmul.f32 %v457, 0.1
      %v580 = vmul.f32 %v460, 0.1
      %v581 = vmul.f32 %v465, 0.1
      %v582 = vmul.f32 %v468, 0.1
      %v583 = vmul.f32 %v473, 0.1
      %v584 = vmul.f32 %v476, 0.1
      %v585 = vmul.f32 %v481, 0.1
      %v586 = vmul.f32 %v484, 0.1
      %v587 = vmul.f32 %v489, 0.1
      %v588 = vmul.f32 %v492, 0.1
      %v589 = vmul.f32 %v497, 0.1
      %v590 = vmul.f32 %v500, 0.1
      %v591 = vmul.f32 %v505, 0.1
      %v592 = vmul.f32 %v508, 0.1
      %v593 = vmul.f32 %v513, 0.1
      %v594 = vmul.f32 %v516, 0.1
      %v595 = vmul.f32 %v521, 0.1
      %v596 = vmul.f32 %v524, 0.1
      %v597 = vmul.f32 %v529, 0.1
      %v598 = vmul.f32 %v532, 0.1
      %v599 = vsel %vm535, %v409, %v567
      %v600 = vsel %vm536, %v412, %v568
      %v601 = vsel %vm537, %v417, %v569
      %v602 = vsel %vm538, %v420, %v570
      %v603 = vsel %vm539, %v425, %v571
      %v604 = vsel %vm540, %v428, %v572
      %v605 = vsel %vm541, %v433, %v573
      %v606 = vsel %vm542, %v436, %v574
      %v607 = vsel %vm543, %v441, %v575
      %v608 = vsel %vm544, %v444, %v576
      %v609 = vsel %vm545, %v449, %v577
      %v610 = vsel %vm546, %v452, %v578
      %v611 = vsel %vm547, %v457, %v579
      %v612 = vsel %vm548, %v460, %v580
      %v613 = vsel %vm549, %v465, %v581
      %v614 = vsel %vm550, %v468, %v582
      %v615 = vsel %vm551, %v473, %v583
      %v616 = vsel %vm552, %v476, %v584
      %v617 = vsel %vm553, %v481, %v585
      %v618 = vsel %vm554, %v484, %v586
      %v619 = vsel %vm555, %v489, %v587
      %v620 = vsel %vm556, %v492, %v588
      %v621 = vsel %vm557, %v497, %v589
      %v622 = vsel %vm558, %v500, %v590
      %v623 = vsel %vm559, %v505, %v591
      %v624 = vsel %vm560, %v508, %v592
      %v625 = vsel %vm561, %v513, %v593
      %v626 = vsel %vm562, %v516, %v594
      %v627 = vsel %vm563, %v521, %v595
      %v628 = vsel %vm564, %v524, %v596
      %v629 = vsel %vm565, %v529, %v597
      %v630 = vsel %vm566, %v532, %v598
      %v631 = vpack.c.bf16 %v600, %v599
      %v632 = vpack.c.bf16 %v602, %v601
      %v633 = vpack.c.bf16 %v604, %v603
      %v634 = vpack.c.bf16 %v606, %v605
      %v635 = vpack.c.bf16 %v608, %v607
      %v636 = vpack.c.bf16 %v610, %v609
      %v637 = vpack.c.bf16 %v612, %v611
      %v638 = vpack.c.bf16 %v614, %v613
      %v639 = vpack.c.bf16 %v616, %v615
      %v640 = vpack.c.bf16 %v618, %v617
      %v641 = vpack.c.bf16 %v620, %v619
      %v642 = vpack.c.bf16 %v622, %v621
      %v643 = vpack.c.bf16 %v624, %v623
      %v644 = vpack.c.bf16 %v626, %v625
      %v645 = vpack.c.bf16 %v628, %v627
      %v646 = vpack.c.bf16 %v630, %v629
      %v663 = vunpack.c.l.b16 %v631
      %v664 = vunpack.c.h.b16 %v631
      %v665 = vunpack.c.l.b16 %v632
      %v666 = vunpack.c.h.b16 %v632
      %v667 = vunpack.c.l.b16 %v633
      %v668 = vunpack.c.h.b16 %v633
      %v669 = vunpack.c.l.b16 %v634
      %v670 = vunpack.c.h.b16 %v634
      %v671 = vunpack.c.l.b16 %v635
      %v672 = vunpack.c.h.b16 %v635
      %v673 = vunpack.c.l.b16 %v636
      %v674 = vunpack.c.h.b16 %v636
      %v675 = vunpack.c.l.b16 %v637
      %v676 = vunpack.c.h.b16 %v637
      %v677 = vunpack.c.l.b16 %v638
      %v678 = vunpack.c.h.b16 %v638
      %v679 = vunpack.c.l.b16 %v639
      %v680 = vunpack.c.h.b16 %v639
      %v681 = vunpack.c.l.b16 %v640
      %v682 = vunpack.c.h.b16 %v640
      %v683 = vunpack.c.l.b16 %v641
      %v684 = vunpack.c.h.b16 %v641
      %v685 = vunpack.c.l.b16 %v642
      %v686 = vunpack.c.h.b16 %v642
      %v687 = vunpack.c.l.b16 %v643
      %v688 = vunpack.c.h.b16 %v643
      %v689 = vunpack.c.l.b16 %v644
      %v690 = vunpack.c.h.b16 %v644
      %v691 = vunpack.c.l.b16 %v645
      %v692 = vunpack.c.h.b16 %v645
      %v693 = vunpack.c.l.b16 %v646
      %v694 = vunpack.c.h.b16 %v646
      %v695 = vpack.c.b16 %v663, %v663
      %v696 = vpack.c.b16 %v664, %v664
      %v697 = vpack.c.b16 %v665, %v665
      %v698 = vpack.c.b16 %v666, %v666
      %v699 = vpack.c.b16 %v667, %v667
      %v700 = vpack.c.b16 %v668, %v668
      %v701 = vpack.c.b16 %v669, %v669
      %v702 = vpack.c.b16 %v670, %v670
      %v703 = vpack.c.b16 %v671, %v671
      %v704 = vpack.c.b16 %v672, %v672
      %v705 = vpack.c.b16 %v673, %v673
      %v706 = vpack.c.b16 %v674, %v674
      %v707 = vpack.c.b16 %v675, %v675
      %v708 = vpack.c.b16 %v676, %v676
      %v709 = vpack.c.b16 %v677, %v677
      %v710 = vpack.c.b16 %v678, %v678
      %v711 = vpack.c.b16 %v679, %v679
      %v712 = vpack.c.b16 %v680, %v680
      %v713 = vpack.c.b16 %v681, %v681
      %v714 = vpack.c.b16 %v682, %v682
      %v715 = vpack.c.b16 %v683, %v683
      %v716 = vpack.c.b16 %v684, %v684
      %v717 = vpack.c.b16 %v685, %v685
      %v718 = vpack.c.b16 %v686, %v686
      %v719 = vpack.c.b16 %v687, %v687
      %v720 = vpack.c.b16 %v688, %v688
      %v721 = vpack.c.b16 %v689, %v689
      %v722 = vpack.c.b16 %v690, %v690
      %v723 = vpack.c.b16 %v691, %v691
      %v724 = vpack.c.b16 %v692, %v692
      %v725 = vpack.c.b16 %v693, %v693
      %v726 = vpack.c.b16 %v694, %v694
      %759 = vst [vmem:[%s172] sm:$0xf] %v695
      %760 = vst [vmem:[%s172 + $0x4] sm:$0xf] %v696
      %761 = vst [vmem:[%s172 + $0x8] sm:$0xf] %v697
      %762 = vst [vmem:[%s172 + $0xc] sm:$0xf] %v698
      %763 = vst [vmem:[%s172 + $0x10] sm:$0xf] %v699
      %764 = vst [vmem:[%s172 + $0x14] sm:$0xf] %v700
      %765 = vst [vmem:[%s172 + $0x18] sm:$0xf] %v701
      %766 = vst [vmem:[%s172 + $0x1c] sm:$0xf] %v702
      %767 = vst [vmem:[%s172 + $0x20] sm:$0xf] %v703
      %768 = vst [vmem:[%s172 + $0x24] sm:$0xf] %v704
      %769 = vst [vmem:[%s172 + $0x28] sm:$0xf] %v705
      %770 = vst [vmem:[%s172 + $0x2c] sm:$0xf] %v706
      %771 = vst [vmem:[%s172 + $0x30] sm:$0xf] %v707
      %772 = vst [vmem:[%s172 + $0x34] sm:$0xf] %v708
      %773 = vst [vmem:[%s172 + $0x38] sm:$0xf] %v709
      %774 = vst [vmem:[%s172 + $0x3c] sm:$0xf] %v710
      %775 = vst [vmem:[%s172 + $0x40] sm:$0xf] %v711
      %776 = vst [vmem:[%s172 + $0x44] sm:$0xf] %v712
      %777 = vst [vmem:[%s172 + $0x48] sm:$0xf] %v713
      %778 = vst [vmem:[%s172 + $0x4c] sm:$0xf] %v714
      %779 = vst [vmem:[%s172 + $0x50] sm:$0xf] %v715
      %780 = vst [vmem:[%s172 + $0x54] sm:$0xf] %v716
      %781 = vst [vmem:[%s172 + $0x58] sm:$0xf] %v717
      %782 = vst [vmem:[%s172 + $0x5c] sm:$0xf] %v718
      %783 = vst [vmem:[%s172 + $0x60] sm:$0xf] %v719
      %784 = vst [vmem:[%s172 + $0x64] sm:$0xf] %v720
      %785 = vst [vmem:[%s172 + $0x68] sm:$0xf] %v721
      %786 = vst [vmem:[%s172 + $0x6c] sm:$0xf] %v722
      %787 = vst [vmem:[%s172 + $0x70] sm:$0xf] %v723
      %788 = vst [vmem:[%s172 + $0x74] sm:$0xf] %v724
      %789 = vst [vmem:[%s172 + $0x78] sm:$0xf] %v725
      %790 = vst [vmem:[%s172 + $0x7c] sm:$0xf] %v726
      %s791 = smul.u32 32, %s14
      %p792 = scmp.lt.s32.totalorder %s791, 63
      %s793 = scalar_select %p792, %s791, 63
      %s794 = smul.addr %s793, 4
      %s795 = scalar_lea.vmem %s3, %s794
      // Predicated region
      $region33: #{forward.77} parent=31 // pred_check
        %p796 = pneg %p100
      $region34: #{forward.77} parent=31 // pred_check_branch
        %798 = sbr.rel (%p796) target = $region36
      $region35: #{forward.77} parent=31 // pred_region
        %s799 = smul.u32 32, %s14
      $region36: #{forward.77} parent=31 // pred_fallthru
        _
    $region32: #{forward.77} parent=5 // pred_fallthru
      _
    %p800 = scmp.le.s32.totalorder 2, %s9
    // Predicated region
    $region37: #{forward.77} parent=5 // pred_check
      %p801 = pneg %p800
    $region38: #{forward.77} parent=5 // pred_check_branch
      %803 = sbr.rel (%p801) target = $region40
    $region39: #{forward.77} parent=5 // pred_region
      %s804 = ssub.s32 %s9, 2
      // Predicated region
      $region41: #{forward.77} parent=39 // pred_check
        %p805 = pneg %p106
      $region42: #{forward.77} parent=39 // pred_check_branch
        %807 = sbr.rel (%p805) target = $region44
      $region43: #{forward.77} parent=39 // pred_region
        %s808 = smul.u32 32, %s15
        %p809 = scmp.lt.s32.totalorder %s808, 63
        %s810 = scalar_select %p809, %s808, 63
        %s811 = smul.addr %s810, 4
        %s812 = scalar_lea.vmem %s3, %s811
      $region44: #{forward.77} parent=39 // pred_fallthru
        _
    $region40: #{forward.77} parent=5 // pred_fallthru
      _
  $region6: #{forward.77} parent=0 // loop_footer
    %s13 = sadd.s32 1, %s9
  $region7: #{forward.77} parent=0 // loop_footer_branch
    %8 = sbr.rel target = $region3
  $region8: #{forward.77} parent=0 // loop_exit
    _

// kernel: forward.78
$region0: #{forward.78}
  #allocation0 [shape = 'u32[]', space=smem, size = 0x4, offset = 0x4, fixed_abs, tag = 'smem constant byte address 0x4 - core index']
  #allocation1 [shape = 'u32[144,128]{1,0:T(1,128)}', space=vmem, size = 0x12000, scoped, tag = 'internal scratch']
  %s0 = inlined_call_operand.vmem [shape: bf16[512,36], index: 0, kind: input, shape index: {}]
  %s1 = inlined_call_operand.vmem [shape: bf16[36,128], index: 1, kind: input, shape index: {}]
  %s2 = inlined_call_operand.vmem [shape: f32[1,128], index: 2, kind: input, shape index: {}]
  %s3 = inlined_call_operand.vmem [shape: bf16[512,128], index: 3, kind: input, shape index: {}]
  %s4 = inlined_call_operand.vmem [shape: bf16[512,128], index: 4, kind: output, shape index: {}]
  %s5 = sld [smem:[#allocation0]]
  $region49: #{forward.78} parent=0
    _
  %s7 = ssub.s32 1, %s5
  %s8 = scalar_select 0, %s7, %s5
  loop: start=0, step=1, limit=4
  $region2: #{forward.78} parent=0 // loop_pre_header
    _
  $region3: #{forward.78} parent=0 // loop_header
    %s10 = sphi 0, %s14
    %p11 = scmp.ge.s32.totalorder %s10, 4
    %s20 = sphi 0, %s22
    %s23 = sphi 0, %s20
    %s24 = sphi 0, %s23
    %s40 = sphi 0, %s24
    %s44 = sphi 0, %s44
    %s46 = sphi 0, %s44
    %s47 = sphi 0, %s46
    %s61 = sphi 0, %s47
    %s65 = sphi 0, %s65
    %s67 = sphi 0, %s65
    %s68 = sphi 0, %s67
    %s82 = sphi 0, %s68
    %s88 = sphi 0, %s90
    %s91 = sphi 0, %s88
    %s92 = sphi 0, %s91
    %s108 = sphi 0, %s92
    %s114 = sphi 0, %s116
    %s117 = sphi 0, %s114
    %s118 = sphi 0, %s117
    %s134 = sphi 0, %s118
  $region4: #{forward.78} parent=0 // loop_header_branch
    %13 = sbr.rel (%p11) target = $region8
  $region5: #{forward.78} parent=0 // loop_body
    %s15 = ssub.s32 %s10, 1
    %s16 = ssub.s32 %s10, 2
    %s17 = sadd.s32 %s10, 1
    %s18 = ssub.s32 %s10, %s17
    %p19 = scmp.eq.s32.totalorder %s18, 0
    %s21 = sadd.s32 %s20, 1
    %s22 = scalar_select %p19, %s20, %s21
    %p25 = pneg %p19
    %p26 = scmp.eq.s32.totalorder %s10, 1
    %p27 = por %p25, %p26
    %p28 = scmp.ne.s32.totalorder %s20, %s23
    %p29 = scmp.eq.s32.totalorder %s10, 0
    %p30 = por %p28, %p29
    %p31 = scmp.ne.s32.totalorder %s20, %s23
    %p32 = scmp.eq.s32.totalorder %s15, 1
    %p33 = por %p31, %p32
    %p34 = scmp.ne.s32.totalorder %s23, %s24
    %p35 = scmp.eq.s32.totalorder %s15, 0
    %p36 = por %p34, %p35
    %p37 = scmp.ne.s32.totalorder %s23, %s24
    %p38 = scmp.eq.s32.totalorder %s16, 1
    %p39 = por %p37, %p38
    %p41 = scmp.ne.s32.totalorder %s24, %s40
    %p42 = scmp.eq.s32.totalorder %s16, 0
    %p43 = por %p41, %p42
    %s45 = sadd.s32 %s44, 1
    %p48 = scmp.eq.s32.totalorder %s10, 1
    %p49 = scmp.ne.s32.totalorder %s44, %s46
    %p50 = scmp.eq.s32.totalorder %s10, 0
    %p51 = por %p49, %p50
    %p52 = scmp.ne.s32.totalorder %s44, %s46
    %p53 = scmp.eq.s32.totalorder %s15, 1
    %p54 = por %p52, %p53
    %p55 = scmp.ne.s32.totalorder %s46, %s47
    %p56 = scmp.eq.s32.totalorder %s15, 0
    %p57 = por %p55, %p56
    %p58 = scmp.ne.s32.totalorder %s46, %s47
    %p59 = scmp.eq.s32.totalorder %s16, 1
    %p60 = por %p58, %p59
    %p62 = scmp.ne.s32.totalorder %s47, %s61
    %p63 = scmp.eq.s32.totalorder %s16, 0
    %p64 = por %p62, %p63
    %s66 = sadd.s32 %s65, 1
    %p69 = scmp.eq.s32.totalorder %s10, 1
    %p70 = scmp.ne.s32.totalorder %s65, %s67
    %p71 = scmp.eq.s32.totalorder %s10, 0
    %p72 = por %p70, %p71
    %p73 = scmp.ne.s32.totalorder %s65, %s67
    %p74 = scmp.eq.s32.totalorder %s15, 1
    %p75 = por %p73, %p74
    %p76 = scmp.ne.s32.totalorder %s67, %s68
    %p77 = scmp.eq.s32.totalorder %s15, 0
    %p78 = por %p76, %p77
    %p79 = scmp.ne.s32.totalorder %s67, %s68
    %p80 = scmp.eq.s32.totalorder %s16, 1
    %p81 = por %p79, %p80
    %p83 = scmp.ne.s32.totalorder %s68, %s82
    %p84 = scmp.eq.s32.totalorder %s16, 0
    %p85 = por %p83, %p84
    %s86 = ssub.s32 %s10, %s17
    %p87 = scmp.eq.s32.totalorder %s86, 0
    %s89 = sadd.s32 %s88, 1
    %s90 = scalar_select %p87, %s88, %s89
    %p93 = pneg %p87
    %p94 = scmp.eq.s32.totalorder %s10, 1
    %p95 = por %p93, %p94
    %p96 = scmp.ne.s32.totalorder %s88, %s91
    %p97 = scmp.eq.s32.totalorder %s10, 0
    %p98 = por %p96, %p97
    %p99 = scmp.ne.s32.totalorder %s88, %s91
    %p100 = scmp.eq.s32.totalorder %s15, 1
    %p101 = por %p99, %p100
    %p102 = scmp.ne.s32.totalorder %s91, %s92
    %p103 = scmp.eq.s32.totalorder %s15, 0
    %p104 = por %p102, %p103
    %p105 = scmp.ne.s32.totalorder %s91, %s92
    %p106 = scmp.eq.s32.totalorder %s16, 1
    %p107 = por %p105, %p106
    %p109 = scmp.ne.s32.totalorder %s92, %s108
    %p110 = scmp.eq.s32.totalorder %s16, 0
    %p111 = por %p109, %p110
    %s112 = ssub.s32 %s10, %s17
    %p113 = scmp.eq.s32.totalorder %s112, 0
    %s115 = sadd.s32 %s114, 1
    %s116 = scalar_select %p113, %s114, %s115
    %p119 = pneg %p113
    %p120 = scmp.eq.s32.totalorder %s10, 1
    %p121 = por %p119, %p120
    %p122 = scmp.ne.s32.totalorder %s114, %s117
    %p123 = scmp.eq.s32.totalorder %s10, 0
    %p124 = por %p122, %p123
    %p125 = scmp.ne.s32.totalorder %s114, %s117
    %p126 = scmp.eq.s32.totalorder %s15, 1
    %p127 = por %p125, %p126
    %p128 = scmp.ne.s32.totalorder %s117, %s118
    %p129 = scmp.eq.s32.totalorder %s15, 0
    %p130 = por %p128, %p129
    %p131 = scmp.ne.s32.totalorder %s117, %s118
    %p132 = scmp.eq.s32.totalorder %s16, 1
    %p133 = por %p131, %p132
    %p135 = scmp.ne.s32.totalorder %s118, %s134
    %p136 = scmp.eq.s32.totalorder %s16, 0
    %p137 = por %p135, %p136
    %p138 = scmp.le.s32.totalorder 1, %s10
    %p139 = scmp.lt.s32.totalorder %s10, 3
    %p140 = pnand %p138, %p139
    %p141 = pneg %p140
    // Predicated region
    $region9: #{forward.78} parent=5 // pred_check
      _
    $region10: #{forward.78} parent=5 // pred_check_branch
      %143 = sbr.rel (%p140) target = $region12
    $region11: #{forward.78} parent=5 // pred_region
      %s144 = ssub.s32 %s10, 1
      // Predicated region
      $region13: #{forward.78} parent=11 // pred_check
        %p145 = pneg %p57
      $region14: #{forward.78} parent=11 // pred_check_branch
        %147 = sbr.rel (%p145) target = $region16
      $region15: #{forward.78} parent=11 // pred_region
        _
      $region16: #{forward.78} parent=11 // pred_fallthru
        _
      // Predicated region
      $region17: #{forward.78} parent=11 // pred_check
        %p148 = pneg %p78
      $region18: #{forward.78} parent=11 // pred_check_branch
        %150 = sbr.rel (%p148) target = $region20
      $region19: #{forward.78} parent=11 // pred_region
        _
      $region20: #{forward.78} parent=11 // pred_fallthru
        _
    $region12: #{forward.78} parent=5 // pred_fallthru
      _
    %p151 = scmp.lt.s32.totalorder %s10, 2
    // Predicated region
    $region21: #{forward.78} parent=5 // pred_check
      %p152 = pneg %p151
    $region22: #{forward.78} parent=5 // pred_check_branch
      %154 = sbr.rel (%p152) target = $region24
    $region23: #{forward.78} parent=5 // pred_region
      // Predicated region
      $region25: #{forward.78} parent=23 // pred_check
        %p155 = pneg %p30
      $region26: #{forward.78} parent=23 // pred_check_branch
        %157 = sbr.rel (%p155) target = $region28
      $region27: #{forward.78} parent=23 // pred_region
        %s158 = smul.u32 32, %s10
        %p159 = scmp.lt.s32.totalorder %s158, 63
        %s160 = scalar_select %p159, %s158, 63
        %s161 = smul.addr %s160, 4
        %s162 = scalar_lea.vmem %s0, %s161
        %s163 = smul.u32 32, %s10
      $region28: #{forward.78} parent=23 // pred_fallthru
        _
      // Predicated region
      $region29: #{forward.78} parent=23 // pred_check
        %p164 = pneg %p98
      $region30: #{forward.78} parent=23 // pred_check_branch
        %166 = sbr.rel (%p164) target = $region32
      $region31: #{forward.78} parent=23 // pred_region
        %s167 = smul.u32 32, %s10
        %p168 = scmp.lt.s32.totalorder %s167, 63
        %s169 = scalar_select %p168, %s167, 63
        %s170 = smul.addr %s169, 4
        %s171 = scalar_lea.vmem %s3, %s170
        %s172 = smul.u32 32, %s10
      $region32: #{forward.78} parent=23 // pred_fallthru
        _
    $region24: #{forward.78} parent=5 // pred_fallthru
      _
    %p173 = scmp.le.s32.totalorder 1, %s10
    %p174 = scmp.lt.s32.totalorder %s10, 3
    %p175 = pnand %p173, %p174
    %p176 = pneg %p175
    // Predicated region
    $region33: #{forward.78} parent=5 // pred_check
      _
    $region34: #{forward.78} parent=5 // pred_check_branch
      %178 = sbr.rel (%p175) target = $region36
    $region35: #{forward.78} parent=5 // pred_region
      %s179 = ssub.s32 %s10, 1
      %s180 = smul.u32 32, %s15
      %p181 = scmp.lt.s32.totalorder %s180, 63
      %s182 = scalar_select %p181, %s180, 63
      %s183 = smul.addr %s182, 4
      %s184 = scalar_lea.vmem %s0, %s183
      %p185 = pneg %p36
      %p186 = pneg %p33
      %p187 = pneg %p57
      %p188 = pneg %p54
      %p189 = pneg %p78
      %p190 = pneg %p75
      %s191 = smul.u32 32, %s15
      %p192 = scmp.lt.s32.totalorder %s191, 63
      %s193 = scalar_select %p192, %s191, 63
      %s194 = smul.addr %s193, 4
      %s195 = scalar_lea.vmem %s3, %s194
      %p196 = pneg %p104
      %p197 = pneg %p101
      %p198 = pneg %p130
      %p199 = pneg %p127
      %s200 = smul.u32 32, %s15
      %p201 = scmp.lt.s32.totalorder %s200, 63
      %s202 = scalar_select %p201, %s200, 63
      %s203 = smul.addr %s202, 4
      %s204 = scalar_lea.vmem %s4, %s203
      %s205 = smul.u32 32, %s15
      %p206 = scmp.lt.s32.totalorder %s205, 63
      %s207 = scalar_select %p206, %s205, 63
      %s208 = smul.addr %s207, 4
      %s209 = scalar_lea.vmem %s0, %s208
      %s210 = smul.u32 32, %s15
      %s211 = smul.u32 32, %s15
      %p212 = scmp.lt.s32.totalorder %s211, 63
      %s213 = scalar_select %p212, %s211, 63
      %s214 = smul.addr %s213, 4
      %s215 = scalar_lea.vmem %s3, %s214
      %s216 = smul.u32 32, %s15
      %s217 = smul.u32 32, %s15
      %p218 = scmp.lt.s32.totalorder %s217, 63
      %s219 = scalar_select %p218, %s217, 63
      %s220 = smul.addr %s219, 4
      %s221 = scalar_lea.vmem %s4, %s220
      %s222 = smul.u32 32, %s15
      %v224 = vld [vmem:[%s209] sm:$0xf]
      %v225 = vld [vmem:[%s209 + $0x4] sm:$0xf]
      %v226 = vld [vmem:[%s209 + $0x8] sm:$0xf]
      %v227 = vld [vmem:[%s209 + $0xc] sm:$0xf]
      %v228 = vld [vmem:[%s209 + $0x10] sm:$0xf]
      %v229 = vld [vmem:[%s209 + $0x14] sm:$0xf]
      %v230 = vld [vmem:[%s209 + $0x18] sm:$0xf]
      %v231 = vld [vmem:[%s209 + $0x1c] sm:$0xf]
      %v232 = vld [vmem:[%s209 + $0x20] sm:$0xf]
      %v233 = vld [vmem:[%s209 + $0x24] sm:$0xf]
      %v234 = vld [vmem:[%s209 + $0x28] sm:$0xf]
      %v235 = vld [vmem:[%s209 + $0x2c] sm:$0xf]
      %v236 = vld [vmem:[%s209 + $0x30] sm:$0xf]
      %v237 = vld [vmem:[%s209 + $0x34] sm:$0xf]
      %v238 = vld [vmem:[%s209 + $0x38] sm:$0xf]
      %v239 = vld [vmem:[%s209 + $0x3c] sm:$0xf]
      %v240 = vld [vmem:[%s209 + $0x40] sm:$0xf]
      %v241 = vld [vmem:[%s209 + $0x44] sm:$0xf]
      %v242 = vld [vmem:[%s209 + $0x48] sm:$0xf]
      %v243 = vld [vmem:[%s209 + $0x4c] sm:$0xf]
      %v244 = vld [vmem:[%s209 + $0x50] sm:$0xf]
      %v245 = vld [vmem:[%s209 + $0x54] sm:$0xf]
      %v246 = vld [vmem:[%s209 + $0x58] sm:$0xf]
      %v247 = vld [vmem:[%s209 + $0x5c] sm:$0xf]
      %v248 = vld [vmem:[%s209 + $0x60] sm:$0xf]
      %v249 = vld [vmem:[%s209 + $0x64] sm:$0xf]
      %v250 = vld [vmem:[%s209 + $0x68] sm:$0xf]
      %v251 = vld [vmem:[%s209 + $0x6c] sm:$0xf]
      %v252 = vld [vmem:[%s209 + $0x70] sm:$0xf]
      %v253 = vld [vmem:[%s209 + $0x74] sm:$0xf]
      %v254 = vld [vmem:[%s209 + $0x78] sm:$0xf]
      %v255 = vld [vmem:[%s209 + $0x7c] sm:$0xf]
      %v256 = vld [vmem:[%s1] sm:$0xf]
      %v257 = vld [vmem:[%s1 + $0x4] sm:$0xf]
      %v258 = vld [vmem:[%s1 + $0x8] sm:$0xf]
      %v259 = vld [vmem:[%s1 + $0xc] sm:$0xf]
      %v260 = vld [vmem:[%s1 + $0x10] sm:$0x3]
      %v261 = vld [vmem:[%s2] sm:$0x1]
      %v263 = vlaneseq
      %v264 = vshrl.u32 %v263, 7
      %v265 = vsub.s32 0, %v264
      %v266 = vrot.slane %v261, %v265
      %v300 = vunpack.c.l.b16 %v224
      %v301 = vunpack.c.l.b16 %v225
      %v302 = vunpack.c.l.b16 %v226
      %v303 = vunpack.c.l.b16 %v227
      %v304 = vunpack.c.l.b16 %v228
      %v305 = vunpack.c.l.b16 %v229
      %v306 = vunpack.c.l.b16 %v230
      %v307 = vunpack.c.l.b16 %v231
      %v308 = vunpack.c.l.b16 %v232
      %v309 = vunpack.c.l.b16 %v233
      %v310 = vunpack.c.l.b16 %v234
      %v311 = vunpack.c.l.b16 %v235
      %v312 = vunpack.c.l.b16 %v236
      %v313 = vunpack.c.l.b16 %v237
      %v314 = vunpack.c.l.b16 %v238
      %v315 = vunpack.c.l.b16 %v239
      %v316 = vunpack.c.l.b16 %v240
      %v317 = vunpack.c.l.b16 %v241
      %v318 = vunpack.c.l.b16 %v242
      %v319 = vunpack.c.l.b16 %v243
      %v320 = vunpack.c.l.b16 %v244
      %v321 = vunpack.c.l.b16 %v245
      %v322 = vunpack.c.l.b16 %v246
      %v323 = vunpack.c.l.b16 %v247
      %v324 = vunpack.c.l.b16 %v248
      %v325 = vunpack.c.l.b16 %v249
      %v326 = vunpack.c.l.b16 %v250
      %v327 = vunpack.c.l.b16 %v251
      %v328 = vunpack.c.l.b16 %v252
      %v329 = vunpack.c.l.b16 %v253
      %v330 = vunpack.c.l.b16 %v254
      %v331 = vunpack.c.l.b16 %v255
      %v332 = vpack.c.b16 %v301, %v300
      %v333 = vpack.c.b16 %v303, %v302
      %v334 = vpack.c.b16 %v305, %v304
      %v335 = vpack.c.b16 %v307, %v306
      %v336 = vpack.c.b16 %v309, %v308
      %v337 = vpack.c.b16 %v311, %v310
      %v338 = vpack.c.b16 %v313, %v312
      %v339 = vpack.c.b16 %v315, %v314
      %v340 = vpack.c.b16 %v317, %v316
      %v341 = vpack.c.b16 %v319, %v318
      %v342 = vpack.c.b16 %v321, %v320
      %v343 = vpack.c.b16 %v323, %v322
      %v344 = vpack.c.b16 %v325, %v324
      %v345 = vpack.c.b16 %v327, %v326
      %v346 = vpack.c.b16 %v329, %v328
      %v347 = vpack.c.b16 %v331, %v330
      %v353 = vunpack.c.l.b16 %v256
      %v354 = vunpack.c.l.b16 %v257
      %v355 = vunpack.c.l.b16 %v258
      %v356 = vunpack.c.l.b16 %v259
      %v357 = vunpack.c.l.b16 %v260
      %v358 = vpack.c.b16 %v354, %v353
      %v359 = vpack.c.b16 %v356, %v355
      %v360 = vpack.c.b16 %v357, %v357
      %vm363 = vcmask 293888
      %v365 = vsel %vm363, %v332, 0
      %v368 = vsel %vm363, %v333, 0
      %v371 = vsel %vm363, %v334, 0
      %v374 = vsel %vm363, %v335, 0
      %v377 = vsel %vm363, %v336, 0
      %v380 = vsel %vm363, %v337, 0
      %v383 = vsel %vm363, %v338, 0
      %v386 = vsel %vm363, %v339, 0
      %v389 = vsel %vm363, %v340, 0
      %v392 = vsel %vm363, %v341, 0
      %v395 = vsel %vm363, %v342, 0
      %v398 = vsel %vm363, %v343, 0
      %v401 = vsel %vm363, %v344, 0
      %v404 = vsel %vm363, %v345, 0
      %v407 = vsel %vm363, %v346, 0
      %v410 = vsel %vm363, %v347, 0
      %vm412 = vcmask 1041408
      %v414 = vsel %vm412, %v360, 0
      %416 = vmatprep.subr.bf16.mxu0 0
      %417 = vmatpush1.bf16.msra.mxu0 0
      %418 = vmatprep.subr.bf16.mxu0 0
      %419 = vmatpush1.bf16.msra.mxu0 0
      %420 = vmatprep.subr.bf16.mxu0 0
      %421 = vmatpush1.bf16.msra.mxu0 0
      %422 = vmatprep.subr.bf16.mxu0 0
      %423 = vmatpush1.bf16.msra.mxu0 0
      %424 = vmatprep.subr.bf16.mxu0 0
      %425 = vmatpush1.bf16.msra.mxu0 0
      %426 = vmatprep.subr.bf16.mxu0 0
      %427 = vmatpush1.bf16.msra.mxu0 %v414
      %428 = vmatprep.subr.bf16.mxu0 0
      %429 = vmatpush1.bf16.msra.mxu0 %v359
      %430 = vmatprep.subr.bf16.mxu0 0
      %431 = vmatpush1.bf16.msra.mxu0 %v358
      %432 = vmatprep.subr.bf16.mxu0 0
      %433 = vmatpush2.bf16.msra.mxu0 0
      %434 = vmatprep.subr.bf16.mxu0 0
      %435 = vmatpush2.bf16.msra.mxu0 0
      %436 = vmatprep.subr.bf16.mxu0 0
      %437 = vmatpush2.bf16.msra.mxu0 0
      %438 = vmatprep.subr.bf16.mxu0 0
      %439 = vmatpush2.bf16.msra.mxu0 0
      %440 = vmatprep.subr.bf16.mxu0 0
      %441 = vmatpush2.bf16.msra.mxu0 0
      %442 = vmatprep.subr.bf16.mxu0 0
      %443 = vmatpush2.bf16.msra.mxu0 0
      %444 = vmatprep.subr.bf16.mxu0 0
      %445 = vmatpush2.bf16.msra.mxu0 0
      %446 = vmatprep.subr.bf16.mxu0 0
      %447 = vmatpush2.bf16.msra.mxu0 0
      %448 = vmatprep.mubr.bf16.mxu0 0
      %449 = vmatmul.mubr.bf16.gmra.mxu0 %v365
      %v450 = vpop.f32.mrf.mxu0
      %v451 = vadd.f32 %v266, %v450
      %v452 = vpop.f32.mrf.mxu0
      %v453 = vpop.f32.mrf.mxu0
      %v454 = vadd.f32 %v266, %v453
      %v455 = vpop.f32.mrf.mxu0
      %456 = vmatprep.mubr.bf16.mxu0 0
      %457 = vmatmul.mubr.bf16.gmra.mxu0 %v368
      %v458 = vpop.f32.mrf.mxu0
      %v459 = vadd.f32 %v266, %v458
      %v460 = vpop.f32.mrf.mxu0
      %v461 = vpop.f32.mrf.mxu0
      %v462 = vadd.f32 %v266, %v461
      %v463 = vpop.f32.mrf.mxu0
      %464 = vmatprep.mubr.bf16.mxu0 0
      %465 = vmatmul.mubr.bf16.gmra.mxu0 %v371
      %v466 = vpop.f32.mrf.mxu0
      %v467 = vadd.f32 %v266, %v466
      %v468 = vpop.f32.mrf.mxu0
      %v469 = vpop.f32.mrf.mxu0
      %v470 = vadd.f32 %v266, %v469
      %v471 = vpop.f32.mrf.mxu0
      %472 = vmatprep.mubr.bf16.mxu0 0
      %473 = vmatmul.mubr.bf16.gmra.mxu0 %v374
      %v474 = vpop.f32.mrf.mxu0
      %v475 = vadd.f32 %v266, %v474
      %v476 = vpop.f32.mrf.mxu0
      %v477 = vpop.f32.mrf.mxu0
      %v478 = vadd.f32 %v266, %v477
      %v479 = vpop.f32.mrf.mxu0
      %480 = vmatprep.mubr.bf16.mxu0 0
      %481 = vmatmul.mubr.bf16.gmra.mxu0 %v377
      %v482 = vpop.f32.mrf.mxu0
      %v483 = vadd.f32 %v266, %v482
      %v484 = vpop.f32.mrf.mxu0
      %v485 = vpop.f32.mrf.mxu0
      %v486 = vadd.f32 %v266, %v485
      %v487 = vpop.f32.mrf.mxu0
      %488 = vmatprep.mubr.bf16.mxu0 0
      %489 = vmatmul.mubr.bf16.gmra.mxu0 %v380
      %v490 = vpop.f32.mrf.mxu0
      %v491 = vadd.f32 %v266, %v490
      %v492 = vpop.f32.mrf.mxu0
      %v493 = vpop.f32.mrf.mxu0
      %v494 = vadd.f32 %v266, %v493
      %v495 = vpop.f32.mrf.mxu0
      %496 = vmatprep.mubr.bf16.mxu0 0
      %497 = vmatmul.mubr.bf16.gmra.mxu0 %v383
      %v498 = vpop.f32.mrf.mxu0
      %v499 = vadd.f32 %v266, %v498
      %v500 = vpop.f32.mrf.mxu0
      %v501 = vpop.f32.mrf.mxu0
      %v502 = vadd.f32 %v266, %v501
      %v503 = vpop.f32.mrf.mxu0
      %504 = vmatprep.mubr.bf16.mxu0 0
      %505 = vmatmul.mubr.bf16.gmra.mxu0 %v386
      %v506 = vpop.f32.mrf.mxu0
      %v507 = vadd.f32 %v266, %v506
      %v508 = vpop.f32.mrf.mxu0
      %v509 = vpop.f32.mrf.mxu0
      %v510 = vadd.f32 %v266, %v509
      %v511 = vpop.f32.mrf.mxu0
      %512 = vmatprep.mubr.bf16.mxu0 0
      %513 = vmatmul.mubr.bf16.gmra.mxu0 %v389
      %v514 = vpop.f32.mrf.mxu0
      %v515 = vadd.f32 %v266, %v514
      %v516 = vpop.f32.mrf.mxu0
      %v517 = vpop.f32.mrf.mxu0
      %v518 = vadd.f32 %v266, %v517
      %v519 = vpop.f32.mrf.mxu0
      %520 = vmatprep.mubr.bf16.mxu0 0
      %521 = vmatmul.mubr.bf16.gmra.mxu0 %v392
      %v522 = vpop.f32.mrf.mxu0
      %v523 = vadd.f32 %v266, %v522
      %v524 = vpop.f32.mrf.mxu0
      %v525 = vpop.f32.mrf.mxu0
      %v526 = vadd.f32 %v266, %v525
      %v527 = vpop.f32.mrf.mxu0
      %528 = vmatprep.mubr.bf16.mxu0 0
      %529 = vmatmul.mubr.bf16.gmra.mxu0 %v395
      %v530 = vpop.f32.mrf.mxu0
      %v531 = vadd.f32 %v266, %v530
      %v532 = vpop.f32.mrf.mxu0
      %v533 = vpop.f32.mrf.mxu0
      %v534 = vadd.f32 %v266, %v533
      %v535 = vpop.f32.mrf.mxu0
      %536 = vmatprep.mubr.bf16.mxu0 0
      %537 = vmatmul.mubr.bf16.gmra.mxu0 %v398
      %v538 = vpop.f32.mrf.mxu0
      %v539 = vadd.f32 %v266, %v538
      %v540 = vpop.f32.mrf.mxu0
      %v541 = vpop.f32.mrf.mxu0
      %v542 = vadd.f32 %v266, %v541
      %v543 = vpop.f32.mrf.mxu0
      %544 = vmatprep.mubr.bf16.mxu0 0
      %545 = vmatmul.mubr.bf16.gmra.mxu0 %v401
      %v546 = vpop.f32.mrf.mxu0
      %v547 = vadd.f32 %v266, %v546
      %v548 = vpop.f32.mrf.mxu0
      %v549 = vpop.f32.mrf.mxu0
      %v550 = vadd.f32 %v266, %v549
      %v551 = vpop.f32.mrf.mxu0
      %552 = vmatprep.mubr.bf16.mxu0 0
      %553 = vmatmul.mubr.bf16.gmra.mxu0 %v404
      %v554 = vpop.f32.mrf.mxu0
      %v555 = vadd.f32 %v266, %v554
      %v556 = vpop.f32.mrf.mxu0
      %v557 = vpop.f32.mrf.mxu0
      %v558 = vadd.f32 %v266, %v557
      %v559 = vpop.f32.mrf.mxu0
      %560 = vmatprep.mubr.bf16.mxu0 0
      %561 = vmatmul.mubr.bf16.gmra.mxu0 %v407
      %v562 = vpop.f32.mrf.mxu0
      %v563 = vadd.f32 %v266, %v562
      %v564 = vpop.f32.mrf.mxu0
      %v565 = vpop.f32.mrf.mxu0
      %v566 = vadd.f32 %v266, %v565
      %v567 = vpop.f32.mrf.mxu0
      %568 = vmatprep.mubr.bf16.mxu0 0
      %569 = vmatmul.mubr.bf16.gmra.mxu0 %v410
      %v570 = vpop.f32.mrf.mxu0
      %v571 = vadd.f32 %v266, %v570
      %v572 = vpop.f32.mrf.mxu0
      %v573 = vpop.f32.mrf.mxu0
      %v574 = vadd.f32 %v266, %v573
      %v575 = vpop.f32.mrf.mxu0
      %576 = vdwg.mxu0
      %vm577 = vcmp.gt.f32.partialorder %v451, 0.0
      %vm578 = vcmp.gt.f32.partialorder %v454, 0.0
      %vm579 = vcmp.gt.f32.partialorder %v459, 0.0
      %vm580 = vcmp.gt.f32.partialorder %v462, 0.0
      %vm581 = vcmp.gt.f32.partialorder %v467, 0.0
      %vm582 = vcmp.gt.f32.partialorder %v470, 0.0
      %vm583 = vcmp.gt.f32.partialorder %v475, 0.0
      %vm584 = vcmp.gt.f32.partialorder %v478, 0.0
      %vm585 = vcmp.gt.f32.partialorder %v483, 0.0
      %vm586 = vcmp.gt.f32.partialorder %v486, 0.0
      %vm587 = vcmp.gt.f32.partialorder %v491, 0.0
      %vm588 = vcmp.gt.f32.partialorder %v494, 0.0
      %vm589 = vcmp.gt.f32.partialorder %v499, 0.0
      %vm590 = vcmp.gt.f32.partialorder %v502, 0.0
      %vm591 = vcmp.gt.f32.partialorder %v507, 0.0
      %vm592 = vcmp.gt.f32.partialorder %v510, 0.0
      %vm593 = vcmp.gt.f32.partialorder %v515, 0.0
      %vm594 = vcmp.gt.f32.partialorder %v518, 0.0
      %vm595 = vcmp.gt.f32.partialorder %v523, 0.0
      %vm596 = vcmp.gt.f32.partialorder %v526, 0.0
      %vm597 = vcmp.gt.f32.partialorder %v531, 0.0
      %vm598 = vcmp.gt.f32.partialorder %v534, 0.0
      %vm599 = vcmp.gt.f32.partialorder %v539, 0.0
      %vm600 = vcmp.gt.f32.partialorder %v542, 0.0
      %vm601 = vcmp.gt.f32.partialorder %v547, 0.0
      %vm602 = vcmp.gt.f32.partialorder %v550, 0.0
      %vm603 = vcmp.gt.f32.partialorder %v555, 0.0
      %vm604 = vcmp.gt.f32.partialorder %v558, 0.0
      %vm605 = vcmp.gt.f32.partialorder %v563, 0.0
      %vm606 = vcmp.gt.f32.partialorder %v566, 0.0
      %vm607 = vcmp.gt.f32.partialorder %v571, 0.0
      %vm608 = vcmp.gt.f32.partialorder %v574, 0.0
      %v609 = vmul.f32 %v451, 0.1
      %v610 = vmul.f32 %v454, 0.1
      %v611 = vmul.f32 %v459, 0.1
      %v612 = vmul.f32 %v462, 0.1
      %v613 = vmul.f32 %v467, 0.1
      %v614 = vmul.f32 %v470, 0.1
      %v615 = vmul.f32 %v475, 0.1
      %v616 = vmul.f32 %v478, 0.1
      %v617 = vmul.f32 %v483, 0.1
      %v618 = vmul.f32 %v486, 0.1
      %v619 = vmul.f32 %v491, 0.1
      %v620 = vmul.f32 %v494, 0.1
      %v621 = vmul.f32 %v499, 0.1
      %v622 = vmul.f32 %v502, 0.1
      %v623 = vmul.f32 %v507, 0.1
      %v624 = vmul.f32 %v510, 0.1
      %v625 = vmul.f32 %v515, 0.1
      %v626 = vmul.f32 %v518, 0.1
      %v627 = vmul.f32 %v523, 0.1
      %v628 = vmul.f32 %v526, 0.1
      %v629 = vmul.f32 %v531, 0.1
      %v630 = vmul.f32 %v534, 0.1
      %v631 = vmul.f32 %v539, 0.1
      %v632 = vmul.f32 %v542, 0.1
      %v633 = vmul.f32 %v547, 0.1
      %v634 = vmul.f32 %v550, 0.1
      %v635 = vmul.f32 %v555, 0.1
      %v636 = vmul.f32 %v558, 0.1
      %v637 = vmul.f32 %v563, 0.1
      %v638 = vmul.f32 %v566, 0.1
      %v639 = vmul.f32 %v571, 0.1
      %v640 = vmul.f32 %v574, 0.1
      %v641 = vsel %vm577, %v451, %v609
      %v642 = vsel %vm578, %v454, %v610
      %v643 = vsel %vm579, %v459, %v611
      %v644 = vsel %vm580, %v462, %v612
      %v645 = vsel %vm581, %v467, %v613
      %v646 = vsel %vm582, %v470, %v614
      %v647 = vsel %vm583, %v475, %v615
      %v648 = vsel %vm584, %v478, %v616
      %v649 = vsel %vm585, %v483, %v617
      %v650 = vsel %vm586, %v486, %v618
      %v651 = vsel %vm587, %v491, %v619
      %v652 = vsel %vm588, %v494, %v620
      %v653 = vsel %vm589, %v499, %v621
      %v654 = vsel %vm590, %v502, %v622
      %v655 = vsel %vm591, %v507, %v623
      %v656 = vsel %vm592, %v510, %v624
      %v657 = vsel %vm593, %v515, %v625
      %v658 = vsel %vm594, %v518, %v626
      %v659 = vsel %vm595, %v523, %v627
      %v660 = vsel %vm596, %v526, %v628
      %v661 = vsel %vm597, %v531, %v629
      %v662 = vsel %vm598, %v534, %v630
      %v663 = vsel %vm599, %v539, %v631
      %v664 = vsel %vm600, %v542, %v632
      %v665 = vsel %vm601, %v547, %v633
      %v666 = vsel %vm602, %v550, %v634
      %v667 = vsel %vm603, %v555, %v635
      %v668 = vsel %vm604, %v558, %v636
      %v669 = vsel %vm605, %v563, %v637
      %v670 = vsel %vm606, %v566, %v638
      %v671 = vsel %vm607, %v571, %v639
      %v672 = vsel %vm608, %v574, %v640
      %v673 = vld [vmem:[%s215] sm:$0xf]
      %v674 = vld [vmem:[%s215 + $0x4] sm:$0xf]
      %v675 = vld [vmem:[%s215 + $0x8] sm:$0xf]
      %v676 = vld [vmem:[%s215 + $0xc] sm:$0xf]
      %v677 = vld [vmem:[%s215 + $0x10] sm:$0xf]
      %v678 = vld [vmem:[%s215 + $0x14] sm:$0xf]
      %v679 = vld [vmem:[%s215 + $0x18] sm:$0xf]
      %v680 = vld [vmem:[%s215 + $0x1c] sm:$0xf]
      %v681 = vld [vmem:[%s215 + $0x20] sm:$0xf]
      %v682 = vld [vmem:[%s215 + $0x24] sm:$0xf]
      %v683 = vld [vmem:[%s215 + $0x28] sm:$0xf]
      %v684 = vld [vmem:[%s215 + $0x2c] sm:$0xf]
      %v685 = vld [vmem:[%s215 + $0x30] sm:$0xf]
      %v686 = vld [vmem:[%s215 + $0x34] sm:$0xf]
      %v687 = vld [vmem:[%s215 + $0x38] sm:$0xf]
      %v688 = vld [vmem:[%s215 + $0x3c] sm:$0xf]
      %v689 = vld [vmem:[%s215 + $0x40] sm:$0xf]
      %v690 = vld [vmem:[%s215 + $0x44] sm:$0xf]
      %v691 = vld [vmem:[%s215 + $0x48] sm:$0xf]
      %v692 = vld [vmem:[%s215 + $0x4c] sm:$0xf]
      %v693 = vld [vmem:[%s215 + $0x50] sm:$0xf]
      %v694 = vld [vmem:[%s215 + $0x54] sm:$0xf]
      %v695 = vld [vmem:[%s215 + $0x58] sm:$0xf]
      %v696 = vld [vmem:[%s215 + $0x5c] sm:$0xf]
      %v697 = vld [vmem:[%s215 + $0x60] sm:$0xf]
      %v698 = vld [vmem:[%s215 + $0x64] sm:$0xf]
      %v699 = vld [vmem:[%s215 + $0x68] sm:$0xf]
      %v700 = vld [vmem:[%s215 + $0x6c] sm:$0xf]
      %v701 = vld [vmem:[%s215 + $0x70] sm:$0xf]
      %v702 = vld [vmem:[%s215 + $0x74] sm:$0xf]
      %v703 = vld [vmem:[%s215 + $0x78] sm:$0xf]
      %v704 = vld [vmem:[%s215 + $0x7c] sm:$0xf]
      %v705 = vunpack.c.l.bf16 %v673
      %v706 = vunpack.c.l.bf16 %v674
      %v707 = vunpack.c.l.bf16 %v675
      %v708 = vunpack.c.l.bf16 %v676
      %v709 = vunpack.c.l.bf16 %v677
      %v710 = vunpack.c.l.bf16 %v678
      %v711 = vunpack.c.l.bf16 %v679
      %v712 = vunpack.c.l.bf16 %v680
      %v713 = vunpack.c.l.bf16 %v681
      %v714 = vunpack.c.l.bf16 %v682
      %v715 = vunpack.c.l.bf16 %v683
      %v716 = vunpack.c.l.bf16 %v684
      %v717 = vunpack.c.l.bf16 %v685
      %v718 = vunpack.c.l.bf16 %v686
      %v719 = vunpack.c.l.bf16 %v687
      %v720 = vunpack.c.l.bf16 %v688
      %v721 = vunpack.c.l.bf16 %v689
      %v722 = vunpack.c.l.bf16 %v690
      %v723 = vunpack.c.l.bf16 %v691
      %v724 = vunpack.c.l.bf16 %v692
      %v725 = vunpack.c.l.bf16 %v693
      %v726 = vunpack.c.l.bf16 %v694
      %v727 = vunpack.c.l.bf16 %v695
      %v728 = vunpack.c.l.bf16 %v696
      %v729 = vunpack.c.l.bf16 %v697
      %v730 = vunpack.c.l.bf16 %v698
      %v731 = vunpack.c.l.bf16 %v699
      %v732 = vunpack.c.l.bf16 %v700
      %v733 = vunpack.c.l.bf16 %v701
      %v734 = vunpack.c.l.bf16 %v702
      %v735 = vunpack.c.l.bf16 %v703
      %v736 = vunpack.c.l.bf16 %v704
      %v737 = vadd.f32 %v641, %v705
      %v738 = vadd.f32 %v642, %v706
      %v739 = vadd.f32 %v643, %v707
      %v740 = vadd.f32 %v644, %v708
      %v741 = vadd.f32 %v645, %v709
      %v742 = vadd.f32 %v646, %v710
      %v743 = vadd.f32 %v647, %v711
      %v744 = vadd.f32 %v648, %v712
      %v745 = vadd.f32 %v649, %v713
      %v746 = vadd.f32 %v650, %v714
      %v747 = vadd.f32 %v651, %v715
      %v748 = vadd.f32 %v652, %v716
      %v749 = vadd.f32 %v653, %v717
      %v750 = vadd.f32 %v654, %v718
      %v751 = vadd.f32 %v655, %v719
      %v752 = vadd.f32 %v656, %v720
      %v753 = vadd.f32 %v657, %v721
      %v754 = vadd.f32 %v658, %v722
      %v755 = vadd.f32 %v659, %v723
      %v756 = vadd.f32 %v660, %v724
      %v757 = vadd.f32 %v661, %v725
      %v758 = vadd.f32 %v662, %v726
      %v759 = vadd.f32 %v663, %v727
      %v760 = vadd.f32 %v664, %v728
      %v761 = vadd.f32 %v665, %v729
      %v762 = vadd.f32 %v666, %v730
      %v763 = vadd.f32 %v667, %v731
      %v764 = vadd.f32 %v668, %v732
      %v765 = vadd.f32 %v669, %v733
      %v766 = vadd.f32 %v670, %v734
      %v767 = vadd.f32 %v671, %v735
      %v768 = vadd.f32 %v672, %v736
      %v769 = vpack.c.bf16 %v738, %v737
      %v770 = vpack.c.bf16 %v740, %v739
      %v771 = vpack.c.bf16 %v742, %v741
      %v772 = vpack.c.bf16 %v744, %v743
      %v773 = vpack.c.bf16 %v746, %v745
      %v774 = vpack.c.bf16 %v748, %v747
      %v775 = vpack.c.bf16 %v750, %v749
      %v776 = vpack.c.bf16 %v752, %v751
      %v777 = vpack.c.bf16 %v754, %v753
      %v778 = vpack.c.bf16 %v756, %v755
      %v779 = vpack.c.bf16 %v758, %v757
      %v780 = vpack.c.bf16 %v760, %v759
      %v781 = vpack.c.bf16 %v762, %v761
      %v782 = vpack.c.bf16 %v764, %v763
      %v783 = vpack.c.bf16 %v766, %v765
      %v784 = vpack.c.bf16 %v768, %v767
      %v801 = vunpack.c.l.b16 %v769
      %v802 = vunpack.c.h.b16 %v769
      %v803 = vunpack.c.l.b16 %v770
      %v804 = vunpack.c.h.b16 %v770
      %v805 = vunpack.c.l.b16 %v771
      %v806 = vunpack.c.h.b16 %v771
      %v807 = vunpack.c.l.b16 %v772
      %v808 = vunpack.c.h.b16 %v772
      %v809 = vunpack.c.l.b16 %v773
      %v810 = vunpack.c.h.b16 %v773
      %v811 = vunpack.c.l.b16 %v774
      %v812 = vunpack.c.h.b16 %v774
      %v813 = vunpack.c.l.b16 %v775
      %v814 = vunpack.c.h.b16 %v775
      %v815 = vunpack.c.l.b16 %v776
      %v816 = vunpack.c.h.b16 %v776
      %v817 = vunpack.c.l.b16 %v777
      %v818 = vunpack.c.h.b16 %v777
      %v819 = vunpack.c.l.b16 %v778
      %v820 = vunpack.c.h.b16 %v778
      %v821 = vunpack.c.l.b16 %v779
      %v822 = vunpack.c.h.b16 %v779
      %v823 = vunpack.c.l.b16 %v780
      %v824 = vunpack.c.h.b16 %v780
      %v825 = vunpack.c.l.b16 %v781
      %v826 = vunpack.c.h.b16 %v781
      %v827 = vunpack.c.l.b16 %v782
      %v828 = vunpack.c.h.b16 %v782
      %v829 = vunpack.c.l.b16 %v783
      %v830 = vunpack.c.h.b16 %v783
      %v831 = vunpack.c.l.b16 %v784
      %v832 = vunpack.c.h.b16 %v784
      %v833 = vpack.c.b16 %v801, %v801
      %v834 = vpack.c.b16 %v802, %v802
      %v835 = vpack.c.b16 %v803, %v803
      %v836 = vpack.c.b16 %v804, %v804
      %v837 = vpack.c.b16 %v805, %v805
      %v838 = vpack.c.b16 %v806, %v806
      %v839 = vpack.c.b16 %v807, %v807
      %v840 = vpack.c.b16 %v808, %v808
      %v841 = vpack.c.b16 %v809, %v809
      %v842 = vpack.c.b16 %v810, %v810
      %v843 = vpack.c.b16 %v811, %v811
      %v844 = vpack.c.b16 %v812, %v812
      %v845 = vpack.c.b16 %v813, %v813
      %v846 = vpack.c.b16 %v814, %v814
      %v847 = vpack.c.b16 %v815, %v815
      %v848 = vpack.c.b16 %v816, %v816
      %v849 = vpack.c.b16 %v817, %v817
      %v850 = vpack.c.b16 %v818, %v818
      %v851 = vpack.c.b16 %v819, %v819
      %v852 = vpack.c.b16 %v820, %v820
      %v853 = vpack.c.b16 %v821, %v821
      %v854 = vpack.c.b16 %v822, %v822
      %v855 = vpack.c.b16 %v823, %v823
      %v856 = vpack.c.b16 %v824, %v824
      %v857 = vpack.c.b16 %v825, %v825
      %v858 = vpack.c.b16 %v826, %v826
      %v859 = vpack.c.b16 %v827, %v827
      %v860 = vpack.c.b16 %v828, %v828
      %v861 = vpack.c.b16 %v829, %v829
      %v862 = vpack.c.b16 %v830, %v830
      %v863 = vpack.c.b16 %v831, %v831
      %v864 = vpack.c.b16 %v832, %v832
      %897 = vst [vmem:[%s221] sm:$0xf] %v833
      %898 = vst [vmem:[%s221 + $0x4] sm:$0xf] %v834
      %899 = vst [vmem:[%s221 + $0x8] sm:$0xf] %v835
      %900 = vst [vmem:[%s221 + $0xc] sm:$0xf] %v836
      %901 = vst [vmem:[%s221 + $0x10] sm:$0xf] %v837
      %902 = vst [vmem:[%s221 + $0x14] sm:$0xf] %v838
      %903 = vst [vmem:[%s221 + $0x18] sm:$0xf] %v839
      %904 = vst [vmem:[%s221 + $0x1c] sm:$0xf] %v840
      %905 = vst [vmem:[%s221 + $0x20] sm:$0xf] %v841
      %906 = vst [vmem:[%s221 + $0x24] sm:$0xf] %v842
      %907 = vst [vmem:[%s221 + $0x28] sm:$0xf] %v843
      %908 = vst [vmem:[%s221 + $0x2c] sm:$0xf] %v844
      %909 = vst [vmem:[%s221 + $0x30] sm:$0xf] %v845
      %910 = vst [vmem:[%s221 + $0x34] sm:$0xf] %v846
      %911 = vst [vmem:[%s221 + $0x38] sm:$0xf] %v847
      %912 = vst [vmem:[%s221 + $0x3c] sm:$0xf] %v848
      %913 = vst [vmem:[%s221 + $0x40] sm:$0xf] %v849
      %914 = vst [vmem:[%s221 + $0x44] sm:$0xf] %v850
      %915 = vst [vmem:[%s221 + $0x48] sm:$0xf] %v851
      %916 = vst [vmem:[%s221 + $0x4c] sm:$0xf] %v852
      %917 = vst [vmem:[%s221 + $0x50] sm:$0xf] %v853
      %918 = vst [vmem:[%s221 + $0x54] sm:$0xf] %v854
      %919 = vst [vmem:[%s221 + $0x58] sm:$0xf] %v855
      %920 = vst [vmem:[%s221 + $0x5c] sm:$0xf] %v856
      %921 = vst [vmem:[%s221 + $0x60] sm:$0xf] %v857
      %922 = vst [vmem:[%s221 + $0x64] sm:$0xf] %v858
      %923 = vst [vmem:[%s221 + $0x68] sm:$0xf] %v859
      %924 = vst [vmem:[%s221 + $0x6c] sm:$0xf] %v860
      %925 = vst [vmem:[%s221 + $0x70] sm:$0xf] %v861
      %926 = vst [vmem:[%s221 + $0x74] sm:$0xf] %v862
      %927 = vst [vmem:[%s221 + $0x78] sm:$0xf] %v863
      %928 = vst [vmem:[%s221 + $0x7c] sm:$0xf] %v864
      %s929 = smul.u32 32, %s15
      %p930 = scmp.lt.s32.totalorder %s929, 63
      %s931 = scalar_select %p930, %s929, 63
      %s932 = smul.addr %s931, 4
      %s933 = scalar_lea.vmem %s4, %s932
      // Predicated region
      $region37: #{forward.78} parent=35 // pred_check
        %p934 = pneg %p127
      $region38: #{forward.78} parent=35 // pred_check_branch
        %936 = sbr.rel (%p934) target = $region40
      $region39: #{forward.78} parent=35 // pred_region
        %s937 = smul.u32 32, %s15
      $region40: #{forward.78} parent=35 // pred_fallthru
        _
    $region36: #{forward.78} parent=5 // pred_fallthru
      _
    %p938 = scmp.le.s32.totalorder 2, %s10
    // Predicated region
    $region41: #{forward.78} parent=5 // pred_check
      %p939 = pneg %p938
    $region42: #{forward.78} parent=5 // pred_check_branch
      %941 = sbr.rel (%p939) target = $region44
    $region43: #{forward.78} parent=5 // pred_region
      %s942 = ssub.s32 %s10, 2
      // Predicated region
      $region45: #{forward.78} parent=43 // pred_check
        %p943 = pneg %p133
      $region46: #{forward.78} parent=43 // pred_check_branch
        %945 = sbr.rel (%p943) target = $region48
      $region47: #{forward.78} parent=43 // pred_region
        %s946 = smul.u32 32, %s16
        %p947 = scmp.lt.s32.totalorder %s946, 63
        %s948 = scalar_select %p947, %s946, 63
        %s949 = smul.addr %s948, 4
        %s950 = scalar_lea.vmem %s4, %s949
      $region48: #{forward.78} parent=43 // pred_fallthru
        _
    $region44: #{forward.78} parent=5 // pred_fallthru
      _
  $region6: #{forward.78} parent=0 // loop_footer
    %s14 = sadd.s32 1, %s10
  $region7: #{forward.78} parent=0 // loop_footer_branch
    %9 = sbr.rel target = $region3
  $region8: #{forward.78} parent=0 // loop_exit
    _

// kernel: forward.79
$region0: #{forward.79}
  #allocation0 [shape = 'u32[]', space=smem, size = 0x4, offset = 0x4, fixed_abs, tag = 'smem constant byte address 0x4 - core index']
  #allocation1 [shape = 'u32[144,128]{1,0:T(1,128)}', space=vmem, size = 0x12000, scoped, tag = 'internal scratch']
  %s0 = inlined_call_operand.vmem [shape: bf16[128,72], index: 0, kind: input, shape index: {}]
  %s1 = inlined_call_operand.vmem [shape: bf16[72,128], index: 1, kind: input, shape index: {}]
  %s2 = inlined_call_operand.vmem [shape: f32[1,128], index: 2, kind: input, shape index: {}]
  %s3 = inlined_call_operand.vmem [shape: bf16[128,128], index: 3, kind: output, shape index: {}]
  %s4 = sld [smem:[#allocation0]]
  $region22: #{forward.79} parent=0
    _
  %s6 = ssub.s32 1, %s4
  %s7 = scalar_select 0, %s6, %s4
  // Predicated region
  $region2: #{forward.79} parent=0 // pred_check
    _
  $region3: #{forward.79} parent=0 // pred_check_branch
    %9 = sbr.rel (0) target = $region5
  $region4: #{forward.79} parent=0 // pred_region
    _
  $region5: #{forward.79} parent=0 // pred_fallthru
    _
  // Predicated region
  $region6: #{forward.79} parent=0 // pred_check
    _
  $region7: #{forward.79} parent=0 // pred_check_branch
    %11 = sbr.rel (0) target = $region9
  $region8: #{forward.79} parent=0 // pred_region
    _
  $region9: #{forward.79} parent=0 // pred_fallthru
    _
  // Predicated region
  $region10: #{forward.79} parent=0 // pred_check
    _
  $region11: #{forward.79} parent=0 // pred_check_branch
    %13 = sbr.rel (0) target = $region13
  $region12: #{forward.79} parent=0 // pred_region
    _
  $region13: #{forward.79} parent=0 // pred_fallthru
    _
  %v15 = vld [vmem:[%s0] sm:$0xf]
  %v16 = vld [vmem:[%s0 + $0x4] sm:$0xf]
  %v17 = vld [vmem:[%s0 + $0x8] sm:$0xf]
  %v18 = vld [vmem:[%s0 + $0xc] sm:$0xf]
  %v19 = vld [vmem:[%s0 + $0x10] sm:$0xf]
  %v20 = vld [vmem:[%s0 + $0x14] sm:$0xf]
  %v21 = vld [vmem:[%s0 + $0x18] sm:$0xf]
  %v22 = vld [vmem:[%s0 + $0x1c] sm:$0xf]
  %v23 = vld [vmem:[%s0 + $0x20] sm:$0xf]
  %v24 = vld [vmem:[%s0 + $0x24] sm:$0xf]
  %v25 = vld [vmem:[%s0 + $0x28] sm:$0xf]
  %v26 = vld [vmem:[%s0 + $0x2c] sm:$0xf]
  %v27 = vld [vmem:[%s0 + $0x30] sm:$0xf]
  %v28 = vld [vmem:[%s0 + $0x34] sm:$0xf]
  %v29 = vld [vmem:[%s0 + $0x38] sm:$0xf]
  %v30 = vld [vmem:[%s0 + $0x3c] sm:$0xf]
  %v31 = vld [vmem:[%s1] sm:$0xf]
  %v32 = vld [vmem:[%s1 + $0x4] sm:$0xf]
  %v33 = vld [vmem:[%s1 + $0x8] sm:$0xf]
  %v34 = vld [vmem:[%s1 + $0xc] sm:$0xf]
  %v35 = vld [vmem:[%s1 + $0x10] sm:$0xf]
  %v36 = vld [vmem:[%s1 + $0x14] sm:$0xf]
  %v37 = vld [vmem:[%s1 + $0x18] sm:$0xf]
  %v38 = vld [vmem:[%s1 + $0x1c] sm:$0xf]
  %v39 = vld [vmem:[%s1 + $0x20] sm:$0xf]
  %v40 = vld [vmem:[%s2] sm:$0x1]
  %v42 = vlaneseq
  %v43 = vshrl.u32 %v42, 7
  %v44 = vsub.s32 0, %v43
  %v45 = vrot.slane %v40, %v44
  %v63 = vunpack.c.l.b16 %v15
  %v64 = vunpack.c.l.b16 %v16
  %v65 = vunpack.c.l.b16 %v17
  %v66 = vunpack.c.l.b16 %v18
  %v67 = vunpack.c.l.b16 %v19
  %v68 = vunpack.c.l.b16 %v20
  %v69 = vunpack.c.l.b16 %v21
  %v70 = vunpack.c.l.b16 %v22
  %v71 = vunpack.c.l.b16 %v23
  %v72 = vunpack.c.l.b16 %v24
  %v73 = vunpack.c.l.b16 %v25
  %v74 = vunpack.c.l.b16 %v26
  %v75 = vunpack.c.l.b16 %v27
  %v76 = vunpack.c.l.b16 %v28
  %v77 = vunpack.c.l.b16 %v29
  %v78 = vunpack.c.l.b16 %v30
  %v79 = vpack.c.b16 %v64, %v63
  %v80 = vpack.c.b16 %v66, %v65
  %v81 = vpack.c.b16 %v68, %v67
  %v82 = vpack.c.b16 %v70, %v69
  %v83 = vpack.c.b16 %v72, %v71
  %v84 = vpack.c.b16 %v74, %v73
  %v85 = vpack.c.b16 %v76, %v75
  %v86 = vpack.c.b16 %v78, %v77
  %v96 = vunpack.c.l.b16 %v31
  %v97 = vunpack.c.l.b16 %v32
  %v98 = vunpack.c.l.b16 %v33
  %v99 = vunpack.c.l.b16 %v34
  %v100 = vunpack.c.l.b16 %v35
  %v101 = vunpack.c.l.b16 %v36
  %v102 = vunpack.c.l.b16 %v37
  %v103 = vunpack.c.l.b16 %v38
  %v104 = vunpack.c.l.b16 %v39
  %v105 = vpack.c.b16 %v97, %v96
  %v106 = vpack.c.b16 %v99, %v98
  %v107 = vpack.c.b16 %v101, %v100
  %v108 = vpack.c.b16 %v103, %v102
  %v109 = vpack.c.b16 %v104, %v104
  %vm114 = vcmask 588800
  %v116 = vsel %vm114, %v79, 0
  %v119 = vsel %vm114, %v80, 0
  %v122 = vsel %vm114, %v81, 0
  %v125 = vsel %vm114, %v82, 0
  %v128 = vsel %vm114, %v83, 0
  %v131 = vsel %vm114, %v84, 0
  %v134 = vsel %vm114, %v85, 0
  %v137 = vsel %vm114, %v86, 0
  %vm139 = vcmask 1043456
  %v141 = vsel %vm139, %v109, 0
  %143 = vmatprep.subr.bf16.mxu0 0
  %144 = vmatpush1.bf16.msra.mxu0 0
  %145 = vmatprep.subr.bf16.mxu0 0
  %146 = vmatpush1.bf16.msra.mxu0 0
  %147 = vmatprep.subr.bf16.mxu0 0
  %148 = vmatpush1.bf16.msra.mxu0 0
  %149 = vmatprep.subr.bf16.mxu0 0
  %150 = vmatpush1.bf16.msra.mxu0 %v141
  %151 = vmatprep.subr.bf16.mxu0 0
  %152 = vmatpush1.bf16.msra.mxu0 %v108
  %153 = vmatprep.subr.bf16.mxu0 0
  %154 = vmatpush1.bf16.msra.mxu0 %v107
  %155 = vmatprep.subr.bf16.mxu0 0
  %156 = vmatpush1.bf16.msra.mxu0 %v106
  %157 = vmatprep.subr.bf16.mxu0 0
  %158 = vmatpush1.bf16.msra.mxu0 %v105
  %159 = vmatprep.subr.bf16.mxu0 0
  %160 = vmatpush2.bf16.msra.mxu0 0
  %161 = vmatprep.subr.bf16.mxu0 0
  %162 = vmatpush2.bf16.msra.mxu0 0
  %163 = vmatprep.subr.bf16.mxu0 0
  %164 = vmatpush2.bf16.msra.mxu0 0
  %165 = vmatprep.subr.bf16.mxu0 0
  %166 = vmatpush2.bf16.msra.mxu0 0
  %167 = vmatprep.subr.bf16.mxu0 0
  %168 = vmatpush2.bf16.msra.mxu0 0
  %169 = vmatprep.subr.bf16.mxu0 0
  %170 = vmatpush2.bf16.msra.mxu0 0
  %171 = vmatprep.subr.bf16.mxu0 0
  %172 = vmatpush2.bf16.msra.mxu0 0
  %173 = vmatprep.subr.bf16.mxu0 0
  %174 = vmatpush2.bf16.msra.mxu0 0
  %175 = vmatprep.mubr.bf16.mxu0 0
  %176 = vmatmul.mubr.bf16.gmra.mxu0 %v116
  %v177 = vpop.f32.mrf.mxu0
  %v178 = vadd.f32 %v45, %v177
  %v179 = vpop.f32.mrf.mxu0
  %v180 = vpop.f32.mrf.mxu0
  %v181 = vadd.f32 %v45, %v180
  %v182 = vpop.f32.mrf.mxu0
  %183 = vmatprep.mubr.bf16.mxu0 0
  %184 = vmatmul.mubr.bf16.gmra.mxu0 %v119
  %v185 = vpop.f32.mrf.mxu0
  %v186 = vadd.f32 %v45, %v185
  %v187 = vpop.f32.mrf.mxu0
  %v188 = vpop.f32.mrf.mxu0
  %v189 = vadd.f32 %v45, %v188
  %v190 = vpop.f32.mrf.mxu0
  %191 = vmatprep.mubr.bf16.mxu0 0
  %192 = vmatmul.mubr.bf16.gmra.mxu0 %v122
  %v193 = vpop.f32.mrf.mxu0
  %v194 = vadd.f32 %v45, %v193
  %v195 = vpop.f32.mrf.mxu0
  %v196 = vpop.f32.mrf.mxu0
  %v197 = vadd.f32 %v45, %v196
  %v198 = vpop.f32.mrf.mxu0
  %199 = vmatprep.mubr.bf16.mxu0 0
  %200 = vmatmul.mubr.bf16.gmra.mxu0 %v125
  %v201 = vpop.f32.mrf.mxu0
  %v202 = vadd.f32 %v45, %v201
  %v203 = vpop.f32.mrf.mxu0
  %v204 = vpop.f32.mrf.mxu0
  %v205 = vadd.f32 %v45, %v204
  %v206 = vpop.f32.mrf.mxu0
  %207 = vmatprep.mubr.bf16.mxu0 0
  %208 = vmatmul.mubr.bf16.gmra.mxu0 %v128
  %v209 = vpop.f32.mrf.mxu0
  %v210 = vadd.f32 %v45, %v209
  %v211 = vpop.f32.mrf.mxu0
  %v212 = vpop.f32.mrf.mxu0
  %v213 = vadd.f32 %v45, %v212
  %v214 = vpop.f32.mrf.mxu0
  %215 = vmatprep.mubr.bf16.mxu0 0
  %216 = vmatmul.mubr.bf16.gmra.mxu0 %v131
  %v217 = vpop.f32.mrf.mxu0
  %v218 = vadd.f32 %v45, %v217
  %v219 = vpop.f32.mrf.mxu0
  %v220 = vpop.f32.mrf.mxu0
  %v221 = vadd.f32 %v45, %v220
  %v222 = vpop.f32.mrf.mxu0
  %223 = vmatprep.mubr.bf16.mxu0 0
  %224 = vmatmul.mubr.bf16.gmra.mxu0 %v134
  %v225 = vpop.f32.mrf.mxu0
  %v226 = vadd.f32 %v45, %v225
  %v227 = vpop.f32.mrf.mxu0
  %v228 = vpop.f32.mrf.mxu0
  %v229 = vadd.f32 %v45, %v228
  %v230 = vpop.f32.mrf.mxu0
  %231 = vmatprep.mubr.bf16.mxu0 0
  %232 = vmatmul.mubr.bf16.gmra.mxu0 %v137
  %v233 = vpop.f32.mrf.mxu0
  %v234 = vadd.f32 %v45, %v233
  %v235 = vpop.f32.mrf.mxu0
  %v236 = vpop.f32.mrf.mxu0
  %v237 = vadd.f32 %v45, %v236
  %v238 = vpop.f32.mrf.mxu0
  %239 = vdwg.mxu0
  %vm240 = vcmp.gt.f32.partialorder %v178, 0.0
  %vm241 = vcmp.gt.f32.partialorder %v181, 0.0
  %vm242 = vcmp.gt.f32.partialorder %v186, 0.0
  %vm243 = vcmp.gt.f32.partialorder %v189, 0.0
  %vm244 = vcmp.gt.f32.partialorder %v194, 0.0
  %vm245 = vcmp.gt.f32.partialorder %v197, 0.0
  %vm246 = vcmp.gt.f32.partialorder %v202, 0.0
  %vm247 = vcmp.gt.f32.partialorder %v205, 0.0
  %vm248 = vcmp.gt.f32.partialorder %v210, 0.0
  %vm249 = vcmp.gt.f32.partialorder %v213, 0.0
  %vm250 = vcmp.gt.f32.partialorder %v218, 0.0
  %vm251 = vcmp.gt.f32.partialorder %v221, 0.0
  %vm252 = vcmp.gt.f32.partialorder %v226, 0.0
  %vm253 = vcmp.gt.f32.partialorder %v229, 0.0
  %vm254 = vcmp.gt.f32.partialorder %v234, 0.0
  %vm255 = vcmp.gt.f32.partialorder %v237, 0.0
  %v256 = vmul.f32 %v178, 0.1
  %v257 = vmul.f32 %v181, 0.1
  %v258 = vmul.f32 %v186, 0.1
  %v259 = vmul.f32 %v189, 0.1
  %v260 = vmul.f32 %v194, 0.1
  %v261 = vmul.f32 %v197, 0.1
  %v262 = vmul.f32 %v202, 0.1
  %v263 = vmul.f32 %v205, 0.1
  %v264 = vmul.f32 %v210, 0.1
  %v265 = vmul.f32 %v213, 0.1
  %v266 = vmul.f32 %v218, 0.1
  %v267 = vmul.f32 %v221, 0.1
  %v268 = vmul.f32 %v226, 0.1
  %v269 = vmul.f32 %v229, 0.1
  %v270 = vmul.f32 %v234, 0.1
  %v271 = vmul.f32 %v237, 0.1
  %v272 = vsel %vm240, %v178, %v256
  %v273 = vsel %vm241, %v181, %v257
  %v274 = vsel %vm242, %v186, %v258
  %v275 = vsel %vm243, %v189, %v259
  %v276 = vsel %vm244, %v194, %v260
  %v277 = vsel %vm245, %v197, %v261
  %v278 = vsel %vm246, %v202, %v262
  %v279 = vsel %vm247, %v205, %v263
  %v280 = vsel %vm248, %v210, %v264
  %v281 = vsel %vm249, %v213, %v265
  %v282 = vsel %vm250, %v218, %v266
  %v283 = vsel %vm251, %v221, %v267
  %v284 = vsel %vm252, %v226, %v268
  %v285 = vsel %vm253, %v229, %v269
  %v286 = vsel %vm254, %v234, %v270
  %v287 = vsel %vm255, %v237, %v271
  %v288 = vpack.c.bf16 %v273, %v272
  %v289 = vpack.c.bf16 %v275, %v274
  %v290 = vpack.c.bf16 %v277, %v276
  %v291 = vpack.c.bf16 %v279, %v278
  %v292 = vpack.c.bf16 %v281, %v280
  %v293 = vpack.c.bf16 %v283, %v282
  %v294 = vpack.c.bf16 %v285, %v284
  %v295 = vpack.c.bf16 %v287, %v286
  %v304 = vunpack.c.l.b16 %v288
  %v305 = vunpack.c.h.b16 %v288
  %v306 = vunpack.c.l.b16 %v289
  %v307 = vunpack.c.h.b16 %v289
  %v308 = vunpack.c.l.b16 %v290
  %v309 = vunpack.c.h.b16 %v290
  %v310 = vunpack.c.l.b16 %v291
  %v311 = vunpack.c.h.b16 %v291
  %v312 = vunpack.c.l.b16 %v292
  %v313 = vunpack.c.h.b16 %v292
  %v314 = vunpack.c.l.b16 %v293
  %v315 = vunpack.c.h.b16 %v293
  %v316 = vunpack.c.l.b16 %v294
  %v317 = vunpack.c.h.b16 %v294
  %v318 = vunpack.c.l.b16 %v295
  %v319 = vunpack.c.h.b16 %v295
  %v320 = vpack.c.b16 %v304, %v304
  %v321 = vpack.c.b16 %v305, %v305
  %v322 = vpack.c.b16 %v306, %v306
  %v323 = vpack.c.b16 %v307, %v307
  %v324 = vpack.c.b16 %v308, %v308
  %v325 = vpack.c.b16 %v309, %v309
  %v326 = vpack.c.b16 %v310, %v310
  %v327 = vpack.c.b16 %v311, %v311
  %v328 = vpack.c.b16 %v312, %v312
  %v329 = vpack.c.b16 %v313, %v313
  %v330 = vpack.c.b16 %v314, %v314
  %v331 = vpack.c.b16 %v315, %v315
  %v332 = vpack.c.b16 %v316, %v316
  %v333 = vpack.c.b16 %v317, %v317
  %v334 = vpack.c.b16 %v318, %v318
  %v335 = vpack.c.b16 %v319, %v319
  %352 = vst [vmem:[%s3] sm:$0xf] %v320
  %353 = vst [vmem:[%s3 + $0x4] sm:$0xf] %v321
  %354 = vst [vmem:[%s3 + $0x8] sm:$0xf] %v322
  %355 = vst [vmem:[%s3 + $0xc] sm:$0xf] %v323
  %356 = vst [vmem:[%s3 + $0x10] sm:$0xf] %v324
  %357 = vst [vmem:[%s3 + $0x14] sm:$0xf] %v325
  %358 = vst [vmem:[%s3 + $0x18] sm:$0xf] %v326
  %359 = vst [vmem:[%s3 + $0x1c] sm:$0xf] %v327
  %360 = vst [vmem:[%s3 + $0x20] sm:$0xf] %v328
  %361 = vst [vmem:[%s3 + $0x24] sm:$0xf] %v329
  %362 = vst [vmem:[%s3 + $0x28] sm:$0xf] %v330
  %363 = vst [vmem:[%s3 + $0x2c] sm:$0xf] %v331
  %364 = vst [vmem:[%s3 + $0x30] sm:$0xf] %v332
  %365 = vst [vmem:[%s3 + $0x34] sm:$0xf] %v333
  %366 = vst [vmem:[%s3 + $0x38] sm:$0xf] %v334
  %367 = vst [vmem:[%s3 + $0x3c] sm:$0xf] %v335
  // Predicated region
  $region14: #{forward.79} parent=0 // pred_check
    _
  $region15: #{forward.79} parent=0 // pred_check_branch
    %369 = sbr.rel (0) target = $region17
  $region16: #{forward.79} parent=0 // pred_region
    _
  $region17: #{forward.79} parent=0 // pred_fallthru
    _
  // Predicated region
  $region18: #{forward.79} parent=0 // pred_check
    _
  $region19: #{forward.79} parent=0 // pred_check_branch
    %371 = sbr.rel (0) target = $region21
  $region20: #{forward.79} parent=0 // pred_region
    _
  $region21: #{forward.79} parent=0 // pred_fallthru
    _

// kernel: forward.80
$region0: #{forward.80}
  #allocation0 [shape = 'u32[]', space=smem, size = 0x4, offset = 0x4, fixed_abs, tag = 'smem constant byte address 0x4 - core index']
  #allocation1 [shape = 'u32[144,128]{1,0:T(1,128)}', space=vmem, size = 0x12000, scoped, tag = 'internal scratch']
  %s0 = inlined_call_operand.vmem [shape: bf16[128,128], index: 0, kind: input, shape index: {}]
  %s1 = inlined_call_operand.vmem [shape: bf16[128,128], index: 1, kind: input, shape index: {}]
  %s2 = inlined_call_operand.vmem [shape: f32[1,128], index: 2, kind: input, shape index: {}]
  %s3 = inlined_call_operand.vmem [shape: bf16[128,128], index: 3, kind: output, shape index: {}]
  %s4 = sld [smem:[#allocation0]]
  $region22: #{forward.80} parent=0
    _
  %s6 = ssub.s32 1, %s4
  %s7 = scalar_select 0, %s6, %s4
  // Predicated region
  $region2: #{forward.80} parent=0 // pred_check
    _
  $region3: #{forward.80} parent=0 // pred_check_branch
    %9 = sbr.rel (0) target = $region5
  $region4: #{forward.80} parent=0 // pred_region
    _
  $region5: #{forward.80} parent=0 // pred_fallthru
    _
  // Predicated region
  $region6: #{forward.80} parent=0 // pred_check
    _
  $region7: #{forward.80} parent=0 // pred_check_branch
    %11 = sbr.rel (0) target = $region9
  $region8: #{forward.80} parent=0 // pred_region
    _
  $region9: #{forward.80} parent=0 // pred_fallthru
    _
  // Predicated region
  $region10: #{forward.80} parent=0 // pred_check
    _
  $region11: #{forward.80} parent=0 // pred_check_branch
    %13 = sbr.rel (0) target = $region13
  $region12: #{forward.80} parent=0 // pred_region
    _
  $region13: #{forward.80} parent=0 // pred_fallthru
    _
  %v15 = vld [vmem:[%s0] sm:$0xf]
  %v16 = vld [vmem:[%s0 + $0x4] sm:$0xf]
  %v17 = vld [vmem:[%s0 + $0x8] sm:$0xf]
  %v18 = vld [vmem:[%s0 + $0xc] sm:$0xf]
  %v19 = vld [vmem:[%s0 + $0x10] sm:$0xf]
  %v20 = vld [vmem:[%s0 + $0x14] sm:$0xf]
  %v21 = vld [vmem:[%s0 + $0x18] sm:$0xf]
  %v22 = vld [vmem:[%s0 + $0x1c] sm:$0xf]
  %v23 = vld [vmem:[%s0 + $0x20] sm:$0xf]
  %v24 = vld [vmem:[%s0 + $0x24] sm:$0xf]
  %v25 = vld [vmem:[%s0 + $0x28] sm:$0xf]
  %v26 = vld [vmem:[%s0 + $0x2c] sm:$0xf]
  %v27 = vld [vmem:[%s0 + $0x30] sm:$0xf]
  %v28 = vld [vmem:[%s0 + $0x34] sm:$0xf]
  %v29 = vld [vmem:[%s0 + $0x38] sm:$0xf]
  %v30 = vld [vmem:[%s0 + $0x3c] sm:$0xf]
  %v31 = vld [vmem:[%s1] sm:$0xf]
  %v32 = vld [vmem:[%s1 + $0x4] sm:$0xf]
  %v33 = vld [vmem:[%s1 + $0x8] sm:$0xf]
  %v34 = vld [vmem:[%s1 + $0xc] sm:$0xf]
  %v35 = vld [vmem:[%s1 + $0x10] sm:$0xf]
  %v36 = vld [vmem:[%s1 + $0x14] sm:$0xf]
  %v37 = vld [vmem:[%s1 + $0x18] sm:$0xf]
  %v38 = vld [vmem:[%s1 + $0x1c] sm:$0xf]
  %v39 = vld [vmem:[%s1 + $0x20] sm:$0xf]
  %v40 = vld [vmem:[%s1 + $0x24] sm:$0xf]
  %v41 = vld [vmem:[%s1 + $0x28] sm:$0xf]
  %v42 = vld [vmem:[%s1 + $0x2c] sm:$0xf]
  %v43 = vld [vmem:[%s1 + $0x30] sm:$0xf]
  %v44 = vld [vmem:[%s1 + $0x34] sm:$0xf]
  %v45 = vld [vmem:[%s1 + $0x38] sm:$0xf]
  %v46 = vld [vmem:[%s1 + $0x3c] sm:$0xf]
  %v47 = vld [vmem:[%s2] sm:$0x1]
  %v49 = vlaneseq
  %v50 = vshrl.u32 %v49, 7
  %v51 = vsub.s32 0, %v50
  %v52 = vrot.slane %v47, %v51
  %v70 = vunpack.c.l.b16 %v15
  %v71 = vunpack.c.l.b16 %v16
  %v72 = vunpack.c.l.b16 %v17
  %v73 = vunpack.c.l.b16 %v18
  %v74 = vunpack.c.l.b16 %v19
  %v75 = vunpack.c.l.b16 %v20
  %v76 = vunpack.c.l.b16 %v21
  %v77 = vunpack.c.l.b16 %v22
  %v78 = vunpack.c.l.b16 %v23
  %v79 = vunpack.c.l.b16 %v24
  %v80 = vunpack.c.l.b16 %v25
  %v81 = vunpack.c.l.b16 %v26
  %v82 = vunpack.c.l.b16 %v27
  %v83 = vunpack.c.l.b16 %v28
  %v84 = vunpack.c.l.b16 %v29
  %v85 = vunpack.c.l.b16 %v30
  %v86 = vpack.c.b16 %v71, %v70
  %v87 = vpack.c.b16 %v73, %v72
  %v88 = vpack.c.b16 %v75, %v74
  %v89 = vpack.c.b16 %v77, %v76
  %v90 = vpack.c.b16 %v79, %v78
  %v91 = vpack.c.b16 %v81, %v80
  %v92 = vpack.c.b16 %v83, %v82
  %v93 = vpack.c.b16 %v85, %v84
  %v118 = vunpack.c.l.b16 %v31
  %v119 = vunpack.c.l.b16 %v32
  %v120 = vunpack.c.l.b16 %v33
  %v121 = vunpack.c.l.b16 %v34
  %v122 = vunpack.c.l.b16 %v35
  %v123 = vunpack.c.l.b16 %v36
  %v124 = vunpack.c.l.b16 %v37
  %v125 = vunpack.c.l.b16 %v38
  %v126 = vunpack.c.l.b16 %v39
  %v127 = vunpack.c.l.b16 %v40
  %v128 = vunpack.c.l.b16 %v41
  %v129 = vunpack.c.l.b16 %v42
  %v130 = vunpack.c.l.b16 %v43
  %v131 = vunpack.c.l.b16 %v44
  %v132 = vunpack.c.l.b16 %v45
  %v133 = vunpack.c.l.b16 %v46
  %v134 = vpack.c.b16 %v119, %v118
  %v135 = vpack.c.b16 %v121, %v120
  %v136 = vpack.c.b16 %v123, %v122
  %v137 = vpack.c.b16 %v125, %v124
  %v138 = vpack.c.b16 %v127, %v126
  %v139 = vpack.c.b16 %v129, %v128
  %v140 = vpack.c.b16 %v131, %v130
  %v141 = vpack.c.b16 %v133, %v132
  %150 = vmatprep.subr.bf16.mxu0 0
  %151 = vmatpush1.bf16.msra.mxu0 %v141
  %152 = vmatprep.subr.bf16.mxu0 0
  %153 = vmatpush1.bf16.msra.mxu0 %v140
  %154 = vmatprep.subr.bf16.mxu0 0
  %155 = vmatpush1.bf16.msra.mxu0 %v139
  %156 = vmatprep.subr.bf16.mxu0 0
  %157 = vmatpush1.bf16.msra.mxu0 %v138
  %158 = vmatprep.subr.bf16.mxu0 0
  %159 = vmatpush1.bf16.msra.mxu0 %v137
  %160 = vmatprep.subr.bf16.mxu0 0
  %161 = vmatpush1.bf16.msra.mxu0 %v136
  %162 = vmatprep.subr.bf16.mxu0 0
  %163 = vmatpush1.bf16.msra.mxu0 %v135
  %164 = vmatprep.subr.bf16.mxu0 0
  %165 = vmatpush1.bf16.msra.mxu0 %v134
  %166 = vmatprep.subr.bf16.mxu0 0
  %167 = vmatpush2.bf16.msra.mxu0 0
  %168 = vmatprep.subr.bf16.mxu0 0
  %169 = vmatpush2.bf16.msra.mxu0 0
  %170 = vmatprep.subr.bf16.mxu0 0
  %171 = vmatpush2.bf16.msra.mxu0 0
  %172 = vmatprep.subr.bf16.mxu0 0
  %173 = vmatpush2.bf16.msra.mxu0 0
  %174 = vmatprep.subr.bf16.mxu0 0
  %175 = vmatpush2.bf16.msra.mxu0 0
  %176 = vmatprep.subr.bf16.mxu0 0
  %177 = vmatpush2.bf16.msra.mxu0 0
  %178 = vmatprep.subr.bf16.mxu0 0
  %179 = vmatpush2.bf16.msra.mxu0 0
  %180 = vmatprep.subr.bf16.mxu0 0
  %181 = vmatpush2.bf16.msra.mxu0 0
  %182 = vmatprep.mubr.bf16.mxu0 0
  %183 = vmatmul.mubr.bf16.gmra.mxu0 %v86
  %v184 = vpop.f32.mrf.mxu0
  %v185 = vadd.f32 %v52, %v184
  %v186 = vpop.f32.mrf.mxu0
  %v187 = vpop.f32.mrf.mxu0
  %v188 = vadd.f32 %v52, %v187
  %v189 = vpop.f32.mrf.mxu0
  %190 = vmatprep.mubr.bf16.mxu0 0
  %191 = vmatmul.mubr.bf16.gmra.mxu0 %v87
  %v192 = vpop.f32.mrf.mxu0
  %v193 = vadd.f32 %v52, %v192
  %v194 = vpop.f32.mrf.mxu0
  %v195 = vpop.f32.mrf.mxu0
  %v196 = vadd.f32 %v52, %v195
  %v197 = vpop.f32.mrf.mxu0
  %198 = vmatprep.mubr.bf16.mxu0 0
  %199 = vmatmul.mubr.bf16.gmra.mxu0 %v88
  %v200 = vpop.f32.mrf.mxu0
  %v201 = vadd.f32 %v52, %v200
  %v202 = vpop.f32.mrf.mxu0
  %v203 = vpop.f32.mrf.mxu0
  %v204 = vadd.f32 %v52, %v203
  %v205 = vpop.f32.mrf.mxu0
  %206 = vmatprep.mubr.bf16.mxu0 0
  %207 = vmatmul.mubr.bf16.gmra.mxu0 %v89
  %v208 = vpop.f32.mrf.mxu0
  %v209 = vadd.f32 %v52, %v208
  %v210 = vpop.f32.mrf.mxu0
  %v211 = vpop.f32.mrf.mxu0
  %v212 = vadd.f32 %v52, %v211
  %v213 = vpop.f32.mrf.mxu0
  %214 = vmatprep.mubr.bf16.mxu0 0
  %215 = vmatmul.mubr.bf16.gmra.mxu0 %v90
  %v216 = vpop.f32.mrf.mxu0
  %v217 = vadd.f32 %v52, %v216
  %v218 = vpop.f32.mrf.mxu0
  %v219 = vpop.f32.mrf.mxu0
  %v220 = vadd.f32 %v52, %v219
  %v221 = vpop.f32.mrf.mxu0
  %222 = vmatprep.mubr.bf16.mxu0 0
  %223 = vmatmul.mubr.bf16.gmra.mxu0 %v91
  %v224 = vpop.f32.mrf.mxu0
  %v225 = vadd.f32 %v52, %v224
  %v226 = vpop.f32.mrf.mxu0
  %v227 = vpop.f32.mrf.mxu0
  %v228 = vadd.f32 %v52, %v227
  %v229 = vpop.f32.mrf.mxu0
  %230 = vmatprep.mubr.bf16.mxu0 0
  %231 = vmatmul.mubr.bf16.gmra.mxu0 %v92
  %v232 = vpop.f32.mrf.mxu0
  %v233 = vadd.f32 %v52, %v232
  %v234 = vpop.f32.mrf.mxu0
  %v235 = vpop.f32.mrf.mxu0
  %v236 = vadd.f32 %v52, %v235
  %v237 = vpop.f32.mrf.mxu0
  %238 = vmatprep.mubr.bf16.mxu0 0
  %239 = vmatmul.mubr.bf16.gmra.mxu0 %v93
  %v240 = vpop.f32.mrf.mxu0
  %v241 = vadd.f32 %v52, %v240
  %v242 = vpop.f32.mrf.mxu0
  %v243 = vpop.f32.mrf.mxu0
  %v244 = vadd.f32 %v52, %v243
  %v245 = vpop.f32.mrf.mxu0
  %246 = vdwg.mxu0
  %vm247 = vcmp.gt.f32.partialorder %v185, 0.0
  %vm248 = vcmp.gt.f32.partialorder %v188, 0.0
  %vm249 = vcmp.gt.f32.partialorder %v193, 0.0
  %vm250 = vcmp.gt.f32.partialorder %v196, 0.0
  %vm251 = vcmp.gt.f32.partialorder %v201, 0.0
  %vm252 = vcmp.gt.f32.partialorder %v204, 0.0
  %vm253 = vcmp.gt.f32.partialorder %v209, 0.0
  %vm254 = vcmp.gt.f32.partialorder %v212, 0.0
  %vm255 = vcmp.gt.f32.partialorder %v217, 0.0
  %vm256 = vcmp.gt.f32.partialorder %v220, 0.0
  %vm257 = vcmp.gt.f32.partialorder %v225, 0.0
  %vm258 = vcmp.gt.f32.partialorder %v228, 0.0
  %vm259 = vcmp.gt.f32.partialorder %v233, 0.0
  %vm260 = vcmp.gt.f32.partialorder %v236, 0.0
  %vm261 = vcmp.gt.f32.partialorder %v241, 0.0
  %vm262 = vcmp.gt.f32.partialorder %v244, 0.0
  %v263 = vmul.f32 %v185, 0.1
  %v264 = vmul.f32 %v188, 0.1
  %v265 = vmul.f32 %v193, 0.1
  %v266 = vmul.f32 %v196, 0.1
  %v267 = vmul.f32 %v201, 0.1
  %v268 = vmul.f32 %v204, 0.1
  %v269 = vmul.f32 %v209, 0.1
  %v270 = vmul.f32 %v212, 0.1
  %v271 = vmul.f32 %v217, 0.1
  %v272 = vmul.f32 %v220, 0.1
  %v273 = vmul.f32 %v225, 0.1
  %v274 = vmul.f32 %v228, 0.1
  %v275 = vmul.f32 %v233, 0.1
  %v276 = vmul.f32 %v236, 0.1
  %v277 = vmul.f32 %v241, 0.1
  %v278 = vmul.f32 %v244, 0.1
  %v279 = vsel %vm247, %v185, %v263
  %v280 = vsel %vm248, %v188, %v264
  %v281 = vsel %vm249, %v193, %v265
  %v282 = vsel %vm250, %v196, %v266
  %v283 = vsel %vm251, %v201, %v267
  %v284 = vsel %vm252, %v204, %v268
  %v285 = vsel %vm253, %v209, %v269
  %v286 = vsel %vm254, %v212, %v270
  %v287 = vsel %vm255, %v217, %v271
  %v288 = vsel %vm256, %v220, %v272
  %v289 = vsel %vm257, %v225, %v273
  %v290 = vsel %vm258, %v228, %v274
  %v291 = vsel %vm259, %v233, %v275
  %v292 = vsel %vm260, %v236, %v276
  %v293 = vsel %vm261, %v241, %v277
  %v294 = vsel %vm262, %v244, %v278
  %v295 = vpack.c.bf16 %v280, %v279
  %v296 = vpack.c.bf16 %v282, %v281
  %v297 = vpack.c.bf16 %v284, %v283
  %v298 = vpack.c.bf16 %v286, %v285
  %v299 = vpack.c.bf16 %v288, %v287
  %v300 = vpack.c.bf16 %v290, %v289
  %v301 = vpack.c.bf16 %v292, %v291
  %v302 = vpack.c.bf16 %v294, %v293
  %v311 = vunpack.c.l.b16 %v295
  %v312 = vunpack.c.h.b16 %v295
  %v313 = vunpack.c.l.b16 %v296
  %v314 = vunpack.c.h.b16 %v296
  %v315 = vunpack.c.l.b16 %v297
  %v316 = vunpack.c.h.b16 %v297
  %v317 = vunpack.c.l.b16 %v298
  %v318 = vunpack.c.h.b16 %v298
  %v319 = vunpack.c.l.b16 %v299
  %v320 = vunpack.c.h.b16 %v299
  %v321 = vunpack.c.l.b16 %v300
  %v322 = vunpack.c.h.b16 %v300
  %v323 = vunpack.c.l.b16 %v301
  %v324 = vunpack.c.h.b16 %v301
  %v325 = vunpack.c.l.b16 %v302
  %v326 = vunpack.c.h.b16 %v302
  %v327 = vpack.c.b16 %v311, %v311
  %v328 = vpack.c.b16 %v312, %v312
  %v329 = vpack.c.b16 %v313, %v313
  %v330 = vpack.c.b16 %v314, %v314
  %v331 = vpack.c.b16 %v315, %v315
  %v332 = vpack.c.b16 %v316, %v316
  %v333 = vpack.c.b16 %v317, %v317
  %v334 = vpack.c.b16 %v318, %v318
  %v335 = vpack.c.b16 %v319, %v319
  %v336 = vpack.c.b16 %v320, %v320
  %v337 = vpack.c.b16 %v321, %v321
  %v338 = vpack.c.b16 %v322, %v322
  %v339 = vpack.c.b16 %v323, %v323
  %v340 = vpack.c.b16 %v324, %v324
  %v341 = vpack.c.b16 %v325, %v325
  %v342 = vpack.c.b16 %v326, %v326
  %359 = vst [vmem:[%s3] sm:$0xf] %v327
  %360 = vst [vmem:[%s3 + $0x4] sm:$0xf] %v328
  %361 = vst [vmem:[%s3 + $0x8] sm:$0xf] %v329
  %362 = vst [vmem:[%s3 + $0xc] sm:$0xf] %v330
  %363 = vst [vmem:[%s3 + $0x10] sm:$0xf] %v331
  %364 = vst [vmem:[%s3 + $0x14] sm:$0xf] %v332
  %365 = vst [vmem:[%s3 + $0x18] sm:$0xf] %v333
  %366 = vst [vmem:[%s3 + $0x1c] sm:$0xf] %v334
  %367 = vst [vmem:[%s3 + $0x20] sm:$0xf] %v335
  %368 = vst [vmem:[%s3 + $0x24] sm:$0xf] %v336
  %369 = vst [vmem:[%s3 + $0x28] sm:$0xf] %v337
  %370 = vst [vmem:[%s3 + $0x2c] sm:$0xf] %v338
  %371 = vst [vmem:[%s3 + $0x30] sm:$0xf] %v339
  %372 = vst [vmem:[%s3 + $0x34] sm:$0xf] %v340
  %373 = vst [vmem:[%s3 + $0x38] sm:$0xf] %v341
  %374 = vst [vmem:[%s3 + $0x3c] sm:$0xf] %v342
  // Predicated region
  $region14: #{forward.80} parent=0 // pred_check
    _
  $region15: #{forward.80} parent=0 // pred_check_branch
    %376 = sbr.rel (0) target = $region17
  $region16: #{forward.80} parent=0 // pred_region
    _
  $region17: #{forward.80} parent=0 // pred_fallthru
    _
  // Predicated region
  $region18: #{forward.80} parent=0 // pred_check
    _
  $region19: #{forward.80} parent=0 // pred_check_branch
    %378 = sbr.rel (0) target = $region21
  $region20: #{forward.80} parent=0 // pred_region
    _
  $region21: #{forward.80} parent=0 // pred_fallthru
    _

// kernel: forward.81
$region0: #{forward.81}
  #allocation0 [shape = 'u32[]', space=smem, size = 0x4, offset = 0x4, fixed_abs, tag = 'smem constant byte address 0x4 - core index']
  #allocation1 [shape = 'u32[144,128]{1,0:T(1,128)}', space=vmem, size = 0x12000, scoped, tag = 'internal scratch']
  %s0 = inlined_call_operand.vmem [shape: bf16[128,72], index: 0, kind: input, shape index: {}]
  %s1 = inlined_call_operand.vmem [shape: bf16[72,128], index: 1, kind: input, shape index: {}]
  %s2 = inlined_call_operand.vmem [shape: f32[1,128], index: 2, kind: input, shape index: {}]
  %s3 = inlined_call_operand.vmem [shape: bf16[128,128], index: 3, kind: input, shape index: {}]
  %s4 = inlined_call_operand.vmem [shape: bf16[128,128], index: 4, kind: output, shape index: {}]
  %s5 = sld [smem:[#allocation0]]
  $region26: #{forward.81} parent=0
    _
  %s7 = ssub.s32 1, %s5
  %s8 = scalar_select 0, %s7, %s5
  // Predicated region
  $region2: #{forward.81} parent=0 // pred_check
    _
  $region3: #{forward.81} parent=0 // pred_check_branch
    %10 = sbr.rel (0) target = $region5
  $region4: #{forward.81} parent=0 // pred_region
    _
  $region5: #{forward.81} parent=0 // pred_fallthru
    _
  // Predicated region
  $region6: #{forward.81} parent=0 // pred_check
    _
  $region7: #{forward.81} parent=0 // pred_check_branch
    %12 = sbr.rel (0) target = $region9
  $region8: #{forward.81} parent=0 // pred_region
    _
  $region9: #{forward.81} parent=0 // pred_fallthru
    _
  // Predicated region
  $region10: #{forward.81} parent=0 // pred_check
    _
  $region11: #{forward.81} parent=0 // pred_check_branch
    %14 = sbr.rel (0) target = $region13
  $region12: #{forward.81} parent=0 // pred_region
    _
  $region13: #{forward.81} parent=0 // pred_fallthru
    _
  // Predicated region
  $region14: #{forward.81} parent=0 // pred_check
    _
  $region15: #{forward.81} parent=0 // pred_check_branch
    %16 = sbr.rel (0) target = $region17
  $region16: #{forward.81} parent=0 // pred_region
    _
  $region17: #{forward.81} parent=0 // pred_fallthru
    _
  %v18 = vld [vmem:[%s0] sm:$0xf]
  %v19 = vld [vmem:[%s0 + $0x4] sm:$0xf]
  %v20 = vld [vmem:[%s0 + $0x8] sm:$0xf]
  %v21 = vld [vmem:[%s0 + $0xc] sm:$0xf]
  %v22 = vld [vmem:[%s0 + $0x10] sm:$0xf]
  %v23 = vld [vmem:[%s0 + $0x14] sm:$0xf]
  %v24 = vld [vmem:[%s0 + $0x18] sm:$0xf]
  %v25 = vld [vmem:[%s0 + $0x1c] sm:$0xf]
  %v26 = vld [vmem:[%s0 + $0x20] sm:$0xf]
  %v27 = vld [vmem:[%s0 + $0x24] sm:$0xf]
  %v28 = vld [vmem:[%s0 + $0x28] sm:$0xf]
  %v29 = vld [vmem:[%s0 + $0x2c] sm:$0xf]
  %v30 = vld [vmem:[%s0 + $0x30] sm:$0xf]
  %v31 = vld [vmem:[%s0 + $0x34] sm:$0xf]
  %v32 = vld [vmem:[%s0 + $0x38] sm:$0xf]
  %v33 = vld [vmem:[%s0 + $0x3c] sm:$0xf]
  %v34 = vld [vmem:[%s1] sm:$0xf]
  %v35 = vld [vmem:[%s1 + $0x4] sm:$0xf]
  %v36 = vld [vmem:[%s1 + $0x8] sm:$0xf]
  %v37 = vld [vmem:[%s1 + $0xc] sm:$0xf]
  %v38 = vld [vmem:[%s1 + $0x10] sm:$0xf]
  %v39 = vld [vmem:[%s1 + $0x14] sm:$0xf]
  %v40 = vld [vmem:[%s1 + $0x18] sm:$0xf]
  %v41 = vld [vmem:[%s1 + $0x1c] sm:$0xf]
  %v42 = vld [vmem:[%s1 + $0x20] sm:$0xf]
  %v43 = vld [vmem:[%s2] sm:$0x1]
  %v45 = vlaneseq
  %v46 = vshrl.u32 %v45, 7
  %v47 = vsub.s32 0, %v46
  %v48 = vrot.slane %v43, %v47
  %v66 = vunpack.c.l.b16 %v18
  %v67 = vunpack.c.l.b16 %v19
  %v68 = vunpack.c.l.b16 %v20
  %v69 = vunpack.c.l.b16 %v21
  %v70 = vunpack.c.l.b16 %v22
  %v71 = vunpack.c.l.b16 %v23
  %v72 = vunpack.c.l.b16 %v24
  %v73 = vunpack.c.l.b16 %v25
  %v74 = vunpack.c.l.b16 %v26
  %v75 = vunpack.c.l.b16 %v27
  %v76 = vunpack.c.l.b16 %v28
  %v77 = vunpack.c.l.b16 %v29
  %v78 = vunpack.c.l.b16 %v30
  %v79 = vunpack.c.l.b16 %v31
  %v80 = vunpack.c.l.b16 %v32
  %v81 = vunpack.c.l.b16 %v33
  %v82 = vpack.c.b16 %v67, %v66
  %v83 = vpack.c.b16 %v69, %v68
  %v84 = vpack.c.b16 %v71, %v70
  %v85 = vpack.c.b16 %v73, %v72
  %v86 = vpack.c.b16 %v75, %v74
  %v87 = vpack.c.b16 %v77, %v76
  %v88 = vpack.c.b16 %v79, %v78
  %v89 = vpack.c.b16 %v81, %v80
  %v99 = vunpack.c.l.b16 %v34
  %v100 = vunpack.c.l.b16 %v35
  %v101 = vunpack.c.l.b16 %v36
  %v102 = vunpack.c.l.b16 %v37
  %v103 = vunpack.c.l.b16 %v38
  %v104 = vunpack.c.l.b16 %v39
  %v105 = vunpack.c.l.b16 %v40
  %v106 = vunpack.c.l.b16 %v41
  %v107 = vunpack.c.l.b16 %v42
  %v108 = vpack.c.b16 %v100, %v99
  %v109 = vpack.c.b16 %v102, %v101
  %v110 = vpack.c.b16 %v104, %v103
  %v111 = vpack.c.b16 %v106, %v105
  %v112 = vpack.c.b16 %v107, %v107
  %vm117 = vcmask 588800
  %v119 = vsel %vm117, %v82, 0
  %v122 = vsel %vm117, %v83, 0
  %v125 = vsel %vm117, %v84, 0
  %v128 = vsel %vm117, %v85, 0
  %v131 = vsel %vm117, %v86, 0
  %v134 = vsel %vm117, %v87, 0
  %v137 = vsel %vm117, %v88, 0
  %v140 = vsel %vm117, %v89, 0
  %vm142 = vcmask 1043456
  %v144 = vsel %vm142, %v112, 0
  %146 = vmatprep.subr.bf16.mxu0 0
  %147 = vmatpush1.bf16.msra.mxu0 0
  %148 = vmatprep.subr.bf16.mxu0 0
  %149 = vmatpush1.bf16.msra.mxu0 0
  %150 = vmatprep.subr.bf16.mxu0 0
  %151 = vmatpush1.bf16.msra.mxu0 0
  %152 = vmatprep.subr.bf16.mxu0 0
  %153 = vmatpush1.bf16.msra.mxu0 %v144
  %154 = vmatprep.subr.bf16.mxu0 0
  %155 = vmatpush1.bf16.msra.mxu0 %v111
  %156 = vmatprep.subr.bf16.mxu0 0
  %157 = vmatpush1.bf16.msra.mxu0 %v110
  %158 = vmatprep.subr.bf16.mxu0 0
  %159 = vmatpush1.bf16.msra.mxu0 %v109
  %160 = vmatprep.subr.bf16.mxu0 0
  %161 = vmatpush1.bf16.msra.mxu0 %v108
  %162 = vmatprep.subr.bf16.mxu0 0
  %163 = vmatpush2.bf16.msra.mxu0 0
  %164 = vmatprep.subr.bf16.mxu0 0
  %165 = vmatpush2.bf16.msra.mxu0 0
  %166 = vmatprep.subr.bf16.mxu0 0
  %167 = vmatpush2.bf16.msra.mxu0 0
  %168 = vmatprep.subr.bf16.mxu0 0
  %169 = vmatpush2.bf16.msra.mxu0 0
  %170 = vmatprep.subr.bf16.mxu0 0
  %171 = vmatpush2.bf16.msra.mxu0 0
  %172 = vmatprep.subr.bf16.mxu0 0
  %173 = vmatpush2.bf16.msra.mxu0 0
  %174 = vmatprep.subr.bf16.mxu0 0
  %175 = vmatpush2.bf16.msra.mxu0 0
  %176 = vmatprep.subr.bf16.mxu0 0
  %177 = vmatpush2.bf16.msra.mxu0 0
  %178 = vmatprep.mubr.bf16.mxu0 0
  %179 = vmatmul.mubr.bf16.gmra.mxu0 %v119
  %v180 = vpop.f32.mrf.mxu0
  %v181 = vadd.f32 %v48, %v180
  %v182 = vpop.f32.mrf.mxu0
  %v183 = vpop.f32.mrf.mxu0
  %v184 = vadd.f32 %v48, %v183
  %v185 = vpop.f32.mrf.mxu0
  %186 = vmatprep.mubr.bf16.mxu0 0
  %187 = vmatmul.mubr.bf16.gmra.mxu0 %v122
  %v188 = vpop.f32.mrf.mxu0
  %v189 = vadd.f32 %v48, %v188
  %v190 = vpop.f32.mrf.mxu0
  %v191 = vpop.f32.mrf.mxu0
  %v192 = vadd.f32 %v48, %v191
  %v193 = vpop.f32.mrf.mxu0
  %194 = vmatprep.mubr.bf16.mxu0 0
  %195 = vmatmul.mubr.bf16.gmra.mxu0 %v125
  %v196 = vpop.f32.mrf.mxu0
  %v197 = vadd.f32 %v48, %v196
  %v198 = vpop.f32.mrf.mxu0
  %v199 = vpop.f32.mrf.mxu0
  %v200 = vadd.f32 %v48, %v199
  %v201 = vpop.f32.mrf.mxu0
  %202 = vmatprep.mubr.bf16.mxu0 0
  %203 = vmatmul.mubr.bf16.gmra.mxu0 %v128
  %v204 = vpop.f32.mrf.mxu0
  %v205 = vadd.f32 %v48, %v204
  %v206 = vpop.f32.mrf.mxu0
  %v207 = vpop.f32.mrf.mxu0
  %v208 = vadd.f32 %v48, %v207
  %v209 = vpop.f32.mrf.mxu0
  %210 = vmatprep.mubr.bf16.mxu0 0
  %211 = vmatmul.mubr.bf16.gmra.mxu0 %v131
  %v212 = vpop.f32.mrf.mxu0
  %v213 = vadd.f32 %v48, %v212
  %v214 = vpop.f32.mrf.mxu0
  %v215 = vpop.f32.mrf.mxu0
  %v216 = vadd.f32 %v48, %v215
  %v217 = vpop.f32.mrf.mxu0
  %218 = vmatprep.mubr.bf16.mxu0 0
  %219 = vmatmul.mubr.bf16.gmra.mxu0 %v134
  %v220 = vpop.f32.mrf.mxu0
  %v221 = vadd.f32 %v48, %v220
  %v222 = vpop.f32.mrf.mxu0
  %v223 = vpop.f32.mrf.mxu0
  %v224 = vadd.f32 %v48, %v223
  %v225 = vpop.f32.mrf.mxu0
  %226 = vmatprep.mubr.bf16.mxu0 0
  %227 = vmatmul.mubr.bf16.gmra.mxu0 %v137
  %v228 = vpop.f32.mrf.mxu0
  %v229 = vadd.f32 %v48, %v228
  %v230 = vpop.f32.mrf.mxu0
  %v231 = vpop.f32.mrf.mxu0
  %v232 = vadd.f32 %v48, %v231
  %v233 = vpop.f32.mrf.mxu0
  %234 = vmatprep.mubr.bf16.mxu0 0
  %235 = vmatmul.mubr.bf16.gmra.mxu0 %v140
  %v236 = vpop.f32.mrf.mxu0
  %v237 = vadd.f32 %v48, %v236
  %v238 = vpop.f32.mrf.mxu0
  %v239 = vpop.f32.mrf.mxu0
  %v240 = vadd.f32 %v48, %v239
  %v241 = vpop.f32.mrf.mxu0
  %242 = vdwg.mxu0
  %vm243 = vcmp.gt.f32.partialorder %v181, 0.0
  %vm244 = vcmp.gt.f32.partialorder %v184, 0.0
  %vm245 = vcmp.gt.f32.partialorder %v189, 0.0
  %vm246 = vcmp.gt.f32.partialorder %v192, 0.0
  %vm247 = vcmp.gt.f32.partialorder %v197, 0.0
  %vm248 = vcmp.gt.f32.partialorder %v200, 0.0
  %vm249 = vcmp.gt.f32.partialorder %v205, 0.0
  %vm250 = vcmp.gt.f32.partialorder %v208, 0.0
  %vm251 = vcmp.gt.f32.partialorder %v213, 0.0
  %vm252 = vcmp.gt.f32.partialorder %v216, 0.0
  %vm253 = vcmp.gt.f32.partialorder %v221, 0.0
  %vm254 = vcmp.gt.f32.partialorder %v224, 0.0
  %vm255 = vcmp.gt.f32.partialorder %v229, 0.0
  %vm256 = vcmp.gt.f32.partialorder %v232, 0.0
  %vm257 = vcmp.gt.f32.partialorder %v237, 0.0
  %vm258 = vcmp.gt.f32.partialorder %v240, 0.0
  %v259 = vmul.f32 %v181, 0.1
  %v260 = vmul.f32 %v184, 0.1
  %v261 = vmul.f32 %v189, 0.1
  %v262 = vmul.f32 %v192, 0.1
  %v263 = vmul.f32 %v197, 0.1
  %v264 = vmul.f32 %v200, 0.1
  %v265 = vmul.f32 %v205, 0.1
  %v266 = vmul.f32 %v208, 0.1
  %v267 = vmul.f32 %v213, 0.1
  %v268 = vmul.f32 %v216, 0.1
  %v269 = vmul.f32 %v221, 0.1
  %v270 = vmul.f32 %v224, 0.1
  %v271 = vmul.f32 %v229, 0.1
  %v272 = vmul.f32 %v232, 0.1
  %v273 = vmul.f32 %v237, 0.1
  %v274 = vmul.f32 %v240, 0.1
  %v275 = vsel %vm243, %v181, %v259
  %v276 = vsel %vm244, %v184, %v260
  %v277 = vsel %vm245, %v189, %v261
  %v278 = vsel %vm246, %v192, %v262
  %v279 = vsel %vm247, %v197, %v263
  %v280 = vsel %vm248, %v200, %v264
  %v281 = vsel %vm249, %v205, %v265
  %v282 = vsel %vm250, %v208, %v266
  %v283 = vsel %vm251, %v213, %v267
  %v284 = vsel %vm252, %v216, %v268
  %v285 = vsel %vm253, %v221, %v269
  %v286 = vsel %vm254, %v224, %v270
  %v287 = vsel %vm255, %v229, %v271
  %v288 = vsel %vm256, %v232, %v272
  %v289 = vsel %vm257, %v237, %v273
  %v290 = vsel %vm258, %v240, %v274
  %v291 = vld [vmem:[%s3] sm:$0xf]
  %v292 = vld [vmem:[%s3 + $0x4] sm:$0xf]
  %v293 = vld [vmem:[%s3 + $0x8] sm:$0xf]
  %v294 = vld [vmem:[%s3 + $0xc] sm:$0xf]
  %v295 = vld [vmem:[%s3 + $0x10] sm:$0xf]
  %v296 = vld [vmem:[%s3 + $0x14] sm:$0xf]
  %v297 = vld [vmem:[%s3 + $0x18] sm:$0xf]
  %v298 = vld [vmem:[%s3 + $0x1c] sm:$0xf]
  %v299 = vld [vmem:[%s3 + $0x20] sm:$0xf]
  %v300 = vld [vmem:[%s3 + $0x24] sm:$0xf]
  %v301 = vld [vmem:[%s3 + $0x28] sm:$0xf]
  %v302 = vld [vmem:[%s3 + $0x2c] sm:$0xf]
  %v303 = vld [vmem:[%s3 + $0x30] sm:$0xf]
  %v304 = vld [vmem:[%s3 + $0x34] sm:$0xf]
  %v305 = vld [vmem:[%s3 + $0x38] sm:$0xf]
  %v306 = vld [vmem:[%s3 + $0x3c] sm:$0xf]
  %v307 = vunpack.c.l.bf16 %v291
  %v308 = vunpack.c.l.bf16 %v292
  %v309 = vunpack.c.l.bf16 %v293
  %v310 = vunpack.c.l.bf16 %v294
  %v311 = vunpack.c.l.bf16 %v295
  %v312 = vunpack.c.l.bf16 %v296
  %v313 = vunpack.c.l.bf16 %v297
  %v314 = vunpack.c.l.bf16 %v298
  %v315 = vunpack.c.l.bf16 %v299
  %v316 = vunpack.c.l.bf16 %v300
  %v317 = vunpack.c.l.bf16 %v301
  %v318 = vunpack.c.l.bf16 %v302
  %v319 = vunpack.c.l.bf16 %v303
  %v320 = vunpack.c.l.bf16 %v304
  %v321 = vunpack.c.l.bf16 %v305
  %v322 = vunpack.c.l.bf16 %v306
  %v323 = vadd.f32 %v275, %v307
  %v324 = vadd.f32 %v276, %v308
  %v325 = vadd.f32 %v277, %v309
  %v326 = vadd.f32 %v278, %v310
  %v327 = vadd.f32 %v279, %v311
  %v328 = vadd.f32 %v280, %v312
  %v329 = vadd.f32 %v281, %v313
  %v330 = vadd.f32 %v282, %v314
  %v331 = vadd.f32 %v283, %v315
  %v332 = vadd.f32 %v284, %v316
  %v333 = vadd.f32 %v285, %v317
  %v334 = vadd.f32 %v286, %v318
  %v335 = vadd.f32 %v287, %v319
  %v336 = vadd.f32 %v288, %v320
  %v337 = vadd.f32 %v289, %v321
  %v338 = vadd.f32 %v290, %v322
  %v339 = vpack.c.bf16 %v324, %v323
  %v340 = vpack.c.bf16 %v326, %v325
  %v341 = vpack.c.bf16 %v328, %v327
  %v342 = vpack.c.bf16 %v330, %v329
  %v343 = vpack.c.bf16 %v332, %v331
  %v344 = vpack.c.bf16 %v334, %v333
  %v345 = vpack.c.bf16 %v336, %v335
  %v346 = vpack.c.bf16 %v338, %v337
  %v355 = vunpack.c.l.b16 %v339
  %v356 = vunpack.c.h.b16 %v339
  %v357 = vunpack.c.l.b16 %v340
  %v358 = vunpack.c.h.b16 %v340
  %v359 = vunpack.c.l.b16 %v341
  %v360 = vunpack.c.h.b16 %v341
  %v361 = vunpack.c.l.b16 %v342
  %v362 = vunpack.c.h.b16 %v342
  %v363 = vunpack.c.l.b16 %v343
  %v364 = vunpack.c.h.b16 %v343
  %v365 = vunpack.c.l.b16 %v344
  %v366 = vunpack.c.h.b16 %v344
  %v367 = vunpack.c.l.b16 %v345
  %v368 = vunpack.c.h.b16 %v345
  %v369 = vunpack.c.l.b16 %v346
  %v370 = vunpack.c.h.b16 %v346
  %v371 = vpack.c.b16 %v355, %v355
  %v372 = vpack.c.b16 %v356, %v356
  %v373 = vpack.c.b16 %v357, %v357
  %v374 = vpack.c.b16 %v358, %v358
  %v375 = vpack.c.b16 %v359, %v359
  %v376 = vpack.c.b16 %v360, %v360
  %v377 = vpack.c.b16 %v361, %v361
  %v378 = vpack.c.b16 %v362, %v362
  %v379 = vpack.c.b16 %v363, %v363
  %v380 = vpack.c.b16 %v364, %v364
  %v381 = vpack.c.b16 %v365, %v365
  %v382 = vpack.c.b16 %v366, %v366
  %v383 = vpack.c.b16 %v367, %v367
  %v384 = vpack.c.b16 %v368, %v368
  %v385 = vpack.c.b16 %v369, %v369
  %v386 = vpack.c.b16 %v370, %v370
  %403 = vst [vmem:[%s4] sm:$0xf] %v371
  %404 = vst [vmem:[%s4 + $0x4] sm:$0xf] %v372
  %405 = vst [vmem:[%s4 + $0x8] sm:$0xf] %v373
  %406 = vst [vmem:[%s4 + $0xc] sm:$0xf] %v374
  %407 = vst [vmem:[%s4 + $0x10] sm:$0xf] %v375
  %408 = vst [vmem:[%s4 + $0x14] sm:$0xf] %v376
  %409 = vst [vmem:[%s4 + $0x18] sm:$0xf] %v377
  %410 = vst [vmem:[%s4 + $0x1c] sm:$0xf] %v378
  %411 = vst [vmem:[%s4 + $0x20] sm:$0xf] %v379
  %412 = vst [vmem:[%s4 + $0x24] sm:$0xf] %v380
  %413 = vst [vmem:[%s4 + $0x28] sm:$0xf] %v381
  %414 = vst [vmem:[%s4 + $0x2c] sm:$0xf] %v382
  %415 = vst [vmem:[%s4 + $0x30] sm:$0xf] %v383
  %416 = vst [vmem:[%s4 + $0x34] sm:$0xf] %v384
  %417 = vst [vmem:[%s4 + $0x38] sm:$0xf] %v385
  %418 = vst [vmem:[%s4 + $0x3c] sm:$0xf] %v386
  // Predicated region
  $region18: #{forward.81} parent=0 // pred_check
    _
  $region19: #{forward.81} parent=0 // pred_check_branch
    %420 = sbr.rel (0) target = $region21
  $region20: #{forward.81} parent=0 // pred_region
    _
  $region21: #{forward.81} parent=0 // pred_fallthru
    _
  // Predicated region
  $region22: #{forward.81} parent=0 // pred_check
    _
  $region23: #{forward.81} parent=0 // pred_check_branch
    %422 = sbr.rel (0) target = $region25
  $region24: #{forward.81} parent=0 // pred_region
    _
  $region25: #{forward.81} parent=0 // pred_fallthru
    _

// kernel: forward.84
$region0: #{forward.84}
  #allocation0 [shape = 'u32[]', space=smem, size = 0x4, offset = 0x4, fixed_abs, tag = 'smem constant byte address 0x4 - core index']
  #allocation1 [shape = 'u32[144,128]{1,0:T(1,128)}', space=vmem, size = 0x12000, scoped, tag = 'internal scratch']
  %s0 = inlined_call_operand.vmem [shape: bf16[32,144], index: 0, kind: input, shape index: {}]
  %s1 = inlined_call_operand.vmem [shape: bf16[144,128], index: 1, kind: input, shape index: {}]
  %s2 = inlined_call_operand.vmem [shape: f32[1,128], index: 2, kind: input, shape index: {}]
  %s3 = inlined_call_operand.vmem [shape: bf16[32,128], index: 3, kind: output, shape index: {}]
  %s4 = sld [smem:[#allocation0]]
  $region22: #{forward.84} parent=0
    _
  %s6 = ssub.s32 1, %s4
  %s7 = scalar_select 0, %s6, %s4
  // Predicated region
  $region2: #{forward.84} parent=0 // pred_check
    _
  $region3: #{forward.84} parent=0 // pred_check_branch
    %9 = sbr.rel (0) target = $region5
  $region4: #{forward.84} parent=0 // pred_region
    _
  $region5: #{forward.84} parent=0 // pred_fallthru
    _
  // Predicated region
  $region6: #{forward.84} parent=0 // pred_check
    _
  $region7: #{forward.84} parent=0 // pred_check_branch
    %11 = sbr.rel (0) target = $region9
  $region8: #{forward.84} parent=0 // pred_region
    _
  $region9: #{forward.84} parent=0 // pred_fallthru
    _
  // Predicated region
  $region10: #{forward.84} parent=0 // pred_check
    _
  $region11: #{forward.84} parent=0 // pred_check_branch
    %13 = sbr.rel (0) target = $region13
  $region12: #{forward.84} parent=0 // pred_region
    _
  $region13: #{forward.84} parent=0 // pred_fallthru
    _
  %v15 = vld [vmem:[%s0] sm:$0xff]
  %v16 = vld [vmem:[%s0 + $0x8] sm:$0xff]
  %v17 = vld [vmem:[%s0 + $0x10] sm:$0xff]
  %v18 = vld [vmem:[%s0 + $0x18] sm:$0xff]
  %v19 = vld [vmem:[%s1] sm:$0xf]
  %v20 = vld [vmem:[%s1 + $0x4] sm:$0xf]
  %v21 = vld [vmem:[%s1 + $0x8] sm:$0xf]
  %v22 = vld [vmem:[%s1 + $0xc] sm:$0xf]
  %v23 = vld [vmem:[%s1 + $0x10] sm:$0xf]
  %v24 = vld [vmem:[%s1 + $0x14] sm:$0xf]
  %v25 = vld [vmem:[%s1 + $0x18] sm:$0xf]
  %v26 = vld [vmem:[%s1 + $0x1c] sm:$0xf]
  %v27 = vld [vmem:[%s1 + $0x20] sm:$0xf]
  %v28 = vld [vmem:[%s1 + $0x24] sm:$0xf]
  %v29 = vld [vmem:[%s1 + $0x28] sm:$0xf]
  %v30 = vld [vmem:[%s1 + $0x2c] sm:$0xf]
  %v31 = vld [vmem:[%s1 + $0x30] sm:$0xf]
  %v32 = vld [vmem:[%s1 + $0x34] sm:$0xf]
  %v33 = vld [vmem:[%s1 + $0x38] sm:$0xf]
  %v34 = vld [vmem:[%s1 + $0x3c] sm:$0xf]
  %v35 = vld [vmem:[%s1 + $0x40] sm:$0xf]
  %v36 = vld [vmem:[%s1 + $0x44] sm:$0xf]
  %v37 = vld [vmem:[%s2] sm:$0x1]
  %v39 = vlaneseq
  %v40 = vshrl.u32 %v39, 7
  %v41 = vsub.s32 0, %v40
  %v42 = vrot.slane %v37, %v41
  %v48 = vunpack.c.l.b16 %v15
  %v49 = vunpack.c.h.b16 %v15
  %v50 = vunpack.c.l.b16 %v16
  %v51 = vunpack.c.h.b16 %v16
  %v52 = vunpack.c.l.b16 %v17
  %v53 = vunpack.c.h.b16 %v17
  %v54 = vunpack.c.l.b16 %v18
  %v55 = vunpack.c.h.b16 %v18
  %v56 = vpack.c.b16 %v50, %v48
  %v57 = vpack.c.b16 %v51, %v49
  %v58 = vpack.c.b16 %v54, %v52
  %v59 = vpack.c.b16 %v55, %v53
  %v80 = vunpack.c.l.b16 %v19
  %v81 = vunpack.c.l.b16 %v20
  %v82 = vunpack.c.l.b16 %v21
  %v83 = vunpack.c.l.b16 %v22
  %v84 = vunpack.c.l.b16 %v23
  %v85 = vunpack.c.l.b16 %v24
  %v86 = vunpack.c.l.b16 %v25
  %v87 = vunpack.c.l.b16 %v26
  %v88 = vunpack.c.l.b16 %v27
  %v89 = vunpack.c.l.b16 %v28
  %v90 = vunpack.c.l.b16 %v29
  %v91 = vunpack.c.l.b16 %v30
  %v92 = vunpack.c.l.b16 %v31
  %v93 = vunpack.c.l.b16 %v32
  %v94 = vunpack.c.l.b16 %v33
  %v95 = vunpack.c.l.b16 %v34
  %v96 = vunpack.c.l.b16 %v35
  %v97 = vunpack.c.l.b16 %v36
  %v98 = vpack.c.b16 %v81, %v80
  %v99 = vpack.c.b16 %v83, %v82
  %v100 = vpack.c.b16 %v85, %v84
  %v101 = vpack.c.b16 %v87, %v86
  %v102 = vpack.c.b16 %v89, %v88
  %v103 = vpack.c.b16 %v91, %v90
  %v104 = vpack.c.b16 %v93, %v92
  %v105 = vpack.c.b16 %v95, %v94
  %v106 = vpack.c.b16 %v97, %v96
  %vm116 = vcmask 130048
  %v118 = vsel %vm116, %v57, 0
  %v121 = vsel %vm116, %v59, 0
  %123 = vmatprep.subr.bf16.mxu0 0
  %124 = vmatpush1.bf16.msra.mxu0 %v105
  %125 = vmatprep.subr.bf16.mxu0 0
  %126 = vmatpush1.bf16.msra.mxu0 %v104
  %127 = vmatprep.subr.bf16.mxu0 0
  %128 = vmatpush1.bf16.msra.mxu0 %v103
  %129 = vmatprep.subr.bf16.mxu0 0
  %130 = vmatpush1.bf16.msra.mxu0 %v102
  %131 = vmatprep.subr.bf16.mxu0 0
  %132 = vmatpush1.bf16.msra.mxu0 %v101
  %133 = vmatprep.subr.bf16.mxu0 0
  %134 = vmatpush1.bf16.msra.mxu0 %v100
  %135 = vmatprep.subr.bf16.mxu0 0
  %136 = vmatpush1.bf16.msra.mxu0 %v99
  %137 = vmatprep.subr.bf16.mxu0 0
  %138 = vmatpush1.bf16.msra.mxu0 %v98
  %139 = vmatprep.subr.bf16.mxu0 0
  %140 = vmatpush2.bf16.msra.mxu0 0
  %141 = vmatprep.subr.bf16.mxu0 0
  %142 = vmatpush2.bf16.msra.mxu0 0
  %143 = vmatprep.subr.bf16.mxu0 0
  %144 = vmatpush2.bf16.msra.mxu0 0
  %145 = vmatprep.subr.bf16.mxu0 0
  %146 = vmatpush2.bf16.msra.mxu0 0
  %147 = vmatprep.subr.bf16.mxu0 0
  %148 = vmatpush2.bf16.msra.mxu0 0
  %149 = vmatprep.subr.bf16.mxu0 0
  %150 = vmatpush2.bf16.msra.mxu0 0
  %151 = vmatprep.subr.bf16.mxu0 0
  %152 = vmatpush2.bf16.msra.mxu0 0
  %153 = vmatprep.subr.bf16.mxu0 0
  %154 = vmatpush2.bf16.msra.mxu0 %v106
  %155 = vmatprep.mubr.bf16.mxu0 %v118
  %156 = vmatmul.mubr.bf16.gmra.mxu0 %v56
  %v157 = vpop.f32.mrf.mxu0
  %v158 = vadd.f32 %v42, %v157
  %v159 = vpop.f32.mrf.mxu0
  %v160 = vpop.f32.mrf.mxu0
  %v161 = vadd.f32 %v42, %v160
  %v162 = vpop.f32.mrf.mxu0
  %163 = vmatprep.mubr.bf16.mxu0 %v121
  %164 = vmatmul.mubr.bf16.gmra.mxu0 %v58
  %v165 = vpop.f32.mrf.mxu0
  %v166 = vadd.f32 %v42, %v165
  %v167 = vpop.f32.mrf.mxu0
  %v168 = vpop.f32.mrf.mxu0
  %v169 = vadd.f32 %v42, %v168
  %v170 = vpop.f32.mrf.mxu0
  %171 = vdwg.mxu0
  %vm172 = vcmp.gt.f32.partialorder %v158, 0.0
  %vm173 = vcmp.gt.f32.partialorder %v161, 0.0
  %vm174 = vcmp.gt.f32.partialorder %v166, 0.0
  %vm175 = vcmp.gt.f32.partialorder %v169, 0.0
  %v176 = vmul.f32 %v158, 0.1
  %v177 = vmul.f32 %v161, 0.1
  %v178 = vmul.f32 %v166, 0.1
  %v179 = vmul.f32 %v169, 0.1
  %v180 = vsel %vm172, %v158, %v176
  %v181 = vsel %vm173, %v161, %v177
  %v182 = vsel %vm174, %v166, %v178
  %v183 = vsel %vm175, %v169, %v179
  %v184 = vpack.c.bf16 %v181, %v180
  %v185 = vpack.c.bf16 %v183, %v182
  %v188 = vunpack.c.l.b16 %v184
  %v189 = vunpack.c.h.b16 %v184
  %v190 = vunpack.c.l.b16 %v185
  %v191 = vunpack.c.h.b16 %v185
  %v192 = vpack.c.b16 %v188, %v188
  %v193 = vpack.c.b16 %v189, %v189
  %v194 = vpack.c.b16 %v190, %v190
  %v195 = vpack.c.b16 %v191, %v191
  %200 = vst [vmem:[%s3] sm:$0xf] %v192
  %201 = vst [vmem:[%s3 + $0x4] sm:$0xf] %v193
  %202 = vst [vmem:[%s3 + $0x8] sm:$0xf] %v194
  %203 = vst [vmem:[%s3 + $0xc] sm:$0xf] %v195
  // Predicated region
  $region14: #{forward.84} parent=0 // pred_check
    _
  $region15: #{forward.84} parent=0 // pred_check_branch
    %205 = sbr.rel (0) target = $region17
  $region16: #{forward.84} parent=0 // pred_region
    _
  $region17: #{forward.84} parent=0 // pred_fallthru
    _
  // Predicated region
  $region18: #{forward.84} parent=0 // pred_check
    _
  $region19: #{forward.84} parent=0 // pred_check_branch
    %207 = sbr.rel (0) target = $region21
  $region20: #{forward.84} parent=0 // pred_region
    _
  $region21: #{forward.84} parent=0 // pred_fallthru
    _

// kernel: forward.85
$region0: #{forward.85}
  #allocation0 [shape = 'u32[]', space=smem, size = 0x4, offset = 0x4, fixed_abs, tag = 'smem constant byte address 0x4 - core index']
  #allocation1 [shape = 'u32[144,128]{1,0:T(1,128)}', space=vmem, size = 0x12000, scoped, tag = 'internal scratch']
  %s0 = inlined_call_operand.vmem [shape: bf16[32,128], index: 0, kind: input, shape index: {}]
  %s1 = inlined_call_operand.vmem [shape: bf16[128,128], index: 1, kind: input, shape index: {}]
  %s2 = inlined_call_operand.vmem [shape: f32[1,128], index: 2, kind: input, shape index: {}]
  %s3 = inlined_call_operand.vmem [shape: bf16[32,128], index: 3, kind: output, shape index: {}]
  %s4 = sld [smem:[#allocation0]]
  $region22: #{forward.85} parent=0
    _
  %s6 = ssub.s32 1, %s4
  %s7 = scalar_select 0, %s6, %s4
  // Predicated region
  $region2: #{forward.85} parent=0 // pred_check
    _
  $region3: #{forward.85} parent=0 // pred_check_branch
    %9 = sbr.rel (0) target = $region5
  $region4: #{forward.85} parent=0 // pred_region
    _
  $region5: #{forward.85} parent=0 // pred_fallthru
    _
  // Predicated region
  $region6: #{forward.85} parent=0 // pred_check
    _
  $region7: #{forward.85} parent=0 // pred_check_branch
    %11 = sbr.rel (0) target = $region9
  $region8: #{forward.85} parent=0 // pred_region
    _
  $region9: #{forward.85} parent=0 // pred_fallthru
    _
  // Predicated region
  $region10: #{forward.85} parent=0 // pred_check
    _
  $region11: #{forward.85} parent=0 // pred_check_branch
    %13 = sbr.rel (0) target = $region13
  $region12: #{forward.85} parent=0 // pred_region
    _
  $region13: #{forward.85} parent=0 // pred_fallthru
    _
  %v15 = vld [vmem:[%s0] sm:$0xf]
  %v16 = vld [vmem:[%s0 + $0x4] sm:$0xf]
  %v17 = vld [vmem:[%s0 + $0x8] sm:$0xf]
  %v18 = vld [vmem:[%s0 + $0xc] sm:$0xf]
  %v19 = vld [vmem:[%s1] sm:$0xf]
  %v20 = vld [vmem:[%s1 + $0x4] sm:$0xf]
  %v21 = vld [vmem:[%s1 + $0x8] sm:$0xf]
  %v22 = vld [vmem:[%s1 + $0xc] sm:$0xf]
  %v23 = vld [vmem:[%s1 + $0x10] sm:$0xf]
  %v24 = vld [vmem:[%s1 + $0x14] sm:$0xf]
  %v25 = vld [vmem:[%s1 + $0x18] sm:$0xf]
  %v26 = vld [vmem:[%s1 + $0x1c] sm:$0xf]
  %v27 = vld [vmem:[%s1 + $0x20] sm:$0xf]
  %v28 = vld [vmem:[%s1 + $0x24] sm:$0xf]
  %v29 = vld [vmem:[%s1 + $0x28] sm:$0xf]
  %v30 = vld [vmem:[%s1 + $0x2c] sm:$0xf]
  %v31 = vld [vmem:[%s1 + $0x30] sm:$0xf]
  %v32 = vld [vmem:[%s1 + $0x34] sm:$0xf]
  %v33 = vld [vmem:[%s1 + $0x38] sm:$0xf]
  %v34 = vld [vmem:[%s1 + $0x3c] sm:$0xf]
  %v35 = vld [vmem:[%s2] sm:$0x1]
  %v37 = vlaneseq
  %v38 = vshrl.u32 %v37, 7
  %v39 = vsub.s32 0, %v38
  %v40 = vrot.slane %v35, %v39
  %v46 = vunpack.c.l.b16 %v15
  %v47 = vunpack.c.l.b16 %v16
  %v48 = vunpack.c.l.b16 %v17
  %v49 = vunpack.c.l.b16 %v18
  %v50 = vpack.c.b16 %v47, %v46
  %v51 = vpack.c.b16 %v49, %v48
  %v70 = vunpack.c.l.b16 %v19
  %v71 = vunpack.c.l.b16 %v20
  %v72 = vunpack.c.l.b16 %v21
  %v73 = vunpack.c.l.b16 %v22
  %v74 = vunpack.c.l.b16 %v23
  %v75 = vunpack.c.l.b16 %v24
  %v76 = vunpack.c.l.b16 %v25
  %v77 = vunpack.c.l.b16 %v26
  %v78 = vunpack.c.l.b16 %v27
  %v79 = vunpack.c.l.b16 %v28
  %v80 = vunpack.c.l.b16 %v29
  %v81 = vunpack.c.l.b16 %v30
  %v82 = vunpack.c.l.b16 %v31
  %v83 = vunpack.c.l.b16 %v32
  %v84 = vunpack.c.l.b16 %v33
  %v85 = vunpack.c.l.b16 %v34
  %v86 = vpack.c.b16 %v71, %v70
  %v87 = vpack.c.b16 %v73, %v72
  %v88 = vpack.c.b16 %v75, %v74
  %v89 = vpack.c.b16 %v77, %v76
  %v90 = vpack.c.b16 %v79, %v78
  %v91 = vpack.c.b16 %v81, %v80
  %v92 = vpack.c.b16 %v83, %v82
  %v93 = vpack.c.b16 %v85, %v84
  %102 = vmatprep.subr.bf16.mxu0 0
  %103 = vmatpush1.bf16.msra.mxu0 %v93
  %104 = vmatprep.subr.bf16.mxu0 0
  %105 = vmatpush1.bf16.msra.mxu0 %v92
  %106 = vmatprep.subr.bf16.mxu0 0
  %107 = vmatpush1.bf16.msra.mxu0 %v91
  %108 = vmatprep.subr.bf16.mxu0 0
  %109 = vmatpush1.bf16.msra.mxu0 %v90
  %110 = vmatprep.subr.bf16.mxu0 0
  %111 = vmatpush1.bf16.msra.mxu0 %v89
  %112 = vmatprep.subr.bf16.mxu0 0
  %113 = vmatpush1.bf16.msra.mxu0 %v88
  %114 = vmatprep.subr.bf16.mxu0 0
  %115 = vmatpush1.bf16.msra.mxu0 %v87
  %116 = vmatprep.subr.bf16.mxu0 0
  %117 = vmatpush1.bf16.msra.mxu0 %v86
  %118 = vmatprep.subr.bf16.mxu0 0
  %119 = vmatpush2.bf16.msra.mxu0 0
  %120 = vmatprep.subr.bf16.mxu0 0
  %121 = vmatpush2.bf16.msra.mxu0 0
  %122 = vmatprep.subr.bf16.mxu0 0
  %123 = vmatpush2.bf16.msra.mxu0 0
  %124 = vmatprep.subr.bf16.mxu0 0
  %125 = vmatpush2.bf16.msra.mxu0 0
  %126 = vmatprep.subr.bf16.mxu0 0
  %127 = vmatpush2.bf16.msra.mxu0 0
  %128 = vmatprep.subr.bf16.mxu0 0
  %129 = vmatpush2.bf16.msra.mxu0 0
  %130 = vmatprep.subr.bf16.mxu0 0
  %131 = vmatpush2.bf16.msra.mxu0 0
  %132 = vmatprep.subr.bf16.mxu0 0
  %133 = vmatpush2.bf16.msra.mxu0 0
  %134 = vmatprep.mubr.bf16.mxu0 0
  %135 = vmatmul.mubr.bf16.gmra.mxu0 %v50
  %v136 = vpop.f32.mrf.mxu0
  %v137 = vadd.f32 %v40, %v136
  %v138 = vpop.f32.mrf.mxu0
  %v139 = vpop.f32.mrf.mxu0
  %v140 = vadd.f32 %v40, %v139
  %v141 = vpop.f32.mrf.mxu0
  %142 = vmatprep.mubr.bf16.mxu0 0
  %143 = vmatmul.mubr.bf16.gmra.mxu0 %v51
  %v144 = vpop.f32.mrf.mxu0
  %v145 = vadd.f32 %v40, %v144
  %v146 = vpop.f32.mrf.mxu0
  %v147 = vpop.f32.mrf.mxu0
  %v148 = vadd.f32 %v40, %v147
  %v149 = vpop.f32.mrf.mxu0
  %150 = vdwg.mxu0
  %vm151 = vcmp.gt.f32.partialorder %v137, 0.0
  %vm152 = vcmp.gt.f32.partialorder %v140, 0.0
  %vm153 = vcmp.gt.f32.partialorder %v145, 0.0
  %vm154 = vcmp.gt.f32.partialorder %v148, 0.0
  %v155 = vmul.f32 %v137, 0.1
  %v156 = vmul.f32 %v140, 0.1
  %v157 = vmul.f32 %v145, 0.1
  %v158 = vmul.f32 %v148, 0.1
  %v159 = vsel %vm151, %v137, %v155
  %v160 = vsel %vm152, %v140, %v156
  %v161 = vsel %vm153, %v145, %v157
  %v162 = vsel %vm154, %v148, %v158
  %v163 = vpack.c.bf16 %v160, %v159
  %v164 = vpack.c.bf16 %v162, %v161
  %v167 = vunpack.c.l.b16 %v163
  %v168 = vunpack.c.h.b16 %v163
  %v169 = vunpack.c.l.b16 %v164
  %v170 = vunpack.c.h.b16 %v164
  %v171 = vpack.c.b16 %v167, %v167
  %v172 = vpack.c.b16 %v168, %v168
  %v173 = vpack.c.b16 %v169, %v169
  %v174 = vpack.c.b16 %v170, %v170
  %179 = vst [vmem:[%s3] sm:$0xf] %v171
  %180 = vst [vmem:[%s3 + $0x4] sm:$0xf] %v172
  %181 = vst [vmem:[%s3 + $0x8] sm:$0xf] %v173
  %182 = vst [vmem:[%s3 + $0xc] sm:$0xf] %v174
  // Predicated region
  $region14: #{forward.85} parent=0 // pred_check
    _
  $region15: #{forward.85} parent=0 // pred_check_branch
    %184 = sbr.rel (0) target = $region17
  $region16: #{forward.85} parent=0 // pred_region
    _
  $region17: #{forward.85} parent=0 // pred_fallthru
    _
  // Predicated region
  $region18: #{forward.85} parent=0 // pred_check
    _
  $region19: #{forward.85} parent=0 // pred_check_branch
    %186 = sbr.rel (0) target = $region21
  $region20: #{forward.85} parent=0 // pred_region
    _
  $region21: #{forward.85} parent=0 // pred_fallthru
    _

// kernel: forward.86
$region0: #{forward.86}
  #allocation0 [shape = 'u32[]', space=smem, size = 0x4, offset = 0x4, fixed_abs, tag = 'smem constant byte address 0x4 - core index']
  #allocation1 [shape = 'u32[144,128]{1,0:T(1,128)}', space=vmem, size = 0x12000, scoped, tag = 'internal scratch']
  %s0 = inlined_call_operand.vmem [shape: bf16[32,144], index: 0, kind: input, shape index: {}]
  %s1 = inlined_call_operand.vmem [shape: bf16[144,128], index: 1, kind: input, shape index: {}]
  %s2 = inlined_call_operand.vmem [shape: f32[1,128], index: 2, kind: input, shape index: {}]
  %s3 = inlined_call_operand.vmem [shape: bf16[32,128], index: 3, kind: input, shape index: {}]
  %s4 = inlined_call_operand.vmem [shape: bf16[32,128], index: 4, kind: output, shape index: {}]
  %s5 = sld [smem:[#allocation0]]
  $region26: #{forward.86} parent=0
    _
  %s7 = ssub.s32 1, %s5
  %s8 = scalar_select 0, %s7, %s5
  // Predicated region
  $region2: #{forward.86} parent=0 // pred_check
    _
  $region3: #{forward.86} parent=0 // pred_check_branch
    %10 = sbr.rel (0) target = $region5
  $region4: #{forward.86} parent=0 // pred_region
    _
  $region5: #{forward.86} parent=0 // pred_fallthru
    _
  // Predicated region
  $region6: #{forward.86} parent=0 // pred_check
    _
  $region7: #{forward.86} parent=0 // pred_check_branch
    %12 = sbr.rel (0) target = $region9
  $region8: #{forward.86} parent=0 // pred_region
    _
  $region9: #{forward.86} parent=0 // pred_fallthru
    _
  // Predicated region
  $region10: #{forward.86} parent=0 // pred_check
    _
  $region11: #{forward.86} parent=0 // pred_check_branch
    %14 = sbr.rel (0) target = $region13
  $region12: #{forward.86} parent=0 // pred_region
    _
  $region13: #{forward.86} parent=0 // pred_fallthru
    _
  // Predicated region
  $region14: #{forward.86} parent=0 // pred_check
    _
  $region15: #{forward.86} parent=0 // pred_check_branch
    %16 = sbr.rel (0) target = $region17
  $region16: #{forward.86} parent=0 // pred_region
    _
  $region17: #{forward.86} parent=0 // pred_fallthru
    _
  %v18 = vld [vmem:[%s0] sm:$0xff]
  %v19 = vld [vmem:[%s0 + $0x8] sm:$0xff]
  %v20 = vld [vmem:[%s0 + $0x10] sm:$0xff]
  %v21 = vld [vmem:[%s0 + $0x18] sm:$0xff]
  %v22 = vld [vmem:[%s1] sm:$0xf]
  %v23 = vld [vmem:[%s1 + $0x4] sm:$0xf]
  %v24 = vld [vmem:[%s1 + $0x8] sm:$0xf]
  %v25 = vld [vmem:[%s1 + $0xc] sm:$0xf]
  %v26 = vld [vmem:[%s1 + $0x10] sm:$0xf]
  %v27 = vld [vmem:[%s1 + $0x14] sm:$0xf]
  %v28 = vld [vmem:[%s1 + $0x18] sm:$0xf]
  %v29 = vld [vmem:[%s1 + $0x1c] sm:$0xf]
  %v30 = vld [vmem:[%s1 + $0x20] sm:$0xf]
  %v31 = vld [vmem:[%s1 + $0x24] sm:$0xf]
  %v32 = vld [vmem:[%s1 + $0x28] sm:$0xf]
  %v33 = vld [vmem:[%s1 + $0x2c] sm:$0xf]
  %v34 = vld [vmem:[%s1 + $0x30] sm:$0xf]
  %v35 = vld [vmem:[%s1 + $0x34] sm:$0xf]
  %v36 = vld [vmem:[%s1 + $0x38] sm:$0xf]
  %v37 = vld [vmem:[%s1 + $0x3c] sm:$0xf]
  %v38 = vld [vmem:[%s1 + $0x40] sm:$0xf]
  %v39 = vld [vmem:[%s1 + $0x44] sm:$0xf]
  %v40 = vld [vmem:[%s2] sm:$0x1]
  %v42 = vlaneseq
  %v43 = vshrl.u32 %v42, 7
  %v44 = vsub.s32 0, %v43
  %v45 = vrot.slane %v40, %v44
  %v51 = vunpack.c.l.b16 %v18
  %v52 = vunpack.c.h.b16 %v18
  %v53 = vunpack.c.l.b16 %v19
  %v54 = vunpack.c.h.b16 %v19
  %v55 = vunpack.c.l.b16 %v20
  %v56 = vunpack.c.h.b16 %v20
  %v57 = vunpack.c.l.b16 %v21
  %v58 = vunpack.c.h.b16 %v21
  %v59 = vpack.c.b16 %v53, %v51
  %v60 = vpack.c.b16 %v54, %v52
  %v61 = vpack.c.b16 %v57, %v55
  %v62 = vpack.c.b16 %v58, %v56
  %v83 = vunpack.c.l.b16 %v22
  %v84 = vunpack.c.l.b16 %v23
  %v85 = vunpack.c.l.b16 %v24
  %v86 = vunpack.c.l.b16 %v25
  %v87 = vunpack.c.l.b16 %v26
  %v88 = vunpack.c.l.b16 %v27
  %v89 = vunpack.c.l.b16 %v28
  %v90 = vunpack.c.l.b16 %v29
  %v91 = vunpack.c.l.b16 %v30
  %v92 = vunpack.c.l.b16 %v31
  %v93 = vunpack.c.l.b16 %v32
  %v94 = vunpack.c.l.b16 %v33
  %v95 = vunpack.c.l.b16 %v34
  %v96 = vunpack.c.l.b16 %v35
  %v97 = vunpack.c.l.b16 %v36
  %v98 = vunpack.c.l.b16 %v37
  %v99 = vunpack.c.l.b16 %v38
  %v100 = vunpack.c.l.b16 %v39
  %v101 = vpack.c.b16 %v84, %v83
  %v102 = vpack.c.b16 %v86, %v85
  %v103 = vpack.c.b16 %v88, %v87
  %v104 = vpack.c.b16 %v90, %v89
  %v105 = vpack.c.b16 %v92, %v91
  %v106 = vpack.c.b16 %v94, %v93
  %v107 = vpack.c.b16 %v96, %v95
  %v108 = vpack.c.b16 %v98, %v97
  %v109 = vpack.c.b16 %v100, %v99
  %vm119 = vcmask 130048
  %v121 = vsel %vm119, %v60, 0
  %v124 = vsel %vm119, %v62, 0
  %126 = vmatprep.subr.bf16.mxu0 0
  %127 = vmatpush1.bf16.msra.mxu0 %v108
  %128 = vmatprep.subr.bf16.mxu0 0
  %129 = vmatpush1.bf16.msra.mxu0 %v107
  %130 = vmatprep.subr.bf16.mxu0 0
  %131 = vmatpush1.bf16.msra.mxu0 %v106
  %132 = vmatprep.subr.bf16.mxu0 0
  %133 = vmatpush1.bf16.msra.mxu0 %v105
  %134 = vmatprep.subr.bf16.mxu0 0
  %135 = vmatpush1.bf16.msra.mxu0 %v104
  %136 = vmatprep.subr.bf16.mxu0 0
  %137 = vmatpush1.bf16.msra.mxu0 %v103
  %138 = vmatprep.subr.bf16.mxu0 0
  %139 = vmatpush1.bf16.msra.mxu0 %v102
  %140 = vmatprep.subr.bf16.mxu0 0
  %141 = vmatpush1.bf16.msra.mxu0 %v101
  %142 = vmatprep.subr.bf16.mxu0 0
  %143 = vmatpush2.bf16.msra.mxu0 0
  %144 = vmatprep.subr.bf16.mxu0 0
  %145 = vmatpush2.bf16.msra.mxu0 0
  %146 = vmatprep.subr.bf16.mxu0 0
  %147 = vmatpush2.bf16.msra.mxu0 0
  %148 = vmatprep.subr.bf16.mxu0 0
  %149 = vmatpush2.bf16.msra.mxu0 0
  %150 = vmatprep.subr.bf16.mxu0 0
  %151 = vmatpush2.bf16.msra.mxu0 0
  %152 = vmatprep.subr.bf16.mxu0 0
  %153 = vmatpush2.bf16.msra.mxu0 0
  %154 = vmatprep.subr.bf16.mxu0 0
  %155 = vmatpush2.bf16.msra.mxu0 0
  %156 = vmatprep.subr.bf16.mxu0 0
  %157 = vmatpush2.bf16.msra.mxu0 %v109
  %158 = vmatprep.mubr.bf16.mxu0 %v121
  %159 = vmatmul.mubr.bf16.gmra.mxu0 %v59
  %v160 = vpop.f32.mrf.mxu0
  %v161 = vadd.f32 %v45, %v160
  %v162 = vpop.f32.mrf.mxu0
  %v163 = vpop.f32.mrf.mxu0
  %v164 = vadd.f32 %v45, %v163
  %v165 = vpop.f32.mrf.mxu0
  %166 = vmatprep.mubr.bf16.mxu0 %v124
  %167 = vmatmul.mubr.bf16.gmra.mxu0 %v61
  %v168 = vpop.f32.mrf.mxu0
  %v169 = vadd.f32 %v45, %v168
  %v170 = vpop.f32.mrf.mxu0
  %v171 = vpop.f32.mrf.mxu0
  %v172 = vadd.f32 %v45, %v171
  %v173 = vpop.f32.mrf.mxu0
  %174 = vdwg.mxu0
  %vm175 = vcmp.gt.f32.partialorder %v161, 0.0
  %vm176 = vcmp.gt.f32.partialorder %v164, 0.0
  %vm177 = vcmp.gt.f32.partialorder %v169, 0.0
  %vm178 = vcmp.gt.f32.partialorder %v172, 0.0
  %v179 = vmul.f32 %v161, 0.1
  %v180 = vmul.f32 %v164, 0.1
  %v181 = vmul.f32 %v169, 0.1
  %v182 = vmul.f32 %v172, 0.1
  %v183 = vsel %vm175, %v161, %v179
  %v184 = vsel %vm176, %v164, %v180
  %v185 = vsel %vm177, %v169, %v181
  %v186 = vsel %vm178, %v172, %v182
  %v187 = vld [vmem:[%s3] sm:$0xf]
  %v188 = vld [vmem:[%s3 + $0x4] sm:$0xf]
  %v189 = vld [vmem:[%s3 + $0x8] sm:$0xf]
  %v190 = vld [vmem:[%s3 + $0xc] sm:$0xf]
  %v191 = vunpack.c.l.bf16 %v187
  %v192 = vunpack.c.l.bf16 %v188
  %v193 = vunpack.c.l.bf16 %v189
  %v194 = vunpack.c.l.bf16 %v190
  %v195 = vadd.f32 %v183, %v191
  %v196 = vadd.f32 %v184, %v192
  %v197 = vadd.f32 %v185, %v193
  %v198 = vadd.f32 %v186, %v194
  %v199 = vpack.c.bf16 %v196, %v195
  %v200 = vpack.c.bf16 %v198, %v197
  %v203 = vunpack.c.l.b16 %v199
  %v204 = vunpack.c.h.b16 %v199
  %v205 = vunpack.c.l.b16 %v200
  %v206 = vunpack.c.h.b16 %v200
  %v207 = vpack.c.b16 %v203, %v203
  %v208 = vpack.c.b16 %v204, %v204
  %v209 = vpack.c.b16 %v205, %v205
  %v210 = vpack.c.b16 %v206, %v206
  %215 = vst [vmem:[%s4] sm:$0xf] %v207
  %216 = vst [vmem:[%s4 + $0x4] sm:$0xf] %v208
  %217 = vst [vmem:[%s4 + $0x8] sm:$0xf] %v209
  %218 = vst [vmem:[%s4 + $0xc] sm:$0xf] %v210
  // Predicated region
  $region18: #{forward.86} parent=0 // pred_check
    _
  $region19: #{forward.86} parent=0 // pred_check_branch
    %220 = sbr.rel (0) target = $region21
  $region20: #{forward.86} parent=0 // pred_region
    _
  $region21: #{forward.86} parent=0 // pred_fallthru
    _
  // Predicated region
  $region22: #{forward.86} parent=0 // pred_check
    _
  $region23: #{forward.86} parent=0 // pred_check_branch
    %222 = sbr.rel (0) target = $region25
  $region24: #{forward.86} parent=0 // pred_region
    _
  $region25: #{forward.86} parent=0 // pred_fallthru
    _

// kernel: forward.102
$region0: #{forward.102}
  #allocation0 [shape = 'u32[]', space=smem, size = 0x4, offset = 0x4, fixed_abs, tag = 'smem constant byte address 0x4 - core index']
  #allocation1 [shape = 'u32[144,128]{1,0:T(1,128)}', space=vmem, size = 0x12000, scoped, tag = 'internal scratch']
  %s0 = inlined_call_operand.vmem [shape: bf16[8,128], index: 0, kind: input, shape index: {}]
  %s1 = inlined_call_operand.vmem [shape: bf16[128,128], index: 1, kind: input, shape index: {}]
  %s2 = inlined_call_operand.vmem [shape: f32[1,128], index: 2, kind: input, shape index: {}]
  %s3 = inlined_call_operand.vmem [shape: bf16[8,128], index: 3, kind: output, shape index: {}]
  %s4 = sld [smem:[#allocation0]]
  $region22: #{forward.102} parent=0
    _
  %s6 = ssub.s32 1, %s4
  %s7 = scalar_select 0, %s6, %s4
  // Predicated region
  $region2: #{forward.102} parent=0 // pred_check
    _
  $region3: #{forward.102} parent=0 // pred_check_branch
    %9 = sbr.rel (0) target = $region5
  $region4: #{forward.102} parent=0 // pred_region
    _
  $region5: #{forward.102} parent=0 // pred_fallthru
    _
  // Predicated region
  $region6: #{forward.102} parent=0 // pred_check
    _
  $region7: #{forward.102} parent=0 // pred_check_branch
    %11 = sbr.rel (0) target = $region9
  $region8: #{forward.102} parent=0 // pred_region
    _
  $region9: #{forward.102} parent=0 // pred_fallthru
    _
  // Predicated region
  $region10: #{forward.102} parent=0 // pred_check
    _
  $region11: #{forward.102} parent=0 // pred_check_branch
    %13 = sbr.rel (0) target = $region13
  $region12: #{forward.102} parent=0 // pred_region
    _
  $region13: #{forward.102} parent=0 // pred_fallthru
    _
  %v15 = vld [vmem:[%s0] sm:$0xf]
  %v16 = vld [vmem:[%s1] sm:$0xf]
  %v17 = vld [vmem:[%s1 + $0x4] sm:$0xf]
  %v18 = vld [vmem:[%s1 + $0x8] sm:$0xf]
  %v19 = vld [vmem:[%s1 + $0xc] sm:$0xf]
  %v20 = vld [vmem:[%s1 + $0x10] sm:$0xf]
  %v21 = vld [vmem:[%s1 + $0x14] sm:$0xf]
  %v22 = vld [vmem:[%s1 + $0x18] sm:$0xf]
  %v23 = vld [vmem:[%s1 + $0x1c] sm:$0xf]
  %v24 = vld [vmem:[%s1 + $0x20] sm:$0xf]
  %v25 = vld [vmem:[%s1 + $0x24] sm:$0xf]
  %v26 = vld [vmem:[%s1 + $0x28] sm:$0xf]
  %v27 = vld [vmem:[%s1 + $0x2c] sm:$0xf]
  %v28 = vld [vmem:[%s1 + $0x30] sm:$0xf]
  %v29 = vld [vmem:[%s1 + $0x34] sm:$0xf]
  %v30 = vld [vmem:[%s1 + $0x38] sm:$0xf]
  %v31 = vld [vmem:[%s1 + $0x3c] sm:$0xf]
  %v32 = vld [vmem:[%s2] sm:$0x1]
  %v34 = vlaneseq
  %v35 = vshrl.u32 %v34, 7
  %v36 = vsub.s32 0, %v35
  %v37 = vrot.slane %v32, %v36
  %v55 = vunpack.c.l.b16 %v16
  %v56 = vunpack.c.l.b16 %v17
  %v57 = vunpack.c.l.b16 %v18
  %v58 = vunpack.c.l.b16 %v19
  %v59 = vunpack.c.l.b16 %v20
  %v60 = vunpack.c.l.b16 %v21
  %v61 = vunpack.c.l.b16 %v22
  %v62 = vunpack.c.l.b16 %v23
  %v63 = vunpack.c.l.b16 %v24
  %v64 = vunpack.c.l.b16 %v25
  %v65 = vunpack.c.l.b16 %v26
  %v66 = vunpack.c.l.b16 %v27
  %v67 = vunpack.c.l.b16 %v28
  %v68 = vunpack.c.l.b16 %v29
  %v69 = vunpack.c.l.b16 %v30
  %v70 = vunpack.c.l.b16 %v31
  %v71 = vpack.c.b16 %v56, %v55
  %v72 = vpack.c.b16 %v58, %v57
  %v73 = vpack.c.b16 %v60, %v59
  %v74 = vpack.c.b16 %v62, %v61
  %v75 = vpack.c.b16 %v64, %v63
  %v76 = vpack.c.b16 %v66, %v65
  %v77 = vpack.c.b16 %v68, %v67
  %v78 = vpack.c.b16 %v70, %v69
  %87 = vmatprep.subr.bf16.mxu0 0
  %88 = vmatpush1.bf16.msra.mxu0 %v78
  %89 = vmatprep.subr.bf16.mxu0 0
  %90 = vmatpush1.bf16.msra.mxu0 %v77
  %91 = vmatprep.subr.bf16.mxu0 0
  %92 = vmatpush1.bf16.msra.mxu0 %v76
  %93 = vmatprep.subr.bf16.mxu0 0
  %94 = vmatpush1.bf16.msra.mxu0 %v75
  %95 = vmatprep.subr.bf16.mxu0 0
  %96 = vmatpush1.bf16.msra.mxu0 %v74
  %97 = vmatprep.subr.bf16.mxu0 0
  %98 = vmatpush1.bf16.msra.mxu0 %v73
  %99 = vmatprep.subr.bf16.mxu0 0
  %100 = vmatpush1.bf16.msra.mxu0 %v72
  %101 = vmatprep.subr.bf16.mxu0 0
  %102 = vmatpush1.bf16.msra.mxu0 %v71
  %103 = vmatprep.subr.bf16.mxu0 0
  %104 = vmatpush2.bf16.msra.mxu0 0
  %105 = vmatprep.subr.bf16.mxu0 0
  %106 = vmatpush2.bf16.msra.mxu0 0
  %107 = vmatprep.subr.bf16.mxu0 0
  %108 = vmatpush2.bf16.msra.mxu0 0
  %109 = vmatprep.subr.bf16.mxu0 0
  %110 = vmatpush2.bf16.msra.mxu0 0
  %111 = vmatprep.subr.bf16.mxu0 0
  %112 = vmatpush2.bf16.msra.mxu0 0
  %113 = vmatprep.subr.bf16.mxu0 0
  %114 = vmatpush2.bf16.msra.mxu0 0
  %115 = vmatprep.subr.bf16.mxu0 0
  %116 = vmatpush2.bf16.msra.mxu0 0
  %117 = vmatprep.subr.bf16.mxu0 0
  %118 = vmatpush2.bf16.msra.mxu0 0
  %119 = vmatprep.mubr.bf16.mxu0 0
  %120 = vmatmul.mubr.bf16.gmra.mxu0 %v15
  %v121 = vpop.f32.mrf.mxu0
  %v122 = vadd.f32 %v37, %v121
  %v123 = vpop.f32.mrf.mxu0
  %v124 = vpop.f32.mrf.mxu0
  %v125 = vpop.f32.mrf.mxu0
  %126 = vdwg.mxu0
  %vm127 = vcmp.gt.f32.partialorder %v122, 0.0
  %v128 = vmul.f32 %v122, 0.1
  %v129 = vsel %vm127, %v122, %v128
  %v130 = vpack.c.bf16 %v129, %v129
  %131 = vst [vmem:[%s3] sm:$0xf] %v130
  // Predicated region
  $region14: #{forward.102} parent=0 // pred_check
    _
  $region15: #{forward.102} parent=0 // pred_check_branch
    %133 = sbr.rel (0) target = $region17
  $region16: #{forward.102} parent=0 // pred_region
    _
  $region17: #{forward.102} parent=0 // pred_fallthru
    _
  // Predicated region
  $region18: #{forward.102} parent=0 // pred_check
    _
  $region19: #{forward.102} parent=0 // pred_check_branch
    %135 = sbr.rel (0) target = $region21
  $region20: #{forward.102} parent=0 // pred_region
    _
  $region21: #{forward.102} parent=0 // pred_fallthru
    _

// kernel: forward.101
$region0: #{forward.101}
  #allocation0 [shape = 'u32[]', space=smem, size = 0x4, offset = 0x4, fixed_abs, tag = 'smem constant byte address 0x4 - core index']
  #allocation1 [shape = 'u32[144,128]{1,0:T(1,128)}', space=vmem, size = 0x12000, scoped, tag = 'internal scratch']
  %s0 = inlined_call_operand.vmem [shape: bf16[8,288], index: 0, kind: input, shape index: {}]
  %s1 = inlined_call_operand.vmem [shape: bf16[288,128], index: 1, kind: input, shape index: {}]
  %s2 = inlined_call_operand.vmem [shape: f32[1,128], index: 2, kind: input, shape index: {}]
  %s3 = inlined_call_operand.vmem [shape: bf16[8,128], index: 3, kind: output, shape index: {}]
  %s4 = sld [smem:[#allocation0]]
  $region22: #{forward.101} parent=0
    _
  %s6 = ssub.s32 1, %s4
  %s7 = scalar_select 0, %s6, %s4
  // Predicated region
  $region2: #{forward.101} parent=0 // pred_check
    _
  $region3: #{forward.101} parent=0 // pred_check_branch
    %9 = sbr.rel (0) target = $region5
  $region4: #{forward.101} parent=0 // pred_region
    _
  $region5: #{forward.101} parent=0 // pred_fallthru
    _
  // Predicated region
  $region6: #{forward.101} parent=0 // pred_check
    _
  $region7: #{forward.101} parent=0 // pred_check_branch
    %11 = sbr.rel (0) target = $region9
  $region8: #{forward.101} parent=0 // pred_region
    _
  $region9: #{forward.101} parent=0 // pred_fallthru
    _
  // Predicated region
  $region10: #{forward.101} parent=0 // pred_check
    _
  $region11: #{forward.101} parent=0 // pred_check_branch
    %13 = sbr.rel (0) target = $region13
  $region12: #{forward.101} parent=0 // pred_region
    _
  $region13: #{forward.101} parent=0 // pred_fallthru
    _
  %v15 = vld [vmem:[%s0] sm:$0xff]
  %v16 = vld [vmem:[%s0 + $0x8] sm:$0xf]
  %v17 = vld [vmem:[%s1] sm:$0xf]
  %v18 = vld [vmem:[%s1 + $0x4] sm:$0xf]
  %v19 = vld [vmem:[%s1 + $0x8] sm:$0xf]
  %v20 = vld [vmem:[%s1 + $0xc] sm:$0xf]
  %v21 = vld [vmem:[%s1 + $0x10] sm:$0xf]
  %v22 = vld [vmem:[%s1 + $0x14] sm:$0xf]
  %v23 = vld [vmem:[%s1 + $0x18] sm:$0xf]
  %v24 = vld [vmem:[%s1 + $0x1c] sm:$0xf]
  %v25 = vld [vmem:[%s1 + $0x20] sm:$0xf]
  %v26 = vld [vmem:[%s1 + $0x24] sm:$0xf]
  %v27 = vld [vmem:[%s1 + $0x28] sm:$0xf]
  %v28 = vld [vmem:[%s1 + $0x2c] sm:$0xf]
  %v29 = vld [vmem:[%s1 + $0x30] sm:$0xf]
  %v30 = vld [vmem:[%s1 + $0x34] sm:$0xf]
  %v31 = vld [vmem:[%s1 + $0x38] sm:$0xf]
  %v32 = vld [vmem:[%s1 + $0x3c] sm:$0xf]
  %v33 = vld [vmem:[%s1 + $0x40] sm:$0xf]
  %v34 = vld [vmem:[%s1 + $0x44] sm:$0xf]
  %v35 = vld [vmem:[%s1 + $0x48] sm:$0xf]
  %v36 = vld [vmem:[%s1 + $0x4c] sm:$0xf]
  %v37 = vld [vmem:[%s1 + $0x50] sm:$0xf]
  %v38 = vld [vmem:[%s1 + $0x54] sm:$0xf]
  %v39 = vld [vmem:[%s1 + $0x58] sm:$0xf]
  %v40 = vld [vmem:[%s1 + $0x5c] sm:$0xf]
  %v41 = vld [vmem:[%s1 + $0x60] sm:$0xf]
  %v42 = vld [vmem:[%s1 + $0x64] sm:$0xf]
  %v43 = vld [vmem:[%s1 + $0x68] sm:$0xf]
  %v44 = vld [vmem:[%s1 + $0x6c] sm:$0xf]
  %v45 = vld [vmem:[%s1 + $0x70] sm:$0xf]
  %v46 = vld [vmem:[%s1 + $0x74] sm:$0xf]
  %v47 = vld [vmem:[%s1 + $0x78] sm:$0xf]
  %v48 = vld [vmem:[%s1 + $0x7c] sm:$0xf]
  %v49 = vld [vmem:[%s1 + $0x80] sm:$0xf]
  %v50 = vld [vmem:[%s1 + $0x84] sm:$0xf]
  %v51 = vld [vmem:[%s1 + $0x88] sm:$0xf]
  %v52 = vld [vmem:[%s1 + $0x8c] sm:$0xf]
  %v53 = vld [vmem:[%s2] sm:$0x1]
  %v55 = vlaneseq
  %v56 = vshrl.u32 %v55, 7
  %v57 = vsub.s32 0, %v56
  %v58 = vrot.slane %v53, %v57
  %v62 = vunpack.c.l.b16 %v15
  %v63 = vunpack.c.h.b16 %v15
  %v64 = vunpack.c.l.b16 %v16
  %v65 = vpack.c.b16 %v62, %v62
  %v66 = vpack.c.b16 %v63, %v63
  %v67 = vpack.c.b16 %v64, %v64
  %v106 = vunpack.c.l.b16 %v17
  %v107 = vunpack.c.l.b16 %v18
  %v108 = vunpack.c.l.b16 %v19
  %v109 = vunpack.c.l.b16 %v20
  %v110 = vunpack.c.l.b16 %v21
  %v111 = vunpack.c.l.b16 %v22
  %v112 = vunpack.c.l.b16 %v23
  %v113 = vunpack.c.l.b16 %v24
  %v114 = vunpack.c.l.b16 %v25
  %v115 = vunpack.c.l.b16 %v26
  %v116 = vunpack.c.l.b16 %v27
  %v117 = vunpack.c.l.b16 %v28
  %v118 = vunpack.c.l.b16 %v29
  %v119 = vunpack.c.l.b16 %v30
  %v120 = vunpack.c.l.b16 %v31
  %v121 = vunpack.c.l.b16 %v32
  %v122 = vunpack.c.l.b16 %v33
  %v123 = vunpack.c.l.b16 %v34
  %v124 = vunpack.c.l.b16 %v35
  %v125 = vunpack.c.l.b16 %v36
  %v126 = vunpack.c.l.b16 %v37
  %v127 = vunpack.c.l.b16 %v38
  %v128 = vunpack.c.l.b16 %v39
  %v129 = vunpack.c.l.b16 %v40
  %v130 = vunpack.c.l.b16 %v41
  %v131 = vunpack.c.l.b16 %v42
  %v132 = vunpack.c.l.b16 %v43
  %v133 = vunpack.c.l.b16 %v44
  %v134 = vunpack.c.l.b16 %v45
  %v135 = vunpack.c.l.b16 %v46
  %v136 = vunpack.c.l.b16 %v47
  %v137 = vunpack.c.l.b16 %v48
  %v138 = vunpack.c.l.b16 %v49
  %v139 = vunpack.c.l.b16 %v50
  %v140 = vunpack.c.l.b16 %v51
  %v141 = vunpack.c.l.b16 %v52
  %v142 = vpack.c.b16 %v107, %v106
  %v143 = vpack.c.b16 %v109, %v108
  %v144 = vpack.c.b16 %v111, %v110
  %v145 = vpack.c.b16 %v113, %v112
  %v146 = vpack.c.b16 %v115, %v114
  %v147 = vpack.c.b16 %v117, %v116
  %v148 = vpack.c.b16 %v119, %v118
  %v149 = vpack.c.b16 %v121, %v120
  %v150 = vpack.c.b16 %v123, %v122
  %v151 = vpack.c.b16 %v125, %v124
  %v152 = vpack.c.b16 %v127, %v126
  %v153 = vpack.c.b16 %v129, %v128
  %v154 = vpack.c.b16 %v131, %v130
  %v155 = vpack.c.b16 %v133, %v132
  %v156 = vpack.c.b16 %v135, %v134
  %v157 = vpack.c.b16 %v137, %v136
  %v158 = vpack.c.b16 %v139, %v138
  %v159 = vpack.c.b16 %v141, %v140
  %vm178 = vcmask 261120
  %v180 = vsel %vm178, %v67, 0
  %182 = vmatprep.subr.bf16.mxu0 0
  %183 = vmatpush1.bf16.msra.mxu0 %v149
  %184 = vmatprep.subr.bf16.mxu0 0
  %185 = vmatpush1.bf16.msra.mxu0 %v148
  %186 = vmatprep.subr.bf16.mxu0 0
  %187 = vmatpush1.bf16.msra.mxu0 %v147
  %188 = vmatprep.subr.bf16.mxu0 0
  %189 = vmatpush1.bf16.msra.mxu0 %v146
  %190 = vmatprep.subr.bf16.mxu0 0
  %191 = vmatpush1.bf16.msra.mxu0 %v145
  %192 = vmatprep.subr.bf16.mxu0 0
  %193 = vmatpush1.bf16.msra.mxu0 %v144
  %194 = vmatprep.subr.bf16.mxu0 0
  %195 = vmatpush1.bf16.msra.mxu0 %v143
  %196 = vmatprep.subr.bf16.mxu0 0
  %197 = vmatpush1.bf16.msra.mxu0 %v142
  %198 = vmatprep.subr.bf16.mxu0 0
  %199 = vmatpush2.bf16.msra.mxu0 %v157
  %200 = vmatprep.subr.bf16.mxu0 0
  %201 = vmatpush2.bf16.msra.mxu0 %v156
  %202 = vmatprep.subr.bf16.mxu0 0
  %203 = vmatpush2.bf16.msra.mxu0 %v155
  %204 = vmatprep.subr.bf16.mxu0 0
  %205 = vmatpush2.bf16.msra.mxu0 %v154
  %206 = vmatprep.subr.bf16.mxu0 0
  %207 = vmatpush2.bf16.msra.mxu0 %v153
  %208 = vmatprep.subr.bf16.mxu0 0
  %209 = vmatpush2.bf16.msra.mxu0 %v152
  %210 = vmatprep.subr.bf16.mxu0 0
  %211 = vmatpush2.bf16.msra.mxu0 %v151
  %212 = vmatprep.subr.bf16.mxu0 0
  %213 = vmatpush2.bf16.msra.mxu0 %v150
  %214 = vmatprep.mubr.bf16.mxu0 %v66
  %215 = vmatmul.mubr.bf16.gmra.mxu0 %v65
  %v216 = vpop.f32.mrf.mxu0
  %v217 = vadd.f32 %v58, %v216
  %v218 = vpop.f32.mrf.mxu0
  %v219 = vpop.f32.mrf.mxu0
  %v220 = vpop.f32.mrf.mxu0
  %221 = vdwg.mxu0
  %222 = vmatprep.subr.bf16.mxu0 0
  %223 = vmatpush1.bf16.msra.mxu0 0
  %224 = vmatprep.subr.bf16.mxu0 0
  %225 = vmatpush1.bf16.msra.mxu0 0
  %226 = vmatprep.subr.bf16.mxu0 0
  %227 = vmatpush1.bf16.msra.mxu0 0
  %228 = vmatprep.subr.bf16.mxu0 0
  %229 = vmatpush1.bf16.msra.mxu0 0
  %230 = vmatprep.subr.bf16.mxu0 0
  %231 = vmatpush1.bf16.msra.mxu0 0
  %232 = vmatprep.subr.bf16.mxu0 0
  %233 = vmatpush1.bf16.msra.mxu0 0
  %234 = vmatprep.subr.bf16.mxu0 0
  %235 = vmatpush1.bf16.msra.mxu0 %v159
  %236 = vmatprep.subr.bf16.mxu0 0
  %237 = vmatpush1.bf16.msra.mxu0 %v158
  %238 = vmatprep.subr.bf16.mxu0 0
  %239 = vmatpush2.bf16.msra.mxu0 0
  %240 = vmatprep.subr.bf16.mxu0 0
  %241 = vmatpush2.bf16.msra.mxu0 0
  %242 = vmatprep.subr.bf16.mxu0 0
  %243 = vmatpush2.bf16.msra.mxu0 0
  %244 = vmatprep.subr.bf16.mxu0 0
  %245 = vmatpush2.bf16.msra.mxu0 0
  %246 = vmatprep.subr.bf16.mxu0 0
  %247 = vmatpush2.bf16.msra.mxu0 0
  %248 = vmatprep.subr.bf16.mxu0 0
  %249 = vmatpush2.bf16.msra.mxu0 0
  %250 = vmatprep.subr.bf16.mxu0 0
  %251 = vmatpush2.bf16.msra.mxu0 0
  %252 = vmatprep.subr.bf16.mxu0 0
  %253 = vmatpush2.bf16.msra.mxu0 0
  %254 = vmatprep.mubr.bf16.mxu0 0
  %255 = vmatmul.mubr.bf16.gmra.mxu0 %v180
  %v256 = vpop.f32.mrf.mxu0
  %v257 = vadd.f32 %v217, %v256
  %v258 = vpop.f32.mrf.mxu0
  %v259 = vpop.f32.mrf.mxu0
  %v260 = vpop.f32.mrf.mxu0
  %261 = vdwg.mxu0
  %vm262 = vcmp.gt.f32.partialorder %v257, 0.0
  %v263 = vmul.f32 %v257, 0.1
  %v264 = vsel %vm262, %v257, %v263
  %v265 = vpack.c.bf16 %v264, %v264
  %266 = vst [vmem:[%s3] sm:$0xf] %v265
  // Predicated region
  $region14: #{forward.101} parent=0 // pred_check
    _
  $region15: #{forward.101} parent=0 // pred_check_branch
    %268 = sbr.rel (0) target = $region17
  $region16: #{forward.101} parent=0 // pred_region
    _
  $region17: #{forward.101} parent=0 // pred_fallthru
    _
  // Predicated region
  $region18: #{forward.101} parent=0 // pred_check
    _
  $region19: #{forward.101} parent=0 // pred_check_branch
    %270 = sbr.rel (0) target = $region21
  $region20: #{forward.101} parent=0 // pred_region
    _
  $region21: #{forward.101} parent=0 // pred_fallthru
    _

// kernel: forward.103
$region0: #{forward.103}
  #allocation0 [shape = 'u32[]', space=smem, size = 0x4, offset = 0x4, fixed_abs, tag = 'smem constant byte address 0x4 - core index']
  #allocation1 [shape = 'u32[144,128]{1,0:T(1,128)}', space=vmem, size = 0x12000, scoped, tag = 'internal scratch']
  %s0 = inlined_call_operand.vmem [shape: bf16[8,288], index: 0, kind: input, shape index: {}]
  %s1 = inlined_call_operand.vmem [shape: bf16[288,128], index: 1, kind: input, shape index: {}]
  %s2 = inlined_call_operand.vmem [shape: f32[1,128], index: 2, kind: input, shape index: {}]
  %s3 = inlined_call_operand.vmem [shape: bf16[8,128], index: 3, kind: input, shape index: {}]
  %s4 = inlined_call_operand.vmem [shape: bf16[8,128], index: 4, kind: output, shape index: {}]
  %s5 = sld [smem:[#allocation0]]
  $region26: #{forward.103} parent=0
    _
  %s7 = ssub.s32 1, %s5
  %s8 = scalar_select 0, %s7, %s5
  // Predicated region
  $region2: #{forward.103} parent=0 // pred_check
    _
  $region3: #{forward.103} parent=0 // pred_check_branch
    %10 = sbr.rel (0) target = $region5
  $region4: #{forward.103} parent=0 // pred_region
    _
  $region5: #{forward.103} parent=0 // pred_fallthru
    _
  // Predicated region
  $region6: #{forward.103} parent=0 // pred_check
    _
  $region7: #{forward.103} parent=0 // pred_check_branch
    %12 = sbr.rel (0) target = $region9
  $region8: #{forward.103} parent=0 // pred_region
    _
  $region9: #{forward.103} parent=0 // pred_fallthru
    _
  // Predicated region
  $region10: #{forward.103} parent=0 // pred_check
    _
  $region11: #{forward.103} parent=0 // pred_check_branch
    %14 = sbr.rel (0) target = $region13
  $region12: #{forward.103} parent=0 // pred_region
    _
  $region13: #{forward.103} parent=0 // pred_fallthru
    _
  // Predicated region
  $region14: #{forward.103} parent=0 // pred_check
    _
  $region15: #{forward.103} parent=0 // pred_check_branch
    %16 = sbr.rel (0) target = $region17
  $region16: #{forward.103} parent=0 // pred_region
    _
  $region17: #{forward.103} parent=0 // pred_fallthru
    _
  %v18 = vld [vmem:[%s0] sm:$0xff]
  %v19 = vld [vmem:[%s0 + $0x8] sm:$0xf]
  %v20 = vld [vmem:[%s1] sm:$0xf]
  %v21 = vld [vmem:[%s1 + $0x4] sm:$0xf]
  %v22 = vld [vmem:[%s1 + $0x8] sm:$0xf]
  %v23 = vld [vmem:[%s1 + $0xc] sm:$0xf]
  %v24 = vld [vmem:[%s1 + $0x10] sm:$0xf]
  %v25 = vld [vmem:[%s1 + $0x14] sm:$0xf]
  %v26 = vld [vmem:[%s1 + $0x18] sm:$0xf]
  %v27 = vld [vmem:[%s1 + $0x1c] sm:$0xf]
  %v28 = vld [vmem:[%s1 + $0x20] sm:$0xf]
  %v29 = vld [vmem:[%s1 + $0x24] sm:$0xf]
  %v30 = vld [vmem:[%s1 + $0x28] sm:$0xf]
  %v31 = vld [vmem:[%s1 + $0x2c] sm:$0xf]
  %v32 = vld [vmem:[%s1 + $0x30] sm:$0xf]
  %v33 = vld [vmem:[%s1 + $0x34] sm:$0xf]
  %v34 = vld [vmem:[%s1 + $0x38] sm:$0xf]
  %v35 = vld [vmem:[%s1 + $0x3c] sm:$0xf]
  %v36 = vld [vmem:[%s1 + $0x40] sm:$0xf]
  %v37 = vld [vmem:[%s1 + $0x44] sm:$0xf]
  %v38 = vld [vmem:[%s1 + $0x48] sm:$0xf]
  %v39 = vld [vmem:[%s1 + $0x4c] sm:$0xf]
  %v40 = vld [vmem:[%s1 + $0x50] sm:$0xf]
  %v41 = vld [vmem:[%s1 + $0x54] sm:$0xf]
  %v42 = vld [vmem:[%s1 + $0x58] sm:$0xf]
  %v43 = vld [vmem:[%s1 + $0x5c] sm:$0xf]
  %v44 = vld [vmem:[%s1 + $0x60] sm:$0xf]
  %v45 = vld [vmem:[%s1 + $0x64] sm:$0xf]
  %v46 = vld [vmem:[%s1 + $0x68] sm:$0xf]
  %v47 = vld [vmem:[%s1 + $0x6c] sm:$0xf]
  %v48 = vld [vmem:[%s1 + $0x70] sm:$0xf]
  %v49 = vld [vmem:[%s1 + $0x74] sm:$0xf]
  %v50 = vld [vmem:[%s1 + $0x78] sm:$0xf]
  %v51 = vld [vmem:[%s1 + $0x7c] sm:$0xf]
  %v52 = vld [vmem:[%s1 + $0x80] sm:$0xf]
  %v53 = vld [vmem:[%s1 + $0x84] sm:$0xf]
  %v54 = vld [vmem:[%s1 + $0x88] sm:$0xf]
  %v55 = vld [vmem:[%s1 + $0x8c] sm:$0xf]
  %v56 = vld [vmem:[%s2] sm:$0x1]
  %v58 = vlaneseq
  %v59 = vshrl.u32 %v58, 7
  %v60 = vsub.s32 0, %v59
  %v61 = vrot.slane %v56, %v60
  %v65 = vunpack.c.l.b16 %v18
  %v66 = vunpack.c.h.b16 %v18
  %v67 = vunpack.c.l.b16 %v19
  %v68 = vpack.c.b16 %v65, %v65
  %v69 = vpack.c.b16 %v66, %v66
  %v70 = vpack.c.b16 %v67, %v67
  %v109 = vunpack.c.l.b16 %v20
  %v110 = vunpack.c.l.b16 %v21
  %v111 = vunpack.c.l.b16 %v22
  %v112 = vunpack.c.l.b16 %v23
  %v113 = vunpack.c.l.b16 %v24
  %v114 = vunpack.c.l.b16 %v25
  %v115 = vunpack.c.l.b16 %v26
  %v116 = vunpack.c.l.b16 %v27
  %v117 = vunpack.c.l.b16 %v28
  %v118 = vunpack.c.l.b16 %v29
  %v119 = vunpack.c.l.b16 %v30
  %v120 = vunpack.c.l.b16 %v31
  %v121 = vunpack.c.l.b16 %v32
  %v122 = vunpack.c.l.b16 %v33
  %v123 = vunpack.c.l.b16 %v34
  %v124 = vunpack.c.l.b16 %v35
  %v125 = vunpack.c.l.b16 %v36
  %v126 = vunpack.c.l.b16 %v37
  %v127 = vunpack.c.l.b16 %v38
  %v128 = vunpack.c.l.b16 %v39
  %v129 = vunpack.c.l.b16 %v40
  %v130 = vunpack.c.l.b16 %v41
  %v131 = vunpack.c.l.b16 %v42
  %v132 = vunpack.c.l.b16 %v43
  %v133 = vunpack.c.l.b16 %v44
  %v134 = vunpack.c.l.b16 %v45
  %v135 = vunpack.c.l.b16 %v46
  %v136 = vunpack.c.l.b16 %v47
  %v137 = vunpack.c.l.b16 %v48
  %v138 = vunpack.c.l.b16 %v49
  %v139 = vunpack.c.l.b16 %v50
  %v140 = vunpack.c.l.b16 %v51
  %v141 = vunpack.c.l.b16 %v52
  %v142 = vunpack.c.l.b16 %v53
  %v143 = vunpack.c.l.b16 %v54
  %v144 = vunpack.c.l.b16 %v55
  %v145 = vpack.c.b16 %v110, %v109
  %v146 = vpack.c.b16 %v112, %v111
  %v147 = vpack.c.b16 %v114, %v113
  %v148 = vpack.c.b16 %v116, %v115
  %v149 = vpack.c.b16 %v118, %v117
  %v150 = vpack.c.b16 %v120, %v119
  %v151 = vpack.c.b16 %v122, %v121
  %v152 = vpack.c.b16 %v124, %v123
  %v153 = vpack.c.b16 %v126, %v125
  %v154 = vpack.c.b16 %v128, %v127
  %v155 = vpack.c.b16 %v130, %v129
  %v156 = vpack.c.b16 %v132, %v131
  %v157 = vpack.c.b16 %v134, %v133
  %v158 = vpack.c.b16 %v136, %v135
  %v159 = vpack.c.b16 %v138, %v137
  %v160 = vpack.c.b16 %v140, %v139
  %v161 = vpack.c.b16 %v142, %v141
  %v162 = vpack.c.b16 %v144, %v143
  %vm181 = vcmask 261120
  %v183 = vsel %vm181, %v70, 0
  %185 = vmatprep.subr.bf16.mxu0 0
  %186 = vmatpush1.bf16.msra.mxu0 %v152
  %187 = vmatprep.subr.bf16.mxu0 0
  %188 = vmatpush1.bf16.msra.mxu0 %v151
  %189 = vmatprep.subr.bf16.mxu0 0
  %190 = vmatpush1.bf16.msra.mxu0 %v150
  %191 = vmatprep.subr.bf16.mxu0 0
  %192 = vmatpush1.bf16.msra.mxu0 %v149
  %193 = vmatprep.subr.bf16.mxu0 0
  %194 = vmatpush1.bf16.msra.mxu0 %v148
  %195 = vmatprep.subr.bf16.mxu0 0
  %196 = vmatpush1.bf16.msra.mxu0 %v147
  %197 = vmatprep.subr.bf16.mxu0 0
  %198 = vmatpush1.bf16.msra.mxu0 %v146
  %199 = vmatprep.subr.bf16.mxu0 0
  %200 = vmatpush1.bf16.msra.mxu0 %v145
  %201 = vmatprep.subr.bf16.mxu0 0
  %202 = vmatpush2.bf16.msra.mxu0 %v160
  %203 = vmatprep.subr.bf16.mxu0 0
  %204 = vmatpush2.bf16.msra.mxu0 %v159
  %205 = vmatprep.subr.bf16.mxu0 0
  %206 = vmatpush2.bf16.msra.mxu0 %v158
  %207 = vmatprep.subr.bf16.mxu0 0
  %208 = vmatpush2.bf16.msra.mxu0 %v157
  %209 = vmatprep.subr.bf16.mxu0 0
  %210 = vmatpush2.bf16.msra.mxu0 %v156
  %211 = vmatprep.subr.bf16.mxu0 0
  %212 = vmatpush2.bf16.msra.mxu0 %v155
  %213 = vmatprep.subr.bf16.mxu0 0
  %214 = vmatpush2.bf16.msra.mxu0 %v154
  %215 = vmatprep.subr.bf16.mxu0 0
  %216 = vmatpush2.bf16.msra.mxu0 %v153
  %217 = vmatprep.mubr.bf16.mxu0 %v69
  %218 = vmatmul.mubr.bf16.gmra.mxu0 %v68
  %v219 = vpop.f32.mrf.mxu0
  %v220 = vadd.f32 %v61, %v219
  %v221 = vpop.f32.mrf.mxu0
  %v222 = vpop.f32.mrf.mxu0
  %v223 = vpop.f32.mrf.mxu0
  %224 = vdwg.mxu0
  %225 = vmatprep.subr.bf16.mxu0 0
  %226 = vmatpush1.bf16.msra.mxu0 0
  %227 = vmatprep.subr.bf16.mxu0 0
  %228 = vmatpush1.bf16.msra.mxu0 0
  %229 = vmatprep.subr.bf16.mxu0 0
  %230 = vmatpush1.bf16.msra.mxu0 0
  %231 = vmatprep.subr.bf16.mxu0 0
  %232 = vmatpush1.bf16.msra.mxu0 0
  %233 = vmatprep.subr.bf16.mxu0 0
  %234 = vmatpush1.bf16.msra.mxu0 0
  %235 = vmatprep.subr.bf16.mxu0 0
  %236 = vmatpush1.bf16.msra.mxu0 0
  %237 = vmatprep.subr.bf16.mxu0 0
  %238 = vmatpush1.bf16.msra.mxu0 %v162
  %239 = vmatprep.subr.bf16.mxu0 0
  %240 = vmatpush1.bf16.msra.mxu0 %v161
  %241 = vmatprep.subr.bf16.mxu0 0
  %242 = vmatpush2.bf16.msra.mxu0 0
  %243 = vmatprep.subr.bf16.mxu0 0
  %244 = vmatpush2.bf16.msra.mxu0 0
  %245 = vmatprep.subr.bf16.mxu0 0
  %246 = vmatpush2.bf16.msra.mxu0 0
  %247 = vmatprep.subr.bf16.mxu0 0
  %248 = vmatpush2.bf16.msra.mxu0 0
  %249 = vmatprep.subr.bf16.mxu0 0
  %250 = vmatpush2.bf16.msra.mxu0 0
  %251 = vmatprep.subr.bf16.mxu0 0
  %252 = vmatpush2.bf16.msra.mxu0 0
  %253 = vmatprep.subr.bf16.mxu0 0
  %254 = vmatpush2.bf16.msra.mxu0 0
  %255 = vmatprep.subr.bf16.mxu0 0
  %256 = vmatpush2.bf16.msra.mxu0 0
  %257 = vmatprep.mubr.bf16.mxu0 0
  %258 = vmatmul.mubr.bf16.gmra.mxu0 %v183
  %v259 = vpop.f32.mrf.mxu0
  %v260 = vadd.f32 %v220, %v259
  %v261 = vpop.f32.mrf.mxu0
  %v262 = vpop.f32.mrf.mxu0
  %v263 = vpop.f32.mrf.mxu0
  %264 = vdwg.mxu0
  %vm265 = vcmp.gt.f32.partialorder %v260, 0.0
  %v266 = vmul.f32 %v260, 0.1
  %v267 = vsel %vm265, %v260, %v266
  %v268 = vld [vmem:[%s3] sm:$0xf]
  %v269 = vunpack.c.l.bf16 %v268
  %v270 = vadd.f32 %v267, %v269
  %v271 = vpack.c.bf16 %v270, %v270
  %272 = vst [vmem:[%s4] sm:$0xf] %v271
  // Predicated region
  $region18: #{forward.103} parent=0 // pred_check
    _
  $region19: #{forward.103} parent=0 // pred_check_branch
    %274 = sbr.rel (0) target = $region21
  $region20: #{forward.103} parent=0 // pred_region
    _
  $region21: #{forward.103} parent=0 // pred_fallthru
    _
  // Predicated region
  $region22: #{forward.103} parent=0 // pred_check
    _
  $region23: #{forward.103} parent=0 // pred_check_branch
    %276 = sbr.rel (0) target = $region25
  $region24: #{forward.103} parent=0 // pred_region
    _
  $region25: #{forward.103} parent=0 // pred_fallthru
    _

// kernel: forward.118
$region0: #{forward.118}
  #allocation0 [shape = 'u32[]', space=smem, size = 0x4, offset = 0x4, fixed_abs, tag = 'smem constant byte address 0x4 - core index']
  #allocation1 [shape = 'u32[144,128]{1,0:T(1,128)}', space=vmem, size = 0x12000, scoped, tag = 'internal scratch']
  %s0 = inlined_call_operand.vmem [shape: bf16[8,576], index: 0, kind: input, shape index: {}]
  %s1 = inlined_call_operand.vmem [shape: bf16[576,128], index: 1, kind: input, shape index: {}]
  %s2 = inlined_call_operand.vmem [shape: f32[1,128], index: 2, kind: input, shape index: {}]
  %s3 = inlined_call_operand.vmem [shape: bf16[8,128], index: 3, kind: output, shape index: {}]
  %s4 = sld [smem:[#allocation0]]
  $region22: #{forward.118} parent=0
    _
  %s6 = ssub.s32 1, %s4
  %s7 = scalar_select 0, %s6, %s4
  // Predicated region
  $region2: #{forward.118} parent=0 // pred_check
    _
  $region3: #{forward.118} parent=0 // pred_check_branch
    %9 = sbr.rel (0) target = $region5
  $region4: #{forward.118} parent=0 // pred_region
    _
  $region5: #{forward.118} parent=0 // pred_fallthru
    _
  // Predicated region
  $region6: #{forward.118} parent=0 // pred_check
    _
  $region7: #{forward.118} parent=0 // pred_check_branch
    %11 = sbr.rel (0) target = $region9
  $region8: #{forward.118} parent=0 // pred_region
    _
  $region9: #{forward.118} parent=0 // pred_fallthru
    _
  // Predicated region
  $region10: #{forward.118} parent=0 // pred_check
    _
  $region11: #{forward.118} parent=0 // pred_check_branch
    %13 = sbr.rel (0) target = $region13
  $region12: #{forward.118} parent=0 // pred_region
    _
  $region13: #{forward.118} parent=0 // pred_fallthru
    _
  %v15 = vld [vmem:[%s0] sm:$0xff]
  %v16 = vld [vmem:[%s0 + $0x8] sm:$0xff]
  %v17 = vld [vmem:[%s0 + $0x10] sm:$0xf]
  %v18 = vld [vmem:[%s1] sm:$0xf]
  %v19 = vld [vmem:[%s1 + $0x4] sm:$0xf]
  %v20 = vld [vmem:[%s1 + $0x8] sm:$0xf]
  %v21 = vld [vmem:[%s1 + $0xc] sm:$0xf]
  %v22 = vld [vmem:[%s1 + $0x10] sm:$0xf]
  %v23 = vld [vmem:[%s1 + $0x14] sm:$0xf]
  %v24 = vld [vmem:[%s1 + $0x18] sm:$0xf]
  %v25 = vld [vmem:[%s1 + $0x1c] sm:$0xf]
  %v26 = vld [vmem:[%s1 + $0x20] sm:$0xf]
  %v27 = vld [vmem:[%s1 + $0x24] sm:$0xf]
  %v28 = vld [vmem:[%s1 + $0x28] sm:$0xf]
  %v29 = vld [vmem:[%s1 + $0x2c] sm:$0xf]
  %v30 = vld [vmem:[%s1 + $0x30] sm:$0xf]
  %v31 = vld [vmem:[%s1 + $0x34] sm:$0xf]
  %v32 = vld [vmem:[%s1 + $0x38] sm:$0xf]
  %v33 = vld [vmem:[%s1 + $0x3c] sm:$0xf]
  %v34 = vld [vmem:[%s1 + $0x40] sm:$0xf]
  %v35 = vld [vmem:[%s1 + $0x44] sm:$0xf]
  %v36 = vld [vmem:[%s1 + $0x48] sm:$0xf]
  %v37 = vld [vmem:[%s1 + $0x4c] sm:$0xf]
  %v38 = vld [vmem:[%s1 + $0x50] sm:$0xf]
  %v39 = vld [vmem:[%s1 + $0x54] sm:$0xf]
  %v40 = vld [vmem:[%s1 + $0x58] sm:$0xf]
  %v41 = vld [vmem:[%s1 + $0x5c] sm:$0xf]
  %v42 = vld [vmem:[%s1 + $0x60] sm:$0xf]
  %v43 = vld [vmem:[%s1 + $0x64] sm:$0xf]
  %v44 = vld [vmem:[%s1 + $0x68] sm:$0xf]
  %v45 = vld [vmem:[%s1 + $0x6c] sm:$0xf]
  %v46 = vld [vmem:[%s1 + $0x70] sm:$0xf]
  %v47 = vld [vmem:[%s1 + $0x74] sm:$0xf]
  %v48 = vld [vmem:[%s1 + $0x78] sm:$0xf]
  %v49 = vld [vmem:[%s1 + $0x7c] sm:$0xf]
  %v50 = vld [vmem:[%s1 + $0x80] sm:$0xf]
  %v51 = vld [vmem:[%s1 + $0x84] sm:$0xf]
  %v52 = vld [vmem:[%s1 + $0x88] sm:$0xf]
  %v53 = vld [vmem:[%s1 + $0x8c] sm:$0xf]
  %v54 = vld [vmem:[%s1 + $0x90] sm:$0xf]
  %v55 = vld [vmem:[%s1 + $0x94] sm:$0xf]
  %v56 = vld [vmem:[%s1 + $0x98] sm:$0xf]
  %v57 = vld [vmem:[%s1 + $0x9c] sm:$0xf]
  %v58 = vld [vmem:[%s1 + $0xa0] sm:$0xf]
  %v59 = vld [vmem:[%s1 + $0xa4] sm:$0xf]
  %v60 = vld [vmem:[%s1 + $0xa8] sm:$0xf]
  %v61 = vld [vmem:[%s1 + $0xac] sm:$0xf]
  %v62 = vld [vmem:[%s1 + $0xb0] sm:$0xf]
  %v63 = vld [vmem:[%s1 + $0xb4] sm:$0xf]
  %v64 = vld [vmem:[%s1 + $0xb8] sm:$0xf]
  %v65 = vld [vmem:[%s1 + $0xbc] sm:$0xf]
  %v66 = vld [vmem:[%s1 + $0xc0] sm:$0xf]
  %v67 = vld [vmem:[%s1 + $0xc4] sm:$0xf]
  %v68 = vld [vmem:[%s1 + $0xc8] sm:$0xf]
  %v69 = vld [vmem:[%s1 + $0xcc] sm:$0xf]
  %v70 = vld [vmem:[%s1 + $0xd0] sm:$0xf]
  %v71 = vld [vmem:[%s1 + $0xd4] sm:$0xf]
  %v72 = vld [vmem:[%s1 + $0xd8] sm:$0xf]
  %v73 = vld [vmem:[%s1 + $0xdc] sm:$0xf]
  %v74 = vld [vmem:[%s1 + $0xe0] sm:$0xf]
  %v75 = vld [vmem:[%s1 + $0xe4] sm:$0xf]
  %v76 = vld [vmem:[%s1 + $0xe8] sm:$0xf]
  %v77 = vld [vmem:[%s1 + $0xec] sm:$0xf]
  %v78 = vld [vmem:[%s1 + $0xf0] sm:$0xf]
  %v79 = vld [vmem:[%s1 + $0xf4] sm:$0xf]
  %v80 = vld [vmem:[%s1 + $0xf8] sm:$0xf]
  %v81 = vld [vmem:[%s1 + $0xfc] sm:$0xf]
  %v82 = vld [vmem:[%s1 + $0x100] sm:$0xf]
  %v83 = vld [vmem:[%s1 + $0x104] sm:$0xf]
  %v84 = vld [vmem:[%s1 + $0x108] sm:$0xf]
  %v85 = vld [vmem:[%s1 + $0x10c] sm:$0xf]
  %v86 = vld [vmem:[%s1 + $0x110] sm:$0xf]
  %v87 = vld [vmem:[%s1 + $0x114] sm:$0xf]
  %v88 = vld [vmem:[%s1 + $0x118] sm:$0xf]
  %v89 = vld [vmem:[%s1 + $0x11c] sm:$0xf]
  %v90 = vld [vmem:[%s2] sm:$0x1]
  %v92 = vlaneseq
  %v93 = vshrl.u32 %v92, 7
  %v94 = vsub.s32 0, %v93
  %v95 = vrot.slane %v90, %v94
  %v100 = vunpack.c.l.b16 %v15
  %v101 = vunpack.c.h.b16 %v15
  %v102 = vunpack.c.l.b16 %v16
  %v103 = vunpack.c.h.b16 %v16
  %v104 = vunpack.c.l.b16 %v17
  %v105 = vpack.c.b16 %v100, %v100
  %v106 = vpack.c.b16 %v101, %v101
  %v107 = vpack.c.b16 %v102, %v102
  %v108 = vpack.c.b16 %v103, %v103
  %v109 = vpack.c.b16 %v104, %v104
  %v186 = vunpack.c.l.b16 %v18
  %v187 = vunpack.c.l.b16 %v19
  %v188 = vunpack.c.l.b16 %v20
  %v189 = vunpack.c.l.b16 %v21
  %v190 = vunpack.c.l.b16 %v22
  %v191 = vunpack.c.l.b16 %v23
  %v192 = vunpack.c.l.b16 %v24
  %v193 = vunpack.c.l.b16 %v25
  %v194 = vunpack.c.l.b16 %v26
  %v195 = vunpack.c.l.b16 %v27
  %v196 = vunpack.c.l.b16 %v28
  %v197 = vunpack.c.l.b16 %v29
  %v198 = vunpack.c.l.b16 %v30
  %v199 = vunpack.c.l.b16 %v31
  %v200 = vunpack.c.l.b16 %v32
  %v201 = vunpack.c.l.b16 %v33
  %v202 = vunpack.c.l.b16 %v34
  %v203 = vunpack.c.l.b16 %v35
  %v204 = vunpack.c.l.b16 %v36
  %v205 = vunpack.c.l.b16 %v37
  %v206 = vunpack.c.l.b16 %v38
  %v207 = vunpack.c.l.b16 %v39
  %v208 = vunpack.c.l.b16 %v40
  %v209 = vunpack.c.l.b16 %v41
  %v210 = vunpack.c.l.b16 %v42
  %v211 = vunpack.c.l.b16 %v43
  %v212 = vunpack.c.l.b16 %v44
  %v213 = vunpack.c.l.b16 %v45
  %v214 = vunpack.c.l.b16 %v46
  %v215 = vunpack.c.l.b16 %v47
  %v216 = vunpack.c.l.b16 %v48
  %v217 = vunpack.c.l.b16 %v49
  %v218 = vunpack.c.l.b16 %v50
  %v219 = vunpack.c.l.b16 %v51
  %v220 = vunpack.c.l.b16 %v52
  %v221 = vunpack.c.l.b16 %v53
  %v222 = vunpack.c.l.b16 %v54
  %v223 = vunpack.c.l.b16 %v55
  %v224 = vunpack.c.l.b16 %v56
  %v225 = vunpack.c.l.b16 %v57
  %v226 = vunpack.c.l.b16 %v58
  %v227 = vunpack.c.l.b16 %v59
  %v228 = vunpack.c.l.b16 %v60
  %v229 = vunpack.c.l.b16 %v61
  %v230 = vunpack.c.l.b16 %v62
  %v231 = vunpack.c.l.b16 %v63
  %v232 = vunpack.c.l.b16 %v64
  %v233 = vunpack.c.l.b16 %v65
  %v234 = vunpack.c.l.b16 %v66
  %v235 = vunpack.c.l.b16 %v67
  %v236 = vunpack.c.l.b16 %v68
  %v237 = vunpack.c.l.b16 %v69
  %v238 = vunpack.c.l.b16 %v70
  %v239 = vunpack.c.l.b16 %v71
  %v240 = vunpack.c.l.b16 %v72
  %v241 = vunpack.c.l.b16 %v73
  %v242 = vunpack.c.l.b16 %v74
  %v243 = vunpack.c.l.b16 %v75
  %v244 = vunpack.c.l.b16 %v76
  %v245 = vunpack.c.l.b16 %v77
  %v246 = vunpack.c.l.b16 %v78
  %v247 = vunpack.c.l.b16 %v79
  %v248 = vunpack.c.l.b16 %v80
  %v249 = vunpack.c.l.b16 %v81
  %v250 = vunpack.c.l.b16 %v82
  %v251 = vunpack.c.l.b16 %v83
  %v252 = vunpack.c.l.b16 %v84
  %v253 = vunpack.c.l.b16 %v85
  %v254 = vunpack.c.l.b16 %v86
  %v255 = vunpack.c.l.b16 %v87
  %v256 = vunpack.c.l.b16 %v88
  %v257 = vunpack.c.l.b16 %v89
  %v258 = vpack.c.b16 %v187, %v186
  %v259 = vpack.c.b16 %v189, %v188
  %v260 = vpack.c.b16 %v191, %v190
  %v261 = vpack.c.b16 %v193, %v192
  %v262 = vpack.c.b16 %v195, %v194
  %v263 = vpack.c.b16 %v197, %v196
  %v264 = vpack.c.b16 %v199, %v198
  %v265 = vpack.c.b16 %v201, %v200
  %v266 = vpack.c.b16 %v203, %v202
  %v267 = vpack.c.b16 %v205, %v204
  %v268 = vpack.c.b16 %v207, %v206
  %v269 = vpack.c.b16 %v209, %v208
  %v270 = vpack.c.b16 %v211, %v210
  %v271 = vpack.c.b16 %v213, %v212
  %v272 = vpack.c.b16 %v215, %v214
  %v273 = vpack.c.b16 %v217, %v216
  %v274 = vpack.c.b16 %v219, %v218
  %v275 = vpack.c.b16 %v221, %v220
  %v276 = vpack.c.b16 %v223, %v222
  %v277 = vpack.c.b16 %v225, %v224
  %v278 = vpack.c.b16 %v227, %v226
  %v279 = vpack.c.b16 %v229, %v228
  %v280 = vpack.c.b16 %v231, %v230
  %v281 = vpack.c.b16 %v233, %v232
  %v282 = vpack.c.b16 %v235, %v234
  %v283 = vpack.c.b16 %v237, %v236
  %v284 = vpack.c.b16 %v239, %v238
  %v285 = vpack.c.b16 %v241, %v240
  %v286 = vpack.c.b16 %v243, %v242
  %v287 = vpack.c.b16 %v245, %v244
  %v288 = vpack.c.b16 %v247, %v246
  %v289 = vpack.c.b16 %v249, %v248
  %v290 = vpack.c.b16 %v251, %v250
  %v291 = vpack.c.b16 %v253, %v252
  %v292 = vpack.c.b16 %v255, %v254
  %v293 = vpack.c.b16 %v257, %v256
  %vm330 = vcmask 523264
  %v332 = vsel %vm330, %v109, 0
  %334 = vmatprep.subr.bf16.mxu0 0
  %335 = vmatpush1.bf16.msra.mxu0 %v265
  %336 = vmatprep.subr.bf16.mxu0 0
  %337 = vmatpush1.bf16.msra.mxu0 %v264
  %338 = vmatprep.subr.bf16.mxu0 0
  %339 = vmatpush1.bf16.msra.mxu0 %v263
  %340 = vmatprep.subr.bf16.mxu0 0
  %341 = vmatpush1.bf16.msra.mxu0 %v262
  %342 = vmatprep.subr.bf16.mxu0 0
  %343 = vmatpush1.bf16.msra.mxu0 %v261
  %344 = vmatprep.subr.bf16.mxu0 0
  %345 = vmatpush1.bf16.msra.mxu0 %v260
  %346 = vmatprep.subr.bf16.mxu0 0
  %347 = vmatpush1.bf16.msra.mxu0 %v259
  %348 = vmatprep.subr.bf16.mxu0 0
  %349 = vmatpush1.bf16.msra.mxu0 %v258
  %350 = vmatprep.subr.bf16.mxu0 0
  %351 = vmatpush2.bf16.msra.mxu0 %v273
  %352 = vmatprep.subr.bf16.mxu0 0
  %353 = vmatpush2.bf16.msra.mxu0 %v272
  %354 = vmatprep.subr.bf16.mxu0 0
  %355 = vmatpush2.bf16.msra.mxu0 %v271
  %356 = vmatprep.subr.bf16.mxu0 0
  %357 = vmatpush2.bf16.msra.mxu0 %v270
  %358 = vmatprep.subr.bf16.mxu0 0
  %359 = vmatpush2.bf16.msra.mxu0 %v269
  %360 = vmatprep.subr.bf16.mxu0 0
  %361 = vmatpush2.bf16.msra.mxu0 %v268
  %362 = vmatprep.subr.bf16.mxu0 0
  %363 = vmatpush2.bf16.msra.mxu0 %v267
  %364 = vmatprep.subr.bf16.mxu0 0
  %365 = vmatpush2.bf16.msra.mxu0 %v266
  %366 = vmatprep.mubr.bf16.mxu0 %v106
  %367 = vmatmul.mubr.bf16.gmra.mxu0 %v105
  %v368 = vpop.f32.mrf.mxu0
  %v369 = vadd.f32 %v95, %v368
  %v370 = vpop.f32.mrf.mxu0
  %v371 = vpop.f32.mrf.mxu0
  %v372 = vpop.f32.mrf.mxu0
  %373 = vdwg.mxu0
  %374 = vmatprep.subr.bf16.mxu0 0
  %375 = vmatpush1.bf16.msra.mxu0 %v281
  %376 = vmatprep.subr.bf16.mxu0 0
  %377 = vmatpush1.bf16.msra.mxu0 %v280
  %378 = vmatprep.subr.bf16.mxu0 0
  %379 = vmatpush1.bf16.msra.mxu0 %v279
  %380 = vmatprep.subr.bf16.mxu0 0
  %381 = vmatpush1.bf16.msra.mxu0 %v278
  %382 = vmatprep.subr.bf16.mxu0 0
  %383 = vmatpush1.bf16.msra.mxu0 %v277
  %384 = vmatprep.subr.bf16.mxu0 0
  %385 = vmatpush1.bf16.msra.mxu0 %v276
  %386 = vmatprep.subr.bf16.mxu0 0
  %387 = vmatpush1.bf16.msra.mxu0 %v275
  %388 = vmatprep.subr.bf16.mxu0 0
  %389 = vmatpush1.bf16.msra.mxu0 %v274
  %390 = vmatprep.subr.bf16.mxu0 0
  %391 = vmatpush2.bf16.msra.mxu0 %v289
  %392 = vmatprep.subr.bf16.mxu0 0
  %393 = vmatpush2.bf16.msra.mxu0 %v288
  %394 = vmatprep.subr.bf16.mxu0 0
  %395 = vmatpush2.bf16.msra.mxu0 %v287
  %396 = vmatprep.subr.bf16.mxu0 0
  %397 = vmatpush2.bf16.msra.mxu0 %v286
  %398 = vmatprep.subr.bf16.mxu0 0
  %399 = vmatpush2.bf16.msra.mxu0 %v285
  %400 = vmatprep.subr.bf16.mxu0 0
  %401 = vmatpush2.bf16.msra.mxu0 %v284
  %402 = vmatprep.subr.bf16.mxu0 0
  %403 = vmatpush2.bf16.msra.mxu0 %v283
  %404 = vmatprep.subr.bf16.mxu0 0
  %405 = vmatpush2.bf16.msra.mxu0 %v282
  %406 = vmatprep.mubr.bf16.mxu0 %v108
  %407 = vmatmul.mubr.bf16.gmra.mxu0 %v107
  %v408 = vpop.f32.mrf.mxu0
  %v409 = vadd.f32 %v369, %v408
  %v410 = vpop.f32.mrf.mxu0
  %v411 = vpop.f32.mrf.mxu0
  %v412 = vpop.f32.mrf.mxu0
  %413 = vdwg.mxu0
  %414 = vmatprep.subr.bf16.mxu0 0
  %415 = vmatpush1.bf16.msra.mxu0 0
  %416 = vmatprep.subr.bf16.mxu0 0
  %417 = vmatpush1.bf16.msra.mxu0 0
  %418 = vmatprep.subr.bf16.mxu0 0
  %419 = vmatpush1.bf16.msra.mxu0 0
  %420 = vmatprep.subr.bf16.mxu0 0
  %421 = vmatpush1.bf16.msra.mxu0 0
  %422 = vmatprep.subr.bf16.mxu0 0
  %423 = vmatpush1.bf16.msra.mxu0 %v293
  %424 = vmatprep.subr.bf16.mxu0 0
  %425 = vmatpush1.bf16.msra.mxu0 %v292
  %426 = vmatprep.subr.bf16.mxu0 0
  %427 = vmatpush1.bf16.msra.mxu0 %v291
  %428 = vmatprep.subr.bf16.mxu0 0
  %429 = vmatpush1.bf16.msra.mxu0 %v290
  %430 = vmatprep.subr.bf16.mxu0 0
  %431 = vmatpush2.bf16.msra.mxu0 0
  %432 = vmatprep.subr.bf16.mxu0 0
  %433 = vmatpush2.bf16.msra.mxu0 0
  %434 = vmatprep.subr.bf16.mxu0 0
  %435 = vmatpush2.bf16.msra.mxu0 0
  %436 = vmatprep.subr.bf16.mxu0 0
  %437 = vmatpush2.bf16.msra.mxu0 0
  %438 = vmatprep.subr.bf16.mxu0 0
  %439 = vmatpush2.bf16.msra.mxu0 0
  %440 = vmatprep.subr.bf16.mxu0 0
  %441 = vmatpush2.bf16.msra.mxu0 0
  %442 = vmatprep.subr.bf16.mxu0 0
  %443 = vmatpush2.bf16.msra.mxu0 0
  %444 = vmatprep.subr.bf16.mxu0 0
  %445 = vmatpush2.bf16.msra.mxu0 0
  %446 = vmatprep.mubr.bf16.mxu0 0
  %447 = vmatmul.mubr.bf16.gmra.mxu0 %v332
  %v448 = vpop.f32.mrf.mxu0
  %v449 = vadd.f32 %v409, %v448
  %v450 = vpop.f32.mrf.mxu0
  %v451 = vpop.f32.mrf.mxu0
  %v452 = vpop.f32.mrf.mxu0
  %453 = vdwg.mxu0
  %vm454 = vcmp.gt.f32.partialorder %v449, 0.0
  %v455 = vmul.f32 %v449, 0.1
  %v456 = vsel %vm454, %v449, %v455
  %v457 = vpack.c.bf16 %v456, %v456
  %458 = vst [vmem:[%s3] sm:$0xf] %v457
  // Predicated region
  $region14: #{forward.118} parent=0 // pred_check
    _
  $region15: #{forward.118} parent=0 // pred_check_branch
    %460 = sbr.rel (0) target = $region17
  $region16: #{forward.118} parent=0 // pred_region
    _
  $region17: #{forward.118} parent=0 // pred_fallthru
    _
  // Predicated region
  $region18: #{forward.118} parent=0 // pred_check
    _
  $region19: #{forward.118} parent=0 // pred_check_branch
    %462 = sbr.rel (0) target = $region21
  $region20: #{forward.118} parent=0 // pred_region
    _
  $region21: #{forward.118} parent=0 // pred_fallthru
    _

// kernel: forward.120
$region0: #{forward.120}
  #allocation0 [shape = 'u32[]', space=smem, size = 0x4, offset = 0x4, fixed_abs, tag = 'smem constant byte address 0x4 - core index']
  #allocation1 [shape = 'u32[144,128]{1,0:T(1,128)}', space=vmem, size = 0x12000, scoped, tag = 'internal scratch']
  %s0 = inlined_call_operand.vmem [shape: bf16[8,576], index: 0, kind: input, shape index: {}]
  %s1 = inlined_call_operand.vmem [shape: bf16[576,128], index: 1, kind: input, shape index: {}]
  %s2 = inlined_call_operand.vmem [shape: f32[1,128], index: 2, kind: input, shape index: {}]
  %s3 = inlined_call_operand.vmem [shape: bf16[8,128], index: 3, kind: input, shape index: {}]
  %s4 = inlined_call_operand.vmem [shape: bf16[8,128], index: 4, kind: output, shape index: {}]
  %s5 = sld [smem:[#allocation0]]
  $region26: #{forward.120} parent=0
    _
  %s7 = ssub.s32 1, %s5
  %s8 = scalar_select 0, %s7, %s5
  // Predicated region
  $region2: #{forward.120} parent=0 // pred_check
    _
  $region3: #{forward.120} parent=0 // pred_check_branch
    %10 = sbr.rel (0) target = $region5
  $region4: #{forward.120} parent=0 // pred_region
    _
  $region5: #{forward.120} parent=0 // pred_fallthru
    _
  // Predicated region
  $region6: #{forward.120} parent=0 // pred_check
    _
  $region7: #{forward.120} parent=0 // pred_check_branch
    %12 = sbr.rel (0) target = $region9
  $region8: #{forward.120} parent=0 // pred_region
    _
  $region9: #{forward.120} parent=0 // pred_fallthru
    _
  // Predicated region
  $region10: #{forward.120} parent=0 // pred_check
    _
  $region11: #{forward.120} parent=0 // pred_check_branch
    %14 = sbr.rel (0) target = $region13
  $region12: #{forward.120} parent=0 // pred_region
    _
  $region13: #{forward.120} parent=0 // pred_fallthru
    _
  // Predicated region
  $region14: #{forward.120} parent=0 // pred_check
    _
  $region15: #{forward.120} parent=0 // pred_check_branch
    %16 = sbr.rel (0) target = $region17
  $region16: #{forward.120} parent=0 // pred_region
    _
  $region17: #{forward.120} parent=0 // pred_fallthru
    _
  %v18 = vld [vmem:[%s0] sm:$0xff]
  %v19 = vld [vmem:[%s0 + $0x8] sm:$0xff]
  %v20 = vld [vmem:[%s0 + $0x10] sm:$0xf]
  %v21 = vld [vmem:[%s1] sm:$0xf]
  %v22 = vld [vmem:[%s1 + $0x4] sm:$0xf]
  %v23 = vld [vmem:[%s1 + $0x8] sm:$0xf]
  %v24 = vld [vmem:[%s1 + $0xc] sm:$0xf]
  %v25 = vld [vmem:[%s1 + $0x10] sm:$0xf]
  %v26 = vld [vmem:[%s1 + $0x14] sm:$0xf]
  %v27 = vld [vmem:[%s1 + $0x18] sm:$0xf]
  %v28 = vld [vmem:[%s1 + $0x1c] sm:$0xf]
  %v29 = vld [vmem:[%s1 + $0x20] sm:$0xf]
  %v30 = vld [vmem:[%s1 + $0x24] sm:$0xf]
  %v31 = vld [vmem:[%s1 + $0x28] sm:$0xf]
  %v32 = vld [vmem:[%s1 + $0x2c] sm:$0xf]
  %v33 = vld [vmem:[%s1 + $0x30] sm:$0xf]
  %v34 = vld [vmem:[%s1 + $0x34] sm:$0xf]
  %v35 = vld [vmem:[%s1 + $0x38] sm:$0xf]
  %v36 = vld [vmem:[%s1 + $0x3c] sm:$0xf]
  %v37 = vld [vmem:[%s1 + $0x40] sm:$0xf]
  %v38 = vld [vmem:[%s1 + $0x44] sm:$0xf]
  %v39 = vld [vmem:[%s1 + $0x48] sm:$0xf]
  %v40 = vld [vmem:[%s1 + $0x4c] sm:$0xf]
  %v41 = vld [vmem:[%s1 + $0x50] sm:$0xf]
  %v42 = vld [vmem:[%s1 + $0x54] sm:$0xf]
  %v43 = vld [vmem:[%s1 + $0x58] sm:$0xf]
  %v44 = vld [vmem:[%s1 + $0x5c] sm:$0xf]
  %v45 = vld [vmem:[%s1 + $0x60] sm:$0xf]
  %v46 = vld [vmem:[%s1 + $0x64] sm:$0xf]
  %v47 = vld [vmem:[%s1 + $0x68] sm:$0xf]
  %v48 = vld [vmem:[%s1 + $0x6c] sm:$0xf]
  %v49 = vld [vmem:[%s1 + $0x70] sm:$0xf]
  %v50 = vld [vmem:[%s1 + $0x74] sm:$0xf]
  %v51 = vld [vmem:[%s1 + $0x78] sm:$0xf]
  %v52 = vld [vmem:[%s1 + $0x7c] sm:$0xf]
  %v53 = vld [vmem:[%s1 + $0x80] sm:$0xf]
  %v54 = vld [vmem:[%s1 + $0x84] sm:$0xf]
  %v55 = vld [vmem:[%s1 + $0x88] sm:$0xf]
  %v56 = vld [vmem:[%s1 + $0x8c] sm:$0xf]
  %v57 = vld [vmem:[%s1 + $0x90] sm:$0xf]
  %v58 = vld [vmem:[%s1 + $0x94] sm:$0xf]
  %v59 = vld [vmem:[%s1 + $0x98] sm:$0xf]
  %v60 = vld [vmem:[%s1 + $0x9c] sm:$0xf]
  %v61 = vld [vmem:[%s1 + $0xa0] sm:$0xf]
  %v62 = vld [vmem:[%s1 + $0xa4] sm:$0xf]
  %v63 = vld [vmem:[%s1 + $0xa8] sm:$0xf]
  %v64 = vld [vmem:[%s1 + $0xac] sm:$0xf]
  %v65 = vld [vmem:[%s1 + $0xb0] sm:$0xf]
  %v66 = vld [vmem:[%s1 + $0xb4] sm:$0xf]
  %v67 = vld [vmem:[%s1 + $0xb8] sm:$0xf]
  %v68 = vld [vmem:[%s1 + $0xbc] sm:$0xf]
  %v69 = vld [vmem:[%s1 + $0xc0] sm:$0xf]
  %v70 = vld [vmem:[%s1 + $0xc4] sm:$0xf]
  %v71 = vld [vmem:[%s1 + $0xc8] sm:$0xf]
  %v72 = vld [vmem:[%s1 + $0xcc] sm:$0xf]
  %v73 = vld [vmem:[%s1 + $0xd0] sm:$0xf]
  %v74 = vld [vmem:[%s1 + $0xd4] sm:$0xf]
  %v75 = vld [vmem:[%s1 + $0xd8] sm:$0xf]
  %v76 = vld [vmem:[%s1 + $0xdc] sm:$0xf]
  %v77 = vld [vmem:[%s1 + $0xe0] sm:$0xf]
  %v78 = vld [vmem:[%s1 + $0xe4] sm:$0xf]
  %v79 = vld [vmem:[%s1 + $0xe8] sm:$0xf]
  %v80 = vld [vmem:[%s1 + $0xec] sm:$0xf]
  %v81 = vld [vmem:[%s1 + $0xf0] sm:$0xf]
  %v82 = vld [vmem:[%s1 + $0xf4] sm:$0xf]
  %v83 = vld [vmem:[%s1 + $0xf8] sm:$0xf]
  %v84 = vld [vmem:[%s1 + $0xfc] sm:$0xf]
  %v85 = vld [vmem:[%s1 + $0x100] sm:$0xf]
  %v86 = vld [vmem:[%s1 + $0x104] sm:$0xf]
  %v87 = vld [vmem:[%s1 + $0x108] sm:$0xf]
  %v88 = vld [vmem:[%s1 + $0x10c] sm:$0xf]
  %v89 = vld [vmem:[%s1 + $0x110] sm:$0xf]
  %v90 = vld [vmem:[%s1 + $0x114] sm:$0xf]
  %v91 = vld [vmem:[%s1 + $0x118] sm:$0xf]
  %v92 = vld [vmem:[%s1 + $0x11c] sm:$0xf]
  %v93 = vld [vmem:[%s2] sm:$0x1]
  %v95 = vlaneseq
  %v96 = vshrl.u32 %v95, 7
  %v97 = vsub.s32 0, %v96
  %v98 = vrot.slane %v93, %v97
  %v103 = vunpack.c.l.b16 %v18
  %v104 = vunpack.c.h.b16 %v18
  %v105 = vunpack.c.l.b16 %v19
  %v106 = vunpack.c.h.b16 %v19
  %v107 = vunpack.c.l.b16 %v20
  %v108 = vpack.c.b16 %v103, %v103
  %v109 = vpack.c.b16 %v104, %v104
  %v110 = vpack.c.b16 %v105, %v105
  %v111 = vpack.c.b16 %v106, %v106
  %v112 = vpack.c.b16 %v107, %v107
  %v189 = vunpack.c.l.b16 %v21
  %v190 = vunpack.c.l.b16 %v22
  %v191 = vunpack.c.l.b16 %v23
  %v192 = vunpack.c.l.b16 %v24
  %v193 = vunpack.c.l.b16 %v25
  %v194 = vunpack.c.l.b16 %v26
  %v195 = vunpack.c.l.b16 %v27
  %v196 = vunpack.c.l.b16 %v28
  %v197 = vunpack.c.l.b16 %v29
  %v198 = vunpack.c.l.b16 %v30
  %v199 = vunpack.c.l.b16 %v31
  %v200 = vunpack.c.l.b16 %v32
  %v201 = vunpack.c.l.b16 %v33
  %v202 = vunpack.c.l.b16 %v34
  %v203 = vunpack.c.l.b16 %v35
  %v204 = vunpack.c.l.b16 %v36
  %v205 = vunpack.c.l.b16 %v37
  %v206 = vunpack.c.l.b16 %v38
  %v207 = vunpack.c.l.b16 %v39
  %v208 = vunpack.c.l.b16 %v40
  %v209 = vunpack.c.l.b16 %v41
  %v210 = vunpack.c.l.b16 %v42
  %v211 = vunpack.c.l.b16 %v43
  %v212 = vunpack.c.l.b16 %v44
  %v213 = vunpack.c.l.b16 %v45
  %v214 = vunpack.c.l.b16 %v46
  %v215 = vunpack.c.l.b16 %v47
  %v216 = vunpack.c.l.b16 %v48
  %v217 = vunpack.c.l.b16 %v49
  %v218 = vunpack.c.l.b16 %v50
  %v219 = vunpack.c.l.b16 %v51
  %v220 = vunpack.c.l.b16 %v52
  %v221 = vunpack.c.l.b16 %v53
  %v222 = vunpack.c.l.b16 %v54
  %v223 = vunpack.c.l.b16 %v55
  %v224 = vunpack.c.l.b16 %v56
  %v225 = vunpack.c.l.b16 %v57
  %v226 = vunpack.c.l.b16 %v58
  %v227 = vunpack.c.l.b16 %v59
  %v228 = vunpack.c.l.b16 %v60
  %v229 = vunpack.c.l.b16 %v61
  %v230 = vunpack.c.l.b16 %v62
  %v231 = vunpack.c.l.b16 %v63
  %v232 = vunpack.c.l.b16 %v64
  %v233 = vunpack.c.l.b16 %v65
  %v234 = vunpack.c.l.b16 %v66
  %v235 = vunpack.c.l.b16 %v67
  %v236 = vunpack.c.l.b16 %v68
  %v237 = vunpack.c.l.b16 %v69
  %v238 = vunpack.c.l.b16 %v70
  %v239 = vunpack.c.l.b16 %v71
  %v240 = vunpack.c.l.b16 %v72
  %v241 = vunpack.c.l.b16 %v73
  %v242 = vunpack.c.l.b16 %v74
  %v243 = vunpack.c.l.b16 %v75
  %v244 = vunpack.c.l.b16 %v76
  %v245 = vunpack.c.l.b16 %v77
  %v246 = vunpack.c.l.b16 %v78
  %v247 = vunpack.c.l.b16 %v79
  %v248 = vunpack.c.l.b16 %v80
  %v249 = vunpack.c.l.b16 %v81
  %v250 = vunpack.c.l.b16 %v82
  %v251 = vunpack.c.l.b16 %v83
  %v252 = vunpack.c.l.b16 %v84
  %v253 = vunpack.c.l.b16 %v85
  %v254 = vunpack.c.l.b16 %v86
  %v255 = vunpack.c.l.b16 %v87
  %v256 = vunpack.c.l.b16 %v88
  %v257 = vunpack.c.l.b16 %v89
  %v258 = vunpack.c.l.b16 %v90
  %v259 = vunpack.c.l.b16 %v91
  %v260 = vunpack.c.l.b16 %v92
  %v261 = vpack.c.b16 %v190, %v189
  %v262 = vpack.c.b16 %v192, %v191
  %v263 = vpack.c.b16 %v194, %v193
  %v264 = vpack.c.b16 %v196, %v195
  %v265 = vpack.c.b16 %v198, %v197
  %v266 = vpack.c.b16 %v200, %v199
  %v267 = vpack.c.b16 %v202, %v201
  %v268 = vpack.c.b16 %v204, %v203
  %v269 = vpack.c.b16 %v206, %v205
  %v270 = vpack.c.b16 %v208, %v207
  %v271 = vpack.c.b16 %v210, %v209
  %v272 = vpack.c.b16 %v212, %v211
  %v273 = vpack.c.b16 %v214, %v213
  %v274 = vpack.c.b16 %v216, %v215
  %v275 = vpack.c.b16 %v218, %v217
  %v276 = vpack.c.b16 %v220, %v219
  %v277 = vpack.c.b16 %v222, %v221
  %v278 = vpack.c.b16 %v224, %v223
  %v279 = vpack.c.b16 %v226, %v225
  %v280 = vpack.c.b16 %v228, %v227
  %v281 = vpack.c.b16 %v230, %v229
  %v282 = vpack.c.b16 %v232, %v231
  %v283 = vpack.c.b16 %v234, %v233
  %v284 = vpack.c.b16 %v236, %v235
  %v285 = vpack.c.b16 %v238, %v237
  %v286 = vpack.c.b16 %v240, %v239
  %v287 = vpack.c.b16 %v242, %v241
  %v288 = vpack.c.b16 %v244, %v243
  %v289 = vpack.c.b16 %v246, %v245
  %v290 = vpack.c.b16 %v248, %v247
  %v291 = vpack.c.b16 %v250, %v249
  %v292 = vpack.c.b16 %v252, %v251
  %v293 = vpack.c.b16 %v254, %v253
  %v294 = vpack.c.b16 %v256, %v255
  %v295 = vpack.c.b16 %v258, %v257
  %v296 = vpack.c.b16 %v260, %v259
  %vm333 = vcmask 523264
  %v335 = vsel %vm333, %v112, 0
  %337 = vmatprep.subr.bf16.mxu0 0
  %338 = vmatpush1.bf16.msra.mxu0 %v268
  %339 = vmatprep.subr.bf16.mxu0 0
  %340 = vmatpush1.bf16.msra.mxu0 %v267
  %341 = vmatprep.subr.bf16.mxu0 0
  %342 = vmatpush1.bf16.msra.mxu0 %v266
  %343 = vmatprep.subr.bf16.mxu0 0
  %344 = vmatpush1.bf16.msra.mxu0 %v265
  %345 = vmatprep.subr.bf16.mxu0 0
  %346 = vmatpush1.bf16.msra.mxu0 %v264
  %347 = vmatprep.subr.bf16.mxu0 0
  %348 = vmatpush1.bf16.msra.mxu0 %v263
  %349 = vmatprep.subr.bf16.mxu0 0
  %350 = vmatpush1.bf16.msra.mxu0 %v262
  %351 = vmatprep.subr.bf16.mxu0 0
  %352 = vmatpush1.bf16.msra.mxu0 %v261
  %353 = vmatprep.subr.bf16.mxu0 0
  %354 = vmatpush2.bf16.msra.mxu0 %v276
  %355 = vmatprep.subr.bf16.mxu0 0
  %356 = vmatpush2.bf16.msra.mxu0 %v275
  %357 = vmatprep.subr.bf16.mxu0 0
  %358 = vmatpush2.bf16.msra.mxu0 %v274
  %359 = vmatprep.subr.bf16.mxu0 0
  %360 = vmatpush2.bf16.msra.mxu0 %v273
  %361 = vmatprep.subr.bf16.mxu0 0
  %362 = vmatpush2.bf16.msra.mxu0 %v272
  %363 = vmatprep.subr.bf16.mxu0 0
  %364 = vmatpush2.bf16.msra.mxu0 %v271
  %365 = vmatprep.subr.bf16.mxu0 0
  %366 = vmatpush2.bf16.msra.mxu0 %v270
  %367 = vmatprep.subr.bf16.mxu0 0
  %368 = vmatpush2.bf16.msra.mxu0 %v269
  %369 = vmatprep.mubr.bf16.mxu0 %v109
  %370 = vmatmul.mubr.bf16.gmra.mxu0 %v108
  %v371 = vpop.f32.mrf.mxu0
  %v372 = vadd.f32 %v98, %v371
  %v373 = vpop.f32.mrf.mxu0
  %v374 = vpop.f32.mrf.mxu0
  %v375 = vpop.f32.mrf.mxu0
  %376 = vdwg.mxu0
  %377 = vmatprep.subr.bf16.mxu0 0
  %378 = vmatpush1.bf16.msra.mxu0 %v284
  %379 = vmatprep.subr.bf16.mxu0 0
  %380 = vmatpush1.bf16.msra.mxu0 %v283
  %381 = vmatprep.subr.bf16.mxu0 0
  %382 = vmatpush1.bf16.msra.mxu0 %v282
  %383 = vmatprep.subr.bf16.mxu0 0
  %384 = vmatpush1.bf16.msra.mxu0 %v281
  %385 = vmatprep.subr.bf16.mxu0 0
  %386 = vmatpush1.bf16.msra.mxu0 %v280
  %387 = vmatprep.subr.bf16.mxu0 0
  %388 = vmatpush1.bf16.msra.mxu0 %v279
  %389 = vmatprep.subr.bf16.mxu0 0
  %390 = vmatpush1.bf16.msra.mxu0 %v278
  %391 = vmatprep.subr.bf16.mxu0 0
  %392 = vmatpush1.bf16.msra.mxu0 %v277
  %393 = vmatprep.subr.bf16.mxu0 0
  %394 = vmatpush2.bf16.msra.mxu0 %v292
  %395 = vmatprep.subr.bf16.mxu0 0
  %396 = vmatpush2.bf16.msra.mxu0 %v291
  %397 = vmatprep.subr.bf16.mxu0 0
  %398 = vmatpush2.bf16.msra.mxu0 %v290
  %399 = vmatprep.subr.bf16.mxu0 0
  %400 = vmatpush2.bf16.msra.mxu0 %v289
  %401 = vmatprep.subr.bf16.mxu0 0
  %402 = vmatpush2.bf16.msra.mxu0 %v288
  %403 = vmatprep.subr.bf16.mxu0 0
  %404 = vmatpush2.bf16.msra.mxu0 %v287
  %405 = vmatprep.subr.bf16.mxu0 0
  %406 = vmatpush2.bf16.msra.mxu0 %v286
  %407 = vmatprep.subr.bf16.mxu0 0
  %408 = vmatpush2.bf16.msra.mxu0 %v285
  %409 = vmatprep.mubr.bf16.mxu0 %v111
  %410 = vmatmul.mubr.bf16.gmra.mxu0 %v110
  %v411 = vpop.f32.mrf.mxu0
  %v412 = vadd.f32 %v372, %v411
  %v413 = vpop.f32.mrf.mxu0
  %v414 = vpop.f32.mrf.mxu0
  %v415 = vpop.f32.mrf.mxu0
  %416 = vdwg.mxu0
  %417 = vmatprep.subr.bf16.mxu0 0
  %418 = vmatpush1.bf16.msra.mxu0 0
  %419 = vmatprep.subr.bf16.mxu0 0
  %420 = vmatpush1.bf16.msra.mxu0 0
  %421 = vmatprep.subr.bf16.mxu0 0
  %422 = vmatpush1.bf16.msra.mxu0 0
  %423 = vmatprep.subr.bf16.mxu0 0
  %424 = vmatpush1.bf16.msra.mxu0 0
  %425 = vmatprep.subr.bf16.mxu0 0
  %426 = vmatpush1.bf16.msra.mxu0 %v296
  %427 = vmatprep.subr.bf16.mxu0 0
  %428 = vmatpush1.bf16.msra.mxu0 %v295
  %429 = vmatprep.subr.bf16.mxu0 0
  %430 = vmatpush1.bf16.msra.mxu0 %v294
  %431 = vmatprep.subr.bf16.mxu0 0
  %432 = vmatpush1.bf16.msra.mxu0 %v293
  %433 = vmatprep.subr.bf16.mxu0 0
  %434 = vmatpush2.bf16.msra.mxu0 0
  %435 = vmatprep.subr.bf16.mxu0 0
  %436 = vmatpush2.bf16.msra.mxu0 0
  %437 = vmatprep.subr.bf16.mxu0 0
  %438 = vmatpush2.bf16.msra.mxu0 0
  %439 = vmatprep.subr.bf16.mxu0 0
  %440 = vmatpush2.bf16.msra.mxu0 0
  %441 = vmatprep.subr.bf16.mxu0 0
  %442 = vmatpush2.bf16.msra.mxu0 0
  %443 = vmatprep.subr.bf16.mxu0 0
  %444 = vmatpush2.bf16.msra.mxu0 0
  %445 = vmatprep.subr.bf16.mxu0 0
  %446 = vmatpush2.bf16.msra.mxu0 0
  %447 = vmatprep.subr.bf16.mxu0 0
  %448 = vmatpush2.bf16.msra.mxu0 0
  %449 = vmatprep.mubr.bf16.mxu0 0
  %450 = vmatmul.mubr.bf16.gmra.mxu0 %v335
  %v451 = vpop.f32.mrf.mxu0
  %v452 = vadd.f32 %v412, %v451
  %v453 = vpop.f32.mrf.mxu0
  %v454 = vpop.f32.mrf.mxu0
  %v455 = vpop.f32.mrf.mxu0
  %456 = vdwg.mxu0
  %vm457 = vcmp.gt.f32.partialorder %v452, 0.0
  %v458 = vmul.f32 %v452, 0.1
  %v459 = vsel %vm457, %v452, %v458
  %v460 = vld [vmem:[%s3] sm:$0xf]
  %v461 = vunpack.c.l.bf16 %v460
  %v462 = vadd.f32 %v459, %v461
  %v463 = vpack.c.bf16 %v462, %v462
  %464 = vst [vmem:[%s4] sm:$0xf] %v463
  // Predicated region
  $region18: #{forward.120} parent=0 // pred_check
    _
  $region19: #{forward.120} parent=0 // pred_check_branch
    %466 = sbr.rel (0) target = $region21
  $region20: #{forward.120} parent=0 // pred_region
    _
  $region21: #{forward.120} parent=0 // pred_fallthru
    _
  // Predicated region
  $region22: #{forward.120} parent=0 // pred_check
    _
  $region23: #{forward.120} parent=0 // pred_check_branch
    %468 = sbr.rel (0) target = $region25
  $region24: #{forward.120} parent=0 // pred_region
    _
  $region25: #{forward.120} parent=0 // pred_fallthru
    _

// kernel: forward.149
$region0: #{forward.149}
  #allocation0 [shape = 'u32[]', space=smem, size = 0x4, offset = 0x4, fixed_abs, tag = 'smem constant byte address 0x4 - core index']
  #allocation1 [shape = 'u32[144,128]{1,0:T(1,128)}', space=vmem, size = 0x12000, scoped, tag = 'internal scratch']
  %s0 = inlined_call_operand.vmem [shape: bf16[32,128], index: 0, kind: input, shape index: {}]
  %s1 = inlined_call_operand.vmem [shape: bf16[128,128], index: 1, kind: input, shape index: {}]
  %s2 = inlined_call_operand.vmem [shape: f32[1,128], index: 2, kind: input, shape index: {}]
  %s3 = inlined_call_operand.vmem [shape: f32[32,128], index: 3, kind: output, shape index: {}]
  %s4 = sld [smem:[#allocation0]]
  $region22: #{forward.149} parent=0
    _
  %s6 = ssub.s32 1, %s4
  %s7 = scalar_select 0, %s6, %s4
  // Predicated region
  $region2: #{forward.149} parent=0 // pred_check
    _
  $region3: #{forward.149} parent=0 // pred_check_branch
    %9 = sbr.rel (0) target = $region5
  $region4: #{forward.149} parent=0 // pred_region
    _
  $region5: #{forward.149} parent=0 // pred_fallthru
    _
  // Predicated region
  $region6: #{forward.149} parent=0 // pred_check
    _
  $region7: #{forward.149} parent=0 // pred_check_branch
    %11 = sbr.rel (0) target = $region9
  $region8: #{forward.149} parent=0 // pred_region
    _
  $region9: #{forward.149} parent=0 // pred_fallthru
    _
  // Predicated region
  $region10: #{forward.149} parent=0 // pred_check
    _
  $region11: #{forward.149} parent=0 // pred_check_branch
    %13 = sbr.rel (0) target = $region13
  $region12: #{forward.149} parent=0 // pred_region
    _
  $region13: #{forward.149} parent=0 // pred_fallthru
    _
  %v15 = vld [vmem:[%s0] sm:$0xf]
  %v16 = vld [vmem:[%s0 + $0x4] sm:$0xf]
  %v17 = vld [vmem:[%s0 + $0x8] sm:$0xf]
  %v18 = vld [vmem:[%s0 + $0xc] sm:$0xf]
  %v19 = vld [vmem:[%s1] sm:$0xf]
  %v20 = vld [vmem:[%s1 + $0x4] sm:$0xf]
  %v21 = vld [vmem:[%s1 + $0x8] sm:$0xf]
  %v22 = vld [vmem:[%s1 + $0xc] sm:$0xf]
  %v23 = vld [vmem:[%s1 + $0x10] sm:$0xf]
  %v24 = vld [vmem:[%s1 + $0x14] sm:$0xf]
  %v25 = vld [vmem:[%s1 + $0x18] sm:$0xf]
  %v26 = vld [vmem:[%s1 + $0x1c] sm:$0xf]
  %v27 = vld [vmem:[%s1 + $0x20] sm:$0xf]
  %v28 = vld [vmem:[%s1 + $0x24] sm:$0xf]
  %v29 = vld [vmem:[%s1 + $0x28] sm:$0xf]
  %v30 = vld [vmem:[%s1 + $0x2c] sm:$0xf]
  %v31 = vld [vmem:[%s1 + $0x30] sm:$0xf]
  %v32 = vld [vmem:[%s1 + $0x34] sm:$0xf]
  %v33 = vld [vmem:[%s1 + $0x38] sm:$0xf]
  %v34 = vld [vmem:[%s1 + $0x3c] sm:$0xf]
  %v35 = vld [vmem:[%s2] sm:$0x1]
  %v37 = vlaneseq
  %v38 = vshrl.u32 %v37, 7
  %v39 = vsub.s32 0, %v38
  %v40 = vrot.slane %v35, %v39
  %v46 = vunpack.c.l.b16 %v15
  %v47 = vunpack.c.l.b16 %v16
  %v48 = vunpack.c.l.b16 %v17
  %v49 = vunpack.c.l.b16 %v18
  %v50 = vpack.c.b16 %v47, %v46
  %v51 = vpack.c.b16 %v49, %v48
  %v70 = vunpack.c.l.b16 %v19
  %v71 = vunpack.c.l.b16 %v20
  %v72 = vunpack.c.l.b16 %v21
  %v73 = vunpack.c.l.b16 %v22
  %v74 = vunpack.c.l.b16 %v23
  %v75 = vunpack.c.l.b16 %v24
  %v76 = vunpack.c.l.b16 %v25
  %v77 = vunpack.c.l.b16 %v26
  %v78 = vunpack.c.l.b16 %v27
  %v79 = vunpack.c.l.b16 %v28
  %v80 = vunpack.c.l.b16 %v29
  %v81 = vunpack.c.l.b16 %v30
  %v82 = vunpack.c.l.b16 %v31
  %v83 = vunpack.c.l.b16 %v32
  %v84 = vunpack.c.l.b16 %v33
  %v85 = vunpack.c.l.b16 %v34
  %v86 = vpack.c.b16 %v71, %v70
  %v87 = vpack.c.b16 %v73, %v72
  %v88 = vpack.c.b16 %v75, %v74
  %v89 = vpack.c.b16 %v77, %v76
  %v90 = vpack.c.b16 %v79, %v78
  %v91 = vpack.c.b16 %v81, %v80
  %v92 = vpack.c.b16 %v83, %v82
  %v93 = vpack.c.b16 %v85, %v84
  %102 = vmatprep.subr.bf16.mxu0 0
  %103 = vmatpush1.bf16.msra.mxu0 %v93
  %104 = vmatprep.subr.bf16.mxu0 0
  %105 = vmatpush1.bf16.msra.mxu0 %v92
  %106 = vmatprep.subr.bf16.mxu0 0
  %107 = vmatpush1.bf16.msra.mxu0 %v91
  %108 = vmatprep.subr.bf16.mxu0 0
  %109 = vmatpush1.bf16.msra.mxu0 %v90
  %110 = vmatprep.subr.bf16.mxu0 0
  %111 = vmatpush1.bf16.msra.mxu0 %v89
  %112 = vmatprep.subr.bf16.mxu0 0
  %113 = vmatpush1.bf16.msra.mxu0 %v88
  %114 = vmatprep.subr.bf16.mxu0 0
  %115 = vmatpush1.bf16.msra.mxu0 %v87
  %116 = vmatprep.subr.bf16.mxu0 0
  %117 = vmatpush1.bf16.msra.mxu0 %v86
  %118 = vmatprep.subr.bf16.mxu0 0
  %119 = vmatpush2.bf16.msra.mxu0 0
  %120 = vmatprep.subr.bf16.mxu0 0
  %121 = vmatpush2.bf16.msra.mxu0 0
  %122 = vmatprep.subr.bf16.mxu0 0
  %123 = vmatpush2.bf16.msra.mxu0 0
  %124 = vmatprep.subr.bf16.mxu0 0
  %125 = vmatpush2.bf16.msra.mxu0 0
  %126 = vmatprep.subr.bf16.mxu0 0
  %127 = vmatpush2.bf16.msra.mxu0 0
  %128 = vmatprep.subr.bf16.mxu0 0
  %129 = vmatpush2.bf16.msra.mxu0 0
  %130 = vmatprep.subr.bf16.mxu0 0
  %131 = vmatpush2.bf16.msra.mxu0 0
  %132 = vmatprep.subr.bf16.mxu0 0
  %133 = vmatpush2.bf16.msra.mxu0 0
  %134 = vmatprep.mubr.bf16.mxu0 0
  %135 = vmatmul.mubr.bf16.gmra.mxu0 %v50
  %v136 = vpop.f32.mrf.mxu0
  %v137 = vadd.f32 %v40, %v136
  %v138 = vpop.f32.mrf.mxu0
  %v139 = vpop.f32.mrf.mxu0
  %v140 = vadd.f32 %v40, %v139
  %v141 = vpop.f32.mrf.mxu0
  %142 = vmatprep.mubr.bf16.mxu0 0
  %143 = vmatmul.mubr.bf16.gmra.mxu0 %v51
  %v144 = vpop.f32.mrf.mxu0
  %v145 = vadd.f32 %v40, %v144
  %v146 = vpop.f32.mrf.mxu0
  %v147 = vpop.f32.mrf.mxu0
  %v148 = vadd.f32 %v40, %v147
  %v149 = vpop.f32.mrf.mxu0
  %150 = vdwg.mxu0
  %151 = vst [vmem:[%s3] sm:$0xff] %v137
  %152 = vst [vmem:[%s3 + $0x8] sm:$0xff] %v140
  %153 = vst [vmem:[%s3 + $0x10] sm:$0xff] %v145
  %154 = vst [vmem:[%s3 + $0x18] sm:$0xff] %v148
  // Predicated region
  $region14: #{forward.149} parent=0 // pred_check
    _
  $region15: #{forward.149} parent=0 // pred_check_branch
    %156 = sbr.rel (0) target = $region17
  $region16: #{forward.149} parent=0 // pred_region
    _
  $region17: #{forward.149} parent=0 // pred_fallthru
    _
  // Predicated region
  $region18: #{forward.149} parent=0 // pred_check
    _
  $region19: #{forward.149} parent=0 // pred_check_branch
    %158 = sbr.rel (0) target = $region21
  $region20: #{forward.149} parent=0 // pred_region
    _
  $region21: #{forward.149} parent=0 // pred_fallthru
    _

// kernel: forward.141
$region0: #{forward.141}
  #allocation0 [shape = 'u32[]', space=smem, size = 0x4, offset = 0x4, fixed_abs, tag = 'smem constant byte address 0x4 - core index']
  #allocation1 [shape = 'u32[144,128]{1,0:T(1,128)}', space=vmem, size = 0x12000, scoped, tag = 'internal scratch']
  %s0 = inlined_call_operand.vmem [shape: bf16[8,128], index: 0, kind: input, shape index: {}]
  %s1 = inlined_call_operand.vmem [shape: bf16[128,128], index: 1, kind: input, shape index: {}]
  %s2 = inlined_call_operand.vmem [shape: f32[1,128], index: 2, kind: input, shape index: {}]
  %s3 = inlined_call_operand.vmem [shape: f32[8,128], index: 3, kind: output, shape index: {}]
  %s4 = sld [smem:[#allocation0]]
  $region22: #{forward.141} parent=0
    _
  %s6 = ssub.s32 1, %s4
  %s7 = scalar_select 0, %s6, %s4
  // Predicated region
  $region2: #{forward.141} parent=0 // pred_check
    _
  $region3: #{forward.141} parent=0 // pred_check_branch
    %9 = sbr.rel (0) target = $region5
  $region4: #{forward.141} parent=0 // pred_region
    _
  $region5: #{forward.141} parent=0 // pred_fallthru
    _
  // Predicated region
  $region6: #{forward.141} parent=0 // pred_check
    _
  $region7: #{forward.141} parent=0 // pred_check_branch
    %11 = sbr.rel (0) target = $region9
  $region8: #{forward.141} parent=0 // pred_region
    _
  $region9: #{forward.141} parent=0 // pred_fallthru
    _
  // Predicated region
  $region10: #{forward.141} parent=0 // pred_check
    _
  $region11: #{forward.141} parent=0 // pred_check_branch
    %13 = sbr.rel (0) target = $region13
  $region12: #{forward.141} parent=0 // pred_region
    _
  $region13: #{forward.141} parent=0 // pred_fallthru
    _
  %v15 = vld [vmem:[%s0] sm:$0xf]
  %v16 = vld [vmem:[%s1] sm:$0xf]
  %v17 = vld [vmem:[%s1 + $0x4] sm:$0xf]
  %v18 = vld [vmem:[%s1 + $0x8] sm:$0xf]
  %v19 = vld [vmem:[%s1 + $0xc] sm:$0xf]
  %v20 = vld [vmem:[%s1 + $0x10] sm:$0xf]
  %v21 = vld [vmem:[%s1 + $0x14] sm:$0xf]
  %v22 = vld [vmem:[%s1 + $0x18] sm:$0xf]
  %v23 = vld [vmem:[%s1 + $0x1c] sm:$0xf]
  %v24 = vld [vmem:[%s1 + $0x20] sm:$0xf]
  %v25 = vld [vmem:[%s1 + $0x24] sm:$0xf]
  %v26 = vld [vmem:[%s1 + $0x28] sm:$0xf]
  %v27 = vld [vmem:[%s1 + $0x2c] sm:$0xf]
  %v28 = vld [vmem:[%s1 + $0x30] sm:$0xf]
  %v29 = vld [vmem:[%s1 + $0x34] sm:$0xf]
  %v30 = vld [vmem:[%s1 + $0x38] sm:$0xf]
  %v31 = vld [vmem:[%s1 + $0x3c] sm:$0xf]
  %v32 = vld [vmem:[%s2] sm:$0x1]
  %v34 = vlaneseq
  %v35 = vshrl.u32 %v34, 7
  %v36 = vsub.s32 0, %v35
  %v37 = vrot.slane %v32, %v36
  %v55 = vunpack.c.l.b16 %v16
  %v56 = vunpack.c.l.b16 %v17
  %v57 = vunpack.c.l.b16 %v18
  %v58 = vunpack.c.l.b16 %v19
  %v59 = vunpack.c.l.b16 %v20
  %v60 = vunpack.c.l.b16 %v21
  %v61 = vunpack.c.l.b16 %v22
  %v62 = vunpack.c.l.b16 %v23
  %v63 = vunpack.c.l.b16 %v24
  %v64 = vunpack.c.l.b16 %v25
  %v65 = vunpack.c.l.b16 %v26
  %v66 = vunpack.c.l.b16 %v27
  %v67 = vunpack.c.l.b16 %v28
  %v68 = vunpack.c.l.b16 %v29
  %v69 = vunpack.c.l.b16 %v30
  %v70 = vunpack.c.l.b16 %v31
  %v71 = vpack.c.b16 %v56, %v55
  %v72 = vpack.c.b16 %v58, %v57
  %v73 = vpack.c.b16 %v60, %v59
  %v74 = vpack.c.b16 %v62, %v61
  %v75 = vpack.c.b16 %v64, %v63
  %v76 = vpack.c.b16 %v66, %v65
  %v77 = vpack.c.b16 %v68, %v67
  %v78 = vpack.c.b16 %v70, %v69
  %87 = vmatprep.subr.bf16.mxu0 0
  %88 = vmatpush1.bf16.msra.mxu0 %v78
  %89 = vmatprep.subr.bf16.mxu0 0
  %90 = vmatpush1.bf16.msra.mxu0 %v77
  %91 = vmatprep.subr.bf16.mxu0 0
  %92 = vmatpush1.bf16.msra.mxu0 %v76
  %93 = vmatprep.subr.bf16.mxu0 0
  %94 = vmatpush1.bf16.msra.mxu0 %v75
  %95 = vmatprep.subr.bf16.mxu0 0
  %96 = vmatpush1.bf16.msra.mxu0 %v74
  %97 = vmatprep.subr.bf16.mxu0 0
  %98 = vmatpush1.bf16.msra.mxu0 %v73
  %99 = vmatprep.subr.bf16.mxu0 0
  %100 = vmatpush1.bf16.msra.mxu0 %v72
  %101 = vmatprep.subr.bf16.mxu0 0
  %102 = vmatpush1.bf16.msra.mxu0 %v71
  %103 = vmatprep.subr.bf16.mxu0 0
  %104 = vmatpush2.bf16.msra.mxu0 0
  %105 = vmatprep.subr.bf16.mxu0 0
  %106 = vmatpush2.bf16.msra.mxu0 0
  %107 = vmatprep.subr.bf16.mxu0 0
  %108 = vmatpush2.bf16.msra.mxu0 0
  %109 = vmatprep.subr.bf16.mxu0 0
  %110 = vmatpush2.bf16.msra.mxu0 0
  %111 = vmatprep.subr.bf16.mxu0 0
  %112 = vmatpush2.bf16.msra.mxu0 0
  %113 = vmatprep.subr.bf16.mxu0 0
  %114 = vmatpush2.bf16.msra.mxu0 0
  %115 = vmatprep.subr.bf16.mxu0 0
  %116 = vmatpush2.bf16.msra.mxu0 0
  %117 = vmatprep.subr.bf16.mxu0 0
  %118 = vmatpush2.bf16.msra.mxu0 0
  %119 = vmatprep.mubr.bf16.mxu0 0
  %120 = vmatmul.mubr.bf16.gmra.mxu0 %v15
  %v121 = vpop.f32.mrf.mxu0
  %v122 = vadd.f32 %v37, %v121
  %v123 = vpop.f32.mrf.mxu0
  %v124 = vpop.f32.mrf.mxu0
  %v125 = vpop.f32.mrf.mxu0
  %126 = vdwg.mxu0
  %127 = vst [vmem:[%s3] sm:$0xff] %v122
  // Predicated region
  $region14: #{forward.141} parent=0 // pred_check
    _
  $region15: #{forward.141} parent=0 // pred_check_branch
    %129 = sbr.rel (0) target = $region17
  $region16: #{forward.141} parent=0 // pred_region
    _
  $region17: #{forward.141} parent=0 // pred_fallthru
    _
  // Predicated region
  $region18: #{forward.141} parent=0 // pred_check
    _
  $region19: #{forward.141} parent=0 // pred_check_branch
    %131 = sbr.rel (0) target = $region21
  $region20: #{forward.141} parent=0 // pred_region
    _
  $region21: #{forward.141} parent=0 // pred_fallthru
    _

</llo_original>
